<compile_context>
chip_gen: v6e
topology: v6e:2x2x1
jax: 0.10.0
libtpu: 0.0.40
codegen_flags: <defaults>
</compile_context>

<pallas_src>
import math

import numpy as np
import jax
import jax.numpy as jnp
from jax.experimental import pallas as pl
from jax.experimental.pallas import tpu as pltpu


MXU_DTYPE = jnp.bfloat16          # matmul operand dtype (accumulation is f32)
LEAKY_SLOPE = 0.2
INV_SQRT2 = 1.0 / math.sqrt(2.0)

# Explicit scoped-VMEM budget: safely below per-TensorCore physical VMEM on all
# generations (64 MiB on v7x, 128 MiB on v5e/v6e) and well above the 16/32 MiB
# defaults that would bite once shapes grow past the demo.
_VMEM_LIMIT_BYTES = 48 * 1024 * 1024


# ----------------------------------------------------------------------------
# In-kernel helpers (one grid step == one sample; activations are 2-D
# (H*W, C) slabs, reshaped to (1, H, W, C) only where spatial structure is
# needed — those reshapes split/collapse leading dims only).
# ----------------------------------------------------------------------------

def _leaky(x):
    return jnp.where(x >= 0, x, LEAKY_SLOPE * x)


def _zero_pad_hw(x):
    """x: (1, H, W, C) -> (1, H+2, W+2, C), zero-padded on H and W."""
    _, H, W, C = x.shape
    zr = jnp.zeros((1, 1, W, C), x.dtype)
    x = jnp.concatenate([zr, x, zr], axis=1)
    zc = jnp.zeros((1, H + 2, 1, C), x.dtype)
    return jnp.concatenate([zc, x, zc], axis=2)


def _im2col_3x3(xp):
    """xp: (1, H+2, W+2, C) -> (H*W, 9*C). Column order is (kh, kw, cin)."""
    _, HP, WP, C = xp.shape
    H, W = HP - 2, WP - 2
    taps = [xp[:, kh:kh + H, kw:kw + W, :] for kh in range(3) for kw in range(3)]
    return jnp.concatenate(taps, axis=-1).reshape(H * W, 9 * C)


def _conv3x3(x2d, H, W, w, b):
    """3x3 conv, stride 1, pad 1, as ONE im2col matmul.
    x2d: (H*W, Cin) f32; w: (9*Cin, Cout) bf16; b: (1, Cout) f32."""
    Cin = x2d.shape[1]
    x = x2d.reshape(1, H, W, Cin)
    p = _im2col_3x3(_zero_pad_hw(x)).astype(MXU_DTYPE)
    return jnp.dot(p, w, preferred_element_type=jnp.float32) + b


def _avg_pool2(x2d, H, W):
    """2x2 average pool. x2d: (H*W, C) -> ((H//2)*(W//2), C). VPU adds only."""
    C = x2d.shape[1]
    x = x2d.reshape(H // 2, 2, W, C)
    x = x[:, 0] + x[:, 1]                               # pool along H
    x = x.reshape(H // 2, W // 2, 2, C)
    x = (x[:, :, 0, :] + x[:, :, 1, :]) * 0.25          # pool along W
    return x.reshape((H // 2) * (W // 2), C)


def _resblk(x2d, H, W, w1, b1, w2, b2, wsc):
    """Fused ResBlk(downsample=True, normalize=False):
         residual : leaky -> conv1(3x3,p1) -> avgpool2 -> leaky -> conv2(3x3,p1)
         shortcut : (1x1 conv if learned) -> avgpool2
         out      : (shortcut + residual) / sqrt(2)."""
    if wsc is not None:
        sc = jnp.dot(x2d.astype(MXU_DTYPE), wsc, preferred_element_type=jnp.float32)
    else:
        sc = x2d                                        # identity: Cin == Cout
    sc = _avg_pool2(sc, H, W)

    r = _conv3x3(_leaky(x2d), H, W, w1, b1)
    r = _avg_pool2(r, H, W)
    r = _conv3x3(_leaky(r), H // 2, W // 2, w2, b2)
    return (r + sc) * INV_SQRT2


# ----------------------------------------------------------------------------
# Fused whole-network kernel + pallas_call wrapper
# ----------------------------------------------------------------------------

def _flatten_params(params):
    """Flatten all weights into one ordered list plus an index plan."""
    weights = []

    def add(a):
        weights.append(a)
        return len(weights) - 1

    w0, b0 = params["conv0"]
    plan_conv0 = (add(w0), add(b0))

    plan_blocks = []
    for blk in params["blocks"]:
        w1, b1 = blk["conv1"]
        w2, b2 = blk["conv2"]
        i1 = (add(w1), add(b1))
        i2 = (add(w2), add(b2))
        if blk["conv1x1"] is not None:
            isc = add(blk["conv1x1"])
        else:
            # identity shortcut is only valid when channel count is unchanged
            assert w1.shape[1] == w2.shape[1], "identity shortcut needs Cin == Cout"
            isc = None
        plan_blocks.append((i1, i2, isc))

    wc, bc = params["final_conv"]
    wl, bl = params["exit"]
    plan_head = (add(wc), add(bc), add(wl), add(bl))
    return weights, (plan_conv0, plan_blocks, plan_head)


def _make_style_encoder_kernel(plan, n_weights, H, W, style_dim, out_dtype):
    plan_conv0, plan_blocks, plan_head = plan
    n_blocks = len(plan_blocks)
    Hf, Wf = H >> n_blocks, W >> n_blocks               # spatial size at the head

    def kernel(x_ref, *refs):
        w = [r[...] for r in refs[:n_weights]]          # all weights VMEM-resident
        o_ref = refs[n_weights]

        # (1, H, W, Cin0) -> (H*W, Cin0): leading-dim collapse only.
        x = x_ref[...].astype(jnp.float32)
        h = x.reshape(H * W, x.shape[-1])

        h = _conv3x3(h, H, W, w[plan_conv0[0]], w[plan_conv0[1]])
        hh, ww = H, W
        for (i1, i2, isc) in plan_blocks:
            wsc = w[isc] if isc is not None else None
            h = _resblk(h, hh, ww, w[i1[0]], w[i1[1]], w[i2[0]], w[i2[1]], wsc)
            hh, ww = hh // 2, ww // 2

        # head: leaky -> 4x4 valid conv (== matmul) -> leaky -> Linear.
        a = _leaky(h)                                   # (Hf*Wf, C)
        # Flatten spatial into the lane axis via slice + lane-concat (row-major
        # (kh, kw, cin) order, matching the host-side head-conv weight layout).
        hf = jnp.concatenate([a[p:p + 1, :] for p in range(Hf * Wf)], axis=-1)
        hf = jnp.dot(hf.astype(MXU_DTYPE), w[plan_head[0]],
                     preferred_element_type=jnp.float32) + w[plan_head[1]]
        hf = _leaky(hf)
        s = jnp.dot(hf.astype(MXU_DTYPE), w[plan_head[2]],
                    preferred_element_type=jnp.float32) + w[plan_head[3]]
        o_ref[...] = s.reshape(1, 1, style_dim).astype(out_dtype)

    return kernel


def _full_spec(shape):
    zeros = (0,) * len(shape)
    return pl.BlockSpec(shape, lambda n, _z=zeros: _z)


def style_encoder_pallas(params, x_nhwc):
    """x_nhwc: (N, H, W, 4) f32 -> (N, style_dim).
    Whole network in ONE pallas_call, gridded (parallel) over the batch."""
    N, H, W, Cin = x_nhwc.shape
    weights, plan = _flatten_params(params)
    style_dim = params["exit"][0].shape[1]

    n_blocks = len(params["blocks"])
    Hf, Wf = H >> n_blocks, W >> n_blocks
    c_last = (params["blocks"][-1]["conv2"][0].shape[1]
              if n_blocks else params["conv0"][0].shape[1])
    assert params["final_conv"][0].shape[0] == Hf * Wf * c_last, "head conv size mismatch"

    kernel = _make_style_encoder_kernel(plan, len(weights), H, W, style_dim,
                                        x_nhwc.dtype)

    in_specs = [pl.BlockSpec((1, H, W, Cin), lambda n: (n, 0, 0, 0))]
    in_specs += [_full_spec(wt.shape) for wt in weights]
    out_spec = pl.BlockSpec((1, 1, style_dim), lambda n: (n, 0, 0))

    out = pl.pallas_call(
        kernel,
        out_shape=jax.ShapeDtypeStruct((N, 1, style_dim), x_nhwc.dtype),
        grid=(N,),
        in_specs=in_specs,
        out_specs=out_spec,
        compiler_params=pltpu.CompilerParams(
            dimension_semantics=("parallel",),
            vmem_limit_bytes=_VMEM_LIMIT_BYTES),
    )(x_nhwc, *weights)
    return out.reshape(N, style_dim)


# ----------------------------------------------------------------------------
# StyleEncoder: parameter init (kernel layout) + forward
# ----------------------------------------------------------------------------

def _conv_param_pt(key, cout, cin, k, bias=True):
    kw_key, kb_key = jax.random.split(key)
    fan_in = cin * k * k
    w = jax.random.normal(kw_key, (cout, cin, k, k), jnp.float32) / np.sqrt(fan_in)
    b = (jax.random.normal(kb_key, (cout,), jnp.float32) * 0.01) if bias else None
    return w, b


def _prep_conv(w_pt, b_pt):
    """PyTorch (Cout, Cin, KH, KW) -> ((KH*KW*Cin, Cout) bf16, (1, Cout) f32)."""
    Cout, Cin, KH, KW = w_pt.shape
    w_k = jnp.transpose(w_pt, (2, 3, 1, 0)).reshape(KH * KW * Cin, Cout).astype(MXU_DTYPE)
    b_k = None if b_pt is None else b_pt.reshape(1, Cout).astype(jnp.float32)
    return w_k, b_k


def init_style_encoder(key, img_size=16, style_dim=8, max_conv_dim=32, dim_in=None):
    # Original module uses dim_in = 2**14 // img_size; the demo overrides dim_in
    # so channel counts stay tiny. Weights stored in kernel layout once.
    if dim_in is None:
        dim_in = 2 ** 14 // img_size
    repeat_num = int(np.log2(img_size)) - 2
    keys = iter(jax.random.split(key, 4 * repeat_num + 8))

    params = {}
    params["conv0"] = _prep_conv(*_conv_param_pt(next(keys), dim_in, 4, 3))

    blocks = []
    d_in = dim_in
    d_out = dim_in
    for _ in range(repeat_num):
        d_out = min(d_in * 2, max_conv_dim)
        conv1x1 = None
        if d_in != d_out:   # learned shortcut only when channel count changes
            conv1x1 = _prep_conv(
                _conv_param_pt(next(keys), d_out, d_in, 1, bias=False)[0], None)[0]
        blocks.append({
            "conv1": _prep_conv(*_conv_param_pt(next(keys), d_in, d_in, 3)),
            "conv2": _prep_conv(*_conv_param_pt(next(keys), d_out, d_in, 3)),
            "conv1x1": conv1x1,
        })
        d_in = d_out
    params["blocks"] = blocks

    params["final_conv"] = _prep_conv(*_conv_param_pt(next(keys), d_out, d_out, 4))

    kw_key, kb_key = jax.random.split(next(keys))
    wl = jax.random.normal(kw_key, (style_dim, d_out), jnp.float32) / np.sqrt(d_out)
    bl = jax.random.normal(kb_key, (style_dim,), jnp.float32) * 0.01
    params["exit"] = (jnp.transpose(wl, (1, 0)).astype(MXU_DTYPE),
                      bl.reshape(1, style_dim).astype(jnp.float32))
    return params


def style_encoder_forward(params, sketch, pose):
    # sketch, pose: NCHW (PyTorch convention); concat on channels -> 4 channels.
    x = jnp.concatenate([sketch, pose], axis=1)
    x = jnp.transpose(x, (0, 2, 3, 1)).astype(jnp.float32)       # -> NHWC
    return style_encoder_pallas(params, x)


if __name__ == "__main__":
    key = jax.random.PRNGKey(0)
    k_params, k_sketch, k_pose = jax.random.split(key, 3)

    # Small shapes: batch=2, img_size=16, 4 input channels (3 sketch + 1 pose),
    # base channels 16, max_conv_dim=32, style_dim=8.
    img_size, style_dim, max_conv_dim, base_dim = 16, 8, 32, 16
    params = init_style_encoder(k_params, img_size=img_size, style_dim=style_dim,
                                max_conv_dim=max_conv_dim, dim_in=base_dim)

    sketch = jax.random.normal(k_sketch, (2, 3, img_size, img_size), jnp.float32)
    pose = jax.random.normal(k_pose, (2, 1, img_size, img_size), jnp.float32)

    fwd = jax.jit(style_encoder_forward)
    s = jax.block_until_ready(fwd(params, sketch, pose))
    assert s.shape == (2, style_dim), s.shape
    assert bool(jnp.all(jnp.isfinite(s)))
    print("KERNEL_OK")
</pallas_src>

<mosaic_0001>
module attributes {stable_mosaic.version = 11 : i64} {
  func.func @kernel(%arg0: i32, %arg1: memref<1x16x16x4xf32, #tpu.memory_space<vmem>>, %arg2: memref<36x16xbf16, #tpu.memory_space<vmem>>, %arg3: memref<1x16xf32, #tpu.memory_space<vmem>>, %arg4: memref<144x16xbf16, #tpu.memory_space<vmem>>, %arg5: memref<1x16xf32, #tpu.memory_space<vmem>>, %arg6: memref<144x32xbf16, #tpu.memory_space<vmem>>, %arg7: memref<1x32xf32, #tpu.memory_space<vmem>>, %arg8: memref<16x32xbf16, #tpu.memory_space<vmem>>, %arg9: memref<288x32xbf16, #tpu.memory_space<vmem>>, %arg10: memref<1x32xf32, #tpu.memory_space<vmem>>, %arg11: memref<288x32xbf16, #tpu.memory_space<vmem>>, %arg12: memref<1x32xf32, #tpu.memory_space<vmem>>, %arg13: memref<512x32xbf16, #tpu.memory_space<vmem>>, %arg14: memref<1x32xf32, #tpu.memory_space<vmem>>, %arg15: memref<32x8xbf16, #tpu.memory_space<vmem>>, %arg16: memref<1x8xf32, #tpu.memory_space<vmem>>, %arg17: memref<1x1x8xf32, #tpu.memory_space<vmem>>) attributes {dimension_semantics = [#tpu.dimension_semantics<parallel>], iteration_bounds = array<i64: 2>, scalar_prefetch = 0 : i64, scratch_operands = 0 : i64, tpu.core_type = #tpu.core_type<tc>, window_params = [{transform_indices = @transform_0, window_bounds = array<i64: 1, 16, 16, 4>}, {pipeline_mode = #tpu.pipeline_mode<synchronous>, transform_indices = @transform_1, window_bounds = array<i64: 36, 16>}, {pipeline_mode = #tpu.pipeline_mode<synchronous>, transform_indices = @transform_2, window_bounds = array<i64: 1, 16>}, {pipeline_mode = #tpu.pipeline_mode<synchronous>, transform_indices = @transform_3, window_bounds = array<i64: 144, 16>}, {pipeline_mode = #tpu.pipeline_mode<synchronous>, transform_indices = @transform_4, window_bounds = array<i64: 1, 16>}, {pipeline_mode = #tpu.pipeline_mode<synchronous>, transform_indices = @transform_5, window_bounds = array<i64: 144, 32>}, {pipeline_mode = #tpu.pipeline_mode<synchronous>, transform_indices = @transform_6, window_bounds = array<i64: 1, 32>}, {pipeline_mode = #tpu.pipeline_mode<synchronous>, transform_indices = @transform_7, window_bounds = array<i64: 16, 32>}, {pipeline_mode = #tpu.pipeline_mode<synchronous>, transform_indices = @transform_8, window_bounds = array<i64: 288, 32>}, {pipeline_mode = #tpu.pipeline_mode<synchronous>, transform_indices = @transform_9, window_bounds = array<i64: 1, 32>}, {pipeline_mode = #tpu.pipeline_mode<synchronous>, transform_indices = @transform_10, window_bounds = array<i64: 288, 32>}, {pipeline_mode = #tpu.pipeline_mode<synchronous>, transform_indices = @transform_11, window_bounds = array<i64: 1, 32>}, {pipeline_mode = #tpu.pipeline_mode<synchronous>, transform_indices = @transform_12, window_bounds = array<i64: 512, 32>}, {pipeline_mode = #tpu.pipeline_mode<synchronous>, transform_indices = @transform_13, window_bounds = array<i64: 1, 32>}, {pipeline_mode = #tpu.pipeline_mode<synchronous>, transform_indices = @transform_14, window_bounds = array<i64: 32, 8>}, {pipeline_mode = #tpu.pipeline_mode<synchronous>, transform_indices = @transform_15, window_bounds = array<i64: 1, 8>}, {transform_indices = @transform_16, window_bounds = array<i64: 1, 1, 8>}]} {
    %c0 = arith.constant 0 : index
    %c0_0 = arith.constant 0 : index
    %0 = vector.load %arg2[%c0, %c0_0] : memref<36x16xbf16, #tpu.memory_space<vmem>>, vector<36x16xbf16>
    %c0_1 = arith.constant 0 : index
    %c0_2 = arith.constant 0 : index
    %1 = vector.load %arg3[%c0_1, %c0_2] : memref<1x16xf32, #tpu.memory_space<vmem>>, vector<1x16xf32>
    %c0_3 = arith.constant 0 : index
    %c0_4 = arith.constant 0 : index
    %2 = vector.load %arg4[%c0_3, %c0_4] : memref<144x16xbf16, #tpu.memory_space<vmem>>, vector<144x16xbf16>
    %c0_5 = arith.constant 0 : index
    %c0_6 = arith.constant 0 : index
    %3 = vector.load %arg5[%c0_5, %c0_6] : memref<1x16xf32, #tpu.memory_space<vmem>>, vector<1x16xf32>
    %c0_7 = arith.constant 0 : index
    %c0_8 = arith.constant 0 : index
    %4 = vector.load %arg6[%c0_7, %c0_8] : memref<144x32xbf16, #tpu.memory_space<vmem>>, vector<144x32xbf16>
    %c0_9 = arith.constant 0 : index
    %c0_10 = arith.constant 0 : index
    %5 = vector.load %arg7[%c0_9, %c0_10] : memref<1x32xf32, #tpu.memory_space<vmem>>, vector<1x32xf32>
    %c0_11 = arith.constant 0 : index
    %c0_12 = arith.constant 0 : index
    %6 = vector.load %arg8[%c0_11, %c0_12] : memref<16x32xbf16, #tpu.memory_space<vmem>>, vector<16x32xbf16>
    %c0_13 = arith.constant 0 : index
    %c0_14 = arith.constant 0 : index
    %7 = vector.load %arg9[%c0_13, %c0_14] : memref<288x32xbf16, #tpu.memory_space<vmem>>, vector<288x32xbf16>
    %c0_15 = arith.constant 0 : index
    %c0_16 = arith.constant 0 : index
    %8 = vector.load %arg10[%c0_15, %c0_16] : memref<1x32xf32, #tpu.memory_space<vmem>>, vector<1x32xf32>
    %c0_17 = arith.constant 0 : index
    %c0_18 = arith.constant 0 : index
    %9 = vector.load %arg11[%c0_17, %c0_18] : memref<288x32xbf16, #tpu.memory_space<vmem>>, vector<288x32xbf16>
    %c0_19 = arith.constant 0 : index
    %c0_20 = arith.constant 0 : index
    %10 = vector.load %arg12[%c0_19, %c0_20] : memref<1x32xf32, #tpu.memory_space<vmem>>, vector<1x32xf32>
    %c0_21 = arith.constant 0 : index
    %c0_22 = arith.constant 0 : index
    %11 = vector.load %arg13[%c0_21, %c0_22] : memref<512x32xbf16, #tpu.memory_space<vmem>>, vector<512x32xbf16>
    %c0_23 = arith.constant 0 : index
    %c0_24 = arith.constant 0 : index
    %12 = vector.load %arg14[%c0_23, %c0_24] : memref<1x32xf32, #tpu.memory_space<vmem>>, vector<1x32xf32>
    %c0_25 = arith.constant 0 : index
    %c0_26 = arith.constant 0 : index
    %13 = vector.load %arg15[%c0_25, %c0_26] : memref<32x8xbf16, #tpu.memory_space<vmem>>, vector<32x8xbf16>
    %c0_27 = arith.constant 0 : index
    %c0_28 = arith.constant 0 : index
    %14 = vector.load %arg16[%c0_27, %c0_28] : memref<1x8xf32, #tpu.memory_space<vmem>>, vector<1x8xf32>
    %c0_29 = arith.constant 0 : index
    %c0_30 = arith.constant 0 : index
    %c0_31 = arith.constant 0 : index
    %c0_32 = arith.constant 0 : index
    %15 = vector.load %arg1[%c0_29, %c0_30, %c0_31, %c0_32] : memref<1x16x16x4xf32, #tpu.memory_space<vmem>>, vector<1x16x16x4xf32>
    %16 = vector.shape_cast %15 : vector<1x16x16x4xf32> to vector<256x4xf32>
    %17 = vector.shape_cast %16 : vector<256x4xf32> to vector<1x16x16x4xf32>
    %cst = arith.constant 0.000000e+00 : f32
    %18 = vector.broadcast %cst : f32 to vector<1x1x16x4xf32>
    %19 = tpu.concatenate %18, %17, %18 in 1 : vector<1x1x16x4xf32>, vector<1x16x16x4xf32>, vector<1x1x16x4xf32> -> vector<1x18x16x4xf32>
    %cst_33 = arith.constant 0.000000e+00 : f32
    %20 = vector.broadcast %cst_33 : f32 to vector<1x18x1x4xf32>
    %21 = tpu.concatenate %20, %19, %20 in 2 : vector<1x18x1x4xf32>, vector<1x18x16x4xf32>, vector<1x18x1x4xf32> -> vector<1x18x18x4xf32>
    %22 = vector.extract_strided_slice %21 {offsets = [0, 0, 0, 0], sizes = [1, 16, 16, 4], strides = [1, 1, 1, 1]} : vector<1x18x18x4xf32> to vector<1x16x16x4xf32>
    %23 = vector.extract_strided_slice %21 {offsets = [0, 0, 1, 0], sizes = [1, 16, 16, 4], strides = [1, 1, 1, 1]} : vector<1x18x18x4xf32> to vector<1x16x16x4xf32>
    %24 = vector.extract_strided_slice %21 {offsets = [0, 0, 2, 0], sizes = [1, 16, 16, 4], strides = [1, 1, 1, 1]} : vector<1x18x18x4xf32> to vector<1x16x16x4xf32>
    %25 = vector.extract_strided_slice %21 {offsets = [0, 1, 0, 0], sizes = [1, 16, 16, 4], strides = [1, 1, 1, 1]} : vector<1x18x18x4xf32> to vector<1x16x16x4xf32>
    %26 = vector.extract_strided_slice %21 {offsets = [0, 1, 1, 0], sizes = [1, 16, 16, 4], strides = [1, 1, 1, 1]} : vector<1x18x18x4xf32> to vector<1x16x16x4xf32>
    %27 = vector.extract_strided_slice %21 {offsets = [0, 1, 2, 0], sizes = [1, 16, 16, 4], strides = [1, 1, 1, 1]} : vector<1x18x18x4xf32> to vector<1x16x16x4xf32>
    %28 = vector.extract_strided_slice %21 {offsets = [0, 2, 0, 0], sizes = [1, 16, 16, 4], strides = [1, 1, 1, 1]} : vector<1x18x18x4xf32> to vector<1x16x16x4xf32>
    %29 = vector.extract_strided_slice %21 {offsets = [0, 2, 1, 0], sizes = [1, 16, 16, 4], strides = [1, 1, 1, 1]} : vector<1x18x18x4xf32> to vector<1x16x16x4xf32>
    %30 = vector.extract_strided_slice %21 {offsets = [0, 2, 2, 0], sizes = [1, 16, 16, 4], strides = [1, 1, 1, 1]} : vector<1x18x18x4xf32> to vector<1x16x16x4xf32>
    %31 = tpu.concatenate %22, %23, %24, %25, %26, %27, %28, %29, %30 in 3 : vector<1x16x16x4xf32>, vector<1x16x16x4xf32>, vector<1x16x16x4xf32>, vector<1x16x16x4xf32>, vector<1x16x16x4xf32>, vector<1x16x16x4xf32>, vector<1x16x16x4xf32>, vector<1x16x16x4xf32>, vector<1x16x16x4xf32> -> vector<1x16x16x36xf32>
    %32 = vector.shape_cast %31 : vector<1x16x16x36xf32> to vector<256x36xf32>
    %33 = arith.truncf %32 : vector<256x36xf32> to vector<256x36xbf16>
    %cst_34 = arith.constant dense<0.000000e+00> : vector<256x16xf32>
    %34 = tpu.matmul %33, %0, %cst_34 {dimension_numbers = #tpu.dot_dimension_numbers<[1], [0], [0], [1], [0, 0, 1, 1], [], []>} : vector<256x36xbf16>, vector<36x16xbf16>, vector<256x16xf32> -> vector<256x16xf32>
    %35 = vector.broadcast %1 : vector<1x16xf32> to vector<256x16xf32>
    %36 = arith.addf %34, %35 : vector<256x16xf32>
    %37 = arith.truncf %36 : vector<256x16xf32> to vector<256x16xbf16>
    %cst_35 = arith.constant dense<0.000000e+00> : vector<256x32xf32>
    %38 = tpu.matmul %37, %6, %cst_35 {dimension_numbers = #tpu.dot_dimension_numbers<[1], [0], [0], [1], [0, 0, 1, 1], [], []>} : vector<256x16xbf16>, vector<16x32xbf16>, vector<256x32xf32> -> vector<256x32xf32>
    %39 = vector.shape_cast %38 : vector<256x32xf32> to vector<8x2x16x32xf32>
    %40 = vector.extract_strided_slice %39 {offsets = [0, 0, 0, 0], sizes = [8, 1, 16, 32], strides = [1, 1, 1, 1]} : vector<8x2x16x32xf32> to vector<8x1x16x32xf32>
    %41 = vector.shape_cast %40 : vector<8x1x16x32xf32> to vector<8x16x32xf32>
    %42 = vector.extract_strided_slice %39 {offsets = [0, 1, 0, 0], sizes = [8, 1, 16, 32], strides = [1, 1, 1, 1]} : vector<8x2x16x32xf32> to vector<8x1x16x32xf32>
    %43 = vector.shape_cast %42 : vector<8x1x16x32xf32> to vector<8x16x32xf32>
    %44 = arith.addf %41, %43 : vector<8x16x32xf32>
    %45 = vector.shape_cast %44 : vector<8x16x32xf32> to vector<8x8x2x32xf32>
    %46 = vector.extract_strided_slice %45 {offsets = [0, 0, 0, 0], sizes = [8, 8, 1, 32], strides = [1, 1, 1, 1]} : vector<8x8x2x32xf32> to vector<8x8x1x32xf32>
    %47 = vector.shape_cast %46 : vector<8x8x1x32xf32> to vector<8x8x32xf32>
    %48 = vector.extract_strided_slice %45 {offsets = [0, 0, 1, 0], sizes = [8, 8, 1, 32], strides = [1, 1, 1, 1]} : vector<8x8x2x32xf32> to vector<8x8x1x32xf32>
    %49 = vector.shape_cast %48 : vector<8x8x1x32xf32> to vector<8x8x32xf32>
    %50 = arith.addf %47, %49 : vector<8x8x32xf32>
    %cst_36 = arith.constant 2.500000e-01 : f32
    %51 = vector.broadcast %cst_36 : f32 to vector<8x8x32xf32>
    %52 = arith.mulf %50, %51 : vector<8x8x32xf32>
    %53 = vector.shape_cast %52 : vector<8x8x32xf32> to vector<64x32xf32>
    %cst_37 = arith.constant 0.000000e+00 : f32
    %54 = vector.broadcast %cst_37 : f32 to vector<256x16xf32>
    %55 = arith.cmpf oge, %36, %54 : vector<256x16xf32>
    %cst_38 = arith.constant 2.000000e-01 : f32
    %56 = vector.broadcast %cst_38 : f32 to vector<256x16xf32>
    %57 = arith.mulf %56, %36 : vector<256x16xf32>
    %58 = arith.select %55, %36, %57 : vector<256x16xi1>, vector<256x16xf32>
    %59 = vector.shape_cast %58 : vector<256x16xf32> to vector<1x16x16x16xf32>
    %cst_39 = arith.constant 0.000000e+00 : f32
    %60 = vector.broadcast %cst_39 : f32 to vector<1x1x16x16xf32>
    %61 = tpu.concatenate %60, %59, %60 in 1 : vector<1x1x16x16xf32>, vector<1x16x16x16xf32>, vector<1x1x16x16xf32> -> vector<1x18x16x16xf32>
    %cst_40 = arith.constant 0.000000e+00 : f32
    %62 = vector.broadcast %cst_40 : f32 to vector<1x18x1x16xf32>
    %63 = tpu.concatenate %62, %61, %62 in 2 : vector<1x18x1x16xf32>, vector<1x18x16x16xf32>, vector<1x18x1x16xf32> -> vector<1x18x18x16xf32>
    %64 = vector.extract_strided_slice %63 {offsets = [0, 0, 0, 0], sizes = [1, 16, 16, 16], strides = [1, 1, 1, 1]} : vector<1x18x18x16xf32> to vector<1x16x16x16xf32>
    %65 = vector.extract_strided_slice %63 {offsets = [0, 0, 1, 0], sizes = [1, 16, 16, 16], strides = [1, 1, 1, 1]} : vector<1x18x18x16xf32> to vector<1x16x16x16xf32>
    %66 = vector.extract_strided_slice %63 {offsets = [0, 0, 2, 0], sizes = [1, 16, 16, 16], strides = [1, 1, 1, 1]} : vector<1x18x18x16xf32> to vector<1x16x16x16xf32>
    %67 = vector.extract_strided_slice %63 {offsets = [0, 1, 0, 0], sizes = [1, 16, 16, 16], strides = [1, 1, 1, 1]} : vector<1x18x18x16xf32> to vector<1x16x16x16xf32>
    %68 = vector.extract_strided_slice %63 {offsets = [0, 1, 1, 0], sizes = [1, 16, 16, 16], strides = [1, 1, 1, 1]} : vector<1x18x18x16xf32> to vector<1x16x16x16xf32>
    %69 = vector.extract_strided_slice %63 {offsets = [0, 1, 2, 0], sizes = [1, 16, 16, 16], strides = [1, 1, 1, 1]} : vector<1x18x18x16xf32> to vector<1x16x16x16xf32>
    %70 = vector.extract_strided_slice %63 {offsets = [0, 2, 0, 0], sizes = [1, 16, 16, 16], strides = [1, 1, 1, 1]} : vector<1x18x18x16xf32> to vector<1x16x16x16xf32>
    %71 = vector.extract_strided_slice %63 {offsets = [0, 2, 1, 0], sizes = [1, 16, 16, 16], strides = [1, 1, 1, 1]} : vector<1x18x18x16xf32> to vector<1x16x16x16xf32>
    %72 = vector.extract_strided_slice %63 {offsets = [0, 2, 2, 0], sizes = [1, 16, 16, 16], strides = [1, 1, 1, 1]} : vector<1x18x18x16xf32> to vector<1x16x16x16xf32>
    %73 = tpu.concatenate %64, %65, %66, %67, %68, %69, %70, %71, %72 in 3 : vector<1x16x16x16xf32>, vector<1x16x16x16xf32>, vector<1x16x16x16xf32>, vector<1x16x16x16xf32>, vector<1x16x16x16xf32>, vector<1x16x16x16xf32>, vector<1x16x16x16xf32>, vector<1x16x16x16xf32>, vector<1x16x16x16xf32> -> vector<1x16x16x144xf32>
    %74 = vector.shape_cast %73 : vector<1x16x16x144xf32> to vector<256x144xf32>
    %75 = arith.truncf %74 : vector<256x144xf32> to vector<256x144xbf16>
    %cst_41 = arith.constant dense<0.000000e+00> : vector<256x16xf32>
    %76 = tpu.matmul %75, %2, %cst_41 {dimension_numbers = #tpu.dot_dimension_numbers<[1], [0], [0], [1], [0, 0, 1, 1], [], []>} : vector<256x144xbf16>, vector<144x16xbf16>, vector<256x16xf32> -> vector<256x16xf32>
    %77 = vector.broadcast %3 : vector<1x16xf32> to vector<256x16xf32>
    %78 = arith.addf %76, %77 : vector<256x16xf32>
    %79 = vector.shape_cast %78 : vector<256x16xf32> to vector<8x2x16x16xf32>
    %80 = vector.extract_strided_slice %79 {offsets = [0, 0, 0, 0], sizes = [8, 1, 16, 16], strides = [1, 1, 1, 1]} : vector<8x2x16x16xf32> to vector<8x1x16x16xf32>
    %81 = vector.shape_cast %80 : vector<8x1x16x16xf32> to vector<8x16x16xf32>
    %82 = vector.extract_strided_slice %79 {offsets = [0, 1, 0, 0], sizes = [8, 1, 16, 16], strides = [1, 1, 1, 1]} : vector<8x2x16x16xf32> to vector<8x1x16x16xf32>
    %83 = vector.shape_cast %82 : vector<8x1x16x16xf32> to vector<8x16x16xf32>
    %84 = arith.addf %81, %83 : vector<8x16x16xf32>
    %85 = vector.shape_cast %84 : vector<8x16x16xf32> to vector<8x8x2x16xf32>
    %86 = vector.extract_strided_slice %85 {offsets = [0, 0, 0, 0], sizes = [8, 8, 1, 16], strides = [1, 1, 1, 1]} : vector<8x8x2x16xf32> to vector<8x8x1x16xf32>
    %87 = vector.shape_cast %86 : vector<8x8x1x16xf32> to vector<8x8x16xf32>
    %88 = vector.extract_strided_slice %85 {offsets = [0, 0, 1, 0], sizes = [8, 8, 1, 16], strides = [1, 1, 1, 1]} : vector<8x8x2x16xf32> to vector<8x8x1x16xf32>
    %89 = vector.shape_cast %88 : vector<8x8x1x16xf32> to vector<8x8x16xf32>
    %90 = arith.addf %87, %89 : vector<8x8x16xf32>
    %cst_42 = arith.constant 2.500000e-01 : f32
    %91 = vector.broadcast %cst_42 : f32 to vector<8x8x16xf32>
    %92 = arith.mulf %90, %91 : vector<8x8x16xf32>
    %93 = vector.shape_cast %92 : vector<8x8x16xf32> to vector<64x16xf32>
    %cst_43 = arith.constant 0.000000e+00 : f32
    %94 = vector.broadcast %cst_43 : f32 to vector<64x16xf32>
    %95 = arith.cmpf oge, %93, %94 : vector<64x16xf32>
    %cst_44 = arith.constant 2.000000e-01 : f32
    %96 = vector.broadcast %cst_44 : f32 to vector<64x16xf32>
    %97 = arith.mulf %96, %93 : vector<64x16xf32>
    %98 = arith.select %95, %93, %97 : vector<64x16xi1>, vector<64x16xf32>
    %99 = vector.shape_cast %98 : vector<64x16xf32> to vector<1x8x8x16xf32>
    %cst_45 = arith.constant 0.000000e+00 : f32
    %100 = vector.broadcast %cst_45 : f32 to vector<1x1x8x16xf32>
    %101 = tpu.concatenate %100, %99, %100 in 1 : vector<1x1x8x16xf32>, vector<1x8x8x16xf32>, vector<1x1x8x16xf32> -> vector<1x10x8x16xf32>
    %cst_46 = arith.constant 0.000000e+00 : f32
    %102 = vector.broadcast %cst_46 : f32 to vector<1x10x1x16xf32>
    %103 = tpu.concatenate %102, %101, %102 in 2 : vector<1x10x1x16xf32>, vector<1x10x8x16xf32>, vector<1x10x1x16xf32> -> vector<1x10x10x16xf32>
    %104 = vector.extract_strided_slice %103 {offsets = [0, 0, 0, 0], sizes = [1, 8, 8, 16], strides = [1, 1, 1, 1]} : vector<1x10x10x16xf32> to vector<1x8x8x16xf32>
    %105 = vector.extract_strided_slice %103 {offsets = [0, 0, 1, 0], sizes = [1, 8, 8, 16], strides = [1, 1, 1, 1]} : vector<1x10x10x16xf32> to vector<1x8x8x16xf32>
    %106 = vector.extract_strided_slice %103 {offsets = [0, 0, 2, 0], sizes = [1, 8, 8, 16], strides = [1, 1, 1, 1]} : vector<1x10x10x16xf32> to vector<1x8x8x16xf32>
    %107 = vector.extract_strided_slice %103 {offsets = [0, 1, 0, 0], sizes = [1, 8, 8, 16], strides = [1, 1, 1, 1]} : vector<1x10x10x16xf32> to vector<1x8x8x16xf32>
    %108 = vector.extract_strided_slice %103 {offsets = [0, 1, 1, 0], sizes = [1, 8, 8, 16], strides = [1, 1, 1, 1]} : vector<1x10x10x16xf32> to vector<1x8x8x16xf32>
    %109 = vector.extract_strided_slice %103 {offsets = [0, 1, 2, 0], sizes = [1, 8, 8, 16], strides = [1, 1, 1, 1]} : vector<1x10x10x16xf32> to vector<1x8x8x16xf32>
    %110 = vector.extract_strided_slice %103 {offsets = [0, 2, 0, 0], sizes = [1, 8, 8, 16], strides = [1, 1, 1, 1]} : vector<1x10x10x16xf32> to vector<1x8x8x16xf32>
    %111 = vector.extract_strided_slice %103 {offsets = [0, 2, 1, 0], sizes = [1, 8, 8, 16], strides = [1, 1, 1, 1]} : vector<1x10x10x16xf32> to vector<1x8x8x16xf32>
    %112 = vector.extract_strided_slice %103 {offsets = [0, 2, 2, 0], sizes = [1, 8, 8, 16], strides = [1, 1, 1, 1]} : vector<1x10x10x16xf32> to vector<1x8x8x16xf32>
    %113 = tpu.concatenate %104, %105, %106, %107, %108, %109, %110, %111, %112 in 3 : vector<1x8x8x16xf32>, vector<1x8x8x16xf32>, vector<1x8x8x16xf32>, vector<1x8x8x16xf32>, vector<1x8x8x16xf32>, vector<1x8x8x16xf32>, vector<1x8x8x16xf32>, vector<1x8x8x16xf32>, vector<1x8x8x16xf32> -> vector<1x8x8x144xf32>
    %114 = vector.shape_cast %113 : vector<1x8x8x144xf32> to vector<64x144xf32>
    %115 = arith.truncf %114 : vector<64x144xf32> to vector<64x144xbf16>
    %cst_47 = arith.constant dense<0.000000e+00> : vector<64x32xf32>
    %116 = tpu.matmul %115, %4, %cst_47 {dimension_numbers = #tpu.dot_dimension_numbers<[1], [0], [0], [1], [0, 0, 1, 1], [], []>} : vector<64x144xbf16>, vector<144x32xbf16>, vector<64x32xf32> -> vector<64x32xf32>
    %117 = vector.broadcast %5 : vector<1x32xf32> to vector<64x32xf32>
    %118 = arith.addf %116, %117 : vector<64x32xf32>
    %119 = arith.addf %118, %53 : vector<64x32xf32>
    %cst_48 = arith.constant 0.707106769 : f32
    %120 = vector.broadcast %cst_48 : f32 to vector<64x32xf32>
    %121 = arith.mulf %119, %120 : vector<64x32xf32>
    %122 = vector.shape_cast %121 : vector<64x32xf32> to vector<4x2x8x32xf32>
    %123 = vector.extract_strided_slice %122 {offsets = [0, 0, 0, 0], sizes = [4, 1, 8, 32], strides = [1, 1, 1, 1]} : vector<4x2x8x32xf32> to vector<4x1x8x32xf32>
    %124 = vector.shape_cast %123 : vector<4x1x8x32xf32> to vector<4x8x32xf32>
    %125 = vector.extract_strided_slice %122 {offsets = [0, 1, 0, 0], sizes = [4, 1, 8, 32], strides = [1, 1, 1, 1]} : vector<4x2x8x32xf32> to vector<4x1x8x32xf32>
    %126 = vector.shape_cast %125 : vector<4x1x8x32xf32> to vector<4x8x32xf32>
    %127 = arith.addf %124, %126 : vector<4x8x32xf32>
    %128 = vector.shape_cast %127 : vector<4x8x32xf32> to vector<4x4x2x32xf32>
    %129 = vector.extract_strided_slice %128 {offsets = [0, 0, 0, 0], sizes = [4, 4, 1, 32], strides = [1, 1, 1, 1]} : vector<4x4x2x32xf32> to vector<4x4x1x32xf32>
    %130 = vector.shape_cast %129 : vector<4x4x1x32xf32> to vector<4x4x32xf32>
    %131 = vector.extract_strided_slice %128 {offsets = [0, 0, 1, 0], sizes = [4, 4, 1, 32], strides = [1, 1, 1, 1]} : vector<4x4x2x32xf32> to vector<4x4x1x32xf32>
    %132 = vector.shape_cast %131 : vector<4x4x1x32xf32> to vector<4x4x32xf32>
    %133 = arith.addf %130, %132 : vector<4x4x32xf32>
    %cst_49 = arith.constant 2.500000e-01 : f32
    %134 = vector.broadcast %cst_49 : f32 to vector<4x4x32xf32>
    %135 = arith.mulf %133, %134 : vector<4x4x32xf32>
    %136 = vector.shape_cast %135 : vector<4x4x32xf32> to vector<16x32xf32>
    %cst_50 = arith.constant 0.000000e+00 : f32
    %137 = vector.broadcast %cst_50 : f32 to vector<64x32xf32>
    %138 = arith.cmpf oge, %121, %137 : vector<64x32xf32>
    %cst_51 = arith.constant 2.000000e-01 : f32
    %139 = vector.broadcast %cst_51 : f32 to vector<64x32xf32>
    %140 = arith.mulf %139, %121 : vector<64x32xf32>
    %141 = arith.select %138, %121, %140 : vector<64x32xi1>, vector<64x32xf32>
    %142 = vector.shape_cast %141 : vector<64x32xf32> to vector<1x8x8x32xf32>
    %cst_52 = arith.constant 0.000000e+00 : f32
    %143 = vector.broadcast %cst_52 : f32 to vector<1x1x8x32xf32>
    %144 = tpu.concatenate %143, %142, %143 in 1 : vector<1x1x8x32xf32>, vector<1x8x8x32xf32>, vector<1x1x8x32xf32> -> vector<1x10x8x32xf32>
    %cst_53 = arith.constant 0.000000e+00 : f32
    %145 = vector.broadcast %cst_53 : f32 to vector<1x10x1x32xf32>
    %146 = tpu.concatenate %145, %144, %145 in 2 : vector<1x10x1x32xf32>, vector<1x10x8x32xf32>, vector<1x10x1x32xf32> -> vector<1x10x10x32xf32>
    %147 = vector.extract_strided_slice %146 {offsets = [0, 0, 0, 0], sizes = [1, 8, 8, 32], strides = [1, 1, 1, 1]} : vector<1x10x10x32xf32> to vector<1x8x8x32xf32>
    %148 = vector.extract_strided_slice %146 {offsets = [0, 0, 1, 0], sizes = [1, 8, 8, 32], strides = [1, 1, 1, 1]} : vector<1x10x10x32xf32> to vector<1x8x8x32xf32>
    %149 = vector.extract_strided_slice %146 {offsets = [0, 0, 2, 0], sizes = [1, 8, 8, 32], strides = [1, 1, 1, 1]} : vector<1x10x10x32xf32> to vector<1x8x8x32xf32>
    %150 = vector.extract_strided_slice %146 {offsets = [0, 1, 0, 0], sizes = [1, 8, 8, 32], strides = [1, 1, 1, 1]} : vector<1x10x10x32xf32> to vector<1x8x8x32xf32>
    %151 = vector.extract_strided_slice %146 {offsets = [0, 1, 1, 0], sizes = [1, 8, 8, 32], strides = [1, 1, 1, 1]} : vector<1x10x10x32xf32> to vector<1x8x8x32xf32>
    %152 = vector.extract_strided_slice %146 {offsets = [0, 1, 2, 0], sizes = [1, 8, 8, 32], strides = [1, 1, 1, 1]} : vector<1x10x10x32xf32> to vector<1x8x8x32xf32>
    %153 = vector.extract_strided_slice %146 {offsets = [0, 2, 0, 0], sizes = [1, 8, 8, 32], strides = [1, 1, 1, 1]} : vector<1x10x10x32xf32> to vector<1x8x8x32xf32>
    %154 = vector.extract_strided_slice %146 {offsets = [0, 2, 1, 0], sizes = [1, 8, 8, 32], strides = [1, 1, 1, 1]} : vector<1x10x10x32xf32> to vector<1x8x8x32xf32>
    %155 = vector.extract_strided_slice %146 {offsets = [0, 2, 2, 0], sizes = [1, 8, 8, 32], strides = [1, 1, 1, 1]} : vector<1x10x10x32xf32> to vector<1x8x8x32xf32>
    %156 = tpu.concatenate %147, %148, %149, %150, %151, %152, %153, %154, %155 in 3 : vector<1x8x8x32xf32>, vector<1x8x8x32xf32>, vector<1x8x8x32xf32>, vector<1x8x8x32xf32>, vector<1x8x8x32xf32>, vector<1x8x8x32xf32>, vector<1x8x8x32xf32>, vector<1x8x8x32xf32>, vector<1x8x8x32xf32> -> vector<1x8x8x288xf32>
    %157 = vector.shape_cast %156 : vector<1x8x8x288xf32> to vector<64x288xf32>
    %158 = arith.truncf %157 : vector<64x288xf32> to vector<64x288xbf16>
    %cst_54 = arith.constant dense<0.000000e+00> : vector<64x32xf32>
    %159 = tpu.matmul %158, %7, %cst_54 {dimension_numbers = #tpu.dot_dimension_numbers<[1], [0], [0], [1], [0, 0, 1, 1], [], []>} : vector<64x288xbf16>, vector<288x32xbf16>, vector<64x32xf32> -> vector<64x32xf32>
    %160 = vector.broadcast %8 : vector<1x32xf32> to vector<64x32xf32>
    %161 = arith.addf %159, %160 : vector<64x32xf32>
    %162 = vector.shape_cast %161 : vector<64x32xf32> to vector<4x2x8x32xf32>
    %163 = vector.extract_strided_slice %162 {offsets = [0, 0, 0, 0], sizes = [4, 1, 8, 32], strides = [1, 1, 1, 1]} : vector<4x2x8x32xf32> to vector<4x1x8x32xf32>
    %164 = vector.shape_cast %163 : vector<4x1x8x32xf32> to vector<4x8x32xf32>
    %165 = vector.extract_strided_slice %162 {offsets = [0, 1, 0, 0], sizes = [4, 1, 8, 32], strides = [1, 1, 1, 1]} : vector<4x2x8x32xf32> to vector<4x1x8x32xf32>
    %166 = vector.shape_cast %165 : vector<4x1x8x32xf32> to vector<4x8x32xf32>
    %167 = arith.addf %164, %166 : vector<4x8x32xf32>
    %168 = vector.shape_cast %167 : vector<4x8x32xf32> to vector<4x4x2x32xf32>
    %169 = vector.extract_strided_slice %168 {offsets = [0, 0, 0, 0], sizes = [4, 4, 1, 32], strides = [1, 1, 1, 1]} : vector<4x4x2x32xf32> to vector<4x4x1x32xf32>
    %170 = vector.shape_cast %169 : vector<4x4x1x32xf32> to vector<4x4x32xf32>
    %171 = vector.extract_strided_slice %168 {offsets = [0, 0, 1, 0], sizes = [4, 4, 1, 32], strides = [1, 1, 1, 1]} : vector<4x4x2x32xf32> to vector<4x4x1x32xf32>
    %172 = vector.shape_cast %171 : vector<4x4x1x32xf32> to vector<4x4x32xf32>
    %173 = arith.addf %170, %172 : vector<4x4x32xf32>
    %cst_55 = arith.constant 2.500000e-01 : f32
    %174 = vector.broadcast %cst_55 : f32 to vector<4x4x32xf32>
    %175 = arith.mulf %173, %174 : vector<4x4x32xf32>
    %176 = vector.shape_cast %175 : vector<4x4x32xf32> to vector<16x32xf32>
    %cst_56 = arith.constant 0.000000e+00 : f32
    %177 = vector.broadcast %cst_56 : f32 to vector<16x32xf32>
    %178 = arith.cmpf oge, %176, %177 : vector<16x32xf32>
    %cst_57 = arith.constant 2.000000e-01 : f32
    %179 = vector.broadcast %cst_57 : f32 to vector<16x32xf32>
    %180 = arith.mulf %179, %176 : vector<16x32xf32>
    %181 = arith.select %178, %176, %180 : vector<16x32xi1>, vector<16x32xf32>
    %182 = vector.shape_cast %181 : vector<16x32xf32> to vector<1x4x4x32xf32>
    %cst_58 = arith.constant 0.000000e+00 : f32
    %183 = vector.broadcast %cst_58 : f32 to vector<1x1x4x32xf32>
    %184 = tpu.concatenate %183, %182, %183 in 1 : vector<1x1x4x32xf32>, vector<1x4x4x32xf32>, vector<1x1x4x32xf32> -> vector<1x6x4x32xf32>
    %cst_59 = arith.constant 0.000000e+00 : f32
    %185 = vector.broadcast %cst_59 : f32 to vector<1x6x1x32xf32>
    %186 = tpu.concatenate %185, %184, %185 in 2 : vector<1x6x1x32xf32>, vector<1x6x4x32xf32>, vector<1x6x1x32xf32> -> vector<1x6x6x32xf32>
    %187 = vector.extract_strided_slice %186 {offsets = [0, 0, 0, 0], sizes = [1, 4, 4, 32], strides = [1, 1, 1, 1]} : vector<1x6x6x32xf32> to vector<1x4x4x32xf32>
    %188 = vector.extract_strided_slice %186 {offsets = [0, 0, 1, 0], sizes = [1, 4, 4, 32], strides = [1, 1, 1, 1]} : vector<1x6x6x32xf32> to vector<1x4x4x32xf32>
    %189 = vector.extract_strided_slice %186 {offsets = [0, 0, 2, 0], sizes = [1, 4, 4, 32], strides = [1, 1, 1, 1]} : vector<1x6x6x32xf32> to vector<1x4x4x32xf32>
    %190 = vector.extract_strided_slice %186 {offsets = [0, 1, 0, 0], sizes = [1, 4, 4, 32], strides = [1, 1, 1, 1]} : vector<1x6x6x32xf32> to vector<1x4x4x32xf32>
    %191 = vector.extract_strided_slice %186 {offsets = [0, 1, 1, 0], sizes = [1, 4, 4, 32], strides = [1, 1, 1, 1]} : vector<1x6x6x32xf32> to vector<1x4x4x32xf32>
    %192 = vector.extract_strided_slice %186 {offsets = [0, 1, 2, 0], sizes = [1, 4, 4, 32], strides = [1, 1, 1, 1]} : vector<1x6x6x32xf32> to vector<1x4x4x32xf32>
    %193 = vector.extract_strided_slice %186 {offsets = [0, 2, 0, 0], sizes = [1, 4, 4, 32], strides = [1, 1, 1, 1]} : vector<1x6x6x32xf32> to vector<1x4x4x32xf32>
    %194 = vector.extract_strided_slice %186 {offsets = [0, 2, 1, 0], sizes = [1, 4, 4, 32], strides = [1, 1, 1, 1]} : vector<1x6x6x32xf32> to vector<1x4x4x32xf32>
    %195 = vector.extract_strided_slice %186 {offsets = [0, 2, 2, 0], sizes = [1, 4, 4, 32], strides = [1, 1, 1, 1]} : vector<1x6x6x32xf32> to vector<1x4x4x32xf32>
    %196 = tpu.concatenate %187, %188, %189, %190, %191, %192, %193, %194, %195 in 3 : vector<1x4x4x32xf32>, vector<1x4x4x32xf32>, vector<1x4x4x32xf32>, vector<1x4x4x32xf32>, vector<1x4x4x32xf32>, vector<1x4x4x32xf32>, vector<1x4x4x32xf32>, vector<1x4x4x32xf32>, vector<1x4x4x32xf32> -> vector<1x4x4x288xf32>
    %197 = vector.shape_cast %196 : vector<1x4x4x288xf32> to vector<16x288xf32>
    %198 = arith.truncf %197 : vector<16x288xf32> to vector<16x288xbf16>
    %cst_60 = arith.constant dense<0.000000e+00> : vector<16x32xf32>
    %199 = tpu.matmul %198, %9, %cst_60 {dimension_numbers = #tpu.dot_dimension_numbers<[1], [0], [0], [1], [0, 0, 1, 1], [], []>} : vector<16x288xbf16>, vector<288x32xbf16>, vector<16x32xf32> -> vector<16x32xf32>
    %200 = vector.broadcast %10 : vector<1x32xf32> to vector<16x32xf32>
    %201 = arith.addf %199, %200 : vector<16x32xf32>
    %202 = arith.addf %201, %136 : vector<16x32xf32>
    %cst_61 = arith.constant 0.707106769 : f32
    %203 = vector.broadcast %cst_61 : f32 to vector<16x32xf32>
    %204 = arith.mulf %202, %203 : vector<16x32xf32>
    %cst_62 = arith.constant 0.000000e+00 : f32
    %205 = vector.broadcast %cst_62 : f32 to vector<16x32xf32>
    %206 = arith.cmpf oge, %204, %205 : vector<16x32xf32>
    %cst_63 = arith.constant 2.000000e-01 : f32
    %207 = vector.broadcast %cst_63 : f32 to vector<16x32xf32>
    %208 = arith.mulf %207, %204 : vector<16x32xf32>
    %209 = arith.select %206, %204, %208 : vector<16x32xi1>, vector<16x32xf32>
    %210 = vector.extract_strided_slice %209 {offsets = [0, 0], sizes = [1, 32], strides = [1, 1]} : vector<16x32xf32> to vector<1x32xf32>
    %211 = vector.extract_strided_slice %209 {offsets = [1, 0], sizes = [1, 32], strides = [1, 1]} : vector<16x32xf32> to vector<1x32xf32>
    %212 = vector.extract_strided_slice %209 {offsets = [2, 0], sizes = [1, 32], strides = [1, 1]} : vector<16x32xf32> to vector<1x32xf32>
    %213 = vector.extract_strided_slice %209 {offsets = [3, 0], sizes = [1, 32], strides = [1, 1]} : vector<16x32xf32> to vector<1x32xf32>
    %214 = vector.extract_strided_slice %209 {offsets = [4, 0], sizes = [1, 32], strides = [1, 1]} : vector<16x32xf32> to vector<1x32xf32>
    %215 = vector.extract_strided_slice %209 {offsets = [5, 0], sizes = [1, 32], strides = [1, 1]} : vector<16x32xf32> to vector<1x32xf32>
    %216 = vector.extract_strided_slice %209 {offsets = [6, 0], sizes = [1, 32], strides = [1, 1]} : vector<16x32xf32> to vector<1x32xf32>
    %217 = vector.extract_strided_slice %209 {offsets = [7, 0], sizes = [1, 32], strides = [1, 1]} : vector<16x32xf32> to vector<1x32xf32>
    %218 = vector.extract_strided_slice %209 {offsets = [8, 0], sizes = [1, 32], strides = [1, 1]} : vector<16x32xf32> to vector<1x32xf32>
    %219 = vector.extract_strided_slice %209 {offsets = [9, 0], sizes = [1, 32], strides = [1, 1]} : vector<16x32xf32> to vector<1x32xf32>
    %220 = vector.extract_strided_slice %209 {offsets = [10, 0], sizes = [1, 32], strides = [1, 1]} : vector<16x32xf32> to vector<1x32xf32>
    %221 = vector.extract_strided_slice %209 {offsets = [11, 0], sizes = [1, 32], strides = [1, 1]} : vector<16x32xf32> to vector<1x32xf32>
    %222 = vector.extract_strided_slice %209 {offsets = [12, 0], sizes = [1, 32], strides = [1, 1]} : vector<16x32xf32> to vector<1x32xf32>
    %223 = vector.extract_strided_slice %209 {offsets = [13, 0], sizes = [1, 32], strides = [1, 1]} : vector<16x32xf32> to vector<1x32xf32>
    %224 = vector.extract_strided_slice %209 {offsets = [14, 0], sizes = [1, 32], strides = [1, 1]} : vector<16x32xf32> to vector<1x32xf32>
    %225 = vector.extract_strided_slice %209 {offsets = [15, 0], sizes = [1, 32], strides = [1, 1]} : vector<16x32xf32> to vector<1x32xf32>
    %226 = tpu.concatenate %210, %211, %212, %213, %214, %215, %216, %217, %218, %219, %220, %221, %222, %223, %224, %225 in 1 : vector<1x32xf32>, vector<1x32xf32>, vector<1x32xf32>, vector<1x32xf32>, vector<1x32xf32>, vector<1x32xf32>, vector<1x32xf32>, vector<1x32xf32>, vector<1x32xf32>, vector<1x32xf32>, vector<1x32xf32>, vector<1x32xf32>, vector<1x32xf32>, vector<1x32xf32>, vector<1x32xf32>, vector<1x32xf32> -> vector<1x512xf32>
    %227 = arith.truncf %226 : vector<1x512xf32> to vector<1x512xbf16>
    %cst_64 = arith.constant dense<0.000000e+00> : vector<1x32xf32>
    %228 = tpu.matmul %227, %11, %cst_64 {dimension_numbers = #tpu.dot_dimension_numbers<[1], [0], [0], [1], [0, 0, 1, 1], [], []>} : vector<1x512xbf16>, vector<512x32xbf16>, vector<1x32xf32> -> vector<1x32xf32>
    %229 = arith.addf %228, %12 : vector<1x32xf32>
    %cst_65 = arith.constant 0.000000e+00 : f32
    %230 = vector.broadcast %cst_65 : f32 to vector<1x32xf32>
    %231 = arith.cmpf oge, %229, %230 : vector<1x32xf32>
    %cst_66 = arith.constant 2.000000e-01 : f32
    %232 = vector.broadcast %cst_66 : f32 to vector<1x32xf32>
    %233 = arith.mulf %232, %229 : vector<1x32xf32>
    %234 = arith.select %231, %229, %233 : vector<1x32xi1>, vector<1x32xf32>
    %235 = arith.truncf %234 : vector<1x32xf32> to vector<1x32xbf16>
    %cst_67 = arith.constant dense<0.000000e+00> : vector<1x8xf32>
    %236 = tpu.matmul %235, %13, %cst_67 {dimension_numbers = #tpu.dot_dimension_numbers<[1], [0], [0], [1], [0, 0, 1, 1], [], []>} : vector<1x32xbf16>, vector<32x8xbf16>, vector<1x8xf32> -> vector<1x8xf32>
    %237 = arith.addf %236, %14 : vector<1x8xf32>
    %238 = vector.shape_cast %237 : vector<1x8xf32> to vector<1x1x8xf32>
    %c0_68 = arith.constant 0 : index
    %c0_69 = arith.constant 0 : index
    %c0_70 = arith.constant 0 : index
    %239 = vector.load %arg17[%c0_68, %c0_69, %c0_70] : memref<1x1x8xf32, #tpu.memory_space<vmem>>, vector<1x1x8xf32>
    tpu.vector_store %arg17[%c0_68, %c0_69, %c0_70], %238 {strides = array<i32>} : memref<1x1x8xf32, #tpu.memory_space<vmem>>, vector<1x1x8xf32>,
    return
  }
  func.func @transform_0(%arg0: i32) -> (i32, i32, i32, i32) {
    %c0_i32 = arith.constant 0 : i32
    %c0_i32_0 = arith.constant 0 : i32
    %c0_i32_1 = arith.constant 0 : i32
    %c0_i32_2 = arith.constant 0 : i32
    return %arg0, %c0_i32, %c0_i32_0, %c0_i32_1 : i32, i32, i32, i32
  }
  func.func @transform_1(%arg0: i32) -> (i32, i32) {
    %c0_i32 = arith.constant 0 : i32
    %c0_i32_0 = arith.constant 0 : i32
    %c0_i32_1 = arith.constant 0 : i32
    return %c0_i32, %c0_i32_0 : i32, i32
  }
  func.func @transform_2(%arg0: i32) -> (i32, i32) {
    %c0_i32 = arith.constant 0 : i32
    %c0_i32_0 = arith.constant 0 : i32
    %c0_i32_1 = arith.constant 0 : i32
    return %c0_i32, %c0_i32_0 : i32, i32
  }
  func.func @transform_3(%arg0: i32) -> (i32, i32) {
    %c0_i32 = arith.constant 0 : i32
    %c0_i32_0 = arith.constant 0 : i32
    %c0_i32_1 = arith.constant 0 : i32
    return %c0_i32, %c0_i32_0 : i32, i32
  }
  func.func @transform_4(%arg0: i32) -> (i32, i32) {
    %c0_i32 = arith.constant 0 : i32
    %c0_i32_0 = arith.constant 0 : i32
    %c0_i32_1 = arith.constant 0 : i32
    return %c0_i32, %c0_i32_0 : i32, i32
  }
  func.func @transform_5(%arg0: i32) -> (i32, i32) {
    %c0_i32 = arith.constant 0 : i32
    %c0_i32_0 = arith.constant 0 : i32
    %c0_i32_1 = arith.constant 0 : i32
    return %c0_i32, %c0_i32_0 : i32, i32
  }
  func.func @transform_6(%arg0: i32) -> (i32, i32) {
    %c0_i32 = arith.constant 0 : i32
    %c0_i32_0 = arith.constant 0 : i32
    %c0_i32_1 = arith.constant 0 : i32
    return %c0_i32, %c0_i32_0 : i32, i32
  }
  func.func @transform_7(%arg0: i32) -> (i32, i32) {
    %c0_i32 = arith.constant 0 : i32
    %c0_i32_0 = arith.constant 0 : i32
    %c0_i32_1 = arith.constant 0 : i32
    return %c0_i32, %c0_i32_0 : i32, i32
  }
  func.func @transform_8(%arg0: i32) -> (i32, i32) {
    %c0_i32 = arith.constant 0 : i32
    %c0_i32_0 = arith.constant 0 : i32
    %c0_i32_1 = arith.constant 0 : i32
    return %c0_i32, %c0_i32_0 : i32, i32
  }
  func.func @transform_9(%arg0: i32) -> (i32, i32) {
    %c0_i32 = arith.constant 0 : i32
    %c0_i32_0 = arith.constant 0 : i32
    %c0_i32_1 = arith.constant 0 : i32
    return %c0_i32, %c0_i32_0 : i32, i32
  }
  func.func @transform_10(%arg0: i32) -> (i32, i32) {
    %c0_i32 = arith.constant 0 : i32
    %c0_i32_0 = arith.constant 0 : i32
    %c0_i32_1 = arith.constant 0 : i32
    return %c0_i32, %c0_i32_0 : i32, i32
  }
  func.func @transform_11(%arg0: i32) -> (i32, i32) {
    %c0_i32 = arith.constant 0 : i32
    %c0_i32_0 = arith.constant 0 : i32
    %c0_i32_1 = arith.constant 0 : i32
    return %c0_i32, %c0_i32_0 : i32, i32
  }
  func.func @transform_12(%arg0: i32) -> (i32, i32) {
    %c0_i32 = arith.constant 0 : i32
    %c0_i32_0 = arith.constant 0 : i32
    %c0_i32_1 = arith.constant 0 : i32
    return %c0_i32, %c0_i32_0 : i32, i32
  }
  func.func @transform_13(%arg0: i32) -> (i32, i32) {
    %c0_i32 = arith.constant 0 : i32
    %c0_i32_0 = arith.constant 0 : i32
    %c0_i32_1 = arith.constant 0 : i32
    return %c0_i32, %c0_i32_0 : i32, i32
  }
  func.func @transform_14(%arg0: i32) -> (i32, i32) {
    %c0_i32 = arith.constant 0 : i32
    %c0_i32_0 = arith.constant 0 : i32
    %c0_i32_1 = arith.constant 0 : i32
    return %c0_i32, %c0_i32_0 : i32, i32
  }
  func.func @transform_15(%arg0: i32) -> (i32, i32) {
    %c0_i32 = arith.constant 0 : i32
    %c0_i32_0 = arith.constant 0 : i32
    %c0_i32_1 = arith.constant 0 : i32
    return %c0_i32, %c0_i32_0 : i32, i32
  }
  func.func @transform_16(%arg0: i32) -> (i32, i32, i32) {
    %c0_i32 = arith.constant 0 : i32
    %c0_i32_0 = arith.constant 0 : i32
    %c0_i32_1 = arith.constant 0 : i32
    return %arg0, %c0_i32, %c0_i32_0 : i32, i32, i32
  }
}

</mosaic_0001>

<llo_original>
// kernel: style_encoder_forward.1
$region0: #{style_encoder_forward.1}
  #allocation0 [shape = 'u32[]', space=smem, size = 0x4, offset = 0x4, fixed_abs, tag = 'smem constant byte address 0x4 - core index']
  #allocation1 [shape = 'u32[144,128]{1,0:T(1,128)}', space=vmem, size = 0x12000, scoped, tag = 'internal scratch']
  %s0 = inlined_call_operand.vmem [shape: f32[2,16,16,4], index: 0, kind: input, shape index: {}]
  %s1 = inlined_call_operand.vmem [shape: bf16[36,16], index: 1, kind: input, shape index: {}]
  %s2 = inlined_call_operand.vmem [shape: f32[1,16], index: 2, kind: input, shape index: {}]
  %s3 = inlined_call_operand.vmem [shape: bf16[144,16], index: 3, kind: input, shape index: {}]
  %s4 = inlined_call_operand.vmem [shape: f32[1,16], index: 4, kind: input, shape index: {}]
  %s5 = inlined_call_operand.vmem [shape: bf16[144,32], index: 5, kind: input, shape index: {}]
  %s6 = inlined_call_operand.vmem [shape: f32[1,32], index: 6, kind: input, shape index: {}]
  %s7 = inlined_call_operand.vmem [shape: bf16[16,32], index: 7, kind: input, shape index: {}]
  %s8 = inlined_call_operand.vmem [shape: bf16[288,32], index: 8, kind: input, shape index: {}]
  %s9 = inlined_call_operand.vmem [shape: f32[1,32], index: 9, kind: input, shape index: {}]
  %s10 = inlined_call_operand.vmem [shape: bf16[288,32], index: 10, kind: input, shape index: {}]
  %s11 = inlined_call_operand.vmem [shape: f32[1,32], index: 11, kind: input, shape index: {}]
  %s12 = inlined_call_operand.vmem [shape: bf16[512,32], index: 12, kind: input, shape index: {}]
  %s13 = inlined_call_operand.vmem [shape: f32[1,32], index: 13, kind: input, shape index: {}]
  %s14 = inlined_call_operand.vmem [shape: bf16[32,8], index: 14, kind: input, shape index: {}]
  %s15 = inlined_call_operand.vmem [shape: f32[1,8], index: 15, kind: input, shape index: {}]
  %s16 = inlined_call_operand.hbm [shape: f32[2,1,8], index: 16, kind: output, shape index: {}]
  %s17 = sld [smem:[#allocation0]]
  $region97: #{style_encoder_forward.1} parent=0
    _
  %s19 = ssub.s32 1, %s17
  %s20 = scalar_select 0, %s19, %s17
  $region1: #{style_encoder_forward.1} parent=0
    #allocation2 [shape = 'u8[1024]{0}', space=vmem, size = 0x400, scoped, tag = 'output window, operand 0']
    #allocation3 [shape = 's32[2]{0}', space=sflag, size = 0x8, scoped, tag = 'scoped memory for style_encoder_forward.1']
    %21 = vsyncpa [#allocation3], 0
    %s22 = scalar_lea.sflag [#allocation3], 1
    %23 = vsyncpa %s22, 0
    loop: start=0, step=1, limit=4
    $region2: #{style_encoder_forward.1} parent=1 // loop_pre_header
      _
    $region3: #{style_encoder_forward.1} parent=1 // loop_header
      %s25 = sphi 0, %s29
      %p26 = scmp.ge.s32.totalorder %s25, 4
      %s35 = sphi 0, %s37
      %s38 = sphi 0, %s35
      %s39 = sphi 0, %s38
      %s55 = sphi 0, %s39
      %s59 = sphi 0, %s59
      %s61 = sphi 0, %s59
      %s62 = sphi 0, %s61
      %s76 = sphi 0, %s62
      %s80 = sphi 0, %s80
      %s82 = sphi 0, %s80
      %s83 = sphi 0, %s82
      %s97 = sphi 0, %s83
      %s101 = sphi 0, %s101
      %s103 = sphi 0, %s101
      %s104 = sphi 0, %s103
      %s118 = sphi 0, %s104
      %s122 = sphi 0, %s122
      %s124 = sphi 0, %s122
      %s125 = sphi 0, %s124
      %s139 = sphi 0, %s125
      %s143 = sphi 0, %s143
      %s145 = sphi 0, %s143
      %s146 = sphi 0, %s145
      %s160 = sphi 0, %s146
      %s164 = sphi 0, %s164
      %s166 = sphi 0, %s164
      %s167 = sphi 0, %s166
      %s181 = sphi 0, %s167
      %s185 = sphi 0, %s185
      %s187 = sphi 0, %s185
      %s188 = sphi 0, %s187
      %s202 = sphi 0, %s188
      %s206 = sphi 0, %s206
      %s208 = sphi 0, %s206
      %s209 = sphi 0, %s208
      %s223 = sphi 0, %s209
      %s227 = sphi 0, %s227
      %s229 = sphi 0, %s227
      %s230 = sphi 0, %s229
      %s244 = sphi 0, %s230
      %s248 = sphi 0, %s248
      %s250 = sphi 0, %s248
      %s251 = sphi 0, %s250
      %s265 = sphi 0, %s251
      %s269 = sphi 0, %s269
      %s271 = sphi 0, %s269
      %s272 = sphi 0, %s271
      %s286 = sphi 0, %s272
      %s290 = sphi 0, %s290
      %s292 = sphi 0, %s290
      %s293 = sphi 0, %s292
      %s307 = sphi 0, %s293
      %s311 = sphi 0, %s311
      %s313 = sphi 0, %s311
      %s314 = sphi 0, %s313
      %s328 = sphi 0, %s314
      %s332 = sphi 0, %s332
      %s334 = sphi 0, %s332
      %s335 = sphi 0, %s334
      %s349 = sphi 0, %s335
      %s353 = sphi 0, %s353
      %s355 = sphi 0, %s353
      %s356 = sphi 0, %s355
      %s370 = sphi 0, %s356
      %s376 = sphi 0, %s378
      %s379 = sphi 0, %s376
      %s380 = sphi 0, %s379
      %s396 = sphi 0, %s380
    $region4: #{style_encoder_forward.1} parent=1 // loop_header_branch
      %28 = sbr.rel (%p26) target = $region8
    $region5: #{style_encoder_forward.1} parent=1 // loop_body
      %s30 = ssub.s32 %s25, 1
      %s31 = ssub.s32 %s25, 2
      %s32 = sadd.s32 %s25, 1
      %s33 = ssub.s32 %s25, %s32
      %p34 = scmp.eq.s32.totalorder %s33, 0
      %s36 = sadd.s32 %s35, 1
      %s37 = scalar_select %p34, %s35, %s36
      %p40 = pneg %p34
      %p41 = scmp.eq.s32.totalorder %s25, 1
      %p42 = por %p40, %p41
      %p43 = scmp.ne.s32.totalorder %s35, %s38
      %p44 = scmp.eq.s32.totalorder %s25, 0
      %p45 = por %p43, %p44
      %p46 = scmp.ne.s32.totalorder %s35, %s38
      %p47 = scmp.eq.s32.totalorder %s30, 1
      %p48 = por %p46, %p47
      %p49 = scmp.ne.s32.totalorder %s38, %s39
      %p50 = scmp.eq.s32.totalorder %s30, 0
      %p51 = por %p49, %p50
      %p52 = scmp.ne.s32.totalorder %s38, %s39
      %p53 = scmp.eq.s32.totalorder %s31, 1
      %p54 = por %p52, %p53
      %p56 = scmp.ne.s32.totalorder %s39, %s55
      %p57 = scmp.eq.s32.totalorder %s31, 0
      %p58 = por %p56, %p57
      %s60 = sadd.s32 %s59, 1
      %p63 = scmp.eq.s32.totalorder %s25, 1
      %p64 = scmp.ne.s32.totalorder %s59, %s61
      %p65 = scmp.eq.s32.totalorder %s25, 0
      %p66 = por %p64, %p65
      %p67 = scmp.ne.s32.totalorder %s59, %s61
      %p68 = scmp.eq.s32.totalorder %s30, 1
      %p69 = por %p67, %p68
      %p70 = scmp.ne.s32.totalorder %s61, %s62
      %p71 = scmp.eq.s32.totalorder %s30, 0
      %p72 = por %p70, %p71
      %p73 = scmp.ne.s32.totalorder %s61, %s62
      %p74 = scmp.eq.s32.totalorder %s31, 1
      %p75 = por %p73, %p74
      %p77 = scmp.ne.s32.totalorder %s62, %s76
      %p78 = scmp.eq.s32.totalorder %s31, 0
      %p79 = por %p77, %p78
      %s81 = sadd.s32 %s80, 1
      %p84 = scmp.eq.s32.totalorder %s25, 1
      %p85 = scmp.ne.s32.totalorder %s80, %s82
      %p86 = scmp.eq.s32.totalorder %s25, 0
      %p87 = por %p85, %p86
      %p88 = scmp.ne.s32.totalorder %s80, %s82
      %p89 = scmp.eq.s32.totalorder %s30, 1
      %p90 = por %p88, %p89
      %p91 = scmp.ne.s32.totalorder %s82, %s83
      %p92 = scmp.eq.s32.totalorder %s30, 0
      %p93 = por %p91, %p92
      %p94 = scmp.ne.s32.totalorder %s82, %s83
      %p95 = scmp.eq.s32.totalorder %s31, 1
      %p96 = por %p94, %p95
      %p98 = scmp.ne.s32.totalorder %s83, %s97
      %p99 = scmp.eq.s32.totalorder %s31, 0
      %p100 = por %p98, %p99
      %s102 = sadd.s32 %s101, 1
      %p105 = scmp.eq.s32.totalorder %s25, 1
      %p106 = scmp.ne.s32.totalorder %s101, %s103
      %p107 = scmp.eq.s32.totalorder %s25, 0
      %p108 = por %p106, %p107
      %p109 = scmp.ne.s32.totalorder %s101, %s103
      %p110 = scmp.eq.s32.totalorder %s30, 1
      %p111 = por %p109, %p110
      %p112 = scmp.ne.s32.totalorder %s103, %s104
      %p113 = scmp.eq.s32.totalorder %s30, 0
      %p114 = por %p112, %p113
      %p115 = scmp.ne.s32.totalorder %s103, %s104
      %p116 = scmp.eq.s32.totalorder %s31, 1
      %p117 = por %p115, %p116
      %p119 = scmp.ne.s32.totalorder %s104, %s118
      %p120 = scmp.eq.s32.totalorder %s31, 0
      %p121 = por %p119, %p120
      %s123 = sadd.s32 %s122, 1
      %p126 = scmp.eq.s32.totalorder %s25, 1
      %p127 = scmp.ne.s32.totalorder %s122, %s124
      %p128 = scmp.eq.s32.totalorder %s25, 0
      %p129 = por %p127, %p128
      %p130 = scmp.ne.s32.totalorder %s122, %s124
      %p131 = scmp.eq.s32.totalorder %s30, 1
      %p132 = por %p130, %p131
      %p133 = scmp.ne.s32.totalorder %s124, %s125
      %p134 = scmp.eq.s32.totalorder %s30, 0
      %p135 = por %p133, %p134
      %p136 = scmp.ne.s32.totalorder %s124, %s125
      %p137 = scmp.eq.s32.totalorder %s31, 1
      %p138 = por %p136, %p137
      %p140 = scmp.ne.s32.totalorder %s125, %s139
      %p141 = scmp.eq.s32.totalorder %s31, 0
      %p142 = por %p140, %p141
      %s144 = sadd.s32 %s143, 1
      %p147 = scmp.eq.s32.totalorder %s25, 1
      %p148 = scmp.ne.s32.totalorder %s143, %s145
      %p149 = scmp.eq.s32.totalorder %s25, 0
      %p150 = por %p148, %p149
      %p151 = scmp.ne.s32.totalorder %s143, %s145
      %p152 = scmp.eq.s32.totalorder %s30, 1
      %p153 = por %p151, %p152
      %p154 = scmp.ne.s32.totalorder %s145, %s146
      %p155 = scmp.eq.s32.totalorder %s30, 0
      %p156 = por %p154, %p155
      %p157 = scmp.ne.s32.totalorder %s145, %s146
      %p158 = scmp.eq.s32.totalorder %s31, 1
      %p159 = por %p157, %p158
      %p161 = scmp.ne.s32.totalorder %s146, %s160
      %p162 = scmp.eq.s32.totalorder %s31, 0
      %p163 = por %p161, %p162
      %s165 = sadd.s32 %s164, 1
      %p168 = scmp.eq.s32.totalorder %s25, 1
      %p169 = scmp.ne.s32.totalorder %s164, %s166
      %p170 = scmp.eq.s32.totalorder %s25, 0
      %p171 = por %p169, %p170
      %p172 = scmp.ne.s32.totalorder %s164, %s166
      %p173 = scmp.eq.s32.totalorder %s30, 1
      %p174 = por %p172, %p173
      %p175 = scmp.ne.s32.totalorder %s166, %s167
      %p176 = scmp.eq.s32.totalorder %s30, 0
      %p177 = por %p175, %p176
      %p178 = scmp.ne.s32.totalorder %s166, %s167
      %p179 = scmp.eq.s32.totalorder %s31, 1
      %p180 = por %p178, %p179
      %p182 = scmp.ne.s32.totalorder %s167, %s181
      %p183 = scmp.eq.s32.totalorder %s31, 0
      %p184 = por %p182, %p183
      %s186 = sadd.s32 %s185, 1
      %p189 = scmp.eq.s32.totalorder %s25, 1
      %p190 = scmp.ne.s32.totalorder %s185, %s187
      %p191 = scmp.eq.s32.totalorder %s25, 0
      %p192 = por %p190, %p191
      %p193 = scmp.ne.s32.totalorder %s185, %s187
      %p194 = scmp.eq.s32.totalorder %s30, 1
      %p195 = por %p193, %p194
      %p196 = scmp.ne.s32.totalorder %s187, %s188
      %p197 = scmp.eq.s32.totalorder %s30, 0
      %p198 = por %p196, %p197
      %p199 = scmp.ne.s32.totalorder %s187, %s188
      %p200 = scmp.eq.s32.totalorder %s31, 1
      %p201 = por %p199, %p200
      %p203 = scmp.ne.s32.totalorder %s188, %s202
      %p204 = scmp.eq.s32.totalorder %s31, 0
      %p205 = por %p203, %p204
      %s207 = sadd.s32 %s206, 1
      %p210 = scmp.eq.s32.totalorder %s25, 1
      %p211 = scmp.ne.s32.totalorder %s206, %s208
      %p212 = scmp.eq.s32.totalorder %s25, 0
      %p213 = por %p211, %p212
      %p214 = scmp.ne.s32.totalorder %s206, %s208
      %p215 = scmp.eq.s32.totalorder %s30, 1
      %p216 = por %p214, %p215
      %p217 = scmp.ne.s32.totalorder %s208, %s209
      %p218 = scmp.eq.s32.totalorder %s30, 0
      %p219 = por %p217, %p218
      %p220 = scmp.ne.s32.totalorder %s208, %s209
      %p221 = scmp.eq.s32.totalorder %s31, 1
      %p222 = por %p220, %p221
      %p224 = scmp.ne.s32.totalorder %s209, %s223
      %p225 = scmp.eq.s32.totalorder %s31, 0
      %p226 = por %p224, %p225
      %s228 = sadd.s32 %s227, 1
      %p231 = scmp.eq.s32.totalorder %s25, 1
      %p232 = scmp.ne.s32.totalorder %s227, %s229
      %p233 = scmp.eq.s32.totalorder %s25, 0
      %p234 = por %p232, %p233
      %p235 = scmp.ne.s32.totalorder %s227, %s229
      %p236 = scmp.eq.s32.totalorder %s30, 1
      %p237 = por %p235, %p236
      %p238 = scmp.ne.s32.totalorder %s229, %s230
      %p239 = scmp.eq.s32.totalorder %s30, 0
      %p240 = por %p238, %p239
      %p241 = scmp.ne.s32.totalorder %s229, %s230
      %p242 = scmp.eq.s32.totalorder %s31, 1
      %p243 = por %p241, %p242
      %p245 = scmp.ne.s32.totalorder %s230, %s244
      %p246 = scmp.eq.s32.totalorder %s31, 0
      %p247 = por %p245, %p246
      %s249 = sadd.s32 %s248, 1
      %p252 = scmp.eq.s32.totalorder %s25, 1
      %p253 = scmp.ne.s32.totalorder %s248, %s250
      %p254 = scmp.eq.s32.totalorder %s25, 0
      %p255 = por %p253, %p254
      %p256 = scmp.ne.s32.totalorder %s248, %s250
      %p257 = scmp.eq.s32.totalorder %s30, 1
      %p258 = por %p256, %p257
      %p259 = scmp.ne.s32.totalorder %s250, %s251
      %p260 = scmp.eq.s32.totalorder %s30, 0
      %p261 = por %p259, %p260
      %p262 = scmp.ne.s32.totalorder %s250, %s251
      %p263 = scmp.eq.s32.totalorder %s31, 1
      %p264 = por %p262, %p263
      %p266 = scmp.ne.s32.totalorder %s251, %s265
      %p267 = scmp.eq.s32.totalorder %s31, 0
      %p268 = por %p266, %p267
      %s270 = sadd.s32 %s269, 1
      %p273 = scmp.eq.s32.totalorder %s25, 1
      %p274 = scmp.ne.s32.totalorder %s269, %s271
      %p275 = scmp.eq.s32.totalorder %s25, 0
      %p276 = por %p274, %p275
      %p277 = scmp.ne.s32.totalorder %s269, %s271
      %p278 = scmp.eq.s32.totalorder %s30, 1
      %p279 = por %p277, %p278
      %p280 = scmp.ne.s32.totalorder %s271, %s272
      %p281 = scmp.eq.s32.totalorder %s30, 0
      %p282 = por %p280, %p281
      %p283 = scmp.ne.s32.totalorder %s271, %s272
      %p284 = scmp.eq.s32.totalorder %s31, 1
      %p285 = por %p283, %p284
      %p287 = scmp.ne.s32.totalorder %s272, %s286
      %p288 = scmp.eq.s32.totalorder %s31, 0
      %p289 = por %p287, %p288
      %s291 = sadd.s32 %s290, 1
      %p294 = scmp.eq.s32.totalorder %s25, 1
      %p295 = scmp.ne.s32.totalorder %s290, %s292
      %p296 = scmp.eq.s32.totalorder %s25, 0
      %p297 = por %p295, %p296
      %p298 = scmp.ne.s32.totalorder %s290, %s292
      %p299 = scmp.eq.s32.totalorder %s30, 1
      %p300 = por %p298, %p299
      %p301 = scmp.ne.s32.totalorder %s292, %s293
      %p302 = scmp.eq.s32.totalorder %s30, 0
      %p303 = por %p301, %p302
      %p304 = scmp.ne.s32.totalorder %s292, %s293
      %p305 = scmp.eq.s32.totalorder %s31, 1
      %p306 = por %p304, %p305
      %p308 = scmp.ne.s32.totalorder %s293, %s307
      %p309 = scmp.eq.s32.totalorder %s31, 0
      %p310 = por %p308, %p309
      %s312 = sadd.s32 %s311, 1
      %p315 = scmp.eq.s32.totalorder %s25, 1
      %p316 = scmp.ne.s32.totalorder %s311, %s313
      %p317 = scmp.eq.s32.totalorder %s25, 0
      %p318 = por %p316, %p317
      %p319 = scmp.ne.s32.totalorder %s311, %s313
      %p320 = scmp.eq.s32.totalorder %s30, 1
      %p321 = por %p319, %p320
      %p322 = scmp.ne.s32.totalorder %s313, %s314
      %p323 = scmp.eq.s32.totalorder %s30, 0
      %p324 = por %p322, %p323
      %p325 = scmp.ne.s32.totalorder %s313, %s314
      %p326 = scmp.eq.s32.totalorder %s31, 1
      %p327 = por %p325, %p326
      %p329 = scmp.ne.s32.totalorder %s314, %s328
      %p330 = scmp.eq.s32.totalorder %s31, 0
      %p331 = por %p329, %p330
      %s333 = sadd.s32 %s332, 1
      %p336 = scmp.eq.s32.totalorder %s25, 1
      %p337 = scmp.ne.s32.totalorder %s332, %s334
      %p338 = scmp.eq.s32.totalorder %s25, 0
      %p339 = por %p337, %p338
      %p340 = scmp.ne.s32.totalorder %s332, %s334
      %p341 = scmp.eq.s32.totalorder %s30, 1
      %p342 = por %p340, %p341
      %p343 = scmp.ne.s32.totalorder %s334, %s335
      %p344 = scmp.eq.s32.totalorder %s30, 0
      %p345 = por %p343, %p344
      %p346 = scmp.ne.s32.totalorder %s334, %s335
      %p347 = scmp.eq.s32.totalorder %s31, 1
      %p348 = por %p346, %p347
      %p350 = scmp.ne.s32.totalorder %s335, %s349
      %p351 = scmp.eq.s32.totalorder %s31, 0
      %p352 = por %p350, %p351
      %s354 = sadd.s32 %s353, 1
      %p357 = scmp.eq.s32.totalorder %s25, 1
      %p358 = scmp.ne.s32.totalorder %s353, %s355
      %p359 = scmp.eq.s32.totalorder %s25, 0
      %p360 = por %p358, %p359
      %p361 = scmp.ne.s32.totalorder %s353, %s355
      %p362 = scmp.eq.s32.totalorder %s30, 1
      %p363 = por %p361, %p362
      %p364 = scmp.ne.s32.totalorder %s355, %s356
      %p365 = scmp.eq.s32.totalorder %s30, 0
      %p366 = por %p364, %p365
      %p367 = scmp.ne.s32.totalorder %s355, %s356
      %p368 = scmp.eq.s32.totalorder %s31, 1
      %p369 = por %p367, %p368
      %p371 = scmp.ne.s32.totalorder %s356, %s370
      %p372 = scmp.eq.s32.totalorder %s31, 0
      %p373 = por %p371, %p372
      %s374 = ssub.s32 %s25, %s32
      %p375 = scmp.eq.s32.totalorder %s374, 0
      %s377 = sadd.s32 %s376, 1
      %s378 = scalar_select %p375, %s376, %s377
      %p381 = pneg %p375
      %p382 = scmp.eq.s32.totalorder %s25, 1
      %p383 = por %p381, %p382
      %p384 = scmp.ne.s32.totalorder %s376, %s379
      %p385 = scmp.eq.s32.totalorder %s25, 0
      %p386 = por %p384, %p385
      %p387 = scmp.ne.s32.totalorder %s376, %s379
      %p388 = scmp.eq.s32.totalorder %s30, 1
      %p389 = por %p387, %p388
      %p390 = scmp.ne.s32.totalorder %s379, %s380
      %p391 = scmp.eq.s32.totalorder %s30, 0
      %p392 = por %p390, %p391
      %p393 = scmp.ne.s32.totalorder %s379, %s380
      %p394 = scmp.eq.s32.totalorder %s31, 1
      %p395 = por %p393, %p394
      %p397 = scmp.ne.s32.totalorder %s380, %s396
      %p398 = scmp.eq.s32.totalorder %s31, 0
      %p399 = por %p397, %p398
      %p400 = scmp.le.s32.totalorder 1, %s25
      %p401 = scmp.lt.s32.totalorder %s25, 3
      %p402 = pnand %p400, %p401
      %p403 = pneg %p402
      // Predicated region
      $region9: #{style_encoder_forward.1} parent=5 // pred_check
        _
      $region10: #{style_encoder_forward.1} parent=5 // pred_check_branch
        %405 = sbr.rel (%p402) target = $region12
      $region11: #{style_encoder_forward.1} parent=5 // pred_region
        %s406 = ssub.s32 %s25, 1
        // Predicated region
        $region13: #{style_encoder_forward.1} parent=11 // pred_check
          %p407 = pneg %p72
        $region14: #{style_encoder_forward.1} parent=11 // pred_check_branch
          %409 = sbr.rel (%p407) target = $region16
        $region15: #{style_encoder_forward.1} parent=11 // pred_region
          _
        $region16: #{style_encoder_forward.1} parent=11 // pred_fallthru
          _
        // Predicated region
        $region17: #{style_encoder_forward.1} parent=11 // pred_check
          %p410 = pneg %p93
        $region18: #{style_encoder_forward.1} parent=11 // pred_check_branch
          %412 = sbr.rel (%p410) target = $region20
        $region19: #{style_encoder_forward.1} parent=11 // pred_region
          _
        $region20: #{style_encoder_forward.1} parent=11 // pred_fallthru
          _
        // Predicated region
        $region21: #{style_encoder_forward.1} parent=11 // pred_check
          %p413 = pneg %p114
        $region22: #{style_encoder_forward.1} parent=11 // pred_check_branch
          %415 = sbr.rel (%p413) target = $region24
        $region23: #{style_encoder_forward.1} parent=11 // pred_region
          _
        $region24: #{style_encoder_forward.1} parent=11 // pred_fallthru
          _
        // Predicated region
        $region25: #{style_encoder_forward.1} parent=11 // pred_check
          %p416 = pneg %p135
        $region26: #{style_encoder_forward.1} parent=11 // pred_check_branch
          %418 = sbr.rel (%p416) target = $region28
        $region27: #{style_encoder_forward.1} parent=11 // pred_region
          _
        $region28: #{style_encoder_forward.1} parent=11 // pred_fallthru
          _
        // Predicated region
        $region29: #{style_encoder_forward.1} parent=11 // pred_check
          %p419 = pneg %p156
        $region30: #{style_encoder_forward.1} parent=11 // pred_check_branch
          %421 = sbr.rel (%p419) target = $region32
        $region31: #{style_encoder_forward.1} parent=11 // pred_region
          _
        $region32: #{style_encoder_forward.1} parent=11 // pred_fallthru
          _
        // Predicated region
        $region33: #{style_encoder_forward.1} parent=11 // pred_check
          %p422 = pneg %p177
        $region34: #{style_encoder_forward.1} parent=11 // pred_check_branch
          %424 = sbr.rel (%p422) target = $region36
        $region35: #{style_encoder_forward.1} parent=11 // pred_region
          _
        $region36: #{style_encoder_forward.1} parent=11 // pred_fallthru
          _
        // Predicated region
        $region37: #{style_encoder_forward.1} parent=11 // pred_check
          %p425 = pneg %p198
        $region38: #{style_encoder_forward.1} parent=11 // pred_check_branch
          %427 = sbr.rel (%p425) target = $region40
        $region39: #{style_encoder_forward.1} parent=11 // pred_region
          _
        $region40: #{style_encoder_forward.1} parent=11 // pred_fallthru
          _
        // Predicated region
        $region41: #{style_encoder_forward.1} parent=11 // pred_check
          %p428 = pneg %p219
        $region42: #{style_encoder_forward.1} parent=11 // pred_check_branch
          %430 = sbr.rel (%p428) target = $region44
        $region43: #{style_encoder_forward.1} parent=11 // pred_region
          _
        $region44: #{style_encoder_forward.1} parent=11 // pred_fallthru
          _
        // Predicated region
        $region45: #{style_encoder_forward.1} parent=11 // pred_check
          %p431 = pneg %p240
        $region46: #{style_encoder_forward.1} parent=11 // pred_check_branch
          %433 = sbr.rel (%p431) target = $region48
        $region47: #{style_encoder_forward.1} parent=11 // pred_region
          _
        $region48: #{style_encoder_forward.1} parent=11 // pred_fallthru
          _
        // Predicated region
        $region49: #{style_encoder_forward.1} parent=11 // pred_check
          %p434 = pneg %p261
        $region50: #{style_encoder_forward.1} parent=11 // pred_check_branch
          %436 = sbr.rel (%p434) target = $region52
        $region51: #{style_encoder_forward.1} parent=11 // pred_region
          _
        $region52: #{style_encoder_forward.1} parent=11 // pred_fallthru
          _
        // Predicated region
        $region53: #{style_encoder_forward.1} parent=11 // pred_check
          %p437 = pneg %p282
        $region54: #{style_encoder_forward.1} parent=11 // pred_check_branch
          %439 = sbr.rel (%p437) target = $region56
        $region55: #{style_encoder_forward.1} parent=11 // pred_region
          _
        $region56: #{style_encoder_forward.1} parent=11 // pred_fallthru
          _
        // Predicated region
        $region57: #{style_encoder_forward.1} parent=11 // pred_check
          %p440 = pneg %p303
        $region58: #{style_encoder_forward.1} parent=11 // pred_check_branch
          %442 = sbr.rel (%p440) target = $region60
        $region59: #{style_encoder_forward.1} parent=11 // pred_region
          _
        $region60: #{style_encoder_forward.1} parent=11 // pred_fallthru
          _
        // Predicated region
        $region61: #{style_encoder_forward.1} parent=11 // pred_check
          %p443 = pneg %p324
        $region62: #{style_encoder_forward.1} parent=11 // pred_check_branch
          %445 = sbr.rel (%p443) target = $region64
        $region63: #{style_encoder_forward.1} parent=11 // pred_region
          _
        $region64: #{style_encoder_forward.1} parent=11 // pred_fallthru
          _
        // Predicated region
        $region65: #{style_encoder_forward.1} parent=11 // pred_check
          %p446 = pneg %p345
        $region66: #{style_encoder_forward.1} parent=11 // pred_check_branch
          %448 = sbr.rel (%p446) target = $region68
        $region67: #{style_encoder_forward.1} parent=11 // pred_region
          _
        $region68: #{style_encoder_forward.1} parent=11 // pred_fallthru
          _
        // Predicated region
        $region69: #{style_encoder_forward.1} parent=11 // pred_check
          %p449 = pneg %p366
        $region70: #{style_encoder_forward.1} parent=11 // pred_check_branch
          %451 = sbr.rel (%p449) target = $region72
        $region71: #{style_encoder_forward.1} parent=11 // pred_region
          _
        $region72: #{style_encoder_forward.1} parent=11 // pred_fallthru
          _
      $region12: #{style_encoder_forward.1} parent=5 // pred_fallthru
        _
      %p452 = scmp.lt.s32.totalorder %s25, 2
      // Predicated region
      $region73: #{style_encoder_forward.1} parent=5 // pred_check
        %p453 = pneg %p452
      $region74: #{style_encoder_forward.1} parent=5 // pred_check_branch
        %455 = sbr.rel (%p453) target = $region76
      $region75: #{style_encoder_forward.1} parent=5 // pred_region
        // Predicated region
        $region77: #{style_encoder_forward.1} parent=75 // pred_check
          %p456 = pneg %p45
        $region78: #{style_encoder_forward.1} parent=75 // pred_check_branch
          %458 = sbr.rel (%p456) target = $region80
        $region79: #{style_encoder_forward.1} parent=75 // pred_region
          %p459 = scmp.lt.s32.totalorder %s25, 1
          %s460 = scalar_select %p459, %s25, 1
          %s461 = smul.addr %s460, 32
          %s462 = smul.addr %s461, 8
          %s463 = scalar_lea.vmem %s0, %s462
        $region80: #{style_encoder_forward.1} parent=75 // pred_fallthru
          _
      $region76: #{style_encoder_forward.1} parent=5 // pred_fallthru
        _
      %p464 = scmp.le.s32.totalorder 1, %s25
      %p465 = scmp.lt.s32.totalorder %s25, 3
      %p466 = pnand %p464, %p465
      %p467 = pneg %p466
      // Predicated region
      $region81: #{style_encoder_forward.1} parent=5 // pred_check
        _
      $region82: #{style_encoder_forward.1} parent=5 // pred_check_branch
        %469 = sbr.rel (%p466) target = $region84
      $region83: #{style_encoder_forward.1} parent=5 // pred_region
        %s470 = ssub.s32 %s25, 1
        %p471 = scmp.lt.s32.totalorder %s30, 1
        %s472 = scalar_select %p471, %s30, 1
        %s473 = smul.addr %s472, 32
        %s474 = smul.addr %s473, 8
        %s475 = scalar_lea.vmem %s0, %s474
        %p476 = pneg %p51
        %p477 = pneg %p48
        %p478 = pneg %p72
        %p479 = pneg %p69
        %p480 = pneg %p93
        %p481 = pneg %p90
        %p482 = pneg %p114
        %p483 = pneg %p111
        %p484 = pneg %p135
        %p485 = pneg %p132
        %p486 = pneg %p156
        %p487 = pneg %p153
        %p488 = pneg %p177
        %p489 = pneg %p174
        %p490 = pneg %p198
        %p491 = pneg %p195
        %p492 = pneg %p219
        %p493 = pneg %p216
        %p494 = pneg %p240
        %p495 = pneg %p237
        %p496 = pneg %p261
        %p497 = pneg %p258
        %p498 = pneg %p282
        %p499 = pneg %p279
        %p500 = pneg %p303
        %p501 = pneg %p300
        %p502 = pneg %p324
        %p503 = pneg %p321
        %p504 = pneg %p345
        %p505 = pneg %p342
        %p506 = pneg %p366
        %p507 = pneg %p363
        %p508 = pneg %p392
        %p509 = pneg %p389
        %s510 = sand.u32 %s379, 1
        %s511 = scalar_lea.sflag [#allocation3], %s510
        %s512 = sand.u32 %s379, 1
        %s513 = scalar_lea.vmem [#allocation2], %s512
        %p514 = scmp.lt.s32.totalorder %s30, 1
        %s515 = scalar_select %p514, %s30, 1
        %s516 = smul.addr %s515, 32
        %s517 = smul.addr %s516, 8
        %s518 = scalar_lea.vmem %s0, %s517
        %v520 = vld [vmem:[%s1] sm:$0xf]
        %v521 = vld [vmem:[%s1 + $0x4] sm:$0xf]
        %v522 = vld [vmem:[%s1 + $0x8] sm:$0xf]
        %v523 = vld [vmem:[%s1 + $0xc] sm:$0xf]
        %v524 = vld [vmem:[%s1 + $0x10] sm:$0x3]
        %v525 = vld [vmem:[%s2] sm:$0x1]
        %v526 = vld [vmem:[%s3] sm:$0xf]
        %v527 = vld [vmem:[%s3 + $0x4] sm:$0xf]
        %v528 = vld [vmem:[%s3 + $0x8] sm:$0xf]
        %v529 = vld [vmem:[%s3 + $0xc] sm:$0xf]
        %v530 = vld [vmem:[%s3 + $0x10] sm:$0xf]
        %v531 = vld [vmem:[%s3 + $0x14] sm:$0xf]
        %v532 = vld [vmem:[%s3 + $0x18] sm:$0xf]
        %v533 = vld [vmem:[%s3 + $0x1c] sm:$0xf]
        %v534 = vld [vmem:[%s3 + $0x20] sm:$0xf]
        %v535 = vld [vmem:[%s3 + $0x24] sm:$0xf]
        %v536 = vld [vmem:[%s3 + $0x28] sm:$0xf]
        %v537 = vld [vmem:[%s3 + $0x2c] sm:$0xf]
        %v538 = vld [vmem:[%s3 + $0x30] sm:$0xf]
        %v539 = vld [vmem:[%s3 + $0x34] sm:$0xf]
        %v540 = vld [vmem:[%s3 + $0x38] sm:$0xf]
        %v541 = vld [vmem:[%s3 + $0x3c] sm:$0xf]
        %v542 = vld [vmem:[%s3 + $0x40] sm:$0xf]
        %v543 = vld [vmem:[%s3 + $0x44] sm:$0xf]
        %v544 = vld [vmem:[%s4] sm:$0x1]
        %v545 = vld [vmem:[%s5] sm:$0xf]
        %v546 = vld [vmem:[%s5 + $0x4] sm:$0xf]
        %v547 = vld [vmem:[%s5 + $0x8] sm:$0xf]
        %v548 = vld [vmem:[%s5 + $0xc] sm:$0xf]
        %v549 = vld [vmem:[%s5 + $0x10] sm:$0xf]
        %v550 = vld [vmem:[%s5 + $0x14] sm:$0xf]
        %v551 = vld [vmem:[%s5 + $0x18] sm:$0xf]
        %v552 = vld [vmem:[%s5 + $0x1c] sm:$0xf]
        %v553 = vld [vmem:[%s5 + $0x20] sm:$0xf]
        %v554 = vld [vmem:[%s5 + $0x24] sm:$0xf]
        %v555 = vld [vmem:[%s5 + $0x28] sm:$0xf]
        %v556 = vld [vmem:[%s5 + $0x2c] sm:$0xf]
        %v557 = vld [vmem:[%s5 + $0x30] sm:$0xf]
        %v558 = vld [vmem:[%s5 + $0x34] sm:$0xf]
        %v559 = vld [vmem:[%s5 + $0x38] sm:$0xf]
        %v560 = vld [vmem:[%s5 + $0x3c] sm:$0xf]
        %v561 = vld [vmem:[%s5 + $0x40] sm:$0xf]
        %v562 = vld [vmem:[%s5 + $0x44] sm:$0xf]
        %v563 = vld [vmem:[%s6] sm:$0x1]
        %v564 = vld [vmem:[%s7] sm:$0xf]
        %v565 = vld [vmem:[%s7 + $0x4] sm:$0xf]
        %v566 = vld [vmem:[%s8] sm:$0xf]
        %v567 = vld [vmem:[%s8 + $0x4] sm:$0xf]
        %v568 = vld [vmem:[%s8 + $0x8] sm:$0xf]
        %v569 = vld [vmem:[%s8 + $0xc] sm:$0xf]
        %v570 = vld [vmem:[%s8 + $0x10] sm:$0xf]
        %v571 = vld [vmem:[%s8 + $0x14] sm:$0xf]
        %v572 = vld [vmem:[%s8 + $0x18] sm:$0xf]
        %v573 = vld [vmem:[%s8 + $0x1c] sm:$0xf]
        %v574 = vld [vmem:[%s8 + $0x20] sm:$0xf]
        %v575 = vld [vmem:[%s8 + $0x24] sm:$0xf]
        %v576 = vld [vmem:[%s8 + $0x28] sm:$0xf]
        %v577 = vld [vmem:[%s8 + $0x2c] sm:$0xf]
        %v578 = vld [vmem:[%s8 + $0x30] sm:$0xf]
        %v579 = vld [vmem:[%s8 + $0x34] sm:$0xf]
        %v580 = vld [vmem:[%s8 + $0x38] sm:$0xf]
        %v581 = vld [vmem:[%s8 + $0x3c] sm:$0xf]
        %v582 = vld [vmem:[%s8 + $0x40] sm:$0xf]
        %v583 = vld [vmem:[%s8 + $0x44] sm:$0xf]
        %v584 = vld [vmem:[%s8 + $0x48] sm:$0xf]
        %v585 = vld [vmem:[%s8 + $0x4c] sm:$0xf]
        %v586 = vld [vmem:[%s8 + $0x50] sm:$0xf]
        %v587 = vld [vmem:[%s8 + $0x54] sm:$0xf]
        %v588 = vld [vmem:[%s8 + $0x58] sm:$0xf]
        %v589 = vld [vmem:[%s8 + $0x5c] sm:$0xf]
        %v590 = vld [vmem:[%s8 + $0x60] sm:$0xf]
        %v591 = vld [vmem:[%s8 + $0x64] sm:$0xf]
        %v592 = vld [vmem:[%s8 + $0x68] sm:$0xf]
        %v593 = vld [vmem:[%s8 + $0x6c] sm:$0xf]
        %v594 = vld [vmem:[%s8 + $0x70] sm:$0xf]
        %v595 = vld [vmem:[%s8 + $0x74] sm:$0xf]
        %v596 = vld [vmem:[%s8 + $0x78] sm:$0xf]
        %v597 = vld [vmem:[%s8 + $0x7c] sm:$0xf]
        %v598 = vld [vmem:[%s8 + $0x80] sm:$0xf]
        %v599 = vld [vmem:[%s8 + $0x84] sm:$0xf]
        %v600 = vld [vmem:[%s8 + $0x88] sm:$0xf]
        %v601 = vld [vmem:[%s8 + $0x8c] sm:$0xf]
        %v602 = vld [vmem:[%s9] sm:$0x1]
        %v603 = vld [vmem:[%s10] sm:$0xf]
        %v604 = vld [vmem:[%s10 + $0x4] sm:$0xf]
        %v605 = vld [vmem:[%s10 + $0x8] sm:$0xf]
        %v606 = vld [vmem:[%s10 + $0xc] sm:$0xf]
        %v607 = vld [vmem:[%s10 + $0x10] sm:$0xf]
        %v608 = vld [vmem:[%s10 + $0x14] sm:$0xf]
        %v609 = vld [vmem:[%s10 + $0x18] sm:$0xf]
        %v610 = vld [vmem:[%s10 + $0x1c] sm:$0xf]
        %v611 = vld [vmem:[%s10 + $0x20] sm:$0xf]
        %v612 = vld [vmem:[%s10 + $0x24] sm:$0xf]
        %v613 = vld [vmem:[%s10 + $0x28] sm:$0xf]
        %v614 = vld [vmem:[%s10 + $0x2c] sm:$0xf]
        %v615 = vld [vmem:[%s10 + $0x30] sm:$0xf]
        %v616 = vld [vmem:[%s10 + $0x34] sm:$0xf]
        %v617 = vld [vmem:[%s10 + $0x38] sm:$0xf]
        %v618 = vld [vmem:[%s10 + $0x3c] sm:$0xf]
        %v619 = vld [vmem:[%s10 + $0x40] sm:$0xf]
        %v620 = vld [vmem:[%s10 + $0x44] sm:$0xf]
        %v621 = vld [vmem:[%s10 + $0x48] sm:$0xf]
        %v622 = vld [vmem:[%s10 + $0x4c] sm:$0xf]
        %v623 = vld [vmem:[%s10 + $0x50] sm:$0xf]
        %v624 = vld [vmem:[%s10 + $0x54] sm:$0xf]
        %v625 = vld [vmem:[%s10 + $0x58] sm:$0xf]
        %v626 = vld [vmem:[%s10 + $0x5c] sm:$0xf]
        %v627 = vld [vmem:[%s10 + $0x60] sm:$0xf]
        %v628 = vld [vmem:[%s10 + $0x64] sm:$0xf]
        %v629 = vld [vmem:[%s10 + $0x68] sm:$0xf]
        %v630 = vld [vmem:[%s10 + $0x6c] sm:$0xf]
        %v631 = vld [vmem:[%s10 + $0x70] sm:$0xf]
        %v632 = vld [vmem:[%s10 + $0x74] sm:$0xf]
        %v633 = vld [vmem:[%s10 + $0x78] sm:$0xf]
        %v634 = vld [vmem:[%s10 + $0x7c] sm:$0xf]
        %v635 = vld [vmem:[%s10 + $0x80] sm:$0xf]
        %v636 = vld [vmem:[%s10 + $0x84] sm:$0xf]
        %v637 = vld [vmem:[%s10 + $0x88] sm:$0xf]
        %v638 = vld [vmem:[%s10 + $0x8c] sm:$0xf]
        %v639 = vld [vmem:[%s11] sm:$0x1]
        %v640 = vld [vmem:[%s12] sm:$0xf]
        %v641 = vld [vmem:[%s12 + $0x4] sm:$0xf]
        %v642 = vld [vmem:[%s12 + $0x8] sm:$0xf]
        %v643 = vld [vmem:[%s12 + $0xc] sm:$0xf]
        %v644 = vld [vmem:[%s12 + $0x10] sm:$0xf]
        %v645 = vld [vmem:[%s12 + $0x14] sm:$0xf]
        %v646 = vld [vmem:[%s12 + $0x18] sm:$0xf]
        %v647 = vld [vmem:[%s12 + $0x1c] sm:$0xf]
        %v648 = vld [vmem:[%s12 + $0x20] sm:$0xf]
        %v649 = vld [vmem:[%s12 + $0x24] sm:$0xf]
        %v650 = vld [vmem:[%s12 + $0x28] sm:$0xf]
        %v651 = vld [vmem:[%s12 + $0x2c] sm:$0xf]
        %v652 = vld [vmem:[%s12 + $0x30] sm:$0xf]
        %v653 = vld [vmem:[%s12 + $0x34] sm:$0xf]
        %v654 = vld [vmem:[%s12 + $0x38] sm:$0xf]
        %v655 = vld [vmem:[%s12 + $0x3c] sm:$0xf]
        %v656 = vld [vmem:[%s12 + $0x40] sm:$0xf]
        %v657 = vld [vmem:[%s12 + $0x44] sm:$0xf]
        %v658 = vld [vmem:[%s12 + $0x48] sm:$0xf]
        %v659 = vld [vmem:[%s12 + $0x4c] sm:$0xf]
        %v660 = vld [vmem:[%s12 + $0x50] sm:$0xf]
        %v661 = vld [vmem:[%s12 + $0x54] sm:$0xf]
        %v662 = vld [vmem:[%s12 + $0x58] sm:$0xf]
        %v663 = vld [vmem:[%s12 + $0x5c] sm:$0xf]
        %v664 = vld [vmem:[%s12 + $0x60] sm:$0xf]
        %v665 = vld [vmem:[%s12 + $0x64] sm:$0xf]
        %v666 = vld [vmem:[%s12 + $0x68] sm:$0xf]
        %v667 = vld [vmem:[%s12 + $0x6c] sm:$0xf]
        %v668 = vld [vmem:[%s12 + $0x70] sm:$0xf]
        %v669 = vld [vmem:[%s12 + $0x74] sm:$0xf]
        %v670 = vld [vmem:[%s12 + $0x78] sm:$0xf]
        %v671 = vld [vmem:[%s12 + $0x7c] sm:$0xf]
        %v672 = vld [vmem:[%s12 + $0x80] sm:$0xf]
        %v673 = vld [vmem:[%s12 + $0x84] sm:$0xf]
        %v674 = vld [vmem:[%s12 + $0x88] sm:$0xf]
        %v675 = vld [vmem:[%s12 + $0x8c] sm:$0xf]
        %v676 = vld [vmem:[%s12 + $0x90] sm:$0xf]
        %v677 = vld [vmem:[%s12 + $0x94] sm:$0xf]
        %v678 = vld [vmem:[%s12 + $0x98] sm:$0xf]
        %v679 = vld [vmem:[%s12 + $0x9c] sm:$0xf]
        %v680 = vld [vmem:[%s12 + $0xa0] sm:$0xf]
        %v681 = vld [vmem:[%s12 + $0xa4] sm:$0xf]
        %v682 = vld [vmem:[%s12 + $0xa8] sm:$0xf]
        %v683 = vld [vmem:[%s12 + $0xac] sm:$0xf]
        %v684 = vld [vmem:[%s12 + $0xb0] sm:$0xf]
        %v685 = vld [vmem:[%s12 + $0xb4] sm:$0xf]
        %v686 = vld [vmem:[%s12 + $0xb8] sm:$0xf]
        %v687 = vld [vmem:[%s12 + $0xbc] sm:$0xf]
        %v688 = vld [vmem:[%s12 + $0xc0] sm:$0xf]
        %v689 = vld [vmem:[%s12 + $0xc4] sm:$0xf]
        %v690 = vld [vmem:[%s12 + $0xc8] sm:$0xf]
        %v691 = vld [vmem:[%s12 + $0xcc] sm:$0xf]
        %v692 = vld [vmem:[%s12 + $0xd0] sm:$0xf]
        %v693 = vld [vmem:[%s12 + $0xd4] sm:$0xf]
        %v694 = vld [vmem:[%s12 + $0xd8] sm:$0xf]
        %v695 = vld [vmem:[%s12 + $0xdc] sm:$0xf]
        %v696 = vld [vmem:[%s12 + $0xe0] sm:$0xf]
        %v697 = vld [vmem:[%s12 + $0xe4] sm:$0xf]
        %v698 = vld [vmem:[%s12 + $0xe8] sm:$0xf]
        %v699 = vld [vmem:[%s12 + $0xec] sm:$0xf]
        %v700 = vld [vmem:[%s12 + $0xf0] sm:$0xf]
        %v701 = vld [vmem:[%s12 + $0xf4] sm:$0xf]
        %v702 = vld [vmem:[%s12 + $0xf8] sm:$0xf]
        %v703 = vld [vmem:[%s12 + $0xfc] sm:$0xf]
        %v704 = vld [vmem:[%s13] sm:$0x1]
        %v705 = vld [vmem:[%s14] sm:$0xf]
        %v706 = vld [vmem:[%s14 + $0x4] sm:$0xf]
        %v707 = vld [vmem:[%s14 + $0x8] sm:$0xf]
        %v708 = vld [vmem:[%s14 + $0xc] sm:$0xf]
        %v709 = vld [vmem:[%s15] sm:$0x1]
        %v710 = vld [vmem:[%s518] sm:$0xff]
        %v711 = vld [vmem:[%s518 + $0x8] sm:$0xff]
        %v712 = vld [vmem:[%s518 + $0x10] sm:$0xff]
        %v713 = vld [vmem:[%s518 + $0x18] sm:$0xff]
        %v714 = vld [vmem:[%s518 + $0x20] sm:$0xff]
        %v715 = vld [vmem:[%s518 + $0x28] sm:$0xff]
        %v716 = vld [vmem:[%s518 + $0x30] sm:$0xff]
        %v717 = vld [vmem:[%s518 + $0x38] sm:$0xff]
        %v718 = vld [vmem:[%s518 + $0x40] sm:$0xff]
        %v719 = vld [vmem:[%s518 + $0x48] sm:$0xff]
        %v720 = vld [vmem:[%s518 + $0x50] sm:$0xff]
        %v721 = vld [vmem:[%s518 + $0x58] sm:$0xff]
        %v722 = vld [vmem:[%s518 + $0x60] sm:$0xff]
        %v723 = vld [vmem:[%s518 + $0x68] sm:$0xff]
        %v724 = vld [vmem:[%s518 + $0x70] sm:$0xff]
        %v725 = vld [vmem:[%s518 + $0x78] sm:$0xff]
        %v726 = vld [vmem:[%s518 + $0x80] sm:$0xff]
        %v727 = vld [vmem:[%s518 + $0x88] sm:$0xff]
        %v728 = vld [vmem:[%s518 + $0x90] sm:$0xff]
        %v729 = vld [vmem:[%s518 + $0x98] sm:$0xff]
        %v730 = vld [vmem:[%s518 + $0xa0] sm:$0xff]
        %v731 = vld [vmem:[%s518 + $0xa8] sm:$0xff]
        %v732 = vld [vmem:[%s518 + $0xb0] sm:$0xff]
        %v733 = vld [vmem:[%s518 + $0xb8] sm:$0xff]
        %v734 = vld [vmem:[%s518 + $0xc0] sm:$0xff]
        %v735 = vld [vmem:[%s518 + $0xc8] sm:$0xff]
        %v736 = vld [vmem:[%s518 + $0xd0] sm:$0xff]
        %v737 = vld [vmem:[%s518 + $0xd8] sm:$0xff]
        %v738 = vld [vmem:[%s518 + $0xe0] sm:$0xff]
        %v739 = vld [vmem:[%s518 + $0xe8] sm:$0xff]
        %v740 = vld [vmem:[%s518 + $0xf0] sm:$0xff]
        %v741 = vld [vmem:[%s518 + $0xf8] sm:$0xff]
        %vm775 = vcmask 1040384
        %v776 = vrot.slane 0.0, 7
        %v777 = vsel %vm775, %v776, %v776
        %v778 = vrot.slane %v710, 7
        %v779 = vrot.slane %v711, 7
        %v780 = vsel %vm775, %v778, %v779
        %v781 = vrot.slane %v712, 7
        %v782 = vrot.slane %v713, 7
        %v783 = vsel %vm775, %v781, %v782
        %v784 = vrot.slane %v714, 7
        %v785 = vrot.slane %v715, 7
        %v786 = vsel %vm775, %v784, %v785
        %v787 = vrot.slane %v716, 7
        %v788 = vrot.slane %v717, 7
        %v789 = vsel %vm775, %v787, %v788
        %v790 = vrot.slane %v718, 7
        %v791 = vrot.slane %v719, 7
        %v792 = vsel %vm775, %v790, %v791
        %v793 = vrot.slane %v720, 7
        %v794 = vrot.slane %v721, 7
        %v795 = vsel %vm775, %v793, %v794
        %v796 = vrot.slane %v722, 7
        %v797 = vrot.slane %v723, 7
        %v798 = vsel %vm775, %v796, %v797
        %v799 = vrot.slane %v724, 7
        %v800 = vrot.slane %v725, 7
        %v801 = vsel %vm775, %v799, %v800
        %v802 = vrot.slane %v726, 7
        %v803 = vrot.slane %v727, 7
        %v804 = vsel %vm775, %v802, %v803
        %v805 = vrot.slane %v728, 7
        %v806 = vrot.slane %v729, 7
        %v807 = vsel %vm775, %v805, %v806
        %v808 = vrot.slane %v730, 7
        %v809 = vrot.slane %v731, 7
        %v810 = vsel %vm775, %v808, %v809
        %v811 = vrot.slane %v732, 7
        %v812 = vrot.slane %v733, 7
        %v813 = vsel %vm775, %v811, %v812
        %v814 = vrot.slane %v734, 7
        %v815 = vrot.slane %v735, 7
        %v816 = vsel %vm775, %v814, %v815
        %v817 = vrot.slane %v736, 7
        %v818 = vrot.slane %v737, 7
        %v819 = vsel %vm775, %v817, %v818
        %v820 = vrot.slane %v738, 7
        %v821 = vrot.slane %v739, 7
        %v822 = vsel %vm775, %v820, %v821
        %v823 = vrot.slane %v740, 7
        %v824 = vrot.slane %v741, 7
        %v825 = vsel %vm775, %v823, %v824
        %v875 = vsel %vm775, 0.0, %v776
        %v876 = vsel %vm775, 0.0, %v778
        %v877 = vsel %vm775, 0.0, %v781
        %v878 = vsel %vm775, 0.0, %v784
        %v879 = vsel %vm775, 0.0, %v787
        %v880 = vsel %vm775, 0.0, %v790
        %v881 = vsel %vm775, 0.0, %v793
        %v882 = vsel %vm775, 0.0, %v796
        %v883 = vsel %vm775, 0.0, %v799
        %v884 = vsel %vm775, 0.0, %v802
        %v885 = vsel %vm775, 0.0, %v805
        %v886 = vsel %vm775, 0.0, %v808
        %v887 = vsel %vm775, 0.0, %v811
        %v888 = vsel %vm775, 0.0, %v814
        %v889 = vsel %vm775, 0.0, %v817
        %v890 = vsel %vm775, 0.0, %v820
        %v891 = vsel %vm775, 0.0, %v823
        %v892 = vsel %vm775, %v776, 0.0
        %v893 = vsel %vm775, %v779, 0.0
        %v894 = vsel %vm775, %v782, 0.0
        %v895 = vsel %vm775, %v785, 0.0
        %v896 = vsel %vm775, %v788, 0.0
        %v897 = vsel %vm775, %v791, 0.0
        %v898 = vsel %vm775, %v794, 0.0
        %v899 = vsel %vm775, %v797, 0.0
        %v900 = vsel %vm775, %v800, 0.0
        %v901 = vsel %vm775, %v803, 0.0
        %v902 = vsel %vm775, %v806, 0.0
        %v903 = vsel %vm775, %v809, 0.0
        %v904 = vsel %vm775, %v812, 0.0
        %v905 = vsel %vm775, %v815, 0.0
        %v906 = vsel %vm775, %v818, 0.0
        %v907 = vsel %vm775, %v821, 0.0
        %v908 = vsel %vm775, %v824, 0.0
        %vm941 = vcmask 1046528
        %v942 = vrot.slane %v875, 1
        %v943 = vrot.slane %v777, 1
        %v944 = vsel %vm941, %v942, %v943
        %v945 = vrot.slane %v892, 1
        %v946 = vsel %vm941, %v943, %v945
        %v947 = vrot.slane %v876, 1
        %v948 = vrot.slane %v780, 1
        %v949 = vsel %vm941, %v947, %v948
        %v950 = vrot.slane %v893, 1
        %v951 = vsel %vm941, %v948, %v950
        %v952 = vrot.slane %v877, 1
        %v953 = vrot.slane %v783, 1
        %v954 = vsel %vm941, %v952, %v953
        %v955 = vrot.slane %v894, 1
        %v956 = vsel %vm941, %v953, %v955
        %v957 = vrot.slane %v878, 1
        %v958 = vrot.slane %v786, 1
        %v959 = vsel %vm941, %v957, %v958
        %v960 = vrot.slane %v895, 1
        %v961 = vsel %vm941, %v958, %v960
        %v962 = vrot.slane %v879, 1
        %v963 = vrot.slane %v789, 1
        %v964 = vsel %vm941, %v962, %v963
        %v965 = vrot.slane %v896, 1
        %v966 = vsel %vm941, %v963, %v965
        %v967 = vrot.slane %v880, 1
        %v968 = vrot.slane %v792, 1
        %v969 = vsel %vm941, %v967, %v968
        %v970 = vrot.slane %v897, 1
        %v971 = vsel %vm941, %v968, %v970
        %v972 = vrot.slane %v881, 1
        %v973 = vrot.slane %v795, 1
        %v974 = vsel %vm941, %v972, %v973
        %v975 = vrot.slane %v898, 1
        %v976 = vsel %vm941, %v973, %v975
        %v977 = vrot.slane %v882, 1
        %v978 = vrot.slane %v798, 1
        %v979 = vsel %vm941, %v977, %v978
        %v980 = vrot.slane %v899, 1
        %v981 = vsel %vm941, %v978, %v980
        %v982 = vrot.slane %v883, 1
        %v983 = vrot.slane %v801, 1
        %v984 = vsel %vm941, %v982, %v983
        %v985 = vrot.slane %v900, 1
        %v986 = vsel %vm941, %v983, %v985
        %v987 = vrot.slane %v884, 1
        %v988 = vrot.slane %v804, 1
        %v989 = vsel %vm941, %v987, %v988
        %v990 = vrot.slane %v901, 1
        %v991 = vsel %vm941, %v988, %v990
        %v992 = vrot.slane %v885, 1
        %v993 = vrot.slane %v807, 1
        %v994 = vsel %vm941, %v992, %v993
        %v995 = vrot.slane %v902, 1
        %v996 = vsel %vm941, %v993, %v995
        %v997 = vrot.slane %v886, 1
        %v998 = vrot.slane %v810, 1
        %v999 = vsel %vm941, %v997, %v998
        %v1000 = vrot.slane %v903, 1
        %v1001 = vsel %vm941, %v998, %v1000
        %v1002 = vrot.slane %v887, 1
        %v1003 = vrot.slane %v813, 1
        %v1004 = vsel %vm941, %v1002, %v1003
        %v1005 = vrot.slane %v904, 1
        %v1006 = vsel %vm941, %v1003, %v1005
        %v1007 = vrot.slane %v888, 1
        %v1008 = vrot.slane %v816, 1
        %v1009 = vsel %vm941, %v1007, %v1008
        %v1010 = vrot.slane %v905, 1
        %v1011 = vsel %vm941, %v1008, %v1010
        %v1012 = vrot.slane %v889, 1
        %v1013 = vrot.slane %v819, 1
        %v1014 = vsel %vm941, %v1012, %v1013
        %v1015 = vrot.slane %v906, 1
        %v1016 = vsel %vm941, %v1013, %v1015
        %v1017 = vrot.slane %v890, 1
        %v1018 = vrot.slane %v822, 1
        %v1019 = vsel %vm941, %v1017, %v1018
        %v1020 = vrot.slane %v907, 1
        %v1021 = vsel %vm941, %v1018, %v1020
        %1022 = vrot.lane.b32.xlu0 %v944, 4
        %v1023 = vpop.permute.xlu0 %1022
        %1024 = vrot.lane.b32.xlu0 %v946, 4
        %v1025 = vpop.permute.xlu0 %1024
        %1026 = vrot.lane.b32.xlu0 %v949, 4
        %v1027 = vpop.permute.xlu0 %1026
        %1028 = vrot.lane.b32.xlu0 %v951, 4
        %v1029 = vpop.permute.xlu0 %1028
        %1030 = vrot.lane.b32.xlu0 %v954, 4
        %v1031 = vpop.permute.xlu0 %1030
        %1032 = vrot.lane.b32.xlu0 %v956, 4
        %v1033 = vpop.permute.xlu0 %1032
        %1034 = vrot.lane.b32.xlu0 %v959, 4
        %v1035 = vpop.permute.xlu0 %1034
        %1036 = vrot.lane.b32.xlu0 %v961, 4
        %v1037 = vpop.permute.xlu0 %1036
        %1038 = vrot.lane.b32.xlu0 %v964, 4
        %v1039 = vpop.permute.xlu0 %1038
        %1040 = vrot.lane.b32.xlu0 %v966, 4
        %v1041 = vpop.permute.xlu0 %1040
        %1042 = vrot.lane.b32.xlu0 %v969, 4
        %v1043 = vpop.permute.xlu0 %1042
        %1044 = vrot.lane.b32.xlu0 %v971, 4
        %v1045 = vpop.permute.xlu0 %1044
        %1046 = vrot.lane.b32.xlu0 %v974, 4
        %v1047 = vpop.permute.xlu0 %1046
        %1048 = vrot.lane.b32.xlu0 %v976, 4
        %v1049 = vpop.permute.xlu0 %1048
        %1050 = vrot.lane.b32.xlu0 %v979, 4
        %v1051 = vpop.permute.xlu0 %1050
        %1052 = vrot.lane.b32.xlu0 %v981, 4
        %v1053 = vpop.permute.xlu0 %1052
        %1054 = vrot.lane.b32.xlu0 %v984, 4
        %v1055 = vpop.permute.xlu0 %1054
        %1056 = vrot.lane.b32.xlu0 %v986, 4
        %v1057 = vpop.permute.xlu0 %1056
        %1058 = vrot.lane.b32.xlu0 %v989, 4
        %v1059 = vpop.permute.xlu0 %1058
        %1060 = vrot.lane.b32.xlu0 %v991, 4
        %v1061 = vpop.permute.xlu0 %1060
        %1062 = vrot.lane.b32.xlu0 %v994, 4
        %v1063 = vpop.permute.xlu0 %1062
        %1064 = vrot.lane.b32.xlu0 %v996, 4
        %v1065 = vpop.permute.xlu0 %1064
        %1066 = vrot.lane.b32.xlu0 %v999, 4
        %v1067 = vpop.permute.xlu0 %1066
        %1068 = vrot.lane.b32.xlu0 %v1001, 4
        %v1069 = vpop.permute.xlu0 %1068
        %1070 = vrot.lane.b32.xlu0 %v1004, 4
        %v1071 = vpop.permute.xlu0 %1070
        %1072 = vrot.lane.b32.xlu0 %v1006, 4
        %v1073 = vpop.permute.xlu0 %1072
        %1074 = vrot.lane.b32.xlu0 %v1009, 4
        %v1075 = vpop.permute.xlu0 %1074
        %1076 = vrot.lane.b32.xlu0 %v1011, 4
        %v1077 = vpop.permute.xlu0 %1076
        %1078 = vrot.lane.b32.xlu0 %v1014, 4
        %v1079 = vpop.permute.xlu0 %1078
        %1080 = vrot.lane.b32.xlu0 %v1016, 4
        %v1081 = vpop.permute.xlu0 %1080
        %1082 = vrot.lane.b32.xlu0 %v1019, 4
        %v1083 = vpop.permute.xlu0 %1082
        %1084 = vrot.lane.b32.xlu0 %v1021, 4
        %v1085 = vpop.permute.xlu0 %1084
        %vm1118 = vcmask 1045504
        %v1119 = vrot.slane %v875, 2
        %v1120 = vrot.slane %v777, 2
        %v1121 = vsel %vm1118, %v1119, %v1120
        %v1122 = vrot.slane %v892, 2
        %v1123 = vsel %vm1118, %v1120, %v1122
        %v1124 = vrot.slane %v876, 2
        %v1125 = vrot.slane %v780, 2
        %v1126 = vsel %vm1118, %v1124, %v1125
        %v1127 = vrot.slane %v893, 2
        %v1128 = vsel %vm1118, %v1125, %v1127
        %v1129 = vrot.slane %v877, 2
        %v1130 = vrot.slane %v783, 2
        %v1131 = vsel %vm1118, %v1129, %v1130
        %v1132 = vrot.slane %v894, 2
        %v1133 = vsel %vm1118, %v1130, %v1132
        %v1134 = vrot.slane %v878, 2
        %v1135 = vrot.slane %v786, 2
        %v1136 = vsel %vm1118, %v1134, %v1135
        %v1137 = vrot.slane %v895, 2
        %v1138 = vsel %vm1118, %v1135, %v1137
        %v1139 = vrot.slane %v879, 2
        %v1140 = vrot.slane %v789, 2
        %v1141 = vsel %vm1118, %v1139, %v1140
        %v1142 = vrot.slane %v896, 2
        %v1143 = vsel %vm1118, %v1140, %v1142
        %v1144 = vrot.slane %v880, 2
        %v1145 = vrot.slane %v792, 2
        %v1146 = vsel %vm1118, %v1144, %v1145
        %v1147 = vrot.slane %v897, 2
        %v1148 = vsel %vm1118, %v1145, %v1147
        %v1149 = vrot.slane %v881, 2
        %v1150 = vrot.slane %v795, 2
        %v1151 = vsel %vm1118, %v1149, %v1150
        %v1152 = vrot.slane %v898, 2
        %v1153 = vsel %vm1118, %v1150, %v1152
        %v1154 = vrot.slane %v882, 2
        %v1155 = vrot.slane %v798, 2
        %v1156 = vsel %vm1118, %v1154, %v1155
        %v1157 = vrot.slane %v899, 2
        %v1158 = vsel %vm1118, %v1155, %v1157
        %v1159 = vrot.slane %v883, 2
        %v1160 = vrot.slane %v801, 2
        %v1161 = vsel %vm1118, %v1159, %v1160
        %v1162 = vrot.slane %v900, 2
        %v1163 = vsel %vm1118, %v1160, %v1162
        %v1164 = vrot.slane %v884, 2
        %v1165 = vrot.slane %v804, 2
        %v1166 = vsel %vm1118, %v1164, %v1165
        %v1167 = vrot.slane %v901, 2
        %v1168 = vsel %vm1118, %v1165, %v1167
        %v1169 = vrot.slane %v885, 2
        %v1170 = vrot.slane %v807, 2
        %v1171 = vsel %vm1118, %v1169, %v1170
        %v1172 = vrot.slane %v902, 2
        %v1173 = vsel %vm1118, %v1170, %v1172
        %v1174 = vrot.slane %v886, 2
        %v1175 = vrot.slane %v810, 2
        %v1176 = vsel %vm1118, %v1174, %v1175
        %v1177 = vrot.slane %v903, 2
        %v1178 = vsel %vm1118, %v1175, %v1177
        %v1179 = vrot.slane %v887, 2
        %v1180 = vrot.slane %v813, 2
        %v1181 = vsel %vm1118, %v1179, %v1180
        %v1182 = vrot.slane %v904, 2
        %v1183 = vsel %vm1118, %v1180, %v1182
        %v1184 = vrot.slane %v888, 2
        %v1185 = vrot.slane %v816, 2
        %v1186 = vsel %vm1118, %v1184, %v1185
        %v1187 = vrot.slane %v905, 2
        %v1188 = vsel %vm1118, %v1185, %v1187
        %v1189 = vrot.slane %v889, 2
        %v1190 = vrot.slane %v819, 2
        %v1191 = vsel %vm1118, %v1189, %v1190
        %v1192 = vrot.slane %v906, 2
        %v1193 = vsel %vm1118, %v1190, %v1192
        %v1194 = vrot.slane %v890, 2
        %v1195 = vrot.slane %v822, 2
        %v1196 = vsel %vm1118, %v1194, %v1195
        %v1197 = vrot.slane %v907, 2
        %v1198 = vsel %vm1118, %v1195, %v1197
        %1199 = vrot.lane.b32.xlu0 %v1121, 8
        %v1200 = vpop.permute.xlu0 %1199
        %1201 = vrot.lane.b32.xlu0 %v1123, 8
        %v1202 = vpop.permute.xlu0 %1201
        %1203 = vrot.lane.b32.xlu0 %v1126, 8
        %v1204 = vpop.permute.xlu0 %1203
        %1205 = vrot.lane.b32.xlu0 %v1128, 8
        %v1206 = vpop.permute.xlu0 %1205
        %1207 = vrot.lane.b32.xlu0 %v1131, 8
        %v1208 = vpop.permute.xlu0 %1207
        %1209 = vrot.lane.b32.xlu0 %v1133, 8
        %v1210 = vpop.permute.xlu0 %1209
        %1211 = vrot.lane.b32.xlu0 %v1136, 8
        %v1212 = vpop.permute.xlu0 %1211
        %1213 = vrot.lane.b32.xlu0 %v1138, 8
        %v1214 = vpop.permute.xlu0 %1213
        %1215 = vrot.lane.b32.xlu0 %v1141, 8
        %v1216 = vpop.permute.xlu0 %1215
        %1217 = vrot.lane.b32.xlu0 %v1143, 8
        %v1218 = vpop.permute.xlu0 %1217
        %1219 = vrot.lane.b32.xlu0 %v1146, 8
        %v1220 = vpop.permute.xlu0 %1219
        %1221 = vrot.lane.b32.xlu0 %v1148, 8
        %v1222 = vpop.permute.xlu0 %1221
        %1223 = vrot.lane.b32.xlu0 %v1151, 8
        %v1224 = vpop.permute.xlu0 %1223
        %1225 = vrot.lane.b32.xlu0 %v1153, 8
        %v1226 = vpop.permute.xlu0 %1225
        %1227 = vrot.lane.b32.xlu0 %v1156, 8
        %v1228 = vpop.permute.xlu0 %1227
        %1229 = vrot.lane.b32.xlu0 %v1158, 8
        %v1230 = vpop.permute.xlu0 %1229
        %1231 = vrot.lane.b32.xlu0 %v1161, 8
        %v1232 = vpop.permute.xlu0 %1231
        %1233 = vrot.lane.b32.xlu0 %v1163, 8
        %v1234 = vpop.permute.xlu0 %1233
        %1235 = vrot.lane.b32.xlu0 %v1166, 8
        %v1236 = vpop.permute.xlu0 %1235
        %1237 = vrot.lane.b32.xlu0 %v1168, 8
        %v1238 = vpop.permute.xlu0 %1237
        %1239 = vrot.lane.b32.xlu0 %v1171, 8
        %v1240 = vpop.permute.xlu0 %1239
        %1241 = vrot.lane.b32.xlu0 %v1173, 8
        %v1242 = vpop.permute.xlu0 %1241
        %1243 = vrot.lane.b32.xlu0 %v1176, 8
        %v1244 = vpop.permute.xlu0 %1243
        %1245 = vrot.lane.b32.xlu0 %v1178, 8
        %v1246 = vpop.permute.xlu0 %1245
        %1247 = vrot.lane.b32.xlu0 %v1181, 8
        %v1248 = vpop.permute.xlu0 %1247
        %1249 = vrot.lane.b32.xlu0 %v1183, 8
        %v1250 = vpop.permute.xlu0 %1249
        %1251 = vrot.lane.b32.xlu0 %v1186, 8
        %v1252 = vpop.permute.xlu0 %1251
        %1253 = vrot.lane.b32.xlu0 %v1188, 8
        %v1254 = vpop.permute.xlu0 %1253
        %1255 = vrot.lane.b32.xlu0 %v1191, 8
        %v1256 = vpop.permute.xlu0 %1255
        %1257 = vrot.lane.b32.xlu0 %v1193, 8
        %v1258 = vpop.permute.xlu0 %1257
        %1259 = vrot.lane.b32.xlu0 %v1196, 8
        %v1260 = vpop.permute.xlu0 %1259
        %1261 = vrot.lane.b32.xlu0 %v1198, 8
        %v1262 = vpop.permute.xlu0 %1261
        %1296 = vrot.lane.b32.xlu0 %v876, 12
        %v1297 = vpop.permute.xlu0 %1296
        %1298 = vrot.lane.b32.xlu0 %v780, 12
        %v1299 = vpop.permute.xlu0 %1298
        %1300 = vrot.lane.b32.xlu0 %v877, 12
        %v1301 = vpop.permute.xlu0 %1300
        %1302 = vrot.lane.b32.xlu0 %v783, 12
        %v1303 = vpop.permute.xlu0 %1302
        %1304 = vrot.lane.b32.xlu0 %v878, 12
        %v1305 = vpop.permute.xlu0 %1304
        %1306 = vrot.lane.b32.xlu0 %v786, 12
        %v1307 = vpop.permute.xlu0 %1306
        %1308 = vrot.lane.b32.xlu0 %v879, 12
        %v1309 = vpop.permute.xlu0 %1308
        %1310 = vrot.lane.b32.xlu0 %v789, 12
        %v1311 = vpop.permute.xlu0 %1310
        %1312 = vrot.lane.b32.xlu0 %v880, 12
        %v1313 = vpop.permute.xlu0 %1312
        %1314 = vrot.lane.b32.xlu0 %v792, 12
        %v1315 = vpop.permute.xlu0 %1314
        %1316 = vrot.lane.b32.xlu0 %v881, 12
        %v1317 = vpop.permute.xlu0 %1316
        %1318 = vrot.lane.b32.xlu0 %v795, 12
        %v1319 = vpop.permute.xlu0 %1318
        %1320 = vrot.lane.b32.xlu0 %v882, 12
        %v1321 = vpop.permute.xlu0 %1320
        %1322 = vrot.lane.b32.xlu0 %v798, 12
        %v1323 = vpop.permute.xlu0 %1322
        %1324 = vrot.lane.b32.xlu0 %v883, 12
        %v1325 = vpop.permute.xlu0 %1324
        %1326 = vrot.lane.b32.xlu0 %v801, 12
        %v1327 = vpop.permute.xlu0 %1326
        %1328 = vrot.lane.b32.xlu0 %v884, 12
        %v1329 = vpop.permute.xlu0 %1328
        %1330 = vrot.lane.b32.xlu0 %v804, 12
        %v1331 = vpop.permute.xlu0 %1330
        %1332 = vrot.lane.b32.xlu0 %v885, 12
        %v1333 = vpop.permute.xlu0 %1332
        %1334 = vrot.lane.b32.xlu0 %v807, 12
        %v1335 = vpop.permute.xlu0 %1334
        %1336 = vrot.lane.b32.xlu0 %v886, 12
        %v1337 = vpop.permute.xlu0 %1336
        %1338 = vrot.lane.b32.xlu0 %v810, 12
        %v1339 = vpop.permute.xlu0 %1338
        %1340 = vrot.lane.b32.xlu0 %v887, 12
        %v1341 = vpop.permute.xlu0 %1340
        %1342 = vrot.lane.b32.xlu0 %v813, 12
        %v1343 = vpop.permute.xlu0 %1342
        %1344 = vrot.lane.b32.xlu0 %v888, 12
        %v1345 = vpop.permute.xlu0 %1344
        %1346 = vrot.lane.b32.xlu0 %v816, 12
        %v1347 = vpop.permute.xlu0 %1346
        %1348 = vrot.lane.b32.xlu0 %v889, 12
        %v1349 = vpop.permute.xlu0 %1348
        %1350 = vrot.lane.b32.xlu0 %v819, 12
        %v1351 = vpop.permute.xlu0 %1350
        %1352 = vrot.lane.b32.xlu0 %v890, 12
        %v1353 = vpop.permute.xlu0 %1352
        %1354 = vrot.lane.b32.xlu0 %v822, 12
        %v1355 = vpop.permute.xlu0 %1354
        %1356 = vrot.lane.b32.xlu0 %v891, 12
        %v1357 = vpop.permute.xlu0 %1356
        %1358 = vrot.lane.b32.xlu0 %v825, 12
        %v1359 = vpop.permute.xlu0 %1358
        %v1393 = vrot.slane %v891, 1
        %v1394 = vrot.slane %v825, 1
        %v1395 = vsel %vm941, %v1393, %v1394
        %v1396 = vrot.slane %v908, 1
        %v1397 = vsel %vm941, %v1394, %v1396
        %1398 = vrot.lane.b32.xlu0 %v949, 16
        %v1399 = vpop.permute.xlu0 %1398
        %1400 = vrot.lane.b32.xlu0 %v951, 16
        %v1401 = vpop.permute.xlu0 %1400
        %1402 = vrot.lane.b32.xlu0 %v954, 16
        %v1403 = vpop.permute.xlu0 %1402
        %1404 = vrot.lane.b32.xlu0 %v956, 16
        %v1405 = vpop.permute.xlu0 %1404
        %1406 = vrot.lane.b32.xlu0 %v959, 16
        %v1407 = vpop.permute.xlu0 %1406
        %1408 = vrot.lane.b32.xlu0 %v961, 16
        %v1409 = vpop.permute.xlu0 %1408
        %1410 = vrot.lane.b32.xlu0 %v964, 16
        %v1411 = vpop.permute.xlu0 %1410
        %1412 = vrot.lane.b32.xlu0 %v966, 16
        %v1413 = vpop.permute.xlu0 %1412
        %1414 = vrot.lane.b32.xlu0 %v969, 16
        %v1415 = vpop.permute.xlu0 %1414
        %1416 = vrot.lane.b32.xlu0 %v971, 16
        %v1417 = vpop.permute.xlu0 %1416
        %1418 = vrot.lane.b32.xlu0 %v974, 16
        %v1419 = vpop.permute.xlu0 %1418
        %1420 = vrot.lane.b32.xlu0 %v976, 16
        %v1421 = vpop.permute.xlu0 %1420
        %1422 = vrot.lane.b32.xlu0 %v979, 16
        %v1423 = vpop.permute.xlu0 %1422
        %1424 = vrot.lane.b32.xlu0 %v981, 16
        %v1425 = vpop.permute.xlu0 %1424
        %1426 = vrot.lane.b32.xlu0 %v984, 16
        %v1427 = vpop.permute.xlu0 %1426
        %1428 = vrot.lane.b32.xlu0 %v986, 16
        %v1429 = vpop.permute.xlu0 %1428
        %1430 = vrot.lane.b32.xlu0 %v989, 16
        %v1431 = vpop.permute.xlu0 %1430
        %1432 = vrot.lane.b32.xlu0 %v991, 16
        %v1433 = vpop.permute.xlu0 %1432
        %1434 = vrot.lane.b32.xlu0 %v994, 16
        %v1435 = vpop.permute.xlu0 %1434
        %1436 = vrot.lane.b32.xlu0 %v996, 16
        %v1437 = vpop.permute.xlu0 %1436
        %1438 = vrot.lane.b32.xlu0 %v999, 16
        %v1439 = vpop.permute.xlu0 %1438
        %1440 = vrot.lane.b32.xlu0 %v1001, 16
        %v1441 = vpop.permute.xlu0 %1440
        %1442 = vrot.lane.b32.xlu0 %v1004, 16
        %v1443 = vpop.permute.xlu0 %1442
        %1444 = vrot.lane.b32.xlu0 %v1006, 16
        %v1445 = vpop.permute.xlu0 %1444
        %1446 = vrot.lane.b32.xlu0 %v1009, 16
        %v1447 = vpop.permute.xlu0 %1446
        %1448 = vrot.lane.b32.xlu0 %v1011, 16
        %v1449 = vpop.permute.xlu0 %1448
        %1450 = vrot.lane.b32.xlu0 %v1014, 16
        %v1451 = vpop.permute.xlu0 %1450
        %1452 = vrot.lane.b32.xlu0 %v1016, 16
        %v1453 = vpop.permute.xlu0 %1452
        %1454 = vrot.lane.b32.xlu0 %v1019, 16
        %v1455 = vpop.permute.xlu0 %1454
        %1456 = vrot.lane.b32.xlu0 %v1021, 16
        %v1457 = vpop.permute.xlu0 %1456
        %1458 = vrot.lane.b32.xlu0 %v1395, 16
        %v1459 = vpop.permute.xlu0 %1458
        %1460 = vrot.lane.b32.xlu0 %v1397, 16
        %v1461 = vpop.permute.xlu0 %1460
        %v1494 = vrot.slane %v891, 2
        %v1495 = vrot.slane %v825, 2
        %v1496 = vsel %vm1118, %v1494, %v1495
        %v1497 = vrot.slane %v908, 2
        %v1498 = vsel %vm1118, %v1495, %v1497
        %1499 = vrot.lane.b32.xlu0 %v1126, 20
        %v1500 = vpop.permute.xlu0 %1499
        %1501 = vrot.lane.b32.xlu0 %v1128, 20
        %v1502 = vpop.permute.xlu0 %1501
        %1503 = vrot.lane.b32.xlu0 %v1131, 20
        %v1504 = vpop.permute.xlu0 %1503
        %1505 = vrot.lane.b32.xlu0 %v1133, 20
        %v1506 = vpop.permute.xlu0 %1505
        %1507 = vrot.lane.b32.xlu0 %v1136, 20
        %v1508 = vpop.permute.xlu0 %1507
        %1509 = vrot.lane.b32.xlu0 %v1138, 20
        %v1510 = vpop.permute.xlu0 %1509
        %1511 = vrot.lane.b32.xlu0 %v1141, 20
        %v1512 = vpop.permute.xlu0 %1511
        %1513 = vrot.lane.b32.xlu0 %v1143, 20
        %v1514 = vpop.permute.xlu0 %1513
        %1515 = vrot.lane.b32.xlu0 %v1146, 20
        %v1516 = vpop.permute.xlu0 %1515
        %1517 = vrot.lane.b32.xlu0 %v1148, 20
        %v1518 = vpop.permute.xlu0 %1517
        %1519 = vrot.lane.b32.xlu0 %v1151, 20
        %v1520 = vpop.permute.xlu0 %1519
        %1521 = vrot.lane.b32.xlu0 %v1153, 20
        %v1522 = vpop.permute.xlu0 %1521
        %1523 = vrot.lane.b32.xlu0 %v1156, 20
        %v1524 = vpop.permute.xlu0 %1523
        %1525 = vrot.lane.b32.xlu0 %v1158, 20
        %v1526 = vpop.permute.xlu0 %1525
        %1527 = vrot.lane.b32.xlu0 %v1161, 20
        %v1528 = vpop.permute.xlu0 %1527
        %1529 = vrot.lane.b32.xlu0 %v1163, 20
        %v1530 = vpop.permute.xlu0 %1529
        %1531 = vrot.lane.b32.xlu0 %v1166, 20
        %v1532 = vpop.permute.xlu0 %1531
        %1533 = vrot.lane.b32.xlu0 %v1168, 20
        %v1534 = vpop.permute.xlu0 %1533
        %1535 = vrot.lane.b32.xlu0 %v1171, 20
        %v1536 = vpop.permute.xlu0 %1535
        %1537 = vrot.lane.b32.xlu0 %v1173, 20
        %v1538 = vpop.permute.xlu0 %1537
        %1539 = vrot.lane.b32.xlu0 %v1176, 20
        %v1540 = vpop.permute.xlu0 %1539
        %1541 = vrot.lane.b32.xlu0 %v1178, 20
        %v1542 = vpop.permute.xlu0 %1541
        %1543 = vrot.lane.b32.xlu0 %v1181, 20
        %v1544 = vpop.permute.xlu0 %1543
        %1545 = vrot.lane.b32.xlu0 %v1183, 20
        %v1546 = vpop.permute.xlu0 %1545
        %1547 = vrot.lane.b32.xlu0 %v1186, 20
        %v1548 = vpop.permute.xlu0 %1547
        %1549 = vrot.lane.b32.xlu0 %v1188, 20
        %v1550 = vpop.permute.xlu0 %1549
        %1551 = vrot.lane.b32.xlu0 %v1191, 20
        %v1552 = vpop.permute.xlu0 %1551
        %1553 = vrot.lane.b32.xlu0 %v1193, 20
        %v1554 = vpop.permute.xlu0 %1553
        %1555 = vrot.lane.b32.xlu0 %v1196, 20
        %v1556 = vpop.permute.xlu0 %1555
        %1557 = vrot.lane.b32.xlu0 %v1198, 20
        %v1558 = vpop.permute.xlu0 %1557
        %1559 = vrot.lane.b32.xlu0 %v1496, 20
        %v1560 = vpop.permute.xlu0 %1559
        %1561 = vrot.lane.b32.xlu0 %v1498, 20
        %v1562 = vpop.permute.xlu0 %1561
        %1595 = vrot.lane.b32.xlu0 %v877, 24
        %v1596 = vpop.permute.xlu0 %1595
        %1597 = vrot.lane.b32.xlu0 %v783, 24
        %v1598 = vpop.permute.xlu0 %1597
        %1599 = vrot.lane.b32.xlu0 %v878, 24
        %v1600 = vpop.permute.xlu0 %1599
        %1601 = vrot.lane.b32.xlu0 %v786, 24
        %v1602 = vpop.permute.xlu0 %1601
        %1603 = vrot.lane.b32.xlu0 %v879, 24
        %v1604 = vpop.permute.xlu0 %1603
        %1605 = vrot.lane.b32.xlu0 %v789, 24
        %v1606 = vpop.permute.xlu0 %1605
        %1607 = vrot.lane.b32.xlu0 %v880, 24
        %v1608 = vpop.permute.xlu0 %1607
        %1609 = vrot.lane.b32.xlu0 %v792, 24
        %v1610 = vpop.permute.xlu0 %1609
        %1611 = vrot.lane.b32.xlu0 %v881, 24
        %v1612 = vpop.permute.xlu0 %1611
        %1613 = vrot.lane.b32.xlu0 %v795, 24
        %v1614 = vpop.permute.xlu0 %1613
        %1615 = vrot.lane.b32.xlu0 %v882, 24
        %v1616 = vpop.permute.xlu0 %1615
        %1617 = vrot.lane.b32.xlu0 %v798, 24
        %v1618 = vpop.permute.xlu0 %1617
        %1619 = vrot.lane.b32.xlu0 %v883, 24
        %v1620 = vpop.permute.xlu0 %1619
        %1621 = vrot.lane.b32.xlu0 %v801, 24
        %v1622 = vpop.permute.xlu0 %1621
        %1623 = vrot.lane.b32.xlu0 %v884, 24
        %v1624 = vpop.permute.xlu0 %1623
        %1625 = vrot.lane.b32.xlu0 %v804, 24
        %v1626 = vpop.permute.xlu0 %1625
        %1627 = vrot.lane.b32.xlu0 %v885, 24
        %v1628 = vpop.permute.xlu0 %1627
        %1629 = vrot.lane.b32.xlu0 %v807, 24
        %v1630 = vpop.permute.xlu0 %1629
        %1631 = vrot.lane.b32.xlu0 %v886, 24
        %v1632 = vpop.permute.xlu0 %1631
        %1633 = vrot.lane.b32.xlu0 %v810, 24
        %v1634 = vpop.permute.xlu0 %1633
        %1635 = vrot.lane.b32.xlu0 %v887, 24
        %v1636 = vpop.permute.xlu0 %1635
        %1637 = vrot.lane.b32.xlu0 %v813, 24
        %v1638 = vpop.permute.xlu0 %1637
        %1639 = vrot.lane.b32.xlu0 %v888, 24
        %v1640 = vpop.permute.xlu0 %1639
        %1641 = vrot.lane.b32.xlu0 %v816, 24
        %v1642 = vpop.permute.xlu0 %1641
        %1643 = vrot.lane.b32.xlu0 %v889, 24
        %v1644 = vpop.permute.xlu0 %1643
        %1645 = vrot.lane.b32.xlu0 %v819, 24
        %v1646 = vpop.permute.xlu0 %1645
        %1647 = vrot.lane.b32.xlu0 %v890, 24
        %v1648 = vpop.permute.xlu0 %1647
        %1649 = vrot.lane.b32.xlu0 %v822, 24
        %v1650 = vpop.permute.xlu0 %1649
        %1651 = vrot.lane.b32.xlu0 %v891, 24
        %v1652 = vpop.permute.xlu0 %1651
        %1653 = vrot.lane.b32.xlu0 %v825, 24
        %v1654 = vpop.permute.xlu0 %1653
        %1655 = vrot.lane.b32.xlu0 %v875, 24
        %v1656 = vpop.permute.xlu0 %1655
        %1657 = vrot.lane.b32.xlu0 %v777, 24
        %v1658 = vpop.permute.xlu0 %1657
        %1691 = vrot.lane.b32.xlu0 %v954, 28
        %v1692 = vpop.permute.xlu0 %1691
        %1693 = vrot.lane.b32.xlu0 %v956, 28
        %v1694 = vpop.permute.xlu0 %1693
        %1695 = vrot.lane.b32.xlu0 %v959, 28
        %v1696 = vpop.permute.xlu0 %1695
        %1697 = vrot.lane.b32.xlu0 %v961, 28
        %v1698 = vpop.permute.xlu0 %1697
        %1699 = vrot.lane.b32.xlu0 %v964, 28
        %v1700 = vpop.permute.xlu0 %1699
        %1701 = vrot.lane.b32.xlu0 %v966, 28
        %v1702 = vpop.permute.xlu0 %1701
        %1703 = vrot.lane.b32.xlu0 %v969, 28
        %v1704 = vpop.permute.xlu0 %1703
        %1705 = vrot.lane.b32.xlu0 %v971, 28
        %v1706 = vpop.permute.xlu0 %1705
        %1707 = vrot.lane.b32.xlu0 %v974, 28
        %v1708 = vpop.permute.xlu0 %1707
        %1709 = vrot.lane.b32.xlu0 %v976, 28
        %v1710 = vpop.permute.xlu0 %1709
        %1711 = vrot.lane.b32.xlu0 %v979, 28
        %v1712 = vpop.permute.xlu0 %1711
        %1713 = vrot.lane.b32.xlu0 %v981, 28
        %v1714 = vpop.permute.xlu0 %1713
        %1715 = vrot.lane.b32.xlu0 %v984, 28
        %v1716 = vpop.permute.xlu0 %1715
        %1717 = vrot.lane.b32.xlu0 %v986, 28
        %v1718 = vpop.permute.xlu0 %1717
        %1719 = vrot.lane.b32.xlu0 %v989, 28
        %v1720 = vpop.permute.xlu0 %1719
        %1721 = vrot.lane.b32.xlu0 %v991, 28
        %v1722 = vpop.permute.xlu0 %1721
        %1723 = vrot.lane.b32.xlu0 %v994, 28
        %v1724 = vpop.permute.xlu0 %1723
        %1725 = vrot.lane.b32.xlu0 %v996, 28
        %v1726 = vpop.permute.xlu0 %1725
        %1727 = vrot.lane.b32.xlu0 %v999, 28
        %v1728 = vpop.permute.xlu0 %1727
        %1729 = vrot.lane.b32.xlu0 %v1001, 28
        %v1730 = vpop.permute.xlu0 %1729
        %1731 = vrot.lane.b32.xlu0 %v1004, 28
        %v1732 = vpop.permute.xlu0 %1731
        %1733 = vrot.lane.b32.xlu0 %v1006, 28
        %v1734 = vpop.permute.xlu0 %1733
        %1735 = vrot.lane.b32.xlu0 %v1009, 28
        %v1736 = vpop.permute.xlu0 %1735
        %1737 = vrot.lane.b32.xlu0 %v1011, 28
        %v1738 = vpop.permute.xlu0 %1737
        %1739 = vrot.lane.b32.xlu0 %v1014, 28
        %v1740 = vpop.permute.xlu0 %1739
        %1741 = vrot.lane.b32.xlu0 %v1016, 28
        %v1742 = vpop.permute.xlu0 %1741
        %1743 = vrot.lane.b32.xlu0 %v1019, 28
        %v1744 = vpop.permute.xlu0 %1743
        %1745 = vrot.lane.b32.xlu0 %v1021, 28
        %v1746 = vpop.permute.xlu0 %1745
        %1747 = vrot.lane.b32.xlu0 %v1395, 28
        %v1748 = vpop.permute.xlu0 %1747
        %1749 = vrot.lane.b32.xlu0 %v1397, 28
        %v1750 = vpop.permute.xlu0 %1749
        %1751 = vrot.lane.b32.xlu0 %v944, 28
        %v1752 = vpop.permute.xlu0 %1751
        %1753 = vrot.lane.b32.xlu0 %v946, 28
        %v1754 = vpop.permute.xlu0 %1753
        %1787 = vrot.lane.b32.xlu0 %v1131, 32
        %v1788 = vpop.permute.xlu0 %1787
        %1789 = vrot.lane.b32.xlu0 %v1133, 32
        %v1790 = vpop.permute.xlu0 %1789
        %1791 = vrot.lane.b32.xlu0 %v1136, 32
        %v1792 = vpop.permute.xlu0 %1791
        %1793 = vrot.lane.b32.xlu0 %v1138, 32
        %v1794 = vpop.permute.xlu0 %1793
        %1795 = vrot.lane.b32.xlu0 %v1141, 32
        %v1796 = vpop.permute.xlu0 %1795
        %1797 = vrot.lane.b32.xlu0 %v1143, 32
        %v1798 = vpop.permute.xlu0 %1797
        %1799 = vrot.lane.b32.xlu0 %v1146, 32
        %v1800 = vpop.permute.xlu0 %1799
        %1801 = vrot.lane.b32.xlu0 %v1148, 32
        %v1802 = vpop.permute.xlu0 %1801
        %1803 = vrot.lane.b32.xlu0 %v1151, 32
        %v1804 = vpop.permute.xlu0 %1803
        %1805 = vrot.lane.b32.xlu0 %v1153, 32
        %v1806 = vpop.permute.xlu0 %1805
        %1807 = vrot.lane.b32.xlu0 %v1156, 32
        %v1808 = vpop.permute.xlu0 %1807
        %1809 = vrot.lane.b32.xlu0 %v1158, 32
        %v1810 = vpop.permute.xlu0 %1809
        %1811 = vrot.lane.b32.xlu0 %v1161, 32
        %v1812 = vpop.permute.xlu0 %1811
        %1813 = vrot.lane.b32.xlu0 %v1163, 32
        %v1814 = vpop.permute.xlu0 %1813
        %1815 = vrot.lane.b32.xlu0 %v1166, 32
        %v1816 = vpop.permute.xlu0 %1815
        %1817 = vrot.lane.b32.xlu0 %v1168, 32
        %v1818 = vpop.permute.xlu0 %1817
        %1819 = vrot.lane.b32.xlu0 %v1171, 32
        %v1820 = vpop.permute.xlu0 %1819
        %1821 = vrot.lane.b32.xlu0 %v1173, 32
        %v1822 = vpop.permute.xlu0 %1821
        %1823 = vrot.lane.b32.xlu0 %v1176, 32
        %v1824 = vpop.permute.xlu0 %1823
        %1825 = vrot.lane.b32.xlu0 %v1178, 32
        %v1826 = vpop.permute.xlu0 %1825
        %1827 = vrot.lane.b32.xlu0 %v1181, 32
        %v1828 = vpop.permute.xlu0 %1827
        %1829 = vrot.lane.b32.xlu0 %v1183, 32
        %v1830 = vpop.permute.xlu0 %1829
        %1831 = vrot.lane.b32.xlu0 %v1186, 32
        %v1832 = vpop.permute.xlu0 %1831
        %1833 = vrot.lane.b32.xlu0 %v1188, 32
        %v1834 = vpop.permute.xlu0 %1833
        %1835 = vrot.lane.b32.xlu0 %v1191, 32
        %v1836 = vpop.permute.xlu0 %1835
        %1837 = vrot.lane.b32.xlu0 %v1193, 32
        %v1838 = vpop.permute.xlu0 %1837
        %1839 = vrot.lane.b32.xlu0 %v1196, 32
        %v1840 = vpop.permute.xlu0 %1839
        %1841 = vrot.lane.b32.xlu0 %v1198, 32
        %v1842 = vpop.permute.xlu0 %1841
        %1843 = vrot.lane.b32.xlu0 %v1496, 32
        %v1844 = vpop.permute.xlu0 %1843
        %1845 = vrot.lane.b32.xlu0 %v1498, 32
        %v1846 = vpop.permute.xlu0 %1845
        %1847 = vrot.lane.b32.xlu0 %v1121, 32
        %v1848 = vpop.permute.xlu0 %1847
        %1849 = vrot.lane.b32.xlu0 %v1123, 32
        %v1850 = vpop.permute.xlu0 %1849
        %vm1883 = vcmask 31744
        %v1884 = vsel %vm1883, %v875, %v1023
        %v1885 = vsel %vm1883, %v777, %v1025
        %v1886 = vsel %vm1883, %v876, %v1027
        %v1887 = vsel %vm1883, %v780, %v1029
        %v1888 = vsel %vm1883, %v877, %v1031
        %v1889 = vsel %vm1883, %v783, %v1033
        %v1890 = vsel %vm1883, %v878, %v1035
        %v1891 = vsel %vm1883, %v786, %v1037
        %v1892 = vsel %vm1883, %v879, %v1039
        %v1893 = vsel %vm1883, %v789, %v1041
        %v1894 = vsel %vm1883, %v880, %v1043
        %v1895 = vsel %vm1883, %v792, %v1045
        %v1896 = vsel %vm1883, %v881, %v1047
        %v1897 = vsel %vm1883, %v795, %v1049
        %v1898 = vsel %vm1883, %v882, %v1051
        %v1899 = vsel %vm1883, %v798, %v1053
        %v1900 = vsel %vm1883, %v883, %v1055
        %v1901 = vsel %vm1883, %v801, %v1057
        %v1902 = vsel %vm1883, %v884, %v1059
        %v1903 = vsel %vm1883, %v804, %v1061
        %v1904 = vsel %vm1883, %v885, %v1063
        %v1905 = vsel %vm1883, %v807, %v1065
        %v1906 = vsel %vm1883, %v886, %v1067
        %v1907 = vsel %vm1883, %v810, %v1069
        %v1908 = vsel %vm1883, %v887, %v1071
        %v1909 = vsel %vm1883, %v813, %v1073
        %v1910 = vsel %vm1883, %v888, %v1075
        %v1911 = vsel %vm1883, %v816, %v1077
        %v1912 = vsel %vm1883, %v889, %v1079
        %v1913 = vsel %vm1883, %v819, %v1081
        %v1914 = vsel %vm1883, %v890, %v1083
        %v1915 = vsel %vm1883, %v822, %v1085
        %vm1916 = vcmask 64512
        %v1917 = vsel %vm1916, %v1884, %v1200
        %v1918 = vsel %vm1916, %v1885, %v1202
        %v1919 = vsel %vm1916, %v1886, %v1204
        %v1920 = vsel %vm1916, %v1887, %v1206
        %v1921 = vsel %vm1916, %v1888, %v1208
        %v1922 = vsel %vm1916, %v1889, %v1210
        %v1923 = vsel %vm1916, %v1890, %v1212
        %v1924 = vsel %vm1916, %v1891, %v1214
        %v1925 = vsel %vm1916, %v1892, %v1216
        %v1926 = vsel %vm1916, %v1893, %v1218
        %v1927 = vsel %vm1916, %v1894, %v1220
        %v1928 = vsel %vm1916, %v1895, %v1222
        %v1929 = vsel %vm1916, %v1896, %v1224
        %v1930 = vsel %vm1916, %v1897, %v1226
        %v1931 = vsel %vm1916, %v1898, %v1228
        %v1932 = vsel %vm1916, %v1899, %v1230
        %v1933 = vsel %vm1916, %v1900, %v1232
        %v1934 = vsel %vm1916, %v1901, %v1234
        %v1935 = vsel %vm1916, %v1902, %v1236
        %v1936 = vsel %vm1916, %v1903, %v1238
        %v1937 = vsel %vm1916, %v1904, %v1240
        %v1938 = vsel %vm1916, %v1905, %v1242
        %v1939 = vsel %vm1916, %v1906, %v1244
        %v1940 = vsel %vm1916, %v1907, %v1246
        %v1941 = vsel %vm1916, %v1908, %v1248
        %v1942 = vsel %vm1916, %v1909, %v1250
        %v1943 = vsel %vm1916, %v1910, %v1252
        %v1944 = vsel %vm1916, %v1911, %v1254
        %v1945 = vsel %vm1916, %v1912, %v1256
        %v1946 = vsel %vm1916, %v1913, %v1258
        %v1947 = vsel %vm1916, %v1914, %v1260
        %v1948 = vsel %vm1916, %v1915, %v1262
        %vm1949 = vcmask 97280
        %v1950 = vsel %vm1949, %v1917, %v1297
        %v1951 = vsel %vm1949, %v1918, %v1299
        %v1952 = vsel %vm1949, %v1919, %v1301
        %v1953 = vsel %vm1949, %v1920, %v1303
        %v1954 = vsel %vm1949, %v1921, %v1305
        %v1955 = vsel %vm1949, %v1922, %v1307
        %v1956 = vsel %vm1949, %v1923, %v1309
        %v1957 = vsel %vm1949, %v1924, %v1311
        %v1958 = vsel %vm1949, %v1925, %v1313
        %v1959 = vsel %vm1949, %v1926, %v1315
        %v1960 = vsel %vm1949, %v1927, %v1317
        %v1961 = vsel %vm1949, %v1928, %v1319
        %v1962 = vsel %vm1949, %v1929, %v1321
        %v1963 = vsel %vm1949, %v1930, %v1323
        %v1964 = vsel %vm1949, %v1931, %v1325
        %v1965 = vsel %vm1949, %v1932, %v1327
        %v1966 = vsel %vm1949, %v1933, %v1329
        %v1967 = vsel %vm1949, %v1934, %v1331
        %v1968 = vsel %vm1949, %v1935, %v1333
        %v1969 = vsel %vm1949, %v1936, %v1335
        %v1970 = vsel %vm1949, %v1937, %v1337
        %v1971 = vsel %vm1949, %v1938, %v1339
        %v1972 = vsel %vm1949, %v1939, %v1341
        %v1973 = vsel %vm1949, %v1940, %v1343
        %v1974 = vsel %vm1949, %v1941, %v1345
        %v1975 = vsel %vm1949, %v1942, %v1347
        %v1976 = vsel %vm1949, %v1943, %v1349
        %v1977 = vsel %vm1949, %v1944, %v1351
        %v1978 = vsel %vm1949, %v1945, %v1353
        %v1979 = vsel %vm1949, %v1946, %v1355
        %v1980 = vsel %vm1949, %v1947, %v1357
        %v1981 = vsel %vm1949, %v1948, %v1359
        %vm1982 = vcmask 130048
        %v1983 = vsel %vm1982, %v1950, %v1399
        %v1984 = vsel %vm1982, %v1951, %v1401
        %v1985 = vsel %vm1982, %v1952, %v1403
        %v1986 = vsel %vm1982, %v1953, %v1405
        %v1987 = vsel %vm1982, %v1954, %v1407
        %v1988 = vsel %vm1982, %v1955, %v1409
        %v1989 = vsel %vm1982, %v1956, %v1411
        %v1990 = vsel %vm1982, %v1957, %v1413
        %v1991 = vsel %vm1982, %v1958, %v1415
        %v1992 = vsel %vm1982, %v1959, %v1417
        %v1993 = vsel %vm1982, %v1960, %v1419
        %v1994 = vsel %vm1982, %v1961, %v1421
        %v1995 = vsel %vm1982, %v1962, %v1423
        %v1996 = vsel %vm1982, %v1963, %v1425
        %v1997 = vsel %vm1982, %v1964, %v1427
        %v1998 = vsel %vm1982, %v1965, %v1429
        %v1999 = vsel %vm1982, %v1966, %v1431
        %v2000 = vsel %vm1982, %v1967, %v1433
        %v2001 = vsel %vm1982, %v1968, %v1435
        %v2002 = vsel %vm1982, %v1969, %v1437
        %v2003 = vsel %vm1982, %v1970, %v1439
        %v2004 = vsel %vm1982, %v1971, %v1441
        %v2005 = vsel %vm1982, %v1972, %v1443
        %v2006 = vsel %vm1982, %v1973, %v1445
        %v2007 = vsel %vm1982, %v1974, %v1447
        %v2008 = vsel %vm1982, %v1975, %v1449
        %v2009 = vsel %vm1982, %v1976, %v1451
        %v2010 = vsel %vm1982, %v1977, %v1453
        %v2011 = vsel %vm1982, %v1978, %v1455
        %v2012 = vsel %vm1982, %v1979, %v1457
        %v2013 = vsel %vm1982, %v1980, %v1459
        %v2014 = vsel %vm1982, %v1981, %v1461
        %vm2015 = vcmask 162816
        %v2016 = vsel %vm2015, %v1983, %v1500
        %v2017 = vsel %vm2015, %v1984, %v1502
        %v2018 = vsel %vm2015, %v1985, %v1504
        %v2019 = vsel %vm2015, %v1986, %v1506
        %v2020 = vsel %vm2015, %v1987, %v1508
        %v2021 = vsel %vm2015, %v1988, %v1510
        %v2022 = vsel %vm2015, %v1989, %v1512
        %v2023 = vsel %vm2015, %v1990, %v1514
        %v2024 = vsel %vm2015, %v1991, %v1516
        %v2025 = vsel %vm2015, %v1992, %v1518
        %v2026 = vsel %vm2015, %v1993, %v1520
        %v2027 = vsel %vm2015, %v1994, %v1522
        %v2028 = vsel %vm2015, %v1995, %v1524
        %v2029 = vsel %vm2015, %v1996, %v1526
        %v2030 = vsel %vm2015, %v1997, %v1528
        %v2031 = vsel %vm2015, %v1998, %v1530
        %v2032 = vsel %vm2015, %v1999, %v1532
        %v2033 = vsel %vm2015, %v2000, %v1534
        %v2034 = vsel %vm2015, %v2001, %v1536
        %v2035 = vsel %vm2015, %v2002, %v1538
        %v2036 = vsel %vm2015, %v2003, %v1540
        %v2037 = vsel %vm2015, %v2004, %v1542
        %v2038 = vsel %vm2015, %v2005, %v1544
        %v2039 = vsel %vm2015, %v2006, %v1546
        %v2040 = vsel %vm2015, %v2007, %v1548
        %v2041 = vsel %vm2015, %v2008, %v1550
        %v2042 = vsel %vm2015, %v2009, %v1552
        %v2043 = vsel %vm2015, %v2010, %v1554
        %v2044 = vsel %vm2015, %v2011, %v1556
        %v2045 = vsel %vm2015, %v2012, %v1558
        %v2046 = vsel %vm2015, %v2013, %v1560
        %v2047 = vsel %vm2015, %v2014, %v1562
        %vm2048 = vcmask 195584
        %v2049 = vsel %vm2048, %v2016, %v1596
        %v2050 = vsel %vm2048, %v2017, %v1598
        %v2051 = vsel %vm2048, %v2018, %v1600
        %v2052 = vsel %vm2048, %v2019, %v1602
        %v2053 = vsel %vm2048, %v2020, %v1604
        %v2054 = vsel %vm2048, %v2021, %v1606
        %v2055 = vsel %vm2048, %v2022, %v1608
        %v2056 = vsel %vm2048, %v2023, %v1610
        %v2057 = vsel %vm2048, %v2024, %v1612
        %v2058 = vsel %vm2048, %v2025, %v1614
        %v2059 = vsel %vm2048, %v2026, %v1616
        %v2060 = vsel %vm2048, %v2027, %v1618
        %v2061 = vsel %vm2048, %v2028, %v1620
        %v2062 = vsel %vm2048, %v2029, %v1622
        %v2063 = vsel %vm2048, %v2030, %v1624
        %v2064 = vsel %vm2048, %v2031, %v1626
        %v2065 = vsel %vm2048, %v2032, %v1628
        %v2066 = vsel %vm2048, %v2033, %v1630
        %v2067 = vsel %vm2048, %v2034, %v1632
        %v2068 = vsel %vm2048, %v2035, %v1634
        %v2069 = vsel %vm2048, %v2036, %v1636
        %v2070 = vsel %vm2048, %v2037, %v1638
        %v2071 = vsel %vm2048, %v2038, %v1640
        %v2072 = vsel %vm2048, %v2039, %v1642
        %v2073 = vsel %vm2048, %v2040, %v1644
        %v2074 = vsel %vm2048, %v2041, %v1646
        %v2075 = vsel %vm2048, %v2042, %v1648
        %v2076 = vsel %vm2048, %v2043, %v1650
        %v2077 = vsel %vm2048, %v2044, %v1652
        %v2078 = vsel %vm2048, %v2045, %v1654
        %v2079 = vsel %vm2048, %v2046, %v1656
        %v2080 = vsel %vm2048, %v2047, %v1658
        %vm2081 = vcmask 228352
        %v2082 = vsel %vm2081, %v2049, %v1692
        %v2083 = vsel %vm2081, %v2050, %v1694
        %v2084 = vsel %vm2081, %v2051, %v1696
        %v2085 = vsel %vm2081, %v2052, %v1698
        %v2086 = vsel %vm2081, %v2053, %v1700
        %v2087 = vsel %vm2081, %v2054, %v1702
        %v2088 = vsel %vm2081, %v2055, %v1704
        %v2089 = vsel %vm2081, %v2056, %v1706
        %v2090 = vsel %vm2081, %v2057, %v1708
        %v2091 = vsel %vm2081, %v2058, %v1710
        %v2092 = vsel %vm2081, %v2059, %v1712
        %v2093 = vsel %vm2081, %v2060, %v1714
        %v2094 = vsel %vm2081, %v2061, %v1716
        %v2095 = vsel %vm2081, %v2062, %v1718
        %v2096 = vsel %vm2081, %v2063, %v1720
        %v2097 = vsel %vm2081, %v2064, %v1722
        %v2098 = vsel %vm2081, %v2065, %v1724
        %v2099 = vsel %vm2081, %v2066, %v1726
        %v2100 = vsel %vm2081, %v2067, %v1728
        %v2101 = vsel %vm2081, %v2068, %v1730
        %v2102 = vsel %vm2081, %v2069, %v1732
        %v2103 = vsel %vm2081, %v2070, %v1734
        %v2104 = vsel %vm2081, %v2071, %v1736
        %v2105 = vsel %vm2081, %v2072, %v1738
        %v2106 = vsel %vm2081, %v2073, %v1740
        %v2107 = vsel %vm2081, %v2074, %v1742
        %v2108 = vsel %vm2081, %v2075, %v1744
        %v2109 = vsel %vm2081, %v2076, %v1746
        %v2110 = vsel %vm2081, %v2077, %v1748
        %v2111 = vsel %vm2081, %v2078, %v1750
        %v2112 = vsel %vm2081, %v2079, %v1752
        %v2113 = vsel %vm2081, %v2080, %v1754
        %vm2114 = vcmask 261120
        %v2115 = vsel %vm2114, %v2082, %v1788
        %v2116 = vsel %vm2114, %v2083, %v1790
        %v2117 = vsel %vm2114, %v2084, %v1792
        %v2118 = vsel %vm2114, %v2085, %v1794
        %v2119 = vsel %vm2114, %v2086, %v1796
        %v2120 = vsel %vm2114, %v2087, %v1798
        %v2121 = vsel %vm2114, %v2088, %v1800
        %v2122 = vsel %vm2114, %v2089, %v1802
        %v2123 = vsel %vm2114, %v2090, %v1804
        %v2124 = vsel %vm2114, %v2091, %v1806
        %v2125 = vsel %vm2114, %v2092, %v1808
        %v2126 = vsel %vm2114, %v2093, %v1810
        %v2127 = vsel %vm2114, %v2094, %v1812
        %v2128 = vsel %vm2114, %v2095, %v1814
        %v2129 = vsel %vm2114, %v2096, %v1816
        %v2130 = vsel %vm2114, %v2097, %v1818
        %v2131 = vsel %vm2114, %v2098, %v1820
        %v2132 = vsel %vm2114, %v2099, %v1822
        %v2133 = vsel %vm2114, %v2100, %v1824
        %v2134 = vsel %vm2114, %v2101, %v1826
        %v2135 = vsel %vm2114, %v2102, %v1828
        %v2136 = vsel %vm2114, %v2103, %v1830
        %v2137 = vsel %vm2114, %v2104, %v1832
        %v2138 = vsel %vm2114, %v2105, %v1834
        %v2139 = vsel %vm2114, %v2106, %v1836
        %v2140 = vsel %vm2114, %v2107, %v1838
        %v2141 = vsel %vm2114, %v2108, %v1840
        %v2142 = vsel %vm2114, %v2109, %v1842
        %v2143 = vsel %vm2114, %v2110, %v1844
        %v2144 = vsel %vm2114, %v2111, %v1846
        %v2145 = vsel %vm2114, %v2112, %v1848
        %v2146 = vsel %vm2114, %v2113, %v1850
        %v2147 = vpack.c.bf16 %v2116, %v2115
        %v2148 = vpack.c.bf16 %v2118, %v2117
        %v2149 = vpack.c.bf16 %v2120, %v2119
        %v2150 = vpack.c.bf16 %v2122, %v2121
        %v2151 = vpack.c.bf16 %v2124, %v2123
        %v2152 = vpack.c.bf16 %v2126, %v2125
        %v2153 = vpack.c.bf16 %v2128, %v2127
        %v2154 = vpack.c.bf16 %v2130, %v2129
        %v2155 = vpack.c.bf16 %v2132, %v2131
        %v2156 = vpack.c.bf16 %v2134, %v2133
        %v2157 = vpack.c.bf16 %v2136, %v2135
        %v2158 = vpack.c.bf16 %v2138, %v2137
        %v2159 = vpack.c.bf16 %v2140, %v2139
        %v2160 = vpack.c.bf16 %v2142, %v2141
        %v2161 = vpack.c.bf16 %v2144, %v2143
        %v2162 = vpack.c.bf16 %v2146, %v2145
        %v2164 = vlaneseq
        %v2165 = vshrl.u32 %v2164, 7
        %v2166 = vsub.s32 0, %v2165
        %v2167 = vrot.slane %v525, %v2166
        %v2174 = vunpack.c.l.b16 %v520
        %v2175 = vunpack.c.l.b16 %v521
        %v2176 = vunpack.c.l.b16 %v522
        %v2177 = vunpack.c.l.b16 %v523
        %v2178 = vunpack.c.l.b16 %v524
        %v2179 = vpack.c.b16 %v2175, %v2174
        %v2180 = vpack.c.b16 %v2177, %v2176
        %v2181 = vpack.c.b16 %v2178, %v2178
        %vm2184 = vcmask 293888
        %v2186 = vsel %vm2184, %v2147, 0
        %v2189 = vsel %vm2184, %v2148, 0
        %v2192 = vsel %vm2184, %v2149, 0
        %v2195 = vsel %vm2184, %v2150, 0
        %v2198 = vsel %vm2184, %v2151, 0
        %v2201 = vsel %vm2184, %v2152, 0
        %v2204 = vsel %vm2184, %v2153, 0
        %v2207 = vsel %vm2184, %v2154, 0
        %v2210 = vsel %vm2184, %v2155, 0
        %v2213 = vsel %vm2184, %v2156, 0
        %v2216 = vsel %vm2184, %v2157, 0
        %v2219 = vsel %vm2184, %v2158, 0
        %v2222 = vsel %vm2184, %v2159, 0
        %v2225 = vsel %vm2184, %v2160, 0
        %v2228 = vsel %vm2184, %v2161, 0
        %v2231 = vsel %vm2184, %v2162, 0
        %vm2233 = vcmask 1041408
        %v2235 = vsel %vm2233, %v2181, 0
        %2237 = vmatprep.subr.bf16.mxu0 0
        %2238 = vmatpush1.bf16.msra.mxu0 0
        %2239 = vmatprep.subr.bf16.mxu0 0
        %2240 = vmatpush1.bf16.msra.mxu0 0
        %2241 = vmatprep.subr.bf16.mxu0 0
        %2242 = vmatpush1.bf16.msra.mxu0 0
        %2243 = vmatprep.subr.bf16.mxu0 0
        %2244 = vmatpush1.bf16.msra.mxu0 0
        %2245 = vmatprep.subr.bf16.mxu0 0
        %2246 = vmatpush1.bf16.msra.mxu0 0
        %2247 = vmatprep.subr.bf16.mxu0 0
        %2248 = vmatpush1.bf16.msra.mxu0 %v2235
        %2249 = vmatprep.subr.bf16.mxu0 0
        %2250 = vmatpush1.bf16.msra.mxu0 %v2180
        %2251 = vmatprep.subr.bf16.mxu0 0
        %2252 = vmatpush1.bf16.msra.mxu0 %v2179
        %2253 = vmatprep.subr.bf16.mxu0 0
        %2254 = vmatpush2.bf16.msra.mxu0 0
        %2255 = vmatprep.subr.bf16.mxu0 0
        %2256 = vmatpush2.bf16.msra.mxu0 0
        %2257 = vmatprep.subr.bf16.mxu0 0
        %2258 = vmatpush2.bf16.msra.mxu0 0
        %2259 = vmatprep.subr.bf16.mxu0 0
        %2260 = vmatpush2.bf16.msra.mxu0 0
        %2261 = vmatprep.subr.bf16.mxu0 0
        %2262 = vmatpush2.bf16.msra.mxu0 0
        %2263 = vmatprep.subr.bf16.mxu0 0
        %2264 = vmatpush2.bf16.msra.mxu0 0
        %2265 = vmatprep.subr.bf16.mxu0 0
        %2266 = vmatpush2.bf16.msra.mxu0 0
        %2267 = vmatprep.subr.bf16.mxu0 0
        %2268 = vmatpush2.bf16.msra.mxu0 0
        %2269 = vmatprep.mubr.bf16.mxu0 0
        %2270 = vmatmul.mubr.bf16.gmra.mxu0 %v2186
        %v2271 = vpop.f32.mrf.mxu0
        %v2272 = vadd.f32 %v2167, %v2271
        %v2273 = vpop.f32.mrf.mxu0
        %v2274 = vpop.f32.mrf.mxu0
        %v2275 = vadd.f32 %v2167, %v2274
        %v2276 = vpop.f32.mrf.mxu0
        %2277 = vmatprep.mubr.bf16.mxu0 0
        %2278 = vmatmul.mubr.bf16.gmra.mxu0 %v2189
        %v2279 = vpop.f32.mrf.mxu0
        %v2280 = vadd.f32 %v2167, %v2279
        %v2281 = vpop.f32.mrf.mxu0
        %v2282 = vpop.f32.mrf.mxu0
        %v2283 = vadd.f32 %v2167, %v2282
        %v2284 = vpop.f32.mrf.mxu0
        %2285 = vmatprep.mubr.bf16.mxu0 0
        %2286 = vmatmul.mubr.bf16.gmra.mxu0 %v2192
        %v2287 = vpop.f32.mrf.mxu0
        %v2288 = vadd.f32 %v2167, %v2287
        %v2289 = vpop.f32.mrf.mxu0
        %v2290 = vpop.f32.mrf.mxu0
        %v2291 = vadd.f32 %v2167, %v2290
        %v2292 = vpop.f32.mrf.mxu0
        %2293 = vmatprep.mubr.bf16.mxu0 0
        %2294 = vmatmul.mubr.bf16.gmra.mxu0 %v2195
        %v2295 = vpop.f32.mrf.mxu0
        %v2296 = vadd.f32 %v2167, %v2295
        %v2297 = vpop.f32.mrf.mxu0
        %v2298 = vpop.f32.mrf.mxu0
        %v2299 = vadd.f32 %v2167, %v2298
        %v2300 = vpop.f32.mrf.mxu0
        %2301 = vmatprep.mubr.bf16.mxu0 0
        %2302 = vmatmul.mubr.bf16.gmra.mxu0 %v2198
        %v2303 = vpop.f32.mrf.mxu0
        %v2304 = vadd.f32 %v2167, %v2303
        %v2305 = vpop.f32.mrf.mxu0
        %v2306 = vpop.f32.mrf.mxu0
        %v2307 = vadd.f32 %v2167, %v2306
        %v2308 = vpop.f32.mrf.mxu0
        %2309 = vmatprep.mubr.bf16.mxu0 0
        %2310 = vmatmul.mubr.bf16.gmra.mxu0 %v2201
        %v2311 = vpop.f32.mrf.mxu0
        %v2312 = vadd.f32 %v2167, %v2311
        %v2313 = vpop.f32.mrf.mxu0
        %v2314 = vpop.f32.mrf.mxu0
        %v2315 = vadd.f32 %v2167, %v2314
        %v2316 = vpop.f32.mrf.mxu0
        %2317 = vmatprep.mubr.bf16.mxu0 0
        %2318 = vmatmul.mubr.bf16.gmra.mxu0 %v2204
        %v2319 = vpop.f32.mrf.mxu0
        %v2320 = vadd.f32 %v2167, %v2319
        %v2321 = vpop.f32.mrf.mxu0
        %v2322 = vpop.f32.mrf.mxu0
        %v2323 = vadd.f32 %v2167, %v2322
        %v2324 = vpop.f32.mrf.mxu0
        %2325 = vmatprep.mubr.bf16.mxu0 0
        %2326 = vmatmul.mubr.bf16.gmra.mxu0 %v2207
        %v2327 = vpop.f32.mrf.mxu0
        %v2328 = vadd.f32 %v2167, %v2327
        %v2329 = vpop.f32.mrf.mxu0
        %v2330 = vpop.f32.mrf.mxu0
        %v2331 = vadd.f32 %v2167, %v2330
        %v2332 = vpop.f32.mrf.mxu0
        %2333 = vmatprep.mubr.bf16.mxu0 0
        %2334 = vmatmul.mubr.bf16.gmra.mxu0 %v2210
        %v2335 = vpop.f32.mrf.mxu0
        %v2336 = vadd.f32 %v2167, %v2335
        %v2337 = vpop.f32.mrf.mxu0
        %v2338 = vpop.f32.mrf.mxu0
        %v2339 = vadd.f32 %v2167, %v2338
        %v2340 = vpop.f32.mrf.mxu0
        %2341 = vmatprep.mubr.bf16.mxu0 0
        %2342 = vmatmul.mubr.bf16.gmra.mxu0 %v2213
        %v2343 = vpop.f32.mrf.mxu0
        %v2344 = vadd.f32 %v2167, %v2343
        %v2345 = vpop.f32.mrf.mxu0
        %v2346 = vpop.f32.mrf.mxu0
        %v2347 = vadd.f32 %v2167, %v2346
        %v2348 = vpop.f32.mrf.mxu0
        %2349 = vmatprep.mubr.bf16.mxu0 0
        %2350 = vmatmul.mubr.bf16.gmra.mxu0 %v2216
        %v2351 = vpop.f32.mrf.mxu0
        %v2352 = vadd.f32 %v2167, %v2351
        %v2353 = vpop.f32.mrf.mxu0
        %v2354 = vpop.f32.mrf.mxu0
        %v2355 = vadd.f32 %v2167, %v2354
        %v2356 = vpop.f32.mrf.mxu0
        %2357 = vmatprep.mubr.bf16.mxu0 0
        %2358 = vmatmul.mubr.bf16.gmra.mxu0 %v2219
        %v2359 = vpop.f32.mrf.mxu0
        %v2360 = vadd.f32 %v2167, %v2359
        %v2361 = vpop.f32.mrf.mxu0
        %v2362 = vpop.f32.mrf.mxu0
        %v2363 = vadd.f32 %v2167, %v2362
        %v2364 = vpop.f32.mrf.mxu0
        %2365 = vmatprep.mubr.bf16.mxu0 0
        %2366 = vmatmul.mubr.bf16.gmra.mxu0 %v2222
        %v2367 = vpop.f32.mrf.mxu0
        %v2368 = vadd.f32 %v2167, %v2367
        %v2369 = vpop.f32.mrf.mxu0
        %v2370 = vpop.f32.mrf.mxu0
        %v2371 = vadd.f32 %v2167, %v2370
        %v2372 = vpop.f32.mrf.mxu0
        %2373 = vmatprep.mubr.bf16.mxu0 0
        %2374 = vmatmul.mubr.bf16.gmra.mxu0 %v2225
        %v2375 = vpop.f32.mrf.mxu0
        %v2376 = vadd.f32 %v2167, %v2375
        %v2377 = vpop.f32.mrf.mxu0
        %v2378 = vpop.f32.mrf.mxu0
        %v2379 = vadd.f32 %v2167, %v2378
        %v2380 = vpop.f32.mrf.mxu0
        %2381 = vmatprep.mubr.bf16.mxu0 0
        %2382 = vmatmul.mubr.bf16.gmra.mxu0 %v2228
        %v2383 = vpop.f32.mrf.mxu0
        %v2384 = vadd.f32 %v2167, %v2383
        %v2385 = vpop.f32.mrf.mxu0
        %v2386 = vpop.f32.mrf.mxu0
        %v2387 = vadd.f32 %v2167, %v2386
        %v2388 = vpop.f32.mrf.mxu0
        %2389 = vmatprep.mubr.bf16.mxu0 0
        %2390 = vmatmul.mubr.bf16.gmra.mxu0 %v2231
        %v2391 = vpop.f32.mrf.mxu0
        %v2392 = vadd.f32 %v2167, %v2391
        %v2393 = vpop.f32.mrf.mxu0
        %v2394 = vpop.f32.mrf.mxu0
        %v2395 = vadd.f32 %v2167, %v2394
        %v2396 = vpop.f32.mrf.mxu0
        %2397 = vdwg.mxu0
        %v2398 = vpack.c.bf16 %v2275, %v2272
        %v2399 = vpack.c.bf16 %v2283, %v2280
        %v2400 = vpack.c.bf16 %v2291, %v2288
        %v2401 = vpack.c.bf16 %v2299, %v2296
        %v2402 = vpack.c.bf16 %v2307, %v2304
        %v2403 = vpack.c.bf16 %v2315, %v2312
        %v2404 = vpack.c.bf16 %v2323, %v2320
        %v2405 = vpack.c.bf16 %v2331, %v2328
        %v2406 = vpack.c.bf16 %v2339, %v2336
        %v2407 = vpack.c.bf16 %v2347, %v2344
        %v2408 = vpack.c.bf16 %v2355, %v2352
        %v2409 = vpack.c.bf16 %v2363, %v2360
        %v2410 = vpack.c.bf16 %v2371, %v2368
        %v2411 = vpack.c.bf16 %v2379, %v2376
        %v2412 = vpack.c.bf16 %v2387, %v2384
        %v2413 = vpack.c.bf16 %v2395, %v2392
        %v2416 = vunpack.c.l.b16 %v564
        %v2417 = vunpack.c.l.b16 %v565
        %v2418 = vpack.c.b16 %v2417, %v2416
        %v2421 = vsel %vm1982, %v2398, 0
        %v2424 = vsel %vm1982, %v2399, 0
        %v2427 = vsel %vm1982, %v2400, 0
        %v2430 = vsel %vm1982, %v2401, 0
        %v2433 = vsel %vm1982, %v2402, 0
        %v2436 = vsel %vm1982, %v2403, 0
        %v2439 = vsel %vm1982, %v2404, 0
        %v2442 = vsel %vm1982, %v2405, 0
        %v2445 = vsel %vm1982, %v2406, 0
        %v2448 = vsel %vm1982, %v2407, 0
        %v2451 = vsel %vm1982, %v2408, 0
        %v2454 = vsel %vm1982, %v2409, 0
        %v2457 = vsel %vm1982, %v2410, 0
        %v2460 = vsel %vm1982, %v2411, 0
        %v2463 = vsel %vm1982, %v2412, 0
        %v2466 = vsel %vm1982, %v2413, 0
        %2468 = vmatprep.subr.bf16.mxu0 0
        %2469 = vmatpush1.bf16.msra.mxu0 0
        %2470 = vmatprep.subr.bf16.mxu0 0
        %2471 = vmatpush1.bf16.msra.mxu0 0
        %2472 = vmatprep.subr.bf16.mxu0 0
        %2473 = vmatpush1.bf16.msra.mxu0 0
        %2474 = vmatprep.subr.bf16.mxu0 0
        %2475 = vmatpush1.bf16.msra.mxu0 0
        %2476 = vmatprep.subr.bf16.mxu0 0
        %2477 = vmatpush1.bf16.msra.mxu0 0
        %2478 = vmatprep.subr.bf16.mxu0 0
        %2479 = vmatpush1.bf16.msra.mxu0 0
        %2480 = vmatprep.subr.bf16.mxu0 0
        %2481 = vmatpush1.bf16.msra.mxu0 0
        %2482 = vmatprep.subr.bf16.mxu0 0
        %2483 = vmatpush1.bf16.msra.mxu0 %v2418
        %2484 = vmatprep.subr.bf16.mxu0 0
        %2485 = vmatpush2.bf16.msra.mxu0 0
        %2486 = vmatprep.subr.bf16.mxu0 0
        %2487 = vmatpush2.bf16.msra.mxu0 0
        %2488 = vmatprep.subr.bf16.mxu0 0
        %2489 = vmatpush2.bf16.msra.mxu0 0
        %2490 = vmatprep.subr.bf16.mxu0 0
        %2491 = vmatpush2.bf16.msra.mxu0 0
        %2492 = vmatprep.subr.bf16.mxu0 0
        %2493 = vmatpush2.bf16.msra.mxu0 0
        %2494 = vmatprep.subr.bf16.mxu0 0
        %2495 = vmatpush2.bf16.msra.mxu0 0
        %2496 = vmatprep.subr.bf16.mxu0 0
        %2497 = vmatpush2.bf16.msra.mxu0 0
        %2498 = vmatprep.subr.bf16.mxu0 0
        %2499 = vmatpush2.bf16.msra.mxu0 0
        %2500 = vmatprep.mubr.bf16.mxu0 0
        %2501 = vmatmul.mubr.bf16.gmra.mxu0 %v2421
        %v2502 = vpop.f32.mrf.mxu0
        %v2503 = vadd.f32 0.0, %v2502
        %v2504 = vpop.f32.mrf.mxu0
        %v2505 = vpop.f32.mrf.mxu0
        %v2506 = vadd.f32 0.0, %v2505
        %v2507 = vpop.f32.mrf.mxu0
        %2508 = vmatprep.mubr.bf16.mxu0 0
        %2509 = vmatmul.mubr.bf16.gmra.mxu0 %v2424
        %v2510 = vpop.f32.mrf.mxu0
        %v2511 = vadd.f32 0.0, %v2510
        %v2512 = vpop.f32.mrf.mxu0
        %v2513 = vpop.f32.mrf.mxu0
        %v2514 = vadd.f32 0.0, %v2513
        %v2515 = vpop.f32.mrf.mxu0
        %2516 = vmatprep.mubr.bf16.mxu0 0
        %2517 = vmatmul.mubr.bf16.gmra.mxu0 %v2427
        %v2518 = vpop.f32.mrf.mxu0
        %v2519 = vadd.f32 0.0, %v2518
        %v2520 = vpop.f32.mrf.mxu0
        %v2521 = vpop.f32.mrf.mxu0
        %v2522 = vadd.f32 0.0, %v2521
        %v2523 = vpop.f32.mrf.mxu0
        %2524 = vmatprep.mubr.bf16.mxu0 0
        %2525 = vmatmul.mubr.bf16.gmra.mxu0 %v2430
        %v2526 = vpop.f32.mrf.mxu0
        %v2527 = vadd.f32 0.0, %v2526
        %v2528 = vpop.f32.mrf.mxu0
        %v2529 = vpop.f32.mrf.mxu0
        %v2530 = vadd.f32 0.0, %v2529
        %v2531 = vpop.f32.mrf.mxu0
        %2532 = vmatprep.mubr.bf16.mxu0 0
        %2533 = vmatmul.mubr.bf16.gmra.mxu0 %v2433
        %v2534 = vpop.f32.mrf.mxu0
        %v2535 = vadd.f32 0.0, %v2534
        %v2536 = vpop.f32.mrf.mxu0
        %v2537 = vpop.f32.mrf.mxu0
        %v2538 = vadd.f32 0.0, %v2537
        %v2539 = vpop.f32.mrf.mxu0
        %2540 = vmatprep.mubr.bf16.mxu0 0
        %2541 = vmatmul.mubr.bf16.gmra.mxu0 %v2436
        %v2542 = vpop.f32.mrf.mxu0
        %v2543 = vadd.f32 0.0, %v2542
        %v2544 = vpop.f32.mrf.mxu0
        %v2545 = vpop.f32.mrf.mxu0
        %v2546 = vadd.f32 0.0, %v2545
        %v2547 = vpop.f32.mrf.mxu0
        %2548 = vmatprep.mubr.bf16.mxu0 0
        %2549 = vmatmul.mubr.bf16.gmra.mxu0 %v2439
        %v2550 = vpop.f32.mrf.mxu0
        %v2551 = vadd.f32 0.0, %v2550
        %v2552 = vpop.f32.mrf.mxu0
        %v2553 = vpop.f32.mrf.mxu0
        %v2554 = vadd.f32 0.0, %v2553
        %v2555 = vpop.f32.mrf.mxu0
        %2556 = vmatprep.mubr.bf16.mxu0 0
        %2557 = vmatmul.mubr.bf16.gmra.mxu0 %v2442
        %v2558 = vpop.f32.mrf.mxu0
        %v2559 = vadd.f32 0.0, %v2558
        %v2560 = vpop.f32.mrf.mxu0
        %v2561 = vpop.f32.mrf.mxu0
        %v2562 = vadd.f32 0.0, %v2561
        %v2563 = vpop.f32.mrf.mxu0
        %2564 = vmatprep.mubr.bf16.mxu0 0
        %2565 = vmatmul.mubr.bf16.gmra.mxu0 %v2445
        %v2566 = vpop.f32.mrf.mxu0
        %v2567 = vadd.f32 0.0, %v2566
        %v2568 = vpop.f32.mrf.mxu0
        %v2569 = vpop.f32.mrf.mxu0
        %v2570 = vadd.f32 0.0, %v2569
        %v2571 = vpop.f32.mrf.mxu0
        %2572 = vmatprep.mubr.bf16.mxu0 0
        %2573 = vmatmul.mubr.bf16.gmra.mxu0 %v2448
        %v2574 = vpop.f32.mrf.mxu0
        %v2575 = vadd.f32 0.0, %v2574
        %v2576 = vpop.f32.mrf.mxu0
        %v2577 = vpop.f32.mrf.mxu0
        %v2578 = vadd.f32 0.0, %v2577
        %v2579 = vpop.f32.mrf.mxu0
        %2580 = vmatprep.mubr.bf16.mxu0 0
        %2581 = vmatmul.mubr.bf16.gmra.mxu0 %v2451
        %v2582 = vpop.f32.mrf.mxu0
        %v2583 = vadd.f32 0.0, %v2582
        %v2584 = vpop.f32.mrf.mxu0
        %v2585 = vpop.f32.mrf.mxu0
        %v2586 = vadd.f32 0.0, %v2585
        %v2587 = vpop.f32.mrf.mxu0
        %2588 = vmatprep.mubr.bf16.mxu0 0
        %2589 = vmatmul.mubr.bf16.gmra.mxu0 %v2454
        %v2590 = vpop.f32.mrf.mxu0
        %v2591 = vadd.f32 0.0, %v2590
        %v2592 = vpop.f32.mrf.mxu0
        %v2593 = vpop.f32.mrf.mxu0
        %v2594 = vadd.f32 0.0, %v2593
        %v2595 = vpop.f32.mrf.mxu0
        %2596 = vmatprep.mubr.bf16.mxu0 0
        %2597 = vmatmul.mubr.bf16.gmra.mxu0 %v2457
        %v2598 = vpop.f32.mrf.mxu0
        %v2599 = vadd.f32 0.0, %v2598
        %v2600 = vpop.f32.mrf.mxu0
        %v2601 = vpop.f32.mrf.mxu0
        %v2602 = vadd.f32 0.0, %v2601
        %v2603 = vpop.f32.mrf.mxu0
        %2604 = vmatprep.mubr.bf16.mxu0 0
        %2605 = vmatmul.mubr.bf16.gmra.mxu0 %v2460
        %v2606 = vpop.f32.mrf.mxu0
        %v2607 = vadd.f32 0.0, %v2606
        %v2608 = vpop.f32.mrf.mxu0
        %v2609 = vpop.f32.mrf.mxu0
        %v2610 = vadd.f32 0.0, %v2609
        %v2611 = vpop.f32.mrf.mxu0
        %2612 = vmatprep.mubr.bf16.mxu0 0
        %2613 = vmatmul.mubr.bf16.gmra.mxu0 %v2463
        %v2614 = vpop.f32.mrf.mxu0
        %v2615 = vadd.f32 0.0, %v2614
        %v2616 = vpop.f32.mrf.mxu0
        %v2617 = vpop.f32.mrf.mxu0
        %v2618 = vadd.f32 0.0, %v2617
        %v2619 = vpop.f32.mrf.mxu0
        %2620 = vmatprep.mubr.bf16.mxu0 0
        %2621 = vmatmul.mubr.bf16.gmra.mxu0 %v2466
        %v2622 = vpop.f32.mrf.mxu0
        %v2623 = vadd.f32 0.0, %v2622
        %v2624 = vpop.f32.mrf.mxu0
        %v2625 = vpop.f32.mrf.mxu0
        %v2626 = vadd.f32 0.0, %v2625
        %v2627 = vpop.f32.mrf.mxu0
        %2628 = vdwg.mxu0
        %v2629 = vadd.f32 %v2503, %v2511
        %v2630 = vadd.f32 %v2506, %v2514
        %v2631 = vadd.f32 %v2519, %v2527
        %v2632 = vadd.f32 %v2522, %v2530
        %v2633 = vadd.f32 %v2535, %v2543
        %v2634 = vadd.f32 %v2538, %v2546
        %v2635 = vadd.f32 %v2551, %v2559
        %v2636 = vadd.f32 %v2554, %v2562
        %v2637 = vadd.f32 %v2567, %v2575
        %v2638 = vadd.f32 %v2570, %v2578
        %v2639 = vadd.f32 %v2583, %v2591
        %v2640 = vadd.f32 %v2586, %v2594
        %v2641 = vadd.f32 %v2599, %v2607
        %v2642 = vadd.f32 %v2602, %v2610
        %v2643 = vadd.f32 %v2615, %v2623
        %v2644 = vadd.f32 %v2618, %v2626
        %v2661 = vcombine.high %v2629, %v2629
        %v2663 = vunpack.c.l.s4 1983009808
        %v2664 = vunpack.c.0.s8 %v2663
        %v2665 = vlaneseq
        %v2666 = vshrl.u32 %v2665, 7
        %v2667 = vsub.s32 %v2664, %v2666
        %v2668 = vrot.slane %v2629, %v2667
        %v2670 = vunpack.c.l.s4 1983009808
        %v2671 = vunpack.c.0.s8 %v2670
        %v2672 = vlaneseq
        %v2673 = vshrl.u32 %v2672, 7
        %v2674 = vsub.s32 %v2671, %v2673
        %v2675 = vrot.slane %v2661, %v2674
        %v2676 = vcombine.high %v2668, %v2668
        %v2677 = vcombine.high %v2675, %v2675
        %v2678 = vcombine.high %v2630, %v2630
        %v2680 = vunpack.c.l.s4 1983009808
        %v2681 = vunpack.c.0.s8 %v2680
        %v2682 = vlaneseq
        %v2683 = vshrl.u32 %v2682, 7
        %v2684 = vsub.s32 %v2681, %v2683
        %v2685 = vrot.slane %v2630, %v2684
        %v2687 = vunpack.c.l.s4 1983009808
        %v2688 = vunpack.c.0.s8 %v2687
        %v2689 = vlaneseq
        %v2690 = vshrl.u32 %v2689, 7
        %v2691 = vsub.s32 %v2688, %v2690
        %v2692 = vrot.slane %v2678, %v2691
        %v2693 = vcombine.high %v2685, %v2685
        %v2694 = vcombine.high %v2692, %v2692
        %v2695 = vcombine.high %v2631, %v2631
        %v2697 = vunpack.c.l.s4 1983009808
        %v2698 = vunpack.c.0.s8 %v2697
        %v2699 = vlaneseq
        %v2700 = vshrl.u32 %v2699, 7
        %v2701 = vsub.s32 %v2698, %v2700
        %v2702 = vrot.slane %v2631, %v2701
        %v2704 = vunpack.c.l.s4 1983009808
        %v2705 = vunpack.c.0.s8 %v2704
        %v2706 = vlaneseq
        %v2707 = vshrl.u32 %v2706, 7
        %v2708 = vsub.s32 %v2705, %v2707
        %v2709 = vrot.slane %v2695, %v2708
        %v2710 = vcombine.high %v2702, %v2702
        %v2711 = vcombine.high %v2709, %v2709
        %v2712 = vcombine.high %v2632, %v2632
        %v2714 = vunpack.c.l.s4 1983009808
        %v2715 = vunpack.c.0.s8 %v2714
        %v2716 = vlaneseq
        %v2717 = vshrl.u32 %v2716, 7
        %v2718 = vsub.s32 %v2715, %v2717
        %v2719 = vrot.slane %v2632, %v2718
        %v2721 = vunpack.c.l.s4 1983009808
        %v2722 = vunpack.c.0.s8 %v2721
        %v2723 = vlaneseq
        %v2724 = vshrl.u32 %v2723, 7
        %v2725 = vsub.s32 %v2722, %v2724
        %v2726 = vrot.slane %v2712, %v2725
        %v2727 = vcombine.high %v2719, %v2719
        %v2728 = vcombine.high %v2726, %v2726
        %v2729 = vcombine.high %v2633, %v2633
        %v2731 = vunpack.c.l.s4 1983009808
        %v2732 = vunpack.c.0.s8 %v2731
        %v2733 = vlaneseq
        %v2734 = vshrl.u32 %v2733, 7
        %v2735 = vsub.s32 %v2732, %v2734
        %v2736 = vrot.slane %v2633, %v2735
        %v2738 = vunpack.c.l.s4 1983009808
        %v2739 = vunpack.c.0.s8 %v2738
        %v2740 = vlaneseq
        %v2741 = vshrl.u32 %v2740, 7
        %v2742 = vsub.s32 %v2739, %v2741
        %v2743 = vrot.slane %v2729, %v2742
        %v2744 = vcombine.high %v2736, %v2736
        %v2745 = vcombine.high %v2743, %v2743
        %v2746 = vcombine.high %v2634, %v2634
        %v2748 = vunpack.c.l.s4 1983009808
        %v2749 = vunpack.c.0.s8 %v2748
        %v2750 = vlaneseq
        %v2751 = vshrl.u32 %v2750, 7
        %v2752 = vsub.s32 %v2749, %v2751
        %v2753 = vrot.slane %v2634, %v2752
        %v2755 = vunpack.c.l.s4 1983009808
        %v2756 = vunpack.c.0.s8 %v2755
        %v2757 = vlaneseq
        %v2758 = vshrl.u32 %v2757, 7
        %v2759 = vsub.s32 %v2756, %v2758
        %v2760 = vrot.slane %v2746, %v2759
        %v2761 = vcombine.high %v2753, %v2753
        %v2762 = vcombine.high %v2760, %v2760
        %v2763 = vcombine.high %v2635, %v2635
        %v2765 = vunpack.c.l.s4 1983009808
        %v2766 = vunpack.c.0.s8 %v2765
        %v2767 = vlaneseq
        %v2768 = vshrl.u32 %v2767, 7
        %v2769 = vsub.s32 %v2766, %v2768
        %v2770 = vrot.slane %v2635, %v2769
        %v2772 = vunpack.c.l.s4 1983009808
        %v2773 = vunpack.c.0.s8 %v2772
        %v2774 = vlaneseq
        %v2775 = vshrl.u32 %v2774, 7
        %v2776 = vsub.s32 %v2773, %v2775
        %v2777 = vrot.slane %v2763, %v2776
        %v2778 = vcombine.high %v2770, %v2770
        %v2779 = vcombine.high %v2777, %v2777
        %v2780 = vcombine.high %v2636, %v2636
        %v2782 = vunpack.c.l.s4 1983009808
        %v2783 = vunpack.c.0.s8 %v2782
        %v2784 = vlaneseq
        %v2785 = vshrl.u32 %v2784, 7
        %v2786 = vsub.s32 %v2783, %v2785
        %v2787 = vrot.slane %v2636, %v2786
        %v2789 = vunpack.c.l.s4 1983009808
        %v2790 = vunpack.c.0.s8 %v2789
        %v2791 = vlaneseq
        %v2792 = vshrl.u32 %v2791, 7
        %v2793 = vsub.s32 %v2790, %v2792
        %v2794 = vrot.slane %v2780, %v2793
        %v2795 = vcombine.high %v2787, %v2787
        %v2796 = vcombine.high %v2794, %v2794
        %v2797 = vcombine.high %v2637, %v2637
        %v2799 = vunpack.c.l.s4 1983009808
        %v2800 = vunpack.c.0.s8 %v2799
        %v2801 = vlaneseq
        %v2802 = vshrl.u32 %v2801, 7
        %v2803 = vsub.s32 %v2800, %v2802
        %v2804 = vrot.slane %v2637, %v2803
        %v2806 = vunpack.c.l.s4 1983009808
        %v2807 = vunpack.c.0.s8 %v2806
        %v2808 = vlaneseq
        %v2809 = vshrl.u32 %v2808, 7
        %v2810 = vsub.s32 %v2807, %v2809
        %v2811 = vrot.slane %v2797, %v2810
        %v2812 = vcombine.high %v2804, %v2804
        %v2813 = vcombine.high %v2811, %v2811
        %v2814 = vcombine.high %v2638, %v2638
        %v2816 = vunpack.c.l.s4 1983009808
        %v2817 = vunpack.c.0.s8 %v2816
        %v2818 = vlaneseq
        %v2819 = vshrl.u32 %v2818, 7
        %v2820 = vsub.s32 %v2817, %v2819
        %v2821 = vrot.slane %v2638, %v2820
        %v2823 = vunpack.c.l.s4 1983009808
        %v2824 = vunpack.c.0.s8 %v2823
        %v2825 = vlaneseq
        %v2826 = vshrl.u32 %v2825, 7
        %v2827 = vsub.s32 %v2824, %v2826
        %v2828 = vrot.slane %v2814, %v2827
        %v2829 = vcombine.high %v2821, %v2821
        %v2830 = vcombine.high %v2828, %v2828
        %v2831 = vcombine.high %v2639, %v2639
        %v2833 = vunpack.c.l.s4 1983009808
        %v2834 = vunpack.c.0.s8 %v2833
        %v2835 = vlaneseq
        %v2836 = vshrl.u32 %v2835, 7
        %v2837 = vsub.s32 %v2834, %v2836
        %v2838 = vrot.slane %v2639, %v2837
        %v2840 = vunpack.c.l.s4 1983009808
        %v2841 = vunpack.c.0.s8 %v2840
        %v2842 = vlaneseq
        %v2843 = vshrl.u32 %v2842, 7
        %v2844 = vsub.s32 %v2841, %v2843
        %v2845 = vrot.slane %v2831, %v2844
        %v2846 = vcombine.high %v2838, %v2838
        %v2847 = vcombine.high %v2845, %v2845
        %v2848 = vcombine.high %v2640, %v2640
        %v2850 = vunpack.c.l.s4 1983009808
        %v2851 = vunpack.c.0.s8 %v2850
        %v2852 = vlaneseq
        %v2853 = vshrl.u32 %v2852, 7
        %v2854 = vsub.s32 %v2851, %v2853
        %v2855 = vrot.slane %v2640, %v2854
        %v2857 = vunpack.c.l.s4 1983009808
        %v2858 = vunpack.c.0.s8 %v2857
        %v2859 = vlaneseq
        %v2860 = vshrl.u32 %v2859, 7
        %v2861 = vsub.s32 %v2858, %v2860
        %v2862 = vrot.slane %v2848, %v2861
        %v2863 = vcombine.high %v2855, %v2855
        %v2864 = vcombine.high %v2862, %v2862
        %v2865 = vcombine.high %v2641, %v2641
        %v2867 = vunpack.c.l.s4 1983009808
        %v2868 = vunpack.c.0.s8 %v2867
        %v2869 = vlaneseq
        %v2870 = vshrl.u32 %v2869, 7
        %v2871 = vsub.s32 %v2868, %v2870
        %v2872 = vrot.slane %v2641, %v2871
        %v2874 = vunpack.c.l.s4 1983009808
        %v2875 = vunpack.c.0.s8 %v2874
        %v2876 = vlaneseq
        %v2877 = vshrl.u32 %v2876, 7
        %v2878 = vsub.s32 %v2875, %v2877
        %v2879 = vrot.slane %v2865, %v2878
        %v2880 = vcombine.high %v2872, %v2872
        %v2881 = vcombine.high %v2879, %v2879
        %v2882 = vcombine.high %v2642, %v2642
        %v2884 = vunpack.c.l.s4 1983009808
        %v2885 = vunpack.c.0.s8 %v2884
        %v2886 = vlaneseq
        %v2887 = vshrl.u32 %v2886, 7
        %v2888 = vsub.s32 %v2885, %v2887
        %v2889 = vrot.slane %v2642, %v2888
        %v2891 = vunpack.c.l.s4 1983009808
        %v2892 = vunpack.c.0.s8 %v2891
        %v2893 = vlaneseq
        %v2894 = vshrl.u32 %v2893, 7
        %v2895 = vsub.s32 %v2892, %v2894
        %v2896 = vrot.slane %v2882, %v2895
        %v2897 = vcombine.high %v2889, %v2889
        %v2898 = vcombine.high %v2896, %v2896
        %v2899 = vcombine.high %v2643, %v2643
        %v2901 = vunpack.c.l.s4 1983009808
        %v2902 = vunpack.c.0.s8 %v2901
        %v2903 = vlaneseq
        %v2904 = vshrl.u32 %v2903, 7
        %v2905 = vsub.s32 %v2902, %v2904
        %v2906 = vrot.slane %v2643, %v2905
        %v2908 = vunpack.c.l.s4 1983009808
        %v2909 = vunpack.c.0.s8 %v2908
        %v2910 = vlaneseq
        %v2911 = vshrl.u32 %v2910, 7
        %v2912 = vsub.s32 %v2909, %v2911
        %v2913 = vrot.slane %v2899, %v2912
        %v2914 = vcombine.high %v2906, %v2906
        %v2915 = vcombine.high %v2913, %v2913
        %v2916 = vcombine.high %v2644, %v2644
        %v2918 = vunpack.c.l.s4 1983009808
        %v2919 = vunpack.c.0.s8 %v2918
        %v2920 = vlaneseq
        %v2921 = vshrl.u32 %v2920, 7
        %v2922 = vsub.s32 %v2919, %v2921
        %v2923 = vrot.slane %v2644, %v2922
        %v2925 = vunpack.c.l.s4 1983009808
        %v2926 = vunpack.c.0.s8 %v2925
        %v2927 = vlaneseq
        %v2928 = vshrl.u32 %v2927, 7
        %v2929 = vsub.s32 %v2926, %v2928
        %v2930 = vrot.slane %v2916, %v2929
        %v2931 = vcombine.high %v2923, %v2923
        %v2932 = vcombine.high %v2930, %v2930
        %v2997 = vrot.slane %v2668, 7
        %v2998 = vrot.slane %v2997, 2
        %v2999 = vrot.slane %v2676, 7
        %v3000 = vrot.slane %v2999, 2
        %v3001 = vrot.slane %v2675, 7
        %v3002 = vrot.slane %v3001, 2
        %v3003 = vrot.slane %v2677, 7
        %v3004 = vrot.slane %v3003, 2
        %v3005 = vrot.slane %v2685, 7
        %v3006 = vrot.slane %v3005, 2
        %v3007 = vrot.slane %v2693, 7
        %v3008 = vrot.slane %v3007, 2
        %v3009 = vrot.slane %v2692, 7
        %v3010 = vrot.slane %v3009, 2
        %v3011 = vrot.slane %v2694, 7
        %v3012 = vrot.slane %v3011, 2
        %v3013 = vrot.slane %v2702, 7
        %v3014 = vrot.slane %v3013, 2
        %v3015 = vrot.slane %v2710, 7
        %v3016 = vrot.slane %v3015, 2
        %v3017 = vrot.slane %v2709, 7
        %v3018 = vrot.slane %v3017, 2
        %v3019 = vrot.slane %v2711, 7
        %v3020 = vrot.slane %v3019, 2
        %v3021 = vrot.slane %v2719, 7
        %v3022 = vrot.slane %v3021, 2
        %v3023 = vrot.slane %v2727, 7
        %v3024 = vrot.slane %v3023, 2
        %v3025 = vrot.slane %v2726, 7
        %v3026 = vrot.slane %v3025, 2
        %v3027 = vrot.slane %v2728, 7
        %v3028 = vrot.slane %v3027, 2
        %v3029 = vrot.slane %v2736, 7
        %v3030 = vrot.slane %v3029, 2
        %v3031 = vrot.slane %v2744, 7
        %v3032 = vrot.slane %v3031, 2
        %v3033 = vrot.slane %v2743, 7
        %v3034 = vrot.slane %v3033, 2
        %v3035 = vrot.slane %v2745, 7
        %v3036 = vrot.slane %v3035, 2
        %v3037 = vrot.slane %v2753, 7
        %v3038 = vrot.slane %v3037, 2
        %v3039 = vrot.slane %v2761, 7
        %v3040 = vrot.slane %v3039, 2
        %v3041 = vrot.slane %v2760, 7
        %v3042 = vrot.slane %v3041, 2
        %v3043 = vrot.slane %v2762, 7
        %v3044 = vrot.slane %v3043, 2
        %v3045 = vrot.slane %v2770, 7
        %v3046 = vrot.slane %v3045, 2
        %v3047 = vrot.slane %v2778, 7
        %v3048 = vrot.slane %v3047, 2
        %v3049 = vrot.slane %v2777, 7
        %v3050 = vrot.slane %v3049, 2
        %v3051 = vrot.slane %v2779, 7
        %v3052 = vrot.slane %v3051, 2
        %v3053 = vrot.slane %v2787, 7
        %v3054 = vrot.slane %v3053, 2
        %v3055 = vrot.slane %v2795, 7
        %v3056 = vrot.slane %v3055, 2
        %v3057 = vrot.slane %v2794, 7
        %v3058 = vrot.slane %v3057, 2
        %v3059 = vrot.slane %v2796, 7
        %v3060 = vrot.slane %v3059, 2
        %v3061 = vrot.slane %v2804, 7
        %v3062 = vrot.slane %v3061, 2
        %v3063 = vrot.slane %v2812, 7
        %v3064 = vrot.slane %v3063, 2
        %v3065 = vrot.slane %v2811, 7
        %v3066 = vrot.slane %v3065, 2
        %v3067 = vrot.slane %v2813, 7
        %v3068 = vrot.slane %v3067, 2
        %v3069 = vrot.slane %v2821, 7
        %v3070 = vrot.slane %v3069, 2
        %v3071 = vrot.slane %v2829, 7
        %v3072 = vrot.slane %v3071, 2
        %v3073 = vrot.slane %v2828, 7
        %v3074 = vrot.slane %v3073, 2
        %v3075 = vrot.slane %v2830, 7
        %v3076 = vrot.slane %v3075, 2
        %v3077 = vrot.slane %v2838, 7
        %v3078 = vrot.slane %v3077, 2
        %v3079 = vrot.slane %v2846, 7
        %v3080 = vrot.slane %v3079, 2
        %v3081 = vrot.slane %v2845, 7
        %v3082 = vrot.slane %v3081, 2
        %v3083 = vrot.slane %v2847, 7
        %v3084 = vrot.slane %v3083, 2
        %v3085 = vrot.slane %v2855, 7
        %v3086 = vrot.slane %v3085, 2
        %v3087 = vrot.slane %v2863, 7
        %v3088 = vrot.slane %v3087, 2
        %v3089 = vrot.slane %v2862, 7
        %v3090 = vrot.slane %v3089, 2
        %v3091 = vrot.slane %v2864, 7
        %v3092 = vrot.slane %v3091, 2
        %v3093 = vrot.slane %v2872, 7
        %v3094 = vrot.slane %v3093, 2
        %v3095 = vrot.slane %v2880, 7
        %v3096 = vrot.slane %v3095, 2
        %v3097 = vrot.slane %v2879, 7
        %v3098 = vrot.slane %v3097, 2
        %v3099 = vrot.slane %v2881, 7
        %v3100 = vrot.slane %v3099, 2
        %v3101 = vrot.slane %v2889, 7
        %v3102 = vrot.slane %v3101, 2
        %v3103 = vrot.slane %v2897, 7
        %v3104 = vrot.slane %v3103, 2
        %v3105 = vrot.slane %v2896, 7
        %v3106 = vrot.slane %v3105, 2
        %v3107 = vrot.slane %v2898, 7
        %v3108 = vrot.slane %v3107, 2
        %v3109 = vrot.slane %v2906, 7
        %v3110 = vrot.slane %v3109, 2
        %v3111 = vrot.slane %v2914, 7
        %v3112 = vrot.slane %v3111, 2
        %v3113 = vrot.slane %v2913, 7
        %v3114 = vrot.slane %v3113, 2
        %v3115 = vrot.slane %v2915, 7
        %v3116 = vrot.slane %v3115, 2
        %v3117 = vrot.slane %v2923, 7
        %v3118 = vrot.slane %v3117, 2
        %v3119 = vrot.slane %v2931, 7
        %v3120 = vrot.slane %v3119, 2
        %v3121 = vrot.slane %v2930, 7
        %v3122 = vrot.slane %v3121, 2
        %v3123 = vrot.slane %v2932, 7
        %v3124 = vrot.slane %v3123, 2
        %v3189 = vadd.f32 %v2668, %v2998
        %v3190 = vadd.f32 %v2676, %v3000
        %v3191 = vadd.f32 %v2675, %v3002
        %v3192 = vadd.f32 %v2677, %v3004
        %v3193 = vadd.f32 %v2685, %v3006
        %v3194 = vadd.f32 %v2693, %v3008
        %v3195 = vadd.f32 %v2692, %v3010
        %v3196 = vadd.f32 %v2694, %v3012
        %v3197 = vadd.f32 %v2702, %v3014
        %v3198 = vadd.f32 %v2710, %v3016
        %v3199 = vadd.f32 %v2709, %v3018
        %v3200 = vadd.f32 %v2711, %v3020
        %v3201 = vadd.f32 %v2719, %v3022
        %v3202 = vadd.f32 %v2727, %v3024
        %v3203 = vadd.f32 %v2726, %v3026
        %v3204 = vadd.f32 %v2728, %v3028
        %v3205 = vadd.f32 %v2736, %v3030
        %v3206 = vadd.f32 %v2744, %v3032
        %v3207 = vadd.f32 %v2743, %v3034
        %v3208 = vadd.f32 %v2745, %v3036
        %v3209 = vadd.f32 %v2753, %v3038
        %v3210 = vadd.f32 %v2761, %v3040
        %v3211 = vadd.f32 %v2760, %v3042
        %v3212 = vadd.f32 %v2762, %v3044
        %v3213 = vadd.f32 %v2770, %v3046
        %v3214 = vadd.f32 %v2778, %v3048
        %v3215 = vadd.f32 %v2777, %v3050
        %v3216 = vadd.f32 %v2779, %v3052
        %v3217 = vadd.f32 %v2787, %v3054
        %v3218 = vadd.f32 %v2795, %v3056
        %v3219 = vadd.f32 %v2794, %v3058
        %v3220 = vadd.f32 %v2796, %v3060
        %v3221 = vadd.f32 %v2804, %v3062
        %v3222 = vadd.f32 %v2812, %v3064
        %v3223 = vadd.f32 %v2811, %v3066
        %v3224 = vadd.f32 %v2813, %v3068
        %v3225 = vadd.f32 %v2821, %v3070
        %v3226 = vadd.f32 %v2829, %v3072
        %v3227 = vadd.f32 %v2828, %v3074
        %v3228 = vadd.f32 %v2830, %v3076
        %v3229 = vadd.f32 %v2838, %v3078
        %v3230 = vadd.f32 %v2846, %v3080
        %v3231 = vadd.f32 %v2845, %v3082
        %v3232 = vadd.f32 %v2847, %v3084
        %v3233 = vadd.f32 %v2855, %v3086
        %v3234 = vadd.f32 %v2863, %v3088
        %v3235 = vadd.f32 %v2862, %v3090
        %v3236 = vadd.f32 %v2864, %v3092
        %v3237 = vadd.f32 %v2872, %v3094
        %v3238 = vadd.f32 %v2880, %v3096
        %v3239 = vadd.f32 %v2879, %v3098
        %v3240 = vadd.f32 %v2881, %v3100
        %v3241 = vadd.f32 %v2889, %v3102
        %v3242 = vadd.f32 %v2897, %v3104
        %v3243 = vadd.f32 %v2896, %v3106
        %v3244 = vadd.f32 %v2898, %v3108
        %v3245 = vadd.f32 %v2906, %v3110
        %v3246 = vadd.f32 %v2914, %v3112
        %v3247 = vadd.f32 %v2913, %v3114
        %v3248 = vadd.f32 %v2915, %v3116
        %v3249 = vadd.f32 %v2923, %v3118
        %v3250 = vadd.f32 %v2931, %v3120
        %v3251 = vadd.f32 %v2930, %v3122
        %v3252 = vadd.f32 %v2932, %v3124
        %v3253 = vmul.f32 %v3189, 0.25
        %v3254 = vmul.f32 %v3190, 0.25
        %v3255 = vmul.f32 %v3191, 0.25
        %v3256 = vmul.f32 %v3192, 0.25
        %v3257 = vmul.f32 %v3193, 0.25
        %v3258 = vmul.f32 %v3194, 0.25
        %v3259 = vmul.f32 %v3195, 0.25
        %v3260 = vmul.f32 %v3196, 0.25
        %v3261 = vmul.f32 %v3197, 0.25
        %v3262 = vmul.f32 %v3198, 0.25
        %v3263 = vmul.f32 %v3199, 0.25
        %v3264 = vmul.f32 %v3200, 0.25
        %v3265 = vmul.f32 %v3201, 0.25
        %v3266 = vmul.f32 %v3202, 0.25
        %v3267 = vmul.f32 %v3203, 0.25
        %v3268 = vmul.f32 %v3204, 0.25
        %v3269 = vmul.f32 %v3205, 0.25
        %v3270 = vmul.f32 %v3206, 0.25
        %v3271 = vmul.f32 %v3207, 0.25
        %v3272 = vmul.f32 %v3208, 0.25
        %v3273 = vmul.f32 %v3209, 0.25
        %v3274 = vmul.f32 %v3210, 0.25
        %v3275 = vmul.f32 %v3211, 0.25
        %v3276 = vmul.f32 %v3212, 0.25
        %v3277 = vmul.f32 %v3213, 0.25
        %v3278 = vmul.f32 %v3214, 0.25
        %v3279 = vmul.f32 %v3215, 0.25
        %v3280 = vmul.f32 %v3216, 0.25
        %v3281 = vmul.f32 %v3217, 0.25
        %v3282 = vmul.f32 %v3218, 0.25
        %v3283 = vmul.f32 %v3219, 0.25
        %v3284 = vmul.f32 %v3220, 0.25
        %v3285 = vmul.f32 %v3221, 0.25
        %v3286 = vmul.f32 %v3222, 0.25
        %v3287 = vmul.f32 %v3223, 0.25
        %v3288 = vmul.f32 %v3224, 0.25
        %v3289 = vmul.f32 %v3225, 0.25
        %v3290 = vmul.f32 %v3226, 0.25
        %v3291 = vmul.f32 %v3227, 0.25
        %v3292 = vmul.f32 %v3228, 0.25
        %v3293 = vmul.f32 %v3229, 0.25
        %v3294 = vmul.f32 %v3230, 0.25
        %v3295 = vmul.f32 %v3231, 0.25
        %v3296 = vmul.f32 %v3232, 0.25
        %v3297 = vmul.f32 %v3233, 0.25
        %v3298 = vmul.f32 %v3234, 0.25
        %v3299 = vmul.f32 %v3235, 0.25
        %v3300 = vmul.f32 %v3236, 0.25
        %v3301 = vmul.f32 %v3237, 0.25
        %v3302 = vmul.f32 %v3238, 0.25
        %v3303 = vmul.f32 %v3239, 0.25
        %v3304 = vmul.f32 %v3240, 0.25
        %v3305 = vmul.f32 %v3241, 0.25
        %v3306 = vmul.f32 %v3242, 0.25
        %v3307 = vmul.f32 %v3243, 0.25
        %v3308 = vmul.f32 %v3244, 0.25
        %v3309 = vmul.f32 %v3245, 0.25
        %v3310 = vmul.f32 %v3246, 0.25
        %v3311 = vmul.f32 %v3247, 0.25
        %v3312 = vmul.f32 %v3248, 0.25
        %v3313 = vmul.f32 %v3249, 0.25
        %v3314 = vmul.f32 %v3250, 0.25
        %v3315 = vmul.f32 %v3251, 0.25
        %v3316 = vmul.f32 %v3252, 0.25
        %vm3317 = vcmp.ge.f32.partialorder %v2272, 0.0
        %vm3318 = vcmp.ge.f32.partialorder %v2275, 0.0
        %vm3319 = vcmp.ge.f32.partialorder %v2280, 0.0
        %vm3320 = vcmp.ge.f32.partialorder %v2283, 0.0
        %vm3321 = vcmp.ge.f32.partialorder %v2288, 0.0
        %vm3322 = vcmp.ge.f32.partialorder %v2291, 0.0
        %vm3323 = vcmp.ge.f32.partialorder %v2296, 0.0
        %vm3324 = vcmp.ge.f32.partialorder %v2299, 0.0
        %vm3325 = vcmp.ge.f32.partialorder %v2304, 0.0
        %vm3326 = vcmp.ge.f32.partialorder %v2307, 0.0
        %vm3327 = vcmp.ge.f32.partialorder %v2312, 0.0
        %vm3328 = vcmp.ge.f32.partialorder %v2315, 0.0
        %vm3329 = vcmp.ge.f32.partialorder %v2320, 0.0
        %vm3330 = vcmp.ge.f32.partialorder %v2323, 0.0
        %vm3331 = vcmp.ge.f32.partialorder %v2328, 0.0
        %vm3332 = vcmp.ge.f32.partialorder %v2331, 0.0
        %vm3333 = vcmp.ge.f32.partialorder %v2336, 0.0
        %vm3334 = vcmp.ge.f32.partialorder %v2339, 0.0
        %vm3335 = vcmp.ge.f32.partialorder %v2344, 0.0
        %vm3336 = vcmp.ge.f32.partialorder %v2347, 0.0
        %vm3337 = vcmp.ge.f32.partialorder %v2352, 0.0
        %vm3338 = vcmp.ge.f32.partialorder %v2355, 0.0
        %vm3339 = vcmp.ge.f32.partialorder %v2360, 0.0
        %vm3340 = vcmp.ge.f32.partialorder %v2363, 0.0
        %vm3341 = vcmp.ge.f32.partialorder %v2368, 0.0
        %vm3342 = vcmp.ge.f32.partialorder %v2371, 0.0
        %vm3343 = vcmp.ge.f32.partialorder %v2376, 0.0
        %vm3344 = vcmp.ge.f32.partialorder %v2379, 0.0
        %vm3345 = vcmp.ge.f32.partialorder %v2384, 0.0
        %vm3346 = vcmp.ge.f32.partialorder %v2387, 0.0
        %vm3347 = vcmp.ge.f32.partialorder %v2392, 0.0
        %vm3348 = vcmp.ge.f32.partialorder %v2395, 0.0
        %v3349 = vmul.f32 %v2272, 0.2
        %v3350 = vmul.f32 %v2275, 0.2
        %v3351 = vmul.f32 %v2280, 0.2
        %v3352 = vmul.f32 %v2283, 0.2
        %v3353 = vmul.f32 %v2288, 0.2
        %v3354 = vmul.f32 %v2291, 0.2
        %v3355 = vmul.f32 %v2296, 0.2
        %v3356 = vmul.f32 %v2299, 0.2
        %v3357 = vmul.f32 %v2304, 0.2
        %v3358 = vmul.f32 %v2307, 0.2
        %v3359 = vmul.f32 %v2312, 0.2
        %v3360 = vmul.f32 %v2315, 0.2
        %v3361 = vmul.f32 %v2320, 0.2
        %v3362 = vmul.f32 %v2323, 0.2
        %v3363 = vmul.f32 %v2328, 0.2
        %v3364 = vmul.f32 %v2331, 0.2
        %v3365 = vmul.f32 %v2336, 0.2
        %v3366 = vmul.f32 %v2339, 0.2
        %v3367 = vmul.f32 %v2344, 0.2
        %v3368 = vmul.f32 %v2347, 0.2
        %v3369 = vmul.f32 %v2352, 0.2
        %v3370 = vmul.f32 %v2355, 0.2
        %v3371 = vmul.f32 %v2360, 0.2
        %v3372 = vmul.f32 %v2363, 0.2
        %v3373 = vmul.f32 %v2368, 0.2
        %v3374 = vmul.f32 %v2371, 0.2
        %v3375 = vmul.f32 %v2376, 0.2
        %v3376 = vmul.f32 %v2379, 0.2
        %v3377 = vmul.f32 %v2384, 0.2
        %v3378 = vmul.f32 %v2387, 0.2
        %v3379 = vmul.f32 %v2392, 0.2
        %v3380 = vmul.f32 %v2395, 0.2
        %v3381 = vsel %vm3317, %v2272, %v3349
        %v3382 = vsel %vm3318, %v2275, %v3350
        %v3383 = vsel %vm3319, %v2280, %v3351
        %v3384 = vsel %vm3320, %v2283, %v3352
        %v3385 = vsel %vm3321, %v2288, %v3353
        %v3386 = vsel %vm3322, %v2291, %v3354
        %v3387 = vsel %vm3323, %v2296, %v3355
        %v3388 = vsel %vm3324, %v2299, %v3356
        %v3389 = vsel %vm3325, %v2304, %v3357
        %v3390 = vsel %vm3326, %v2307, %v3358
        %v3391 = vsel %vm3327, %v2312, %v3359
        %v3392 = vsel %vm3328, %v2315, %v3360
        %v3393 = vsel %vm3329, %v2320, %v3361
        %v3394 = vsel %vm3330, %v2323, %v3362
        %v3395 = vsel %vm3331, %v2328, %v3363
        %v3396 = vsel %vm3332, %v2331, %v3364
        %v3397 = vsel %vm3333, %v2336, %v3365
        %v3398 = vsel %vm3334, %v2339, %v3366
        %v3399 = vsel %vm3335, %v2344, %v3367
        %v3400 = vsel %vm3336, %v2347, %v3368
        %v3401 = vsel %vm3337, %v2352, %v3369
        %v3402 = vsel %vm3338, %v2355, %v3370
        %v3403 = vsel %vm3339, %v2360, %v3371
        %v3404 = vsel %vm3340, %v2363, %v3372
        %v3405 = vsel %vm3341, %v2368, %v3373
        %v3406 = vsel %vm3342, %v2371, %v3374
        %v3407 = vsel %vm3343, %v2376, %v3375
        %v3408 = vsel %vm3344, %v2379, %v3376
        %v3409 = vsel %vm3345, %v2384, %v3377
        %v3410 = vsel %vm3346, %v2387, %v3378
        %v3411 = vsel %vm3347, %v2392, %v3379
        %v3412 = vsel %vm3348, %v2395, %v3380
        %v3445 = vrot.slane %v3381, 7
        %v3446 = vrot.slane %v3382, 7
        %v3447 = vsel %vm775, %v3445, %v3446
        %v3448 = vrot.slane %v3383, 7
        %v3449 = vrot.slane %v3384, 7
        %v3450 = vsel %vm775, %v3448, %v3449
        %v3451 = vrot.slane %v3385, 7
        %v3452 = vrot.slane %v3386, 7
        %v3453 = vsel %vm775, %v3451, %v3452
        %v3454 = vrot.slane %v3387, 7
        %v3455 = vrot.slane %v3388, 7
        %v3456 = vsel %vm775, %v3454, %v3455
        %v3457 = vrot.slane %v3389, 7
        %v3458 = vrot.slane %v3390, 7
        %v3459 = vsel %vm775, %v3457, %v3458
        %v3460 = vrot.slane %v3391, 7
        %v3461 = vrot.slane %v3392, 7
        %v3462 = vsel %vm775, %v3460, %v3461
        %v3463 = vrot.slane %v3393, 7
        %v3464 = vrot.slane %v3394, 7
        %v3465 = vsel %vm775, %v3463, %v3464
        %v3466 = vrot.slane %v3395, 7
        %v3467 = vrot.slane %v3396, 7
        %v3468 = vsel %vm775, %v3466, %v3467
        %v3469 = vrot.slane %v3397, 7
        %v3470 = vrot.slane %v3398, 7
        %v3471 = vsel %vm775, %v3469, %v3470
        %v3472 = vrot.slane %v3399, 7
        %v3473 = vrot.slane %v3400, 7
        %v3474 = vsel %vm775, %v3472, %v3473
        %v3475 = vrot.slane %v3401, 7
        %v3476 = vrot.slane %v3402, 7
        %v3477 = vsel %vm775, %v3475, %v3476
        %v3478 = vrot.slane %v3403, 7
        %v3479 = vrot.slane %v3404, 7
        %v3480 = vsel %vm775, %v3478, %v3479
        %v3481 = vrot.slane %v3405, 7
        %v3482 = vrot.slane %v3406, 7
        %v3483 = vsel %vm775, %v3481, %v3482
        %v3484 = vrot.slane %v3407, 7
        %v3485 = vrot.slane %v3408, 7
        %v3486 = vsel %vm775, %v3484, %v3485
        %v3487 = vrot.slane %v3409, 7
        %v3488 = vrot.slane %v3410, 7
        %v3489 = vsel %vm775, %v3487, %v3488
        %v3490 = vrot.slane %v3411, 7
        %v3491 = vrot.slane %v3412, 7
        %v3492 = vsel %vm775, %v3490, %v3491
        %v3540 = vsel %vm775, 0.0, %v3445
        %v3541 = vsel %vm775, 0.0, %v3448
        %v3542 = vsel %vm775, 0.0, %v3451
        %v3543 = vsel %vm775, 0.0, %v3454
        %v3544 = vsel %vm775, 0.0, %v3457
        %v3545 = vsel %vm775, 0.0, %v3460
        %v3546 = vsel %vm775, 0.0, %v3463
        %v3547 = vsel %vm775, 0.0, %v3466
        %v3548 = vsel %vm775, 0.0, %v3469
        %v3549 = vsel %vm775, 0.0, %v3472
        %v3550 = vsel %vm775, 0.0, %v3475
        %v3551 = vsel %vm775, 0.0, %v3478
        %v3552 = vsel %vm775, 0.0, %v3481
        %v3553 = vsel %vm775, 0.0, %v3484
        %v3554 = vsel %vm775, 0.0, %v3487
        %v3555 = vsel %vm775, 0.0, %v3490
        %v3556 = vsel %vm775, %v3446, 0.0
        %v3557 = vsel %vm775, %v3449, 0.0
        %v3558 = vsel %vm775, %v3452, 0.0
        %v3559 = vsel %vm775, %v3455, 0.0
        %v3560 = vsel %vm775, %v3458, 0.0
        %v3561 = vsel %vm775, %v3461, 0.0
        %v3562 = vsel %vm775, %v3464, 0.0
        %v3563 = vsel %vm775, %v3467, 0.0
        %v3564 = vsel %vm775, %v3470, 0.0
        %v3565 = vsel %vm775, %v3473, 0.0
        %v3566 = vsel %vm775, %v3476, 0.0
        %v3567 = vsel %vm775, %v3479, 0.0
        %v3568 = vsel %vm775, %v3482, 0.0
        %v3569 = vsel %vm775, %v3485, 0.0
        %v3570 = vsel %vm775, %v3488, 0.0
        %v3571 = vsel %vm775, %v3491, 0.0
        %v3602 = vrot.slane %v3540, 1
        %v3603 = vrot.slane %v3447, 1
        %v3604 = vsel %vm941, %v3602, %v3603
        %v3605 = vrot.slane %v3556, 1
        %v3606 = vsel %vm941, %v3603, %v3605
        %v3607 = vrot.slane %v3541, 1
        %v3608 = vrot.slane %v3450, 1
        %v3609 = vsel %vm941, %v3607, %v3608
        %v3610 = vrot.slane %v3557, 1
        %v3611 = vsel %vm941, %v3608, %v3610
        %v3612 = vrot.slane %v3542, 1
        %v3613 = vrot.slane %v3453, 1
        %v3614 = vsel %vm941, %v3612, %v3613
        %v3615 = vrot.slane %v3558, 1
        %v3616 = vsel %vm941, %v3613, %v3615
        %v3617 = vrot.slane %v3543, 1
        %v3618 = vrot.slane %v3456, 1
        %v3619 = vsel %vm941, %v3617, %v3618
        %v3620 = vrot.slane %v3559, 1
        %v3621 = vsel %vm941, %v3618, %v3620
        %v3622 = vrot.slane %v3544, 1
        %v3623 = vrot.slane %v3459, 1
        %v3624 = vsel %vm941, %v3622, %v3623
        %v3625 = vrot.slane %v3560, 1
        %v3626 = vsel %vm941, %v3623, %v3625
        %v3627 = vrot.slane %v3545, 1
        %v3628 = vrot.slane %v3462, 1
        %v3629 = vsel %vm941, %v3627, %v3628
        %v3630 = vrot.slane %v3561, 1
        %v3631 = vsel %vm941, %v3628, %v3630
        %v3632 = vrot.slane %v3546, 1
        %v3633 = vrot.slane %v3465, 1
        %v3634 = vsel %vm941, %v3632, %v3633
        %v3635 = vrot.slane %v3562, 1
        %v3636 = vsel %vm941, %v3633, %v3635
        %v3637 = vrot.slane %v3547, 1
        %v3638 = vrot.slane %v3468, 1
        %v3639 = vsel %vm941, %v3637, %v3638
        %v3640 = vrot.slane %v3563, 1
        %v3641 = vsel %vm941, %v3638, %v3640
        %v3642 = vrot.slane %v3548, 1
        %v3643 = vrot.slane %v3471, 1
        %v3644 = vsel %vm941, %v3642, %v3643
        %v3645 = vrot.slane %v3564, 1
        %v3646 = vsel %vm941, %v3643, %v3645
        %v3647 = vrot.slane %v3549, 1
        %v3648 = vrot.slane %v3474, 1
        %v3649 = vsel %vm941, %v3647, %v3648
        %v3650 = vrot.slane %v3565, 1
        %v3651 = vsel %vm941, %v3648, %v3650
        %v3652 = vrot.slane %v3550, 1
        %v3653 = vrot.slane %v3477, 1
        %v3654 = vsel %vm941, %v3652, %v3653
        %v3655 = vrot.slane %v3566, 1
        %v3656 = vsel %vm941, %v3653, %v3655
        %v3657 = vrot.slane %v3551, 1
        %v3658 = vrot.slane %v3480, 1
        %v3659 = vsel %vm941, %v3657, %v3658
        %v3660 = vrot.slane %v3567, 1
        %v3661 = vsel %vm941, %v3658, %v3660
        %v3662 = vrot.slane %v3552, 1
        %v3663 = vrot.slane %v3483, 1
        %v3664 = vsel %vm941, %v3662, %v3663
        %v3665 = vrot.slane %v3568, 1
        %v3666 = vsel %vm941, %v3663, %v3665
        %v3667 = vrot.slane %v3553, 1
        %v3668 = vrot.slane %v3486, 1
        %v3669 = vsel %vm941, %v3667, %v3668
        %v3670 = vrot.slane %v3569, 1
        %v3671 = vsel %vm941, %v3668, %v3670
        %v3672 = vrot.slane %v3554, 1
        %v3673 = vrot.slane %v3489, 1
        %v3674 = vsel %vm941, %v3672, %v3673
        %v3675 = vrot.slane %v3570, 1
        %v3676 = vsel %vm941, %v3673, %v3675
        %3677 = vrot.lane.b32.xlu0 %v944, 16
        %v3678 = vpop.permute.xlu0 %3677
        %3679 = vrot.lane.b32.xlu0 %v946, 16
        %v3680 = vpop.permute.xlu0 %3679
        %3681 = vrot.lane.b32.xlu0 %v3604, 16
        %v3682 = vpop.permute.xlu0 %3681
        %3683 = vrot.lane.b32.xlu0 %v3606, 16
        %v3684 = vpop.permute.xlu0 %3683
        %3685 = vrot.lane.b32.xlu0 %v3609, 16
        %v3686 = vpop.permute.xlu0 %3685
        %3687 = vrot.lane.b32.xlu0 %v3611, 16
        %v3688 = vpop.permute.xlu0 %3687
        %3689 = vrot.lane.b32.xlu0 %v3614, 16
        %v3690 = vpop.permute.xlu0 %3689
        %3691 = vrot.lane.b32.xlu0 %v3616, 16
        %v3692 = vpop.permute.xlu0 %3691
        %3693 = vrot.lane.b32.xlu0 %v3619, 16
        %v3694 = vpop.permute.xlu0 %3693
        %3695 = vrot.lane.b32.xlu0 %v3621, 16
        %v3696 = vpop.permute.xlu0 %3695
        %3697 = vrot.lane.b32.xlu0 %v3624, 16
        %v3698 = vpop.permute.xlu0 %3697
        %3699 = vrot.lane.b32.xlu0 %v3626, 16
        %v3700 = vpop.permute.xlu0 %3699
        %3701 = vrot.lane.b32.xlu0 %v3629, 16
        %v3702 = vpop.permute.xlu0 %3701
        %3703 = vrot.lane.b32.xlu0 %v3631, 16
        %v3704 = vpop.permute.xlu0 %3703
        %3705 = vrot.lane.b32.xlu0 %v3634, 16
        %v3706 = vpop.permute.xlu0 %3705
        %3707 = vrot.lane.b32.xlu0 %v3636, 16
        %v3708 = vpop.permute.xlu0 %3707
        %3709 = vrot.lane.b32.xlu0 %v3639, 16
        %v3710 = vpop.permute.xlu0 %3709
        %3711 = vrot.lane.b32.xlu0 %v3641, 16
        %v3712 = vpop.permute.xlu0 %3711
        %3713 = vrot.lane.b32.xlu0 %v3644, 16
        %v3714 = vpop.permute.xlu0 %3713
        %3715 = vrot.lane.b32.xlu0 %v3646, 16
        %v3716 = vpop.permute.xlu0 %3715
        %3717 = vrot.lane.b32.xlu0 %v3649, 16
        %v3718 = vpop.permute.xlu0 %3717
        %3719 = vrot.lane.b32.xlu0 %v3651, 16
        %v3720 = vpop.permute.xlu0 %3719
        %3721 = vrot.lane.b32.xlu0 %v3654, 16
        %v3722 = vpop.permute.xlu0 %3721
        %3723 = vrot.lane.b32.xlu0 %v3656, 16
        %v3724 = vpop.permute.xlu0 %3723
        %3725 = vrot.lane.b32.xlu0 %v3659, 16
        %v3726 = vpop.permute.xlu0 %3725
        %3727 = vrot.lane.b32.xlu0 %v3661, 16
        %v3728 = vpop.permute.xlu0 %3727
        %3729 = vrot.lane.b32.xlu0 %v3664, 16
        %v3730 = vpop.permute.xlu0 %3729
        %3731 = vrot.lane.b32.xlu0 %v3666, 16
        %v3732 = vpop.permute.xlu0 %3731
        %3733 = vrot.lane.b32.xlu0 %v3669, 16
        %v3734 = vpop.permute.xlu0 %3733
        %3735 = vrot.lane.b32.xlu0 %v3671, 16
        %v3736 = vpop.permute.xlu0 %3735
        %3737 = vrot.lane.b32.xlu0 %v3674, 16
        %v3738 = vpop.permute.xlu0 %3737
        %3739 = vrot.lane.b32.xlu0 %v3676, 16
        %v3740 = vpop.permute.xlu0 %3739
        %v3773 = vrot.slane %v3540, 2
        %v3774 = vrot.slane %v3447, 2
        %v3775 = vsel %vm1118, %v3773, %v3774
        %v3776 = vrot.slane %v3556, 2
        %v3777 = vsel %vm1118, %v3774, %v3776
        %v3778 = vrot.slane %v3541, 2
        %v3779 = vrot.slane %v3450, 2
        %v3780 = vsel %vm1118, %v3778, %v3779
        %v3781 = vrot.slane %v3557, 2
        %v3782 = vsel %vm1118, %v3779, %v3781
        %v3783 = vrot.slane %v3542, 2
        %v3784 = vrot.slane %v3453, 2
        %v3785 = vsel %vm1118, %v3783, %v3784
        %v3786 = vrot.slane %v3558, 2
        %v3787 = vsel %vm1118, %v3784, %v3786
        %v3788 = vrot.slane %v3543, 2
        %v3789 = vrot.slane %v3456, 2
        %v3790 = vsel %vm1118, %v3788, %v3789
        %v3791 = vrot.slane %v3559, 2
        %v3792 = vsel %vm1118, %v3789, %v3791
        %v3793 = vrot.slane %v3544, 2
        %v3794 = vrot.slane %v3459, 2
        %v3795 = vsel %vm1118, %v3793, %v3794
        %v3796 = vrot.slane %v3560, 2
        %v3797 = vsel %vm1118, %v3794, %v3796
        %v3798 = vrot.slane %v3545, 2
        %v3799 = vrot.slane %v3462, 2
        %v3800 = vsel %vm1118, %v3798, %v3799
        %v3801 = vrot.slane %v3561, 2
        %v3802 = vsel %vm1118, %v3799, %v3801
        %v3803 = vrot.slane %v3546, 2
        %v3804 = vrot.slane %v3465, 2
        %v3805 = vsel %vm1118, %v3803, %v3804
        %v3806 = vrot.slane %v3562, 2
        %v3807 = vsel %vm1118, %v3804, %v3806
        %v3808 = vrot.slane %v3547, 2
        %v3809 = vrot.slane %v3468, 2
        %v3810 = vsel %vm1118, %v3808, %v3809
        %v3811 = vrot.slane %v3563, 2
        %v3812 = vsel %vm1118, %v3809, %v3811
        %v3813 = vrot.slane %v3548, 2
        %v3814 = vrot.slane %v3471, 2
        %v3815 = vsel %vm1118, %v3813, %v3814
        %v3816 = vrot.slane %v3564, 2
        %v3817 = vsel %vm1118, %v3814, %v3816
        %v3818 = vrot.slane %v3549, 2
        %v3819 = vrot.slane %v3474, 2
        %v3820 = vsel %vm1118, %v3818, %v3819
        %v3821 = vrot.slane %v3565, 2
        %v3822 = vsel %vm1118, %v3819, %v3821
        %v3823 = vrot.slane %v3550, 2
        %v3824 = vrot.slane %v3477, 2
        %v3825 = vsel %vm1118, %v3823, %v3824
        %v3826 = vrot.slane %v3566, 2
        %v3827 = vsel %vm1118, %v3824, %v3826
        %v3828 = vrot.slane %v3551, 2
        %v3829 = vrot.slane %v3480, 2
        %v3830 = vsel %vm1118, %v3828, %v3829
        %v3831 = vrot.slane %v3567, 2
        %v3832 = vsel %vm1118, %v3829, %v3831
        %v3833 = vrot.slane %v3552, 2
        %v3834 = vrot.slane %v3483, 2
        %v3835 = vsel %vm1118, %v3833, %v3834
        %v3836 = vrot.slane %v3568, 2
        %v3837 = vsel %vm1118, %v3834, %v3836
        %v3838 = vrot.slane %v3553, 2
        %v3839 = vrot.slane %v3486, 2
        %v3840 = vsel %vm1118, %v3838, %v3839
        %v3841 = vrot.slane %v3569, 2
        %v3842 = vsel %vm1118, %v3839, %v3841
        %v3843 = vrot.slane %v3554, 2
        %v3844 = vrot.slane %v3489, 2
        %v3845 = vsel %vm1118, %v3843, %v3844
        %v3846 = vrot.slane %v3570, 2
        %v3847 = vsel %vm1118, %v3844, %v3846
        %3848 = vrot.lane.b32.xlu0 %v3775, 32
        %v3849 = vpop.permute.xlu0 %3848
        %3850 = vrot.lane.b32.xlu0 %v3777, 32
        %v3851 = vpop.permute.xlu0 %3850
        %3852 = vrot.lane.b32.xlu0 %v3780, 32
        %v3853 = vpop.permute.xlu0 %3852
        %3854 = vrot.lane.b32.xlu0 %v3782, 32
        %v3855 = vpop.permute.xlu0 %3854
        %3856 = vrot.lane.b32.xlu0 %v3785, 32
        %v3857 = vpop.permute.xlu0 %3856
        %3858 = vrot.lane.b32.xlu0 %v3787, 32
        %v3859 = vpop.permute.xlu0 %3858
        %3860 = vrot.lane.b32.xlu0 %v3790, 32
        %v3861 = vpop.permute.xlu0 %3860
        %3862 = vrot.lane.b32.xlu0 %v3792, 32
        %v3863 = vpop.permute.xlu0 %3862
        %3864 = vrot.lane.b32.xlu0 %v3795, 32
        %v3865 = vpop.permute.xlu0 %3864
        %3866 = vrot.lane.b32.xlu0 %v3797, 32
        %v3867 = vpop.permute.xlu0 %3866
        %3868 = vrot.lane.b32.xlu0 %v3800, 32
        %v3869 = vpop.permute.xlu0 %3868
        %3870 = vrot.lane.b32.xlu0 %v3802, 32
        %v3871 = vpop.permute.xlu0 %3870
        %3872 = vrot.lane.b32.xlu0 %v3805, 32
        %v3873 = vpop.permute.xlu0 %3872
        %3874 = vrot.lane.b32.xlu0 %v3807, 32
        %v3875 = vpop.permute.xlu0 %3874
        %3876 = vrot.lane.b32.xlu0 %v3810, 32
        %v3877 = vpop.permute.xlu0 %3876
        %3878 = vrot.lane.b32.xlu0 %v3812, 32
        %v3879 = vpop.permute.xlu0 %3878
        %3880 = vrot.lane.b32.xlu0 %v3815, 32
        %v3881 = vpop.permute.xlu0 %3880
        %3882 = vrot.lane.b32.xlu0 %v3817, 32
        %v3883 = vpop.permute.xlu0 %3882
        %3884 = vrot.lane.b32.xlu0 %v3820, 32
        %v3885 = vpop.permute.xlu0 %3884
        %3886 = vrot.lane.b32.xlu0 %v3822, 32
        %v3887 = vpop.permute.xlu0 %3886
        %3888 = vrot.lane.b32.xlu0 %v3825, 32
        %v3889 = vpop.permute.xlu0 %3888
        %3890 = vrot.lane.b32.xlu0 %v3827, 32
        %v3891 = vpop.permute.xlu0 %3890
        %3892 = vrot.lane.b32.xlu0 %v3830, 32
        %v3893 = vpop.permute.xlu0 %3892
        %3894 = vrot.lane.b32.xlu0 %v3832, 32
        %v3895 = vpop.permute.xlu0 %3894
        %3896 = vrot.lane.b32.xlu0 %v3835, 32
        %v3897 = vpop.permute.xlu0 %3896
        %3898 = vrot.lane.b32.xlu0 %v3837, 32
        %v3899 = vpop.permute.xlu0 %3898
        %3900 = vrot.lane.b32.xlu0 %v3840, 32
        %v3901 = vpop.permute.xlu0 %3900
        %3902 = vrot.lane.b32.xlu0 %v3842, 32
        %v3903 = vpop.permute.xlu0 %3902
        %3904 = vrot.lane.b32.xlu0 %v3845, 32
        %v3905 = vpop.permute.xlu0 %3904
        %3906 = vrot.lane.b32.xlu0 %v3847, 32
        %v3907 = vpop.permute.xlu0 %3906
        %3939 = vrot.lane.b32.xlu0 %v3540, 48
        %v3940 = vpop.permute.xlu0 %3939
        %3941 = vrot.lane.b32.xlu0 %v3447, 48
        %v3942 = vpop.permute.xlu0 %3941
        %3943 = vrot.lane.b32.xlu0 %v3541, 48
        %v3944 = vpop.permute.xlu0 %3943
        %3945 = vrot.lane.b32.xlu0 %v3450, 48
        %v3946 = vpop.permute.xlu0 %3945
        %3947 = vrot.lane.b32.xlu0 %v3542, 48
        %v3948 = vpop.permute.xlu0 %3947
        %3949 = vrot.lane.b32.xlu0 %v3453, 48
        %v3950 = vpop.permute.xlu0 %3949
        %3951 = vrot.lane.b32.xlu0 %v3543, 48
        %v3952 = vpop.permute.xlu0 %3951
        %3953 = vrot.lane.b32.xlu0 %v3456, 48
        %v3954 = vpop.permute.xlu0 %3953
        %3955 = vrot.lane.b32.xlu0 %v3544, 48
        %v3956 = vpop.permute.xlu0 %3955
        %3957 = vrot.lane.b32.xlu0 %v3459, 48
        %v3958 = vpop.permute.xlu0 %3957
        %3959 = vrot.lane.b32.xlu0 %v3545, 48
        %v3960 = vpop.permute.xlu0 %3959
        %3961 = vrot.lane.b32.xlu0 %v3462, 48
        %v3962 = vpop.permute.xlu0 %3961
        %3963 = vrot.lane.b32.xlu0 %v3546, 48
        %v3964 = vpop.permute.xlu0 %3963
        %3965 = vrot.lane.b32.xlu0 %v3465, 48
        %v3966 = vpop.permute.xlu0 %3965
        %3967 = vrot.lane.b32.xlu0 %v3547, 48
        %v3968 = vpop.permute.xlu0 %3967
        %3969 = vrot.lane.b32.xlu0 %v3468, 48
        %v3970 = vpop.permute.xlu0 %3969
        %3971 = vrot.lane.b32.xlu0 %v3548, 48
        %v3972 = vpop.permute.xlu0 %3971
        %3973 = vrot.lane.b32.xlu0 %v3471, 48
        %v3974 = vpop.permute.xlu0 %3973
        %3975 = vrot.lane.b32.xlu0 %v3549, 48
        %v3976 = vpop.permute.xlu0 %3975
        %3977 = vrot.lane.b32.xlu0 %v3474, 48
        %v3978 = vpop.permute.xlu0 %3977
        %3979 = vrot.lane.b32.xlu0 %v3550, 48
        %v3980 = vpop.permute.xlu0 %3979
        %3981 = vrot.lane.b32.xlu0 %v3477, 48
        %v3982 = vpop.permute.xlu0 %3981
        %3983 = vrot.lane.b32.xlu0 %v3551, 48
        %v3984 = vpop.permute.xlu0 %3983
        %3985 = vrot.lane.b32.xlu0 %v3480, 48
        %v3986 = vpop.permute.xlu0 %3985
        %3987 = vrot.lane.b32.xlu0 %v3552, 48
        %v3988 = vpop.permute.xlu0 %3987
        %3989 = vrot.lane.b32.xlu0 %v3483, 48
        %v3990 = vpop.permute.xlu0 %3989
        %3991 = vrot.lane.b32.xlu0 %v3553, 48
        %v3992 = vpop.permute.xlu0 %3991
        %3993 = vrot.lane.b32.xlu0 %v3486, 48
        %v3994 = vpop.permute.xlu0 %3993
        %3995 = vrot.lane.b32.xlu0 %v3554, 48
        %v3996 = vpop.permute.xlu0 %3995
        %3997 = vrot.lane.b32.xlu0 %v3489, 48
        %v3998 = vpop.permute.xlu0 %3997
        %3999 = vrot.lane.b32.xlu0 %v3555, 48
        %v4000 = vpop.permute.xlu0 %3999
        %4001 = vrot.lane.b32.xlu0 %v3492, 48
        %v4002 = vpop.permute.xlu0 %4001
        %v4036 = vrot.slane %v3555, 1
        %v4037 = vrot.slane %v3492, 1
        %v4038 = vsel %vm941, %v4036, %v4037
        %v4039 = vrot.slane %v3571, 1
        %v4040 = vsel %vm941, %v4037, %v4039
        %4041 = vrot.lane.b32.xlu0 %v3604, 64
        %v4042 = vpop.permute.xlu0 %4041
        %4043 = vrot.lane.b32.xlu0 %v3606, 64
        %v4044 = vpop.permute.xlu0 %4043
        %4045 = vrot.lane.b32.xlu0 %v3609, 64
        %v4046 = vpop.permute.xlu0 %4045
        %4047 = vrot.lane.b32.xlu0 %v3611, 64
        %v4048 = vpop.permute.xlu0 %4047
        %4049 = vrot.lane.b32.xlu0 %v3614, 64
        %v4050 = vpop.permute.xlu0 %4049
        %4051 = vrot.lane.b32.xlu0 %v3616, 64
        %v4052 = vpop.permute.xlu0 %4051
        %4053 = vrot.lane.b32.xlu0 %v3619, 64
        %v4054 = vpop.permute.xlu0 %4053
        %4055 = vrot.lane.b32.xlu0 %v3621, 64
        %v4056 = vpop.permute.xlu0 %4055
        %4057 = vrot.lane.b32.xlu0 %v3624, 64
        %v4058 = vpop.permute.xlu0 %4057
        %4059 = vrot.lane.b32.xlu0 %v3626, 64
        %v4060 = vpop.permute.xlu0 %4059
        %4061 = vrot.lane.b32.xlu0 %v3629, 64
        %v4062 = vpop.permute.xlu0 %4061
        %4063 = vrot.lane.b32.xlu0 %v3631, 64
        %v4064 = vpop.permute.xlu0 %4063
        %4065 = vrot.lane.b32.xlu0 %v3634, 64
        %v4066 = vpop.permute.xlu0 %4065
        %4067 = vrot.lane.b32.xlu0 %v3636, 64
        %v4068 = vpop.permute.xlu0 %4067
        %4069 = vrot.lane.b32.xlu0 %v3639, 64
        %v4070 = vpop.permute.xlu0 %4069
        %4071 = vrot.lane.b32.xlu0 %v3641, 64
        %v4072 = vpop.permute.xlu0 %4071
        %4073 = vrot.lane.b32.xlu0 %v3644, 64
        %v4074 = vpop.permute.xlu0 %4073
        %4075 = vrot.lane.b32.xlu0 %v3646, 64
        %v4076 = vpop.permute.xlu0 %4075
        %4077 = vrot.lane.b32.xlu0 %v3649, 64
        %v4078 = vpop.permute.xlu0 %4077
        %4079 = vrot.lane.b32.xlu0 %v3651, 64
        %v4080 = vpop.permute.xlu0 %4079
        %4081 = vrot.lane.b32.xlu0 %v3654, 64
        %v4082 = vpop.permute.xlu0 %4081
        %4083 = vrot.lane.b32.xlu0 %v3656, 64
        %v4084 = vpop.permute.xlu0 %4083
        %4085 = vrot.lane.b32.xlu0 %v3659, 64
        %v4086 = vpop.permute.xlu0 %4085
        %4087 = vrot.lane.b32.xlu0 %v3661, 64
        %v4088 = vpop.permute.xlu0 %4087
        %4089 = vrot.lane.b32.xlu0 %v3664, 64
        %v4090 = vpop.permute.xlu0 %4089
        %4091 = vrot.lane.b32.xlu0 %v3666, 64
        %v4092 = vpop.permute.xlu0 %4091
        %4093 = vrot.lane.b32.xlu0 %v3669, 64
        %v4094 = vpop.permute.xlu0 %4093
        %4095 = vrot.lane.b32.xlu0 %v3671, 64
        %v4096 = vpop.permute.xlu0 %4095
        %4097 = vrot.lane.b32.xlu0 %v3674, 64
        %v4098 = vpop.permute.xlu0 %4097
        %4099 = vrot.lane.b32.xlu0 %v3676, 64
        %v4100 = vpop.permute.xlu0 %4099
        %4101 = vrot.lane.b32.xlu0 %v4038, 64
        %v4102 = vpop.permute.xlu0 %4101
        %4103 = vrot.lane.b32.xlu0 %v4040, 64
        %v4104 = vpop.permute.xlu0 %4103
        %v4137 = vrot.slane %v3555, 2
        %v4138 = vrot.slane %v3492, 2
        %v4139 = vsel %vm1118, %v4137, %v4138
        %v4140 = vrot.slane %v3571, 2
        %v4141 = vsel %vm1118, %v4138, %v4140
        %4142 = vrot.lane.b32.xlu0 %v3775, 80
        %v4143 = vpop.permute.xlu0 %4142
        %4144 = vrot.lane.b32.xlu0 %v3777, 80
        %v4145 = vpop.permute.xlu0 %4144
        %4146 = vrot.lane.b32.xlu0 %v3780, 80
        %v4147 = vpop.permute.xlu0 %4146
        %4148 = vrot.lane.b32.xlu0 %v3782, 80
        %v4149 = vpop.permute.xlu0 %4148
        %4150 = vrot.lane.b32.xlu0 %v3785, 80
        %v4151 = vpop.permute.xlu0 %4150
        %4152 = vrot.lane.b32.xlu0 %v3787, 80
        %v4153 = vpop.permute.xlu0 %4152
        %4154 = vrot.lane.b32.xlu0 %v3790, 80
        %v4155 = vpop.permute.xlu0 %4154
        %4156 = vrot.lane.b32.xlu0 %v3792, 80
        %v4157 = vpop.permute.xlu0 %4156
        %4158 = vrot.lane.b32.xlu0 %v3795, 80
        %v4159 = vpop.permute.xlu0 %4158
        %4160 = vrot.lane.b32.xlu0 %v3797, 80
        %v4161 = vpop.permute.xlu0 %4160
        %4162 = vrot.lane.b32.xlu0 %v3800, 80
        %v4163 = vpop.permute.xlu0 %4162
        %4164 = vrot.lane.b32.xlu0 %v3802, 80
        %v4165 = vpop.permute.xlu0 %4164
        %4166 = vrot.lane.b32.xlu0 %v3805, 80
        %v4167 = vpop.permute.xlu0 %4166
        %4168 = vrot.lane.b32.xlu0 %v3807, 80
        %v4169 = vpop.permute.xlu0 %4168
        %4170 = vrot.lane.b32.xlu0 %v3810, 80
        %v4171 = vpop.permute.xlu0 %4170
        %4172 = vrot.lane.b32.xlu0 %v3812, 80
        %v4173 = vpop.permute.xlu0 %4172
        %4174 = vrot.lane.b32.xlu0 %v3815, 80
        %v4175 = vpop.permute.xlu0 %4174
        %4176 = vrot.lane.b32.xlu0 %v3817, 80
        %v4177 = vpop.permute.xlu0 %4176
        %4178 = vrot.lane.b32.xlu0 %v3820, 80
        %v4179 = vpop.permute.xlu0 %4178
        %4180 = vrot.lane.b32.xlu0 %v3822, 80
        %v4181 = vpop.permute.xlu0 %4180
        %4182 = vrot.lane.b32.xlu0 %v3825, 80
        %v4183 = vpop.permute.xlu0 %4182
        %4184 = vrot.lane.b32.xlu0 %v3827, 80
        %v4185 = vpop.permute.xlu0 %4184
        %4186 = vrot.lane.b32.xlu0 %v3830, 80
        %v4187 = vpop.permute.xlu0 %4186
        %4188 = vrot.lane.b32.xlu0 %v3832, 80
        %v4189 = vpop.permute.xlu0 %4188
        %4190 = vrot.lane.b32.xlu0 %v3835, 80
        %v4191 = vpop.permute.xlu0 %4190
        %4192 = vrot.lane.b32.xlu0 %v3837, 80
        %v4193 = vpop.permute.xlu0 %4192
        %4194 = vrot.lane.b32.xlu0 %v3840, 80
        %v4195 = vpop.permute.xlu0 %4194
        %4196 = vrot.lane.b32.xlu0 %v3842, 80
        %v4197 = vpop.permute.xlu0 %4196
        %4198 = vrot.lane.b32.xlu0 %v3845, 80
        %v4199 = vpop.permute.xlu0 %4198
        %4200 = vrot.lane.b32.xlu0 %v3847, 80
        %v4201 = vpop.permute.xlu0 %4200
        %4202 = vrot.lane.b32.xlu0 %v4139, 80
        %v4203 = vpop.permute.xlu0 %4202
        %4204 = vrot.lane.b32.xlu0 %v4141, 80
        %v4205 = vpop.permute.xlu0 %4204
        %4238 = vrot.lane.b32.xlu0 %v3541, 96
        %v4239 = vpop.permute.xlu0 %4238
        %4240 = vrot.lane.b32.xlu0 %v3450, 96
        %v4241 = vpop.permute.xlu0 %4240
        %4242 = vrot.lane.b32.xlu0 %v3542, 96
        %v4243 = vpop.permute.xlu0 %4242
        %4244 = vrot.lane.b32.xlu0 %v3453, 96
        %v4245 = vpop.permute.xlu0 %4244
        %4246 = vrot.lane.b32.xlu0 %v3543, 96
        %v4247 = vpop.permute.xlu0 %4246
        %4248 = vrot.lane.b32.xlu0 %v3456, 96
        %v4249 = vpop.permute.xlu0 %4248
        %4250 = vrot.lane.b32.xlu0 %v3544, 96
        %v4251 = vpop.permute.xlu0 %4250
        %4252 = vrot.lane.b32.xlu0 %v3459, 96
        %v4253 = vpop.permute.xlu0 %4252
        %4254 = vrot.lane.b32.xlu0 %v3545, 96
        %v4255 = vpop.permute.xlu0 %4254
        %4256 = vrot.lane.b32.xlu0 %v3462, 96
        %v4257 = vpop.permute.xlu0 %4256
        %4258 = vrot.lane.b32.xlu0 %v3546, 96
        %v4259 = vpop.permute.xlu0 %4258
        %4260 = vrot.lane.b32.xlu0 %v3465, 96
        %v4261 = vpop.permute.xlu0 %4260
        %4262 = vrot.lane.b32.xlu0 %v3547, 96
        %v4263 = vpop.permute.xlu0 %4262
        %4264 = vrot.lane.b32.xlu0 %v3468, 96
        %v4265 = vpop.permute.xlu0 %4264
        %4266 = vrot.lane.b32.xlu0 %v3548, 96
        %v4267 = vpop.permute.xlu0 %4266
        %4268 = vrot.lane.b32.xlu0 %v3471, 96
        %v4269 = vpop.permute.xlu0 %4268
        %4270 = vrot.lane.b32.xlu0 %v3549, 96
        %v4271 = vpop.permute.xlu0 %4270
        %4272 = vrot.lane.b32.xlu0 %v3474, 96
        %v4273 = vpop.permute.xlu0 %4272
        %4274 = vrot.lane.b32.xlu0 %v3550, 96
        %v4275 = vpop.permute.xlu0 %4274
        %4276 = vrot.lane.b32.xlu0 %v3477, 96
        %v4277 = vpop.permute.xlu0 %4276
        %4278 = vrot.lane.b32.xlu0 %v3551, 96
        %v4279 = vpop.permute.xlu0 %4278
        %4280 = vrot.lane.b32.xlu0 %v3480, 96
        %v4281 = vpop.permute.xlu0 %4280
        %4282 = vrot.lane.b32.xlu0 %v3552, 96
        %v4283 = vpop.permute.xlu0 %4282
        %4284 = vrot.lane.b32.xlu0 %v3483, 96
        %v4285 = vpop.permute.xlu0 %4284
        %4286 = vrot.lane.b32.xlu0 %v3553, 96
        %v4287 = vpop.permute.xlu0 %4286
        %4288 = vrot.lane.b32.xlu0 %v3486, 96
        %v4289 = vpop.permute.xlu0 %4288
        %4290 = vrot.lane.b32.xlu0 %v3554, 96
        %v4291 = vpop.permute.xlu0 %4290
        %4292 = vrot.lane.b32.xlu0 %v3489, 96
        %v4293 = vpop.permute.xlu0 %4292
        %4294 = vrot.lane.b32.xlu0 %v3555, 96
        %v4295 = vpop.permute.xlu0 %4294
        %4296 = vrot.lane.b32.xlu0 %v3492, 96
        %v4297 = vpop.permute.xlu0 %4296
        %4298 = vrot.lane.b32.xlu0 %v875, 96
        %v4299 = vpop.permute.xlu0 %4298
        %4300 = vrot.lane.b32.xlu0 %v777, 96
        %v4301 = vpop.permute.xlu0 %4300
        %4334 = vrot.lane.b32.xlu0 %v3609, 112
        %v4335 = vpop.permute.xlu0 %4334
        %4336 = vrot.lane.b32.xlu0 %v3611, 112
        %v4337 = vpop.permute.xlu0 %4336
        %4338 = vrot.lane.b32.xlu0 %v3614, 112
        %v4339 = vpop.permute.xlu0 %4338
        %4340 = vrot.lane.b32.xlu0 %v3616, 112
        %v4341 = vpop.permute.xlu0 %4340
        %4342 = vrot.lane.b32.xlu0 %v3619, 112
        %v4343 = vpop.permute.xlu0 %4342
        %4344 = vrot.lane.b32.xlu0 %v3621, 112
        %v4345 = vpop.permute.xlu0 %4344
        %4346 = vrot.lane.b32.xlu0 %v3624, 112
        %v4347 = vpop.permute.xlu0 %4346
        %4348 = vrot.lane.b32.xlu0 %v3626, 112
        %v4349 = vpop.permute.xlu0 %4348
        %4350 = vrot.lane.b32.xlu0 %v3629, 112
        %v4351 = vpop.permute.xlu0 %4350
        %4352 = vrot.lane.b32.xlu0 %v3631, 112
        %v4353 = vpop.permute.xlu0 %4352
        %4354 = vrot.lane.b32.xlu0 %v3634, 112
        %v4355 = vpop.permute.xlu0 %4354
        %4356 = vrot.lane.b32.xlu0 %v3636, 112
        %v4357 = vpop.permute.xlu0 %4356
        %4358 = vrot.lane.b32.xlu0 %v3639, 112
        %v4359 = vpop.permute.xlu0 %4358
        %4360 = vrot.lane.b32.xlu0 %v3641, 112
        %v4361 = vpop.permute.xlu0 %4360
        %4362 = vrot.lane.b32.xlu0 %v3644, 112
        %v4363 = vpop.permute.xlu0 %4362
        %4364 = vrot.lane.b32.xlu0 %v3646, 112
        %v4365 = vpop.permute.xlu0 %4364
        %4366 = vrot.lane.b32.xlu0 %v3649, 112
        %v4367 = vpop.permute.xlu0 %4366
        %4368 = vrot.lane.b32.xlu0 %v3651, 112
        %v4369 = vpop.permute.xlu0 %4368
        %4370 = vrot.lane.b32.xlu0 %v3654, 112
        %v4371 = vpop.permute.xlu0 %4370
        %4372 = vrot.lane.b32.xlu0 %v3656, 112
        %v4373 = vpop.permute.xlu0 %4372
        %4374 = vrot.lane.b32.xlu0 %v3659, 112
        %v4375 = vpop.permute.xlu0 %4374
        %4376 = vrot.lane.b32.xlu0 %v3661, 112
        %v4377 = vpop.permute.xlu0 %4376
        %4378 = vrot.lane.b32.xlu0 %v3664, 112
        %v4379 = vpop.permute.xlu0 %4378
        %4380 = vrot.lane.b32.xlu0 %v3666, 112
        %v4381 = vpop.permute.xlu0 %4380
        %4382 = vrot.lane.b32.xlu0 %v3669, 112
        %v4383 = vpop.permute.xlu0 %4382
        %4384 = vrot.lane.b32.xlu0 %v3671, 112
        %v4385 = vpop.permute.xlu0 %4384
        %4386 = vrot.lane.b32.xlu0 %v3674, 112
        %v4387 = vpop.permute.xlu0 %4386
        %4388 = vrot.lane.b32.xlu0 %v3676, 112
        %v4389 = vpop.permute.xlu0 %4388
        %4390 = vrot.lane.b32.xlu0 %v4038, 112
        %v4391 = vpop.permute.xlu0 %4390
        %4392 = vrot.lane.b32.xlu0 %v4040, 112
        %v4393 = vpop.permute.xlu0 %4392
        %4394 = vrot.lane.b32.xlu0 %v944, 112
        %v4395 = vpop.permute.xlu0 %4394
        %4396 = vrot.lane.b32.xlu0 %v946, 112
        %v4397 = vpop.permute.xlu0 %4396
        %v4462 = vsel %vm1982, %v875, %v3678
        %v4463 = vsel %vm1982, %v777, %v3680
        %v4464 = vsel %vm1982, %v3540, %v3682
        %v4465 = vsel %vm1982, %v3447, %v3684
        %v4466 = vsel %vm1982, %v3541, %v3686
        %v4467 = vsel %vm1982, %v3450, %v3688
        %v4468 = vsel %vm1982, %v3542, %v3690
        %v4469 = vsel %vm1982, %v3453, %v3692
        %v4470 = vsel %vm1982, %v3543, %v3694
        %v4471 = vsel %vm1982, %v3456, %v3696
        %v4472 = vsel %vm1982, %v3544, %v3698
        %v4473 = vsel %vm1982, %v3459, %v3700
        %v4474 = vsel %vm1982, %v3545, %v3702
        %v4475 = vsel %vm1982, %v3462, %v3704
        %v4476 = vsel %vm1982, %v3546, %v3706
        %v4477 = vsel %vm1982, %v3465, %v3708
        %v4478 = vsel %vm1982, %v3547, %v3710
        %v4479 = vsel %vm1982, %v3468, %v3712
        %v4480 = vsel %vm1982, %v3548, %v3714
        %v4481 = vsel %vm1982, %v3471, %v3716
        %v4482 = vsel %vm1982, %v3549, %v3718
        %v4483 = vsel %vm1982, %v3474, %v3720
        %v4484 = vsel %vm1982, %v3550, %v3722
        %v4485 = vsel %vm1982, %v3477, %v3724
        %v4486 = vsel %vm1982, %v3551, %v3726
        %v4487 = vsel %vm1982, %v3480, %v3728
        %v4488 = vsel %vm1982, %v3552, %v3730
        %v4489 = vsel %vm1982, %v3483, %v3732
        %v4490 = vsel %vm1982, %v3553, %v3734
        %v4491 = vsel %vm1982, %v3486, %v3736
        %v4492 = vsel %vm1982, %v3554, %v3738
        %v4493 = vsel %vm1982, %v3489, %v3740
        %v4494 = vsel %vm2114, %v4462, %v1848
        %v4495 = vsel %vm2114, %v4463, %v1850
        %v4496 = vsel %vm2114, %v4464, %v3849
        %v4497 = vsel %vm2114, %v4465, %v3851
        %v4498 = vsel %vm2114, %v4466, %v3853
        %v4499 = vsel %vm2114, %v4467, %v3855
        %v4500 = vsel %vm2114, %v4468, %v3857
        %v4501 = vsel %vm2114, %v4469, %v3859
        %v4502 = vsel %vm2114, %v4470, %v3861
        %v4503 = vsel %vm2114, %v4471, %v3863
        %v4504 = vsel %vm2114, %v4472, %v3865
        %v4505 = vsel %vm2114, %v4473, %v3867
        %v4506 = vsel %vm2114, %v4474, %v3869
        %v4507 = vsel %vm2114, %v4475, %v3871
        %v4508 = vsel %vm2114, %v4476, %v3873
        %v4509 = vsel %vm2114, %v4477, %v3875
        %v4510 = vsel %vm2114, %v4478, %v3877
        %v4511 = vsel %vm2114, %v4479, %v3879
        %v4512 = vsel %vm2114, %v4480, %v3881
        %v4513 = vsel %vm2114, %v4481, %v3883
        %v4514 = vsel %vm2114, %v4482, %v3885
        %v4515 = vsel %vm2114, %v4483, %v3887
        %v4516 = vsel %vm2114, %v4484, %v3889
        %v4517 = vsel %vm2114, %v4485, %v3891
        %v4518 = vsel %vm2114, %v4486, %v3893
        %v4519 = vsel %vm2114, %v4487, %v3895
        %v4520 = vsel %vm2114, %v4488, %v3897
        %v4521 = vsel %vm2114, %v4489, %v3899
        %v4522 = vsel %vm2114, %v4490, %v3901
        %v4523 = vsel %vm2114, %v4491, %v3903
        %v4524 = vsel %vm2114, %v4492, %v3905
        %v4525 = vsel %vm2114, %v4493, %v3907
        %vm4526 = vcmask 392192
        %v4527 = vsel %vm4526, %v4494, %v3940
        %v4528 = vsel %vm4526, %v4495, %v3942
        %v4529 = vsel %vm4526, %v4496, %v3944
        %v4530 = vsel %vm4526, %v4497, %v3946
        %v4531 = vsel %vm4526, %v4498, %v3948
        %v4532 = vsel %vm4526, %v4499, %v3950
        %v4533 = vsel %vm4526, %v4500, %v3952
        %v4534 = vsel %vm4526, %v4501, %v3954
        %v4535 = vsel %vm4526, %v4502, %v3956
        %v4536 = vsel %vm4526, %v4503, %v3958
        %v4537 = vsel %vm4526, %v4504, %v3960
        %v4538 = vsel %vm4526, %v4505, %v3962
        %v4539 = vsel %vm4526, %v4506, %v3964
        %v4540 = vsel %vm4526, %v4507, %v3966
        %v4541 = vsel %vm4526, %v4508, %v3968
        %v4542 = vsel %vm4526, %v4509, %v3970
        %v4543 = vsel %vm4526, %v4510, %v3972
        %v4544 = vsel %vm4526, %v4511, %v3974
        %v4545 = vsel %vm4526, %v4512, %v3976
        %v4546 = vsel %vm4526, %v4513, %v3978
        %v4547 = vsel %vm4526, %v4514, %v3980
        %v4548 = vsel %vm4526, %v4515, %v3982
        %v4549 = vsel %vm4526, %v4516, %v3984
        %v4550 = vsel %vm4526, %v4517, %v3986
        %v4551 = vsel %vm4526, %v4518, %v3988
        %v4552 = vsel %vm4526, %v4519, %v3990
        %v4553 = vsel %vm4526, %v4520, %v3992
        %v4554 = vsel %vm4526, %v4521, %v3994
        %v4555 = vsel %vm4526, %v4522, %v3996
        %v4556 = vsel %vm4526, %v4523, %v3998
        %v4557 = vsel %vm4526, %v4524, %v4000
        %v4558 = vsel %vm4526, %v4525, %v4002
        %vm4559 = vcmask 523264
        %v4560 = vsel %vm4559, %v4527, %v4042
        %v4561 = vsel %vm4559, %v4528, %v4044
        %v4562 = vsel %vm4559, %v4529, %v4046
        %v4563 = vsel %vm4559, %v4530, %v4048
        %v4564 = vsel %vm4559, %v4531, %v4050
        %v4565 = vsel %vm4559, %v4532, %v4052
        %v4566 = vsel %vm4559, %v4533, %v4054
        %v4567 = vsel %vm4559, %v4534, %v4056
        %v4568 = vsel %vm4559, %v4535, %v4058
        %v4569 = vsel %vm4559, %v4536, %v4060
        %v4570 = vsel %vm4559, %v4537, %v4062
        %v4571 = vsel %vm4559, %v4538, %v4064
        %v4572 = vsel %vm4559, %v4539, %v4066
        %v4573 = vsel %vm4559, %v4540, %v4068
        %v4574 = vsel %vm4559, %v4541, %v4070
        %v4575 = vsel %vm4559, %v4542, %v4072
        %v4576 = vsel %vm4559, %v4543, %v4074
        %v4577 = vsel %vm4559, %v4544, %v4076
        %v4578 = vsel %vm4559, %v4545, %v4078
        %v4579 = vsel %vm4559, %v4546, %v4080
        %v4580 = vsel %vm4559, %v4547, %v4082
        %v4581 = vsel %vm4559, %v4548, %v4084
        %v4582 = vsel %vm4559, %v4549, %v4086
        %v4583 = vsel %vm4559, %v4550, %v4088
        %v4584 = vsel %vm4559, %v4551, %v4090
        %v4585 = vsel %vm4559, %v4552, %v4092
        %v4586 = vsel %vm4559, %v4553, %v4094
        %v4587 = vsel %vm4559, %v4554, %v4096
        %v4588 = vsel %vm4559, %v4555, %v4098
        %v4589 = vsel %vm4559, %v4556, %v4100
        %v4590 = vsel %vm4559, %v4557, %v4102
        %v4591 = vsel %vm4559, %v4558, %v4104
        %vm4592 = vcmask 654336
        %v4593 = vsel %vm4592, %v4560, %v4143
        %v4594 = vsel %vm4592, %v4561, %v4145
        %v4595 = vsel %vm4592, %v4562, %v4147
        %v4596 = vsel %vm4592, %v4563, %v4149
        %v4597 = vsel %vm4592, %v4564, %v4151
        %v4598 = vsel %vm4592, %v4565, %v4153
        %v4599 = vsel %vm4592, %v4566, %v4155
        %v4600 = vsel %vm4592, %v4567, %v4157
        %v4601 = vsel %vm4592, %v4568, %v4159
        %v4602 = vsel %vm4592, %v4569, %v4161
        %v4603 = vsel %vm4592, %v4570, %v4163
        %v4604 = vsel %vm4592, %v4571, %v4165
        %v4605 = vsel %vm4592, %v4572, %v4167
        %v4606 = vsel %vm4592, %v4573, %v4169
        %v4607 = vsel %vm4592, %v4574, %v4171
        %v4608 = vsel %vm4592, %v4575, %v4173
        %v4609 = vsel %vm4592, %v4576, %v4175
        %v4610 = vsel %vm4592, %v4577, %v4177
        %v4611 = vsel %vm4592, %v4578, %v4179
        %v4612 = vsel %vm4592, %v4579, %v4181
        %v4613 = vsel %vm4592, %v4580, %v4183
        %v4614 = vsel %vm4592, %v4581, %v4185
        %v4615 = vsel %vm4592, %v4582, %v4187
        %v4616 = vsel %vm4592, %v4583, %v4189
        %v4617 = vsel %vm4592, %v4584, %v4191
        %v4618 = vsel %vm4592, %v4585, %v4193
        %v4619 = vsel %vm4592, %v4586, %v4195
        %v4620 = vsel %vm4592, %v4587, %v4197
        %v4621 = vsel %vm4592, %v4588, %v4199
        %v4622 = vsel %vm4592, %v4589, %v4201
        %v4623 = vsel %vm4592, %v4590, %v4203
        %v4624 = vsel %vm4592, %v4591, %v4205
        %vm4625 = vcmask 785408
        %v4626 = vsel %vm4625, %v4593, %v4239
        %v4627 = vsel %vm4625, %v4594, %v4241
        %v4628 = vsel %vm4625, %v4595, %v4243
        %v4629 = vsel %vm4625, %v4596, %v4245
        %v4630 = vsel %vm4625, %v4597, %v4247
        %v4631 = vsel %vm4625, %v4598, %v4249
        %v4632 = vsel %vm4625, %v4599, %v4251
        %v4633 = vsel %vm4625, %v4600, %v4253
        %v4634 = vsel %vm4625, %v4601, %v4255
        %v4635 = vsel %vm4625, %v4602, %v4257
        %v4636 = vsel %vm4625, %v4603, %v4259
        %v4637 = vsel %vm4625, %v4604, %v4261
        %v4638 = vsel %vm4625, %v4605, %v4263
        %v4639 = vsel %vm4625, %v4606, %v4265
        %v4640 = vsel %vm4625, %v4607, %v4267
        %v4641 = vsel %vm4625, %v4608, %v4269
        %v4642 = vsel %vm4625, %v4609, %v4271
        %v4643 = vsel %vm4625, %v4610, %v4273
        %v4644 = vsel %vm4625, %v4611, %v4275
        %v4645 = vsel %vm4625, %v4612, %v4277
        %v4646 = vsel %vm4625, %v4613, %v4279
        %v4647 = vsel %vm4625, %v4614, %v4281
        %v4648 = vsel %vm4625, %v4615, %v4283
        %v4649 = vsel %vm4625, %v4616, %v4285
        %v4650 = vsel %vm4625, %v4617, %v4287
        %v4651 = vsel %vm4625, %v4618, %v4289
        %v4652 = vsel %vm4625, %v4619, %v4291
        %v4653 = vsel %vm4625, %v4620, %v4293
        %v4654 = vsel %vm4625, %v4621, %v4295
        %v4655 = vsel %vm4625, %v4622, %v4297
        %v4656 = vsel %vm4625, %v4623, %v4299
        %v4657 = vsel %vm4625, %v4624, %v4301
        %vm4658 = vcmask 916480
        %v4659 = vsel %vm4658, %v4626, %v4335
        %v4660 = vsel %vm4658, %v4627, %v4337
        %v4661 = vsel %vm4658, %v4628, %v4339
        %v4662 = vsel %vm4658, %v4629, %v4341
        %v4663 = vsel %vm4658, %v4630, %v4343
        %v4664 = vsel %vm4658, %v4631, %v4345
        %v4665 = vsel %vm4658, %v4632, %v4347
        %v4666 = vsel %vm4658, %v4633, %v4349
        %v4667 = vsel %vm4658, %v4634, %v4351
        %v4668 = vsel %vm4658, %v4635, %v4353
        %v4669 = vsel %vm4658, %v4636, %v4355
        %v4670 = vsel %vm4658, %v4637, %v4357
        %v4671 = vsel %vm4658, %v4638, %v4359
        %v4672 = vsel %vm4658, %v4639, %v4361
        %v4673 = vsel %vm4658, %v4640, %v4363
        %v4674 = vsel %vm4658, %v4641, %v4365
        %v4675 = vsel %vm4658, %v4642, %v4367
        %v4676 = vsel %vm4658, %v4643, %v4369
        %v4677 = vsel %vm4658, %v4644, %v4371
        %v4678 = vsel %vm4658, %v4645, %v4373
        %v4679 = vsel %vm4658, %v4646, %v4375
        %v4680 = vsel %vm4658, %v4647, %v4377
        %v4681 = vsel %vm4658, %v4648, %v4379
        %v4682 = vsel %vm4658, %v4649, %v4381
        %v4683 = vsel %vm4658, %v4650, %v4383
        %v4684 = vsel %vm4658, %v4651, %v4385
        %v4685 = vsel %vm4658, %v4652, %v4387
        %v4686 = vsel %vm4658, %v4653, %v4389
        %v4687 = vsel %vm4658, %v4654, %v4391
        %v4688 = vsel %vm4658, %v4655, %v4393
        %v4689 = vsel %vm4658, %v4656, %v4395
        %v4690 = vsel %vm4658, %v4657, %v4397
        %v4691 = vpack.c.bf16 %v4660, %v4659
        %v4692 = vpack.c.bf16 %v3782, %v3780
        %v4693 = vpack.c.bf16 %v4662, %v4661
        %v4694 = vpack.c.bf16 %v3787, %v3785
        %v4695 = vpack.c.bf16 %v4664, %v4663
        %v4696 = vpack.c.bf16 %v3792, %v3790
        %v4697 = vpack.c.bf16 %v4666, %v4665
        %v4698 = vpack.c.bf16 %v3797, %v3795
        %v4699 = vpack.c.bf16 %v4668, %v4667
        %v4700 = vpack.c.bf16 %v3802, %v3800
        %v4701 = vpack.c.bf16 %v4670, %v4669
        %v4702 = vpack.c.bf16 %v3807, %v3805
        %v4703 = vpack.c.bf16 %v4672, %v4671
        %v4704 = vpack.c.bf16 %v3812, %v3810
        %v4705 = vpack.c.bf16 %v4674, %v4673
        %v4706 = vpack.c.bf16 %v3817, %v3815
        %v4707 = vpack.c.bf16 %v4676, %v4675
        %v4708 = vpack.c.bf16 %v3822, %v3820
        %v4709 = vpack.c.bf16 %v4678, %v4677
        %v4710 = vpack.c.bf16 %v3827, %v3825
        %v4711 = vpack.c.bf16 %v4680, %v4679
        %v4712 = vpack.c.bf16 %v3832, %v3830
        %v4713 = vpack.c.bf16 %v4682, %v4681
        %v4714 = vpack.c.bf16 %v3837, %v3835
        %v4715 = vpack.c.bf16 %v4684, %v4683
        %v4716 = vpack.c.bf16 %v3842, %v3840
        %v4717 = vpack.c.bf16 %v4686, %v4685
        %v4718 = vpack.c.bf16 %v3847, %v3845
        %v4719 = vpack.c.bf16 %v4688, %v4687
        %v4720 = vpack.c.bf16 %v4141, %v4139
        %v4721 = vpack.c.bf16 %v4690, %v4689
        %v4722 = vpack.c.bf16 %v1123, %v1121
        %v4724 = vlaneseq
        %v4725 = vshrl.u32 %v4724, 7
        %v4726 = vsub.s32 0, %v4725
        %v4727 = vrot.slane %v544, %v4726
        %v4747 = vunpack.c.l.b16 %v526
        %v4748 = vunpack.c.l.b16 %v527
        %v4749 = vunpack.c.l.b16 %v528
        %v4750 = vunpack.c.l.b16 %v529
        %v4751 = vunpack.c.l.b16 %v530
        %v4752 = vunpack.c.l.b16 %v531
        %v4753 = vunpack.c.l.b16 %v532
        %v4754 = vunpack.c.l.b16 %v533
        %v4755 = vunpack.c.l.b16 %v534
        %v4756 = vunpack.c.l.b16 %v535
        %v4757 = vunpack.c.l.b16 %v536
        %v4758 = vunpack.c.l.b16 %v537
        %v4759 = vunpack.c.l.b16 %v538
        %v4760 = vunpack.c.l.b16 %v539
        %v4761 = vunpack.c.l.b16 %v540
        %v4762 = vunpack.c.l.b16 %v541
        %v4763 = vunpack.c.l.b16 %v542
        %v4764 = vunpack.c.l.b16 %v543
        %v4765 = vpack.c.b16 %v4748, %v4747
        %v4766 = vpack.c.b16 %v4750, %v4749
        %v4767 = vpack.c.b16 %v4752, %v4751
        %v4768 = vpack.c.b16 %v4754, %v4753
        %v4769 = vpack.c.b16 %v4756, %v4755
        %v4770 = vpack.c.b16 %v4758, %v4757
        %v4771 = vpack.c.b16 %v4760, %v4759
        %v4772 = vpack.c.b16 %v4762, %v4761
        %v4773 = vpack.c.b16 %v4764, %v4763
        %v4784 = vsel %vm1982, %v4692, 0
        %v4787 = vsel %vm1982, %v4694, 0
        %v4790 = vsel %vm1982, %v4696, 0
        %v4793 = vsel %vm1982, %v4698, 0
        %v4796 = vsel %vm1982, %v4700, 0
        %v4799 = vsel %vm1982, %v4702, 0
        %v4802 = vsel %vm1982, %v4704, 0
        %v4805 = vsel %vm1982, %v4706, 0
        %v4808 = vsel %vm1982, %v4708, 0
        %v4811 = vsel %vm1982, %v4710, 0
        %v4814 = vsel %vm1982, %v4712, 0
        %v4817 = vsel %vm1982, %v4714, 0
        %v4820 = vsel %vm1982, %v4716, 0
        %v4823 = vsel %vm1982, %v4718, 0
        %v4826 = vsel %vm1982, %v4720, 0
        %v4829 = vsel %vm1982, %v4722, 0
        %4831 = vmatprep.subr.bf16.mxu0 0
        %4832 = vmatpush1.bf16.msra.mxu0 %v4772
        %4833 = vmatprep.subr.bf16.mxu0 0
        %4834 = vmatpush1.bf16.msra.mxu0 %v4771
        %4835 = vmatprep.subr.bf16.mxu0 0
        %4836 = vmatpush1.bf16.msra.mxu0 %v4770
        %4837 = vmatprep.subr.bf16.mxu0 0
        %4838 = vmatpush1.bf16.msra.mxu0 %v4769
        %4839 = vmatprep.subr.bf16.mxu0 0
        %4840 = vmatpush1.bf16.msra.mxu0 %v4768
        %4841 = vmatprep.subr.bf16.mxu0 0
        %4842 = vmatpush1.bf16.msra.mxu0 %v4767
        %4843 = vmatprep.subr.bf16.mxu0 0
        %4844 = vmatpush1.bf16.msra.mxu0 %v4766
        %4845 = vmatprep.subr.bf16.mxu0 0
        %4846 = vmatpush1.bf16.msra.mxu0 %v4765
        %4847 = vmatprep.subr.bf16.mxu0 0
        %4848 = vmatpush2.bf16.msra.mxu0 0
        %4849 = vmatprep.subr.bf16.mxu0 0
        %4850 = vmatpush2.bf16.msra.mxu0 0
        %4851 = vmatprep.subr.bf16.mxu0 0
        %4852 = vmatpush2.bf16.msra.mxu0 0
        %4853 = vmatprep.subr.bf16.mxu0 0
        %4854 = vmatpush2.bf16.msra.mxu0 0
        %4855 = vmatprep.subr.bf16.mxu0 0
        %4856 = vmatpush2.bf16.msra.mxu0 0
        %4857 = vmatprep.subr.bf16.mxu0 0
        %4858 = vmatpush2.bf16.msra.mxu0 0
        %4859 = vmatprep.subr.bf16.mxu0 0
        %4860 = vmatpush2.bf16.msra.mxu0 0
        %4861 = vmatprep.subr.bf16.mxu0 0
        %4862 = vmatpush2.bf16.msra.mxu0 %v4773
        %4863 = vmatprep.mubr.bf16.mxu0 %v4784
        %4864 = vmatmul.mubr.bf16.gmra.mxu0 %v4691
        %v4865 = vpop.f32.mrf.mxu0
        %v4866 = vadd.f32 %v4727, %v4865
        %v4867 = vpop.f32.mrf.mxu0
        %v4868 = vpop.f32.mrf.mxu0
        %v4869 = vadd.f32 %v4727, %v4868
        %v4870 = vpop.f32.mrf.mxu0
        %4871 = vmatprep.mubr.bf16.mxu0 %v4787
        %4872 = vmatmul.mubr.bf16.gmra.mxu0 %v4693
        %v4873 = vpop.f32.mrf.mxu0
        %v4874 = vadd.f32 %v4727, %v4873
        %v4875 = vpop.f32.mrf.mxu0
        %v4876 = vpop.f32.mrf.mxu0
        %v4877 = vadd.f32 %v4727, %v4876
        %v4878 = vpop.f32.mrf.mxu0
        %4879 = vmatprep.mubr.bf16.mxu0 %v4790
        %4880 = vmatmul.mubr.bf16.gmra.mxu0 %v4695
        %v4881 = vpop.f32.mrf.mxu0
        %v4882 = vadd.f32 %v4727, %v4881
        %v4883 = vpop.f32.mrf.mxu0
        %v4884 = vpop.f32.mrf.mxu0
        %v4885 = vadd.f32 %v4727, %v4884
        %v4886 = vpop.f32.mrf.mxu0
        %4887 = vmatprep.mubr.bf16.mxu0 %v4793
        %4888 = vmatmul.mubr.bf16.gmra.mxu0 %v4697
        %v4889 = vpop.f32.mrf.mxu0
        %v4890 = vadd.f32 %v4727, %v4889
        %v4891 = vpop.f32.mrf.mxu0
        %v4892 = vpop.f32.mrf.mxu0
        %v4893 = vadd.f32 %v4727, %v4892
        %v4894 = vpop.f32.mrf.mxu0
        %4895 = vmatprep.mubr.bf16.mxu0 %v4796
        %4896 = vmatmul.mubr.bf16.gmra.mxu0 %v4699
        %v4897 = vpop.f32.mrf.mxu0
        %v4898 = vadd.f32 %v4727, %v4897
        %v4899 = vpop.f32.mrf.mxu0
        %v4900 = vpop.f32.mrf.mxu0
        %v4901 = vadd.f32 %v4727, %v4900
        %v4902 = vpop.f32.mrf.mxu0
        %4903 = vmatprep.mubr.bf16.mxu0 %v4799
        %4904 = vmatmul.mubr.bf16.gmra.mxu0 %v4701
        %v4905 = vpop.f32.mrf.mxu0
        %v4906 = vadd.f32 %v4727, %v4905
        %v4907 = vpop.f32.mrf.mxu0
        %v4908 = vpop.f32.mrf.mxu0
        %v4909 = vadd.f32 %v4727, %v4908
        %v4910 = vpop.f32.mrf.mxu0
        %4911 = vmatprep.mubr.bf16.mxu0 %v4802
        %4912 = vmatmul.mubr.bf16.gmra.mxu0 %v4703
        %v4913 = vpop.f32.mrf.mxu0
        %v4914 = vadd.f32 %v4727, %v4913
        %v4915 = vpop.f32.mrf.mxu0
        %v4916 = vpop.f32.mrf.mxu0
        %v4917 = vadd.f32 %v4727, %v4916
        %v4918 = vpop.f32.mrf.mxu0
        %4919 = vmatprep.mubr.bf16.mxu0 %v4805
        %4920 = vmatmul.mubr.bf16.gmra.mxu0 %v4705
        %v4921 = vpop.f32.mrf.mxu0
        %v4922 = vadd.f32 %v4727, %v4921
        %v4923 = vpop.f32.mrf.mxu0
        %v4924 = vpop.f32.mrf.mxu0
        %v4925 = vadd.f32 %v4727, %v4924
        %v4926 = vpop.f32.mrf.mxu0
        %4927 = vmatprep.mubr.bf16.mxu0 %v4808
        %4928 = vmatmul.mubr.bf16.gmra.mxu0 %v4707
        %v4929 = vpop.f32.mrf.mxu0
        %v4930 = vadd.f32 %v4727, %v4929
        %v4931 = vpop.f32.mrf.mxu0
        %v4932 = vpop.f32.mrf.mxu0
        %v4933 = vadd.f32 %v4727, %v4932
        %v4934 = vpop.f32.mrf.mxu0
        %4935 = vmatprep.mubr.bf16.mxu0 %v4811
        %4936 = vmatmul.mubr.bf16.gmra.mxu0 %v4709
        %v4937 = vpop.f32.mrf.mxu0
        %v4938 = vadd.f32 %v4727, %v4937
        %v4939 = vpop.f32.mrf.mxu0
        %v4940 = vpop.f32.mrf.mxu0
        %v4941 = vadd.f32 %v4727, %v4940
        %v4942 = vpop.f32.mrf.mxu0
        %4943 = vmatprep.mubr.bf16.mxu0 %v4814
        %4944 = vmatmul.mubr.bf16.gmra.mxu0 %v4711
        %v4945 = vpop.f32.mrf.mxu0
        %v4946 = vadd.f32 %v4727, %v4945
        %v4947 = vpop.f32.mrf.mxu0
        %v4948 = vpop.f32.mrf.mxu0
        %v4949 = vadd.f32 %v4727, %v4948
        %v4950 = vpop.f32.mrf.mxu0
        %4951 = vmatprep.mubr.bf16.mxu0 %v4817
        %4952 = vmatmul.mubr.bf16.gmra.mxu0 %v4713
        %v4953 = vpop.f32.mrf.mxu0
        %v4954 = vadd.f32 %v4727, %v4953
        %v4955 = vpop.f32.mrf.mxu0
        %v4956 = vpop.f32.mrf.mxu0
        %v4957 = vadd.f32 %v4727, %v4956
        %v4958 = vpop.f32.mrf.mxu0
        %4959 = vmatprep.mubr.bf16.mxu0 %v4820
        %4960 = vmatmul.mubr.bf16.gmra.mxu0 %v4715
        %v4961 = vpop.f32.mrf.mxu0
        %v4962 = vadd.f32 %v4727, %v4961
        %v4963 = vpop.f32.mrf.mxu0
        %v4964 = vpop.f32.mrf.mxu0
        %v4965 = vadd.f32 %v4727, %v4964
        %v4966 = vpop.f32.mrf.mxu0
        %4967 = vmatprep.mubr.bf16.mxu0 %v4823
        %4968 = vmatmul.mubr.bf16.gmra.mxu0 %v4717
        %v4969 = vpop.f32.mrf.mxu0
        %v4970 = vadd.f32 %v4727, %v4969
        %v4971 = vpop.f32.mrf.mxu0
        %v4972 = vpop.f32.mrf.mxu0
        %v4973 = vadd.f32 %v4727, %v4972
        %v4974 = vpop.f32.mrf.mxu0
        %4975 = vmatprep.mubr.bf16.mxu0 %v4826
        %4976 = vmatmul.mubr.bf16.gmra.mxu0 %v4719
        %v4977 = vpop.f32.mrf.mxu0
        %v4978 = vadd.f32 %v4727, %v4977
        %v4979 = vpop.f32.mrf.mxu0
        %v4980 = vpop.f32.mrf.mxu0
        %v4981 = vadd.f32 %v4727, %v4980
        %v4982 = vpop.f32.mrf.mxu0
        %4983 = vmatprep.mubr.bf16.mxu0 %v4829
        %4984 = vmatmul.mubr.bf16.gmra.mxu0 %v4721
        %v4985 = vpop.f32.mrf.mxu0
        %v4986 = vadd.f32 %v4727, %v4985
        %v4987 = vpop.f32.mrf.mxu0
        %v4988 = vpop.f32.mrf.mxu0
        %v4989 = vadd.f32 %v4727, %v4988
        %v4990 = vpop.f32.mrf.mxu0
        %4991 = vdwg.mxu0
        %v4992 = vadd.f32 %v4866, %v4874
        %v4993 = vadd.f32 %v4869, %v4877
        %v4994 = vadd.f32 %v4882, %v4890
        %v4995 = vadd.f32 %v4885, %v4893
        %v4996 = vadd.f32 %v4898, %v4906
        %v4997 = vadd.f32 %v4901, %v4909
        %v4998 = vadd.f32 %v4914, %v4922
        %v4999 = vadd.f32 %v4917, %v4925
        %v5000 = vadd.f32 %v4930, %v4938
        %v5001 = vadd.f32 %v4933, %v4941
        %v5002 = vadd.f32 %v4946, %v4954
        %v5003 = vadd.f32 %v4949, %v4957
        %v5004 = vadd.f32 %v4962, %v4970
        %v5005 = vadd.f32 %v4965, %v4973
        %v5006 = vadd.f32 %v4978, %v4986
        %v5007 = vadd.f32 %v4981, %v4989
        %v5024 = vcombine.high %v4992, %v4992
        %v5026 = vunpack.c.l.s4 1983009808
        %v5027 = vunpack.c.0.s8 %v5026
        %v5028 = vlaneseq
        %v5029 = vshrl.u32 %v5028, 7
        %v5030 = vsub.s32 %v5027, %v5029
        %v5031 = vrot.slane %v4992, %v5030
        %v5033 = vunpack.c.l.s4 1983009808
        %v5034 = vunpack.c.0.s8 %v5033
        %v5035 = vlaneseq
        %v5036 = vshrl.u32 %v5035, 7
        %v5037 = vsub.s32 %v5034, %v5036
        %v5038 = vrot.slane %v5024, %v5037
        %v5039 = vcombine.high %v5031, %v5031
        %v5040 = vcombine.high %v5038, %v5038
        %v5041 = vcombine.high %v4993, %v4993
        %v5043 = vunpack.c.l.s4 1983009808
        %v5044 = vunpack.c.0.s8 %v5043
        %v5045 = vlaneseq
        %v5046 = vshrl.u32 %v5045, 7
        %v5047 = vsub.s32 %v5044, %v5046
        %v5048 = vrot.slane %v4993, %v5047
        %v5050 = vunpack.c.l.s4 1983009808
        %v5051 = vunpack.c.0.s8 %v5050
        %v5052 = vlaneseq
        %v5053 = vshrl.u32 %v5052, 7
        %v5054 = vsub.s32 %v5051, %v5053
        %v5055 = vrot.slane %v5041, %v5054
        %v5056 = vcombine.high %v5048, %v5048
        %v5057 = vcombine.high %v5055, %v5055
        %v5058 = vcombine.high %v4994, %v4994
        %v5060 = vunpack.c.l.s4 1983009808
        %v5061 = vunpack.c.0.s8 %v5060
        %v5062 = vlaneseq
        %v5063 = vshrl.u32 %v5062, 7
        %v5064 = vsub.s32 %v5061, %v5063
        %v5065 = vrot.slane %v4994, %v5064
        %v5067 = vunpack.c.l.s4 1983009808
        %v5068 = vunpack.c.0.s8 %v5067
        %v5069 = vlaneseq
        %v5070 = vshrl.u32 %v5069, 7
        %v5071 = vsub.s32 %v5068, %v5070
        %v5072 = vrot.slane %v5058, %v5071
        %v5073 = vcombine.high %v5065, %v5065
        %v5074 = vcombine.high %v5072, %v5072
        %v5075 = vcombine.high %v4995, %v4995
        %v5077 = vunpack.c.l.s4 1983009808
        %v5078 = vunpack.c.0.s8 %v5077
        %v5079 = vlaneseq
        %v5080 = vshrl.u32 %v5079, 7
        %v5081 = vsub.s32 %v5078, %v5080
        %v5082 = vrot.slane %v4995, %v5081
        %v5084 = vunpack.c.l.s4 1983009808
        %v5085 = vunpack.c.0.s8 %v5084
        %v5086 = vlaneseq
        %v5087 = vshrl.u32 %v5086, 7
        %v5088 = vsub.s32 %v5085, %v5087
        %v5089 = vrot.slane %v5075, %v5088
        %v5090 = vcombine.high %v5082, %v5082
        %v5091 = vcombine.high %v5089, %v5089
        %v5092 = vcombine.high %v4996, %v4996
        %v5094 = vunpack.c.l.s4 1983009808
        %v5095 = vunpack.c.0.s8 %v5094
        %v5096 = vlaneseq
        %v5097 = vshrl.u32 %v5096, 7
        %v5098 = vsub.s32 %v5095, %v5097
        %v5099 = vrot.slane %v4996, %v5098
        %v5101 = vunpack.c.l.s4 1983009808
        %v5102 = vunpack.c.0.s8 %v5101
        %v5103 = vlaneseq
        %v5104 = vshrl.u32 %v5103, 7
        %v5105 = vsub.s32 %v5102, %v5104
        %v5106 = vrot.slane %v5092, %v5105
        %v5107 = vcombine.high %v5099, %v5099
        %v5108 = vcombine.high %v5106, %v5106
        %v5109 = vcombine.high %v4997, %v4997
        %v5111 = vunpack.c.l.s4 1983009808
        %v5112 = vunpack.c.0.s8 %v5111
        %v5113 = vlaneseq
        %v5114 = vshrl.u32 %v5113, 7
        %v5115 = vsub.s32 %v5112, %v5114
        %v5116 = vrot.slane %v4997, %v5115
        %v5118 = vunpack.c.l.s4 1983009808
        %v5119 = vunpack.c.0.s8 %v5118
        %v5120 = vlaneseq
        %v5121 = vshrl.u32 %v5120, 7
        %v5122 = vsub.s32 %v5119, %v5121
        %v5123 = vrot.slane %v5109, %v5122
        %v5124 = vcombine.high %v5116, %v5116
        %v5125 = vcombine.high %v5123, %v5123
        %v5126 = vcombine.high %v4998, %v4998
        %v5128 = vunpack.c.l.s4 1983009808
        %v5129 = vunpack.c.0.s8 %v5128
        %v5130 = vlaneseq
        %v5131 = vshrl.u32 %v5130, 7
        %v5132 = vsub.s32 %v5129, %v5131
        %v5133 = vrot.slane %v4998, %v5132
        %v5135 = vunpack.c.l.s4 1983009808
        %v5136 = vunpack.c.0.s8 %v5135
        %v5137 = vlaneseq
        %v5138 = vshrl.u32 %v5137, 7
        %v5139 = vsub.s32 %v5136, %v5138
        %v5140 = vrot.slane %v5126, %v5139
        %v5141 = vcombine.high %v5133, %v5133
        %v5142 = vcombine.high %v5140, %v5140
        %v5143 = vcombine.high %v4999, %v4999
        %v5145 = vunpack.c.l.s4 1983009808
        %v5146 = vunpack.c.0.s8 %v5145
        %v5147 = vlaneseq
        %v5148 = vshrl.u32 %v5147, 7
        %v5149 = vsub.s32 %v5146, %v5148
        %v5150 = vrot.slane %v4999, %v5149
        %v5152 = vunpack.c.l.s4 1983009808
        %v5153 = vunpack.c.0.s8 %v5152
        %v5154 = vlaneseq
        %v5155 = vshrl.u32 %v5154, 7
        %v5156 = vsub.s32 %v5153, %v5155
        %v5157 = vrot.slane %v5143, %v5156
        %v5158 = vcombine.high %v5150, %v5150
        %v5159 = vcombine.high %v5157, %v5157
        %v5160 = vcombine.high %v5000, %v5000
        %v5162 = vunpack.c.l.s4 1983009808
        %v5163 = vunpack.c.0.s8 %v5162
        %v5164 = vlaneseq
        %v5165 = vshrl.u32 %v5164, 7
        %v5166 = vsub.s32 %v5163, %v5165
        %v5167 = vrot.slane %v5000, %v5166
        %v5169 = vunpack.c.l.s4 1983009808
        %v5170 = vunpack.c.0.s8 %v5169
        %v5171 = vlaneseq
        %v5172 = vshrl.u32 %v5171, 7
        %v5173 = vsub.s32 %v5170, %v5172
        %v5174 = vrot.slane %v5160, %v5173
        %v5175 = vcombine.high %v5167, %v5167
        %v5176 = vcombine.high %v5174, %v5174
        %v5177 = vcombine.high %v5001, %v5001
        %v5179 = vunpack.c.l.s4 1983009808
        %v5180 = vunpack.c.0.s8 %v5179
        %v5181 = vlaneseq
        %v5182 = vshrl.u32 %v5181, 7
        %v5183 = vsub.s32 %v5180, %v5182
        %v5184 = vrot.slane %v5001, %v5183
        %v5186 = vunpack.c.l.s4 1983009808
        %v5187 = vunpack.c.0.s8 %v5186
        %v5188 = vlaneseq
        %v5189 = vshrl.u32 %v5188, 7
        %v5190 = vsub.s32 %v5187, %v5189
        %v5191 = vrot.slane %v5177, %v5190
        %v5192 = vcombine.high %v5184, %v5184
        %v5193 = vcombine.high %v5191, %v5191
        %v5194 = vcombine.high %v5002, %v5002
        %v5196 = vunpack.c.l.s4 1983009808
        %v5197 = vunpack.c.0.s8 %v5196
        %v5198 = vlaneseq
        %v5199 = vshrl.u32 %v5198, 7
        %v5200 = vsub.s32 %v5197, %v5199
        %v5201 = vrot.slane %v5002, %v5200
        %v5203 = vunpack.c.l.s4 1983009808
        %v5204 = vunpack.c.0.s8 %v5203
        %v5205 = vlaneseq
        %v5206 = vshrl.u32 %v5205, 7
        %v5207 = vsub.s32 %v5204, %v5206
        %v5208 = vrot.slane %v5194, %v5207
        %v5209 = vcombine.high %v5201, %v5201
        %v5210 = vcombine.high %v5208, %v5208
        %v5211 = vcombine.high %v5003, %v5003
        %v5213 = vunpack.c.l.s4 1983009808
        %v5214 = vunpack.c.0.s8 %v5213
        %v5215 = vlaneseq
        %v5216 = vshrl.u32 %v5215, 7
        %v5217 = vsub.s32 %v5214, %v5216
        %v5218 = vrot.slane %v5003, %v5217
        %v5220 = vunpack.c.l.s4 1983009808
        %v5221 = vunpack.c.0.s8 %v5220
        %v5222 = vlaneseq
        %v5223 = vshrl.u32 %v5222, 7
        %v5224 = vsub.s32 %v5221, %v5223
        %v5225 = vrot.slane %v5211, %v5224
        %v5226 = vcombine.high %v5218, %v5218
        %v5227 = vcombine.high %v5225, %v5225
        %v5228 = vcombine.high %v5004, %v5004
        %v5230 = vunpack.c.l.s4 1983009808
        %v5231 = vunpack.c.0.s8 %v5230
        %v5232 = vlaneseq
        %v5233 = vshrl.u32 %v5232, 7
        %v5234 = vsub.s32 %v5231, %v5233
        %v5235 = vrot.slane %v5004, %v5234
        %v5237 = vunpack.c.l.s4 1983009808
        %v5238 = vunpack.c.0.s8 %v5237
        %v5239 = vlaneseq
        %v5240 = vshrl.u32 %v5239, 7
        %v5241 = vsub.s32 %v5238, %v5240
        %v5242 = vrot.slane %v5228, %v5241
        %v5243 = vcombine.high %v5235, %v5235
        %v5244 = vcombine.high %v5242, %v5242
        %v5245 = vcombine.high %v5005, %v5005
        %v5247 = vunpack.c.l.s4 1983009808
        %v5248 = vunpack.c.0.s8 %v5247
        %v5249 = vlaneseq
        %v5250 = vshrl.u32 %v5249, 7
        %v5251 = vsub.s32 %v5248, %v5250
        %v5252 = vrot.slane %v5005, %v5251
        %v5254 = vunpack.c.l.s4 1983009808
        %v5255 = vunpack.c.0.s8 %v5254
        %v5256 = vlaneseq
        %v5257 = vshrl.u32 %v5256, 7
        %v5258 = vsub.s32 %v5255, %v5257
        %v5259 = vrot.slane %v5245, %v5258
        %v5260 = vcombine.high %v5252, %v5252
        %v5261 = vcombine.high %v5259, %v5259
        %v5262 = vcombine.high %v5006, %v5006
        %v5264 = vunpack.c.l.s4 1983009808
        %v5265 = vunpack.c.0.s8 %v5264
        %v5266 = vlaneseq
        %v5267 = vshrl.u32 %v5266, 7
        %v5268 = vsub.s32 %v5265, %v5267
        %v5269 = vrot.slane %v5006, %v5268
        %v5271 = vunpack.c.l.s4 1983009808
        %v5272 = vunpack.c.0.s8 %v5271
        %v5273 = vlaneseq
        %v5274 = vshrl.u32 %v5273, 7
        %v5275 = vsub.s32 %v5272, %v5274
        %v5276 = vrot.slane %v5262, %v5275
        %v5277 = vcombine.high %v5269, %v5269
        %v5278 = vcombine.high %v5276, %v5276
        %v5279 = vcombine.high %v5007, %v5007
        %v5281 = vunpack.c.l.s4 1983009808
        %v5282 = vunpack.c.0.s8 %v5281
        %v5283 = vlaneseq
        %v5284 = vshrl.u32 %v5283, 7
        %v5285 = vsub.s32 %v5282, %v5284
        %v5286 = vrot.slane %v5007, %v5285
        %v5288 = vunpack.c.l.s4 1983009808
        %v5289 = vunpack.c.0.s8 %v5288
        %v5290 = vlaneseq
        %v5291 = vshrl.u32 %v5290, 7
        %v5292 = vsub.s32 %v5289, %v5291
        %v5293 = vrot.slane %v5279, %v5292
        %v5294 = vcombine.high %v5286, %v5286
        %v5295 = vcombine.high %v5293, %v5293
        %v5360 = vrot.slane %v5031, 7
        %v5361 = vrot.slane %v5360, 2
        %v5362 = vrot.slane %v5039, 7
        %v5363 = vrot.slane %v5362, 2
        %v5364 = vrot.slane %v5038, 7
        %v5365 = vrot.slane %v5364, 2
        %v5366 = vrot.slane %v5040, 7
        %v5367 = vrot.slane %v5366, 2
        %v5368 = vrot.slane %v5048, 7
        %v5369 = vrot.slane %v5368, 2
        %v5370 = vrot.slane %v5056, 7
        %v5371 = vrot.slane %v5370, 2
        %v5372 = vrot.slane %v5055, 7
        %v5373 = vrot.slane %v5372, 2
        %v5374 = vrot.slane %v5057, 7
        %v5375 = vrot.slane %v5374, 2
        %v5376 = vrot.slane %v5065, 7
        %v5377 = vrot.slane %v5376, 2
        %v5378 = vrot.slane %v5073, 7
        %v5379 = vrot.slane %v5378, 2
        %v5380 = vrot.slane %v5072, 7
        %v5381 = vrot.slane %v5380, 2
        %v5382 = vrot.slane %v5074, 7
        %v5383 = vrot.slane %v5382, 2
        %v5384 = vrot.slane %v5082, 7
        %v5385 = vrot.slane %v5384, 2
        %v5386 = vrot.slane %v5090, 7
        %v5387 = vrot.slane %v5386, 2
        %v5388 = vrot.slane %v5089, 7
        %v5389 = vrot.slane %v5388, 2
        %v5390 = vrot.slane %v5091, 7
        %v5391 = vrot.slane %v5390, 2
        %v5392 = vrot.slane %v5099, 7
        %v5393 = vrot.slane %v5392, 2
        %v5394 = vrot.slane %v5107, 7
        %v5395 = vrot.slane %v5394, 2
        %v5396 = vrot.slane %v5106, 7
        %v5397 = vrot.slane %v5396, 2
        %v5398 = vrot.slane %v5108, 7
        %v5399 = vrot.slane %v5398, 2
        %v5400 = vrot.slane %v5116, 7
        %v5401 = vrot.slane %v5400, 2
        %v5402 = vrot.slane %v5124, 7
        %v5403 = vrot.slane %v5402, 2
        %v5404 = vrot.slane %v5123, 7
        %v5405 = vrot.slane %v5404, 2
        %v5406 = vrot.slane %v5125, 7
        %v5407 = vrot.slane %v5406, 2
        %v5408 = vrot.slane %v5133, 7
        %v5409 = vrot.slane %v5408, 2
        %v5410 = vrot.slane %v5141, 7
        %v5411 = vrot.slane %v5410, 2
        %v5412 = vrot.slane %v5140, 7
        %v5413 = vrot.slane %v5412, 2
        %v5414 = vrot.slane %v5142, 7
        %v5415 = vrot.slane %v5414, 2
        %v5416 = vrot.slane %v5150, 7
        %v5417 = vrot.slane %v5416, 2
        %v5418 = vrot.slane %v5158, 7
        %v5419 = vrot.slane %v5418, 2
        %v5420 = vrot.slane %v5157, 7
        %v5421 = vrot.slane %v5420, 2
        %v5422 = vrot.slane %v5159, 7
        %v5423 = vrot.slane %v5422, 2
        %v5424 = vrot.slane %v5167, 7
        %v5425 = vrot.slane %v5424, 2
        %v5426 = vrot.slane %v5175, 7
        %v5427 = vrot.slane %v5426, 2
        %v5428 = vrot.slane %v5174, 7
        %v5429 = vrot.slane %v5428, 2
        %v5430 = vrot.slane %v5176, 7
        %v5431 = vrot.slane %v5430, 2
        %v5432 = vrot.slane %v5184, 7
        %v5433 = vrot.slane %v5432, 2
        %v5434 = vrot.slane %v5192, 7
        %v5435 = vrot.slane %v5434, 2
        %v5436 = vrot.slane %v5191, 7
        %v5437 = vrot.slane %v5436, 2
        %v5438 = vrot.slane %v5193, 7
        %v5439 = vrot.slane %v5438, 2
        %v5440 = vrot.slane %v5201, 7
        %v5441 = vrot.slane %v5440, 2
        %v5442 = vrot.slane %v5209, 7
        %v5443 = vrot.slane %v5442, 2
        %v5444 = vrot.slane %v5208, 7
        %v5445 = vrot.slane %v5444, 2
        %v5446 = vrot.slane %v5210, 7
        %v5447 = vrot.slane %v5446, 2
        %v5448 = vrot.slane %v5218, 7
        %v5449 = vrot.slane %v5448, 2
        %v5450 = vrot.slane %v5226, 7
        %v5451 = vrot.slane %v5450, 2
        %v5452 = vrot.slane %v5225, 7
        %v5453 = vrot.slane %v5452, 2
        %v5454 = vrot.slane %v5227, 7
        %v5455 = vrot.slane %v5454, 2
        %v5456 = vrot.slane %v5235, 7
        %v5457 = vrot.slane %v5456, 2
        %v5458 = vrot.slane %v5243, 7
        %v5459 = vrot.slane %v5458, 2
        %v5460 = vrot.slane %v5242, 7
        %v5461 = vrot.slane %v5460, 2
        %v5462 = vrot.slane %v5244, 7
        %v5463 = vrot.slane %v5462, 2
        %v5464 = vrot.slane %v5252, 7
        %v5465 = vrot.slane %v5464, 2
        %v5466 = vrot.slane %v5260, 7
        %v5467 = vrot.slane %v5466, 2
        %v5468 = vrot.slane %v5259, 7
        %v5469 = vrot.slane %v5468, 2
        %v5470 = vrot.slane %v5261, 7
        %v5471 = vrot.slane %v5470, 2
        %v5472 = vrot.slane %v5269, 7
        %v5473 = vrot.slane %v5472, 2
        %v5474 = vrot.slane %v5277, 7
        %v5475 = vrot.slane %v5474, 2
        %v5476 = vrot.slane %v5276, 7
        %v5477 = vrot.slane %v5476, 2
        %v5478 = vrot.slane %v5278, 7
        %v5479 = vrot.slane %v5478, 2
        %v5480 = vrot.slane %v5286, 7
        %v5481 = vrot.slane %v5480, 2
        %v5482 = vrot.slane %v5294, 7
        %v5483 = vrot.slane %v5482, 2
        %v5484 = vrot.slane %v5293, 7
        %v5485 = vrot.slane %v5484, 2
        %v5486 = vrot.slane %v5295, 7
        %v5487 = vrot.slane %v5486, 2
        %v5552 = vadd.f32 %v5031, %v5361
        %v5553 = vadd.f32 %v5039, %v5363
        %v5554 = vadd.f32 %v5038, %v5365
        %v5555 = vadd.f32 %v5040, %v5367
        %v5556 = vadd.f32 %v5048, %v5369
        %v5557 = vadd.f32 %v5056, %v5371
        %v5558 = vadd.f32 %v5055, %v5373
        %v5559 = vadd.f32 %v5057, %v5375
        %v5560 = vadd.f32 %v5065, %v5377
        %v5561 = vadd.f32 %v5073, %v5379
        %v5562 = vadd.f32 %v5072, %v5381
        %v5563 = vadd.f32 %v5074, %v5383
        %v5564 = vadd.f32 %v5082, %v5385
        %v5565 = vadd.f32 %v5090, %v5387
        %v5566 = vadd.f32 %v5089, %v5389
        %v5567 = vadd.f32 %v5091, %v5391
        %v5568 = vadd.f32 %v5099, %v5393
        %v5569 = vadd.f32 %v5107, %v5395
        %v5570 = vadd.f32 %v5106, %v5397
        %v5571 = vadd.f32 %v5108, %v5399
        %v5572 = vadd.f32 %v5116, %v5401
        %v5573 = vadd.f32 %v5124, %v5403
        %v5574 = vadd.f32 %v5123, %v5405
        %v5575 = vadd.f32 %v5125, %v5407
        %v5576 = vadd.f32 %v5133, %v5409
        %v5577 = vadd.f32 %v5141, %v5411
        %v5578 = vadd.f32 %v5140, %v5413
        %v5579 = vadd.f32 %v5142, %v5415
        %v5580 = vadd.f32 %v5150, %v5417
        %v5581 = vadd.f32 %v5158, %v5419
        %v5582 = vadd.f32 %v5157, %v5421
        %v5583 = vadd.f32 %v5159, %v5423
        %v5584 = vadd.f32 %v5167, %v5425
        %v5585 = vadd.f32 %v5175, %v5427
        %v5586 = vadd.f32 %v5174, %v5429
        %v5587 = vadd.f32 %v5176, %v5431
        %v5588 = vadd.f32 %v5184, %v5433
        %v5589 = vadd.f32 %v5192, %v5435
        %v5590 = vadd.f32 %v5191, %v5437
        %v5591 = vadd.f32 %v5193, %v5439
        %v5592 = vadd.f32 %v5201, %v5441
        %v5593 = vadd.f32 %v5209, %v5443
        %v5594 = vadd.f32 %v5208, %v5445
        %v5595 = vadd.f32 %v5210, %v5447
        %v5596 = vadd.f32 %v5218, %v5449
        %v5597 = vadd.f32 %v5226, %v5451
        %v5598 = vadd.f32 %v5225, %v5453
        %v5599 = vadd.f32 %v5227, %v5455
        %v5600 = vadd.f32 %v5235, %v5457
        %v5601 = vadd.f32 %v5243, %v5459
        %v5602 = vadd.f32 %v5242, %v5461
        %v5603 = vadd.f32 %v5244, %v5463
        %v5604 = vadd.f32 %v5252, %v5465
        %v5605 = vadd.f32 %v5260, %v5467
        %v5606 = vadd.f32 %v5259, %v5469
        %v5607 = vadd.f32 %v5261, %v5471
        %v5608 = vadd.f32 %v5269, %v5473
        %v5609 = vadd.f32 %v5277, %v5475
        %v5610 = vadd.f32 %v5276, %v5477
        %v5611 = vadd.f32 %v5278, %v5479
        %v5612 = vadd.f32 %v5286, %v5481
        %v5613 = vadd.f32 %v5294, %v5483
        %v5614 = vadd.f32 %v5293, %v5485
        %v5615 = vadd.f32 %v5295, %v5487
        %v5616 = vmul.f32 %v5552, 0.25
        %v5617 = vmul.f32 %v5553, 0.25
        %v5618 = vmul.f32 %v5554, 0.25
        %v5619 = vmul.f32 %v5555, 0.25
        %v5620 = vmul.f32 %v5556, 0.25
        %v5621 = vmul.f32 %v5557, 0.25
        %v5622 = vmul.f32 %v5558, 0.25
        %v5623 = vmul.f32 %v5559, 0.25
        %v5624 = vmul.f32 %v5560, 0.25
        %v5625 = vmul.f32 %v5561, 0.25
        %v5626 = vmul.f32 %v5562, 0.25
        %v5627 = vmul.f32 %v5563, 0.25
        %v5628 = vmul.f32 %v5564, 0.25
        %v5629 = vmul.f32 %v5565, 0.25
        %v5630 = vmul.f32 %v5566, 0.25
        %v5631 = vmul.f32 %v5567, 0.25
        %v5632 = vmul.f32 %v5568, 0.25
        %v5633 = vmul.f32 %v5569, 0.25
        %v5634 = vmul.f32 %v5570, 0.25
        %v5635 = vmul.f32 %v5571, 0.25
        %v5636 = vmul.f32 %v5572, 0.25
        %v5637 = vmul.f32 %v5573, 0.25
        %v5638 = vmul.f32 %v5574, 0.25
        %v5639 = vmul.f32 %v5575, 0.25
        %v5640 = vmul.f32 %v5576, 0.25
        %v5641 = vmul.f32 %v5577, 0.25
        %v5642 = vmul.f32 %v5578, 0.25
        %v5643 = vmul.f32 %v5579, 0.25
        %v5644 = vmul.f32 %v5580, 0.25
        %v5645 = vmul.f32 %v5581, 0.25
        %v5646 = vmul.f32 %v5582, 0.25
        %v5647 = vmul.f32 %v5583, 0.25
        %v5648 = vmul.f32 %v5584, 0.25
        %v5649 = vmul.f32 %v5585, 0.25
        %v5650 = vmul.f32 %v5586, 0.25
        %v5651 = vmul.f32 %v5587, 0.25
        %v5652 = vmul.f32 %v5588, 0.25
        %v5653 = vmul.f32 %v5589, 0.25
        %v5654 = vmul.f32 %v5590, 0.25
        %v5655 = vmul.f32 %v5591, 0.25
        %v5656 = vmul.f32 %v5592, 0.25
        %v5657 = vmul.f32 %v5593, 0.25
        %v5658 = vmul.f32 %v5594, 0.25
        %v5659 = vmul.f32 %v5595, 0.25
        %v5660 = vmul.f32 %v5596, 0.25
        %v5661 = vmul.f32 %v5597, 0.25
        %v5662 = vmul.f32 %v5598, 0.25
        %v5663 = vmul.f32 %v5599, 0.25
        %v5664 = vmul.f32 %v5600, 0.25
        %v5665 = vmul.f32 %v5601, 0.25
        %v5666 = vmul.f32 %v5602, 0.25
        %v5667 = vmul.f32 %v5603, 0.25
        %v5668 = vmul.f32 %v5604, 0.25
        %v5669 = vmul.f32 %v5605, 0.25
        %v5670 = vmul.f32 %v5606, 0.25
        %v5671 = vmul.f32 %v5607, 0.25
        %v5672 = vmul.f32 %v5608, 0.25
        %v5673 = vmul.f32 %v5609, 0.25
        %v5674 = vmul.f32 %v5610, 0.25
        %v5675 = vmul.f32 %v5611, 0.25
        %v5676 = vmul.f32 %v5612, 0.25
        %v5677 = vmul.f32 %v5613, 0.25
        %v5678 = vmul.f32 %v5614, 0.25
        %v5679 = vmul.f32 %v5615, 0.25
        %vm5680 = vcmp.ge.f32.partialorder %v5616, 0.0
        %vm5681 = vcmp.ge.f32.partialorder %v5617, 0.0
        %vm5682 = vcmp.ge.f32.partialorder %v5618, 0.0
        %vm5683 = vcmp.ge.f32.partialorder %v5619, 0.0
        %vm5684 = vcmp.ge.f32.partialorder %v5620, 0.0
        %vm5685 = vcmp.ge.f32.partialorder %v5621, 0.0
        %vm5686 = vcmp.ge.f32.partialorder %v5622, 0.0
        %vm5687 = vcmp.ge.f32.partialorder %v5623, 0.0
        %vm5688 = vcmp.ge.f32.partialorder %v5624, 0.0
        %vm5689 = vcmp.ge.f32.partialorder %v5625, 0.0
        %vm5690 = vcmp.ge.f32.partialorder %v5626, 0.0
        %vm5691 = vcmp.ge.f32.partialorder %v5627, 0.0
        %vm5692 = vcmp.ge.f32.partialorder %v5628, 0.0
        %vm5693 = vcmp.ge.f32.partialorder %v5629, 0.0
        %vm5694 = vcmp.ge.f32.partialorder %v5630, 0.0
        %vm5695 = vcmp.ge.f32.partialorder %v5631, 0.0
        %vm5696 = vcmp.ge.f32.partialorder %v5632, 0.0
        %vm5697 = vcmp.ge.f32.partialorder %v5633, 0.0
        %vm5698 = vcmp.ge.f32.partialorder %v5634, 0.0
        %vm5699 = vcmp.ge.f32.partialorder %v5635, 0.0
        %vm5700 = vcmp.ge.f32.partialorder %v5636, 0.0
        %vm5701 = vcmp.ge.f32.partialorder %v5637, 0.0
        %vm5702 = vcmp.ge.f32.partialorder %v5638, 0.0
        %vm5703 = vcmp.ge.f32.partialorder %v5639, 0.0
        %vm5704 = vcmp.ge.f32.partialorder %v5640, 0.0
        %vm5705 = vcmp.ge.f32.partialorder %v5641, 0.0
        %vm5706 = vcmp.ge.f32.partialorder %v5642, 0.0
        %vm5707 = vcmp.ge.f32.partialorder %v5643, 0.0
        %vm5708 = vcmp.ge.f32.partialorder %v5644, 0.0
        %vm5709 = vcmp.ge.f32.partialorder %v5645, 0.0
        %vm5710 = vcmp.ge.f32.partialorder %v5646, 0.0
        %vm5711 = vcmp.ge.f32.partialorder %v5647, 0.0
        %vm5712 = vcmp.ge.f32.partialorder %v5648, 0.0
        %vm5713 = vcmp.ge.f32.partialorder %v5649, 0.0
        %vm5714 = vcmp.ge.f32.partialorder %v5650, 0.0
        %vm5715 = vcmp.ge.f32.partialorder %v5651, 0.0
        %vm5716 = vcmp.ge.f32.partialorder %v5652, 0.0
        %vm5717 = vcmp.ge.f32.partialorder %v5653, 0.0
        %vm5718 = vcmp.ge.f32.partialorder %v5654, 0.0
        %vm5719 = vcmp.ge.f32.partialorder %v5655, 0.0
        %vm5720 = vcmp.ge.f32.partialorder %v5656, 0.0
        %vm5721 = vcmp.ge.f32.partialorder %v5657, 0.0
        %vm5722 = vcmp.ge.f32.partialorder %v5658, 0.0
        %vm5723 = vcmp.ge.f32.partialorder %v5659, 0.0
        %vm5724 = vcmp.ge.f32.partialorder %v5660, 0.0
        %vm5725 = vcmp.ge.f32.partialorder %v5661, 0.0
        %vm5726 = vcmp.ge.f32.partialorder %v5662, 0.0
        %vm5727 = vcmp.ge.f32.partialorder %v5663, 0.0
        %vm5728 = vcmp.ge.f32.partialorder %v5664, 0.0
        %vm5729 = vcmp.ge.f32.partialorder %v5665, 0.0
        %vm5730 = vcmp.ge.f32.partialorder %v5666, 0.0
        %vm5731 = vcmp.ge.f32.partialorder %v5667, 0.0
        %vm5732 = vcmp.ge.f32.partialorder %v5668, 0.0
        %vm5733 = vcmp.ge.f32.partialorder %v5669, 0.0
        %vm5734 = vcmp.ge.f32.partialorder %v5670, 0.0
        %vm5735 = vcmp.ge.f32.partialorder %v5671, 0.0
        %vm5736 = vcmp.ge.f32.partialorder %v5672, 0.0
        %vm5737 = vcmp.ge.f32.partialorder %v5673, 0.0
        %vm5738 = vcmp.ge.f32.partialorder %v5674, 0.0
        %vm5739 = vcmp.ge.f32.partialorder %v5675, 0.0
        %vm5740 = vcmp.ge.f32.partialorder %v5676, 0.0
        %vm5741 = vcmp.ge.f32.partialorder %v5677, 0.0
        %vm5742 = vcmp.ge.f32.partialorder %v5678, 0.0
        %vm5743 = vcmp.ge.f32.partialorder %v5679, 0.0
        %v5744 = vmul.f32 %v5616, 0.2
        %v5745 = vmul.f32 %v5617, 0.2
        %v5746 = vmul.f32 %v5618, 0.2
        %v5747 = vmul.f32 %v5619, 0.2
        %v5748 = vmul.f32 %v5620, 0.2
        %v5749 = vmul.f32 %v5621, 0.2
        %v5750 = vmul.f32 %v5622, 0.2
        %v5751 = vmul.f32 %v5623, 0.2
        %v5752 = vmul.f32 %v5624, 0.2
        %v5753 = vmul.f32 %v5625, 0.2
        %v5754 = vmul.f32 %v5626, 0.2
        %v5755 = vmul.f32 %v5627, 0.2
        %v5756 = vmul.f32 %v5628, 0.2
        %v5757 = vmul.f32 %v5629, 0.2
        %v5758 = vmul.f32 %v5630, 0.2
        %v5759 = vmul.f32 %v5631, 0.2
        %v5760 = vmul.f32 %v5632, 0.2
        %v5761 = vmul.f32 %v5633, 0.2
        %v5762 = vmul.f32 %v5634, 0.2
        %v5763 = vmul.f32 %v5635, 0.2
        %v5764 = vmul.f32 %v5636, 0.2
        %v5765 = vmul.f32 %v5637, 0.2
        %v5766 = vmul.f32 %v5638, 0.2
        %v5767 = vmul.f32 %v5639, 0.2
        %v5768 = vmul.f32 %v5640, 0.2
        %v5769 = vmul.f32 %v5641, 0.2
        %v5770 = vmul.f32 %v5642, 0.2
        %v5771 = vmul.f32 %v5643, 0.2
        %v5772 = vmul.f32 %v5644, 0.2
        %v5773 = vmul.f32 %v5645, 0.2
        %v5774 = vmul.f32 %v5646, 0.2
        %v5775 = vmul.f32 %v5647, 0.2
        %v5776 = vmul.f32 %v5648, 0.2
        %v5777 = vmul.f32 %v5649, 0.2
        %v5778 = vmul.f32 %v5650, 0.2
        %v5779 = vmul.f32 %v5651, 0.2
        %v5780 = vmul.f32 %v5652, 0.2
        %v5781 = vmul.f32 %v5653, 0.2
        %v5782 = vmul.f32 %v5654, 0.2
        %v5783 = vmul.f32 %v5655, 0.2
        %v5784 = vmul.f32 %v5656, 0.2
        %v5785 = vmul.f32 %v5657, 0.2
        %v5786 = vmul.f32 %v5658, 0.2
        %v5787 = vmul.f32 %v5659, 0.2
        %v5788 = vmul.f32 %v5660, 0.2
        %v5789 = vmul.f32 %v5661, 0.2
        %v5790 = vmul.f32 %v5662, 0.2
        %v5791 = vmul.f32 %v5663, 0.2
        %v5792 = vmul.f32 %v5664, 0.2
        %v5793 = vmul.f32 %v5665, 0.2
        %v5794 = vmul.f32 %v5666, 0.2
        %v5795 = vmul.f32 %v5667, 0.2
        %v5796 = vmul.f32 %v5668, 0.2
        %v5797 = vmul.f32 %v5669, 0.2
        %v5798 = vmul.f32 %v5670, 0.2
        %v5799 = vmul.f32 %v5671, 0.2
        %v5800 = vmul.f32 %v5672, 0.2
        %v5801 = vmul.f32 %v5673, 0.2
        %v5802 = vmul.f32 %v5674, 0.2
        %v5803 = vmul.f32 %v5675, 0.2
        %v5804 = vmul.f32 %v5676, 0.2
        %v5805 = vmul.f32 %v5677, 0.2
        %v5806 = vmul.f32 %v5678, 0.2
        %v5807 = vmul.f32 %v5679, 0.2
        %v5808 = vsel %vm5680, %v5616, %v5744
        %v5809 = vsel %vm5681, %v5617, %v5745
        %v5810 = vsel %vm5682, %v5618, %v5746
        %v5811 = vsel %vm5683, %v5619, %v5747
        %v5812 = vsel %vm5684, %v5620, %v5748
        %v5813 = vsel %vm5685, %v5621, %v5749
        %v5814 = vsel %vm5686, %v5622, %v5750
        %v5815 = vsel %vm5687, %v5623, %v5751
        %v5816 = vsel %vm5688, %v5624, %v5752
        %v5817 = vsel %vm5689, %v5625, %v5753
        %v5818 = vsel %vm5690, %v5626, %v5754
        %v5819 = vsel %vm5691, %v5627, %v5755
        %v5820 = vsel %vm5692, %v5628, %v5756
        %v5821 = vsel %vm5693, %v5629, %v5757
        %v5822 = vsel %vm5694, %v5630, %v5758
        %v5823 = vsel %vm5695, %v5631, %v5759
        %v5824 = vsel %vm5696, %v5632, %v5760
        %v5825 = vsel %vm5697, %v5633, %v5761
        %v5826 = vsel %vm5698, %v5634, %v5762
        %v5827 = vsel %vm5699, %v5635, %v5763
        %v5828 = vsel %vm5700, %v5636, %v5764
        %v5829 = vsel %vm5701, %v5637, %v5765
        %v5830 = vsel %vm5702, %v5638, %v5766
        %v5831 = vsel %vm5703, %v5639, %v5767
        %v5832 = vsel %vm5704, %v5640, %v5768
        %v5833 = vsel %vm5705, %v5641, %v5769
        %v5834 = vsel %vm5706, %v5642, %v5770
        %v5835 = vsel %vm5707, %v5643, %v5771
        %v5836 = vsel %vm5708, %v5644, %v5772
        %v5837 = vsel %vm5709, %v5645, %v5773
        %v5838 = vsel %vm5710, %v5646, %v5774
        %v5839 = vsel %vm5711, %v5647, %v5775
        %v5840 = vsel %vm5712, %v5648, %v5776
        %v5841 = vsel %vm5713, %v5649, %v5777
        %v5842 = vsel %vm5714, %v5650, %v5778
        %v5843 = vsel %vm5715, %v5651, %v5779
        %v5844 = vsel %vm5716, %v5652, %v5780
        %v5845 = vsel %vm5717, %v5653, %v5781
        %v5846 = vsel %vm5718, %v5654, %v5782
        %v5847 = vsel %vm5719, %v5655, %v5783
        %v5848 = vsel %vm5720, %v5656, %v5784
        %v5849 = vsel %vm5721, %v5657, %v5785
        %v5850 = vsel %vm5722, %v5658, %v5786
        %v5851 = vsel %vm5723, %v5659, %v5787
        %v5852 = vsel %vm5724, %v5660, %v5788
        %v5853 = vsel %vm5725, %v5661, %v5789
        %v5854 = vsel %vm5726, %v5662, %v5790
        %v5855 = vsel %vm5727, %v5663, %v5791
        %v5856 = vsel %vm5728, %v5664, %v5792
        %v5857 = vsel %vm5729, %v5665, %v5793
        %v5858 = vsel %vm5730, %v5666, %v5794
        %v5859 = vsel %vm5731, %v5667, %v5795
        %v5860 = vsel %vm5732, %v5668, %v5796
        %v5861 = vsel %vm5733, %v5669, %v5797
        %v5862 = vsel %vm5734, %v5670, %v5798
        %v5863 = vsel %vm5735, %v5671, %v5799
        %v5864 = vsel %vm5736, %v5672, %v5800
        %v5865 = vsel %vm5737, %v5673, %v5801
        %v5866 = vsel %vm5738, %v5674, %v5802
        %v5867 = vsel %vm5739, %v5675, %v5803
        %v5868 = vsel %vm5740, %v5676, %v5804
        %v5869 = vsel %vm5741, %v5677, %v5805
        %v5870 = vsel %vm5742, %v5678, %v5806
        %v5871 = vsel %vm5743, %v5679, %v5807
        %v5936 = vlaneseq
        %v5937 = vshrl.u32 %v5936, 7
        %v5938 = vsub.s32 0, %v5937
        %v5939 = vrot.slane %v5808, %v5938
        %v5940 = vlaneseq
        %v5941 = vshrl.u32 %v5940, 7
        %v5942 = vsub.s32 0, %v5941
        %v5943 = vrot.slane %v5809, %v5942
        %v5944 = vlaneseq
        %v5945 = vshrl.u32 %v5944, 7
        %v5946 = vsub.s32 0, %v5945
        %v5947 = vrot.slane %v5810, %v5946
        %v5948 = vlaneseq
        %v5949 = vshrl.u32 %v5948, 7
        %v5950 = vsub.s32 0, %v5949
        %v5951 = vrot.slane %v5811, %v5950
        %v5952 = vlaneseq
        %v5953 = vshrl.u32 %v5952, 7
        %v5954 = vsub.s32 0, %v5953
        %v5955 = vrot.slane %v5812, %v5954
        %v5956 = vlaneseq
        %v5957 = vshrl.u32 %v5956, 7
        %v5958 = vsub.s32 0, %v5957
        %v5959 = vrot.slane %v5813, %v5958
        %v5960 = vlaneseq
        %v5961 = vshrl.u32 %v5960, 7
        %v5962 = vsub.s32 0, %v5961
        %v5963 = vrot.slane %v5814, %v5962
        %v5964 = vlaneseq
        %v5965 = vshrl.u32 %v5964, 7
        %v5966 = vsub.s32 0, %v5965
        %v5967 = vrot.slane %v5815, %v5966
        %v5968 = vlaneseq
        %v5969 = vshrl.u32 %v5968, 7
        %v5970 = vsub.s32 0, %v5969
        %v5971 = vrot.slane %v5816, %v5970
        %v5972 = vlaneseq
        %v5973 = vshrl.u32 %v5972, 7
        %v5974 = vsub.s32 0, %v5973
        %v5975 = vrot.slane %v5817, %v5974
        %v5976 = vlaneseq
        %v5977 = vshrl.u32 %v5976, 7
        %v5978 = vsub.s32 0, %v5977
        %v5979 = vrot.slane %v5818, %v5978
        %v5980 = vlaneseq
        %v5981 = vshrl.u32 %v5980, 7
        %v5982 = vsub.s32 0, %v5981
        %v5983 = vrot.slane %v5819, %v5982
        %v5984 = vlaneseq
        %v5985 = vshrl.u32 %v5984, 7
        %v5986 = vsub.s32 0, %v5985
        %v5987 = vrot.slane %v5820, %v5986
        %v5988 = vlaneseq
        %v5989 = vshrl.u32 %v5988, 7
        %v5990 = vsub.s32 0, %v5989
        %v5991 = vrot.slane %v5821, %v5990
        %v5992 = vlaneseq
        %v5993 = vshrl.u32 %v5992, 7
        %v5994 = vsub.s32 0, %v5993
        %v5995 = vrot.slane %v5822, %v5994
        %v5996 = vlaneseq
        %v5997 = vshrl.u32 %v5996, 7
        %v5998 = vsub.s32 0, %v5997
        %v5999 = vrot.slane %v5823, %v5998
        %v6000 = vlaneseq
        %v6001 = vshrl.u32 %v6000, 7
        %v6002 = vsub.s32 0, %v6001
        %v6003 = vrot.slane %v5824, %v6002
        %v6004 = vlaneseq
        %v6005 = vshrl.u32 %v6004, 7
        %v6006 = vsub.s32 0, %v6005
        %v6007 = vrot.slane %v5825, %v6006
        %v6008 = vlaneseq
        %v6009 = vshrl.u32 %v6008, 7
        %v6010 = vsub.s32 0, %v6009
        %v6011 = vrot.slane %v5826, %v6010
        %v6012 = vlaneseq
        %v6013 = vshrl.u32 %v6012, 7
        %v6014 = vsub.s32 0, %v6013
        %v6015 = vrot.slane %v5827, %v6014
        %v6016 = vlaneseq
        %v6017 = vshrl.u32 %v6016, 7
        %v6018 = vsub.s32 0, %v6017
        %v6019 = vrot.slane %v5828, %v6018
        %v6020 = vlaneseq
        %v6021 = vshrl.u32 %v6020, 7
        %v6022 = vsub.s32 0, %v6021
        %v6023 = vrot.slane %v5829, %v6022
        %v6024 = vlaneseq
        %v6025 = vshrl.u32 %v6024, 7
        %v6026 = vsub.s32 0, %v6025
        %v6027 = vrot.slane %v5830, %v6026
        %v6028 = vlaneseq
        %v6029 = vshrl.u32 %v6028, 7
        %v6030 = vsub.s32 0, %v6029
        %v6031 = vrot.slane %v5831, %v6030
        %v6032 = vlaneseq
        %v6033 = vshrl.u32 %v6032, 7
        %v6034 = vsub.s32 0, %v6033
        %v6035 = vrot.slane %v5832, %v6034
        %v6036 = vlaneseq
        %v6037 = vshrl.u32 %v6036, 7
        %v6038 = vsub.s32 0, %v6037
        %v6039 = vrot.slane %v5833, %v6038
        %v6040 = vlaneseq
        %v6041 = vshrl.u32 %v6040, 7
        %v6042 = vsub.s32 0, %v6041
        %v6043 = vrot.slane %v5834, %v6042
        %v6044 = vlaneseq
        %v6045 = vshrl.u32 %v6044, 7
        %v6046 = vsub.s32 0, %v6045
        %v6047 = vrot.slane %v5835, %v6046
        %v6048 = vlaneseq
        %v6049 = vshrl.u32 %v6048, 7
        %v6050 = vsub.s32 0, %v6049
        %v6051 = vrot.slane %v5836, %v6050
        %v6052 = vlaneseq
        %v6053 = vshrl.u32 %v6052, 7
        %v6054 = vsub.s32 0, %v6053
        %v6055 = vrot.slane %v5837, %v6054
        %v6056 = vlaneseq
        %v6057 = vshrl.u32 %v6056, 7
        %v6058 = vsub.s32 0, %v6057
        %v6059 = vrot.slane %v5838, %v6058
        %v6060 = vlaneseq
        %v6061 = vshrl.u32 %v6060, 7
        %v6062 = vsub.s32 0, %v6061
        %v6063 = vrot.slane %v5839, %v6062
        %v6064 = vlaneseq
        %v6065 = vshrl.u32 %v6064, 7
        %v6066 = vsub.s32 0, %v6065
        %v6067 = vrot.slane %v5840, %v6066
        %v6068 = vlaneseq
        %v6069 = vshrl.u32 %v6068, 7
        %v6070 = vsub.s32 0, %v6069
        %v6071 = vrot.slane %v5841, %v6070
        %v6072 = vlaneseq
        %v6073 = vshrl.u32 %v6072, 7
        %v6074 = vsub.s32 0, %v6073
        %v6075 = vrot.slane %v5842, %v6074
        %v6076 = vlaneseq
        %v6077 = vshrl.u32 %v6076, 7
        %v6078 = vsub.s32 0, %v6077
        %v6079 = vrot.slane %v5843, %v6078
        %v6080 = vlaneseq
        %v6081 = vshrl.u32 %v6080, 7
        %v6082 = vsub.s32 0, %v6081
        %v6083 = vrot.slane %v5844, %v6082
        %v6084 = vlaneseq
        %v6085 = vshrl.u32 %v6084, 7
        %v6086 = vsub.s32 0, %v6085
        %v6087 = vrot.slane %v5845, %v6086
        %v6088 = vlaneseq
        %v6089 = vshrl.u32 %v6088, 7
        %v6090 = vsub.s32 0, %v6089
        %v6091 = vrot.slane %v5846, %v6090
        %v6092 = vlaneseq
        %v6093 = vshrl.u32 %v6092, 7
        %v6094 = vsub.s32 0, %v6093
        %v6095 = vrot.slane %v5847, %v6094
        %v6096 = vlaneseq
        %v6097 = vshrl.u32 %v6096, 7
        %v6098 = vsub.s32 0, %v6097
        %v6099 = vrot.slane %v5848, %v6098
        %v6100 = vlaneseq
        %v6101 = vshrl.u32 %v6100, 7
        %v6102 = vsub.s32 0, %v6101
        %v6103 = vrot.slane %v5849, %v6102
        %v6104 = vlaneseq
        %v6105 = vshrl.u32 %v6104, 7
        %v6106 = vsub.s32 0, %v6105
        %v6107 = vrot.slane %v5850, %v6106
        %v6108 = vlaneseq
        %v6109 = vshrl.u32 %v6108, 7
        %v6110 = vsub.s32 0, %v6109
        %v6111 = vrot.slane %v5851, %v6110
        %v6112 = vlaneseq
        %v6113 = vshrl.u32 %v6112, 7
        %v6114 = vsub.s32 0, %v6113
        %v6115 = vrot.slane %v5852, %v6114
        %v6116 = vlaneseq
        %v6117 = vshrl.u32 %v6116, 7
        %v6118 = vsub.s32 0, %v6117
        %v6119 = vrot.slane %v5853, %v6118
        %v6120 = vlaneseq
        %v6121 = vshrl.u32 %v6120, 7
        %v6122 = vsub.s32 0, %v6121
        %v6123 = vrot.slane %v5854, %v6122
        %v6124 = vlaneseq
        %v6125 = vshrl.u32 %v6124, 7
        %v6126 = vsub.s32 0, %v6125
        %v6127 = vrot.slane %v5855, %v6126
        %v6128 = vlaneseq
        %v6129 = vshrl.u32 %v6128, 7
        %v6130 = vsub.s32 0, %v6129
        %v6131 = vrot.slane %v5856, %v6130
        %v6132 = vlaneseq
        %v6133 = vshrl.u32 %v6132, 7
        %v6134 = vsub.s32 0, %v6133
        %v6135 = vrot.slane %v5857, %v6134
        %v6136 = vlaneseq
        %v6137 = vshrl.u32 %v6136, 7
        %v6138 = vsub.s32 0, %v6137
        %v6139 = vrot.slane %v5858, %v6138
        %v6140 = vlaneseq
        %v6141 = vshrl.u32 %v6140, 7
        %v6142 = vsub.s32 0, %v6141
        %v6143 = vrot.slane %v5859, %v6142
        %v6144 = vlaneseq
        %v6145 = vshrl.u32 %v6144, 7
        %v6146 = vsub.s32 0, %v6145
        %v6147 = vrot.slane %v5860, %v6146
        %v6148 = vlaneseq
        %v6149 = vshrl.u32 %v6148, 7
        %v6150 = vsub.s32 0, %v6149
        %v6151 = vrot.slane %v5861, %v6150
        %v6152 = vlaneseq
        %v6153 = vshrl.u32 %v6152, 7
        %v6154 = vsub.s32 0, %v6153
        %v6155 = vrot.slane %v5862, %v6154
        %v6156 = vlaneseq
        %v6157 = vshrl.u32 %v6156, 7
        %v6158 = vsub.s32 0, %v6157
        %v6159 = vrot.slane %v5863, %v6158
        %v6160 = vlaneseq
        %v6161 = vshrl.u32 %v6160, 7
        %v6162 = vsub.s32 0, %v6161
        %v6163 = vrot.slane %v5864, %v6162
        %v6164 = vlaneseq
        %v6165 = vshrl.u32 %v6164, 7
        %v6166 = vsub.s32 0, %v6165
        %v6167 = vrot.slane %v5865, %v6166
        %v6168 = vlaneseq
        %v6169 = vshrl.u32 %v6168, 7
        %v6170 = vsub.s32 0, %v6169
        %v6171 = vrot.slane %v5866, %v6170
        %v6172 = vlaneseq
        %v6173 = vshrl.u32 %v6172, 7
        %v6174 = vsub.s32 0, %v6173
        %v6175 = vrot.slane %v5867, %v6174
        %v6176 = vlaneseq
        %v6177 = vshrl.u32 %v6176, 7
        %v6178 = vsub.s32 0, %v6177
        %v6179 = vrot.slane %v5868, %v6178
        %v6180 = vlaneseq
        %v6181 = vshrl.u32 %v6180, 7
        %v6182 = vsub.s32 0, %v6181
        %v6183 = vrot.slane %v5869, %v6182
        %v6184 = vlaneseq
        %v6185 = vshrl.u32 %v6184, 7
        %v6186 = vsub.s32 0, %v6185
        %v6187 = vrot.slane %v5870, %v6186
        %v6188 = vlaneseq
        %v6189 = vshrl.u32 %v6188, 7
        %v6190 = vsub.s32 0, %v6189
        %v6191 = vrot.slane %v5871, %v6190
        %vm6192 = vcmask 1041409
        %v6193 = vsel %vm6192, %v5943, %v5939
        %vm6194 = vcmask 1042434
        %v6195 = vsel %vm6194, %v5947, %v6193
        %vm6196 = vcmask 1043459
        %v6197 = vsel %vm6196, %v5951, %v6195
        %vm6198 = vcmask 1044484
        %v6199 = vsel %vm6198, %v5955, %v6197
        %vm6200 = vcmask 1045509
        %v6201 = vsel %vm6200, %v5959, %v6199
        %vm6202 = vcmask 1046534
        %v6203 = vsel %vm6202, %v5963, %v6201
        %vm6204 = vcmask 1047559
        %v6205 = vsel %vm6204, %v5967, %v6203
        %v6206 = vsel %vm6192, %v5975, %v5971
        %v6207 = vsel %vm6194, %v5979, %v6206
        %v6208 = vsel %vm6196, %v5983, %v6207
        %v6209 = vsel %vm6198, %v5987, %v6208
        %v6210 = vsel %vm6200, %v5991, %v6209
        %v6211 = vsel %vm6202, %v5995, %v6210
        %v6212 = vsel %vm6204, %v5999, %v6211
        %v6213 = vsel %vm6192, %v6007, %v6003
        %v6214 = vsel %vm6194, %v6011, %v6213
        %v6215 = vsel %vm6196, %v6015, %v6214
        %v6216 = vsel %vm6198, %v6019, %v6215
        %v6217 = vsel %vm6200, %v6023, %v6216
        %v6218 = vsel %vm6202, %v6027, %v6217
        %v6219 = vsel %vm6204, %v6031, %v6218
        %v6220 = vsel %vm6192, %v6039, %v6035
        %v6221 = vsel %vm6194, %v6043, %v6220
        %v6222 = vsel %vm6196, %v6047, %v6221
        %v6223 = vsel %vm6198, %v6051, %v6222
        %v6224 = vsel %vm6200, %v6055, %v6223
        %v6225 = vsel %vm6202, %v6059, %v6224
        %v6226 = vsel %vm6204, %v6063, %v6225
        %v6227 = vsel %vm6192, %v6071, %v6067
        %v6228 = vsel %vm6194, %v6075, %v6227
        %v6229 = vsel %vm6196, %v6079, %v6228
        %v6230 = vsel %vm6198, %v6083, %v6229
        %v6231 = vsel %vm6200, %v6087, %v6230
        %v6232 = vsel %vm6202, %v6091, %v6231
        %v6233 = vsel %vm6204, %v6095, %v6232
        %v6234 = vsel %vm6192, %v6103, %v6099
        %v6235 = vsel %vm6194, %v6107, %v6234
        %v6236 = vsel %vm6196, %v6111, %v6235
        %v6237 = vsel %vm6198, %v6115, %v6236
        %v6238 = vsel %vm6200, %v6119, %v6237
        %v6239 = vsel %vm6202, %v6123, %v6238
        %v6240 = vsel %vm6204, %v6127, %v6239
        %v6241 = vsel %vm6192, %v6135, %v6131
        %v6242 = vsel %vm6194, %v6139, %v6241
        %v6243 = vsel %vm6196, %v6143, %v6242
        %v6244 = vsel %vm6198, %v6147, %v6243
        %v6245 = vsel %vm6200, %v6151, %v6244
        %v6246 = vsel %vm6202, %v6155, %v6245
        %v6247 = vsel %vm6204, %v6159, %v6246
        %v6248 = vsel %vm6192, %v6167, %v6163
        %v6249 = vsel %vm6194, %v6171, %v6248
        %v6250 = vsel %vm6196, %v6175, %v6249
        %v6251 = vsel %vm6198, %v6179, %v6250
        %v6252 = vsel %vm6200, %v6183, %v6251
        %v6253 = vsel %vm6202, %v6187, %v6252
        %v6254 = vsel %vm6204, %v6191, %v6253
        %v6255 = vrot.slane %v6205, 7
        %v6256 = vrot.slane %v6212, 7
        %v6257 = vrot.slane %v6219, 7
        %v6258 = vrot.slane %v6226, 7
        %v6259 = vrot.slane %v6233, 7
        %v6260 = vrot.slane %v6240, 7
        %v6261 = vrot.slane %v6247, 7
        %v6262 = vrot.slane %v6254, 7
        %v6271 = vsel %vm775, 0.0, %v6255
        %v6272 = vsel %vm775, 0.0, %v6256
        %v6273 = vsel %vm775, 0.0, %v6257
        %v6274 = vsel %vm775, 0.0, %v6258
        %v6275 = vsel %vm775, 0.0, %v6259
        %v6276 = vsel %vm775, 0.0, %v6260
        %v6277 = vsel %vm775, 0.0, %v6261
        %v6278 = vsel %vm775, 0.0, %v6262
        %v6279 = vsel %vm775, %v6255, 0.0
        %v6280 = vsel %vm775, %v6256, 0.0
        %v6281 = vsel %vm775, %v6257, 0.0
        %v6282 = vsel %vm775, %v6258, 0.0
        %v6283 = vsel %vm775, %v6259, 0.0
        %v6284 = vsel %vm775, %v6260, 0.0
        %v6285 = vsel %vm775, %v6261, 0.0
        %v6286 = vsel %vm775, %v6262, 0.0
        %v6301 = vsel %vm941, %v942, %v945
        %v6302 = vrot.slane %v6271, 1
        %v6303 = vrot.slane %v6279, 1
        %v6304 = vsel %vm941, %v6302, %v6303
        %v6305 = vrot.slane %v6272, 1
        %v6306 = vrot.slane %v6280, 1
        %v6307 = vsel %vm941, %v6305, %v6306
        %v6308 = vrot.slane %v6273, 1
        %v6309 = vrot.slane %v6281, 1
        %v6310 = vsel %vm941, %v6308, %v6309
        %v6311 = vrot.slane %v6274, 1
        %v6312 = vrot.slane %v6282, 1
        %v6313 = vsel %vm941, %v6311, %v6312
        %v6314 = vrot.slane %v6275, 1
        %v6315 = vrot.slane %v6283, 1
        %v6316 = vsel %vm941, %v6314, %v6315
        %v6317 = vrot.slane %v6276, 1
        %v6318 = vrot.slane %v6284, 1
        %v6319 = vsel %vm941, %v6317, %v6318
        %v6320 = vrot.slane %v6277, 1
        %v6321 = vrot.slane %v6285, 1
        %v6322 = vsel %vm941, %v6320, %v6321
        %6323 = vrot.lane.b32.xlu0 %v6301, 16
        %v6324 = vpop.permute.xlu0 %6323
        %6325 = vrot.lane.b32.xlu0 %v6304, 16
        %v6326 = vpop.permute.xlu0 %6325
        %6327 = vrot.lane.b32.xlu0 %v6307, 16
        %v6328 = vpop.permute.xlu0 %6327
        %6329 = vrot.lane.b32.xlu0 %v6310, 16
        %v6330 = vpop.permute.xlu0 %6329
        %6331 = vrot.lane.b32.xlu0 %v6313, 16
        %v6332 = vpop.permute.xlu0 %6331
        %6333 = vrot.lane.b32.xlu0 %v6316, 16
        %v6334 = vpop.permute.xlu0 %6333
        %6335 = vrot.lane.b32.xlu0 %v6319, 16
        %v6336 = vpop.permute.xlu0 %6335
        %6337 = vrot.lane.b32.xlu0 %v6322, 16
        %v6338 = vpop.permute.xlu0 %6337
        %v6347 = vsel %vm1118, %v1119, %v1122
        %v6348 = vrot.slane %v6271, 2
        %v6349 = vrot.slane %v6279, 2
        %v6350 = vsel %vm1118, %v6348, %v6349
        %v6351 = vrot.slane %v6272, 2
        %v6352 = vrot.slane %v6280, 2
        %v6353 = vsel %vm1118, %v6351, %v6352
        %v6354 = vrot.slane %v6273, 2
        %v6355 = vrot.slane %v6281, 2
        %v6356 = vsel %vm1118, %v6354, %v6355
        %v6357 = vrot.slane %v6274, 2
        %v6358 = vrot.slane %v6282, 2
        %v6359 = vsel %vm1118, %v6357, %v6358
        %v6360 = vrot.slane %v6275, 2
        %v6361 = vrot.slane %v6283, 2
        %v6362 = vsel %vm1118, %v6360, %v6361
        %v6363 = vrot.slane %v6276, 2
        %v6364 = vrot.slane %v6284, 2
        %v6365 = vsel %vm1118, %v6363, %v6364
        %v6366 = vrot.slane %v6277, 2
        %v6367 = vrot.slane %v6285, 2
        %v6368 = vsel %vm1118, %v6366, %v6367
        %6369 = vrot.lane.b32.xlu0 %v6347, 32
        %v6370 = vpop.permute.xlu0 %6369
        %6371 = vrot.lane.b32.xlu0 %v6350, 32
        %v6372 = vpop.permute.xlu0 %6371
        %6373 = vrot.lane.b32.xlu0 %v6353, 32
        %v6374 = vpop.permute.xlu0 %6373
        %6375 = vrot.lane.b32.xlu0 %v6356, 32
        %v6376 = vpop.permute.xlu0 %6375
        %6377 = vrot.lane.b32.xlu0 %v6359, 32
        %v6378 = vpop.permute.xlu0 %6377
        %6379 = vrot.lane.b32.xlu0 %v6362, 32
        %v6380 = vpop.permute.xlu0 %6379
        %6381 = vrot.lane.b32.xlu0 %v6365, 32
        %v6382 = vpop.permute.xlu0 %6381
        %6383 = vrot.lane.b32.xlu0 %v6368, 32
        %v6384 = vpop.permute.xlu0 %6383
        %6394 = vrot.lane.b32.xlu0 %v6271, 48
        %v6395 = vpop.permute.xlu0 %6394
        %6396 = vrot.lane.b32.xlu0 %v6272, 48
        %v6397 = vpop.permute.xlu0 %6396
        %6398 = vrot.lane.b32.xlu0 %v6273, 48
        %v6399 = vpop.permute.xlu0 %6398
        %6400 = vrot.lane.b32.xlu0 %v6274, 48
        %v6401 = vpop.permute.xlu0 %6400
        %6402 = vrot.lane.b32.xlu0 %v6275, 48
        %v6403 = vpop.permute.xlu0 %6402
        %6404 = vrot.lane.b32.xlu0 %v6276, 48
        %v6405 = vpop.permute.xlu0 %6404
        %6406 = vrot.lane.b32.xlu0 %v6277, 48
        %v6407 = vpop.permute.xlu0 %6406
        %6408 = vrot.lane.b32.xlu0 %v6278, 48
        %v6409 = vpop.permute.xlu0 %6408
        %v6419 = vrot.slane %v6278, 1
        %v6420 = vrot.slane %v6286, 1
        %v6421 = vsel %vm941, %v6419, %v6420
        %6422 = vrot.lane.b32.xlu0 %v6304, 64
        %v6423 = vpop.permute.xlu0 %6422
        %6424 = vrot.lane.b32.xlu0 %v6307, 64
        %v6425 = vpop.permute.xlu0 %6424
        %6426 = vrot.lane.b32.xlu0 %v6310, 64
        %v6427 = vpop.permute.xlu0 %6426
        %6428 = vrot.lane.b32.xlu0 %v6313, 64
        %v6429 = vpop.permute.xlu0 %6428
        %6430 = vrot.lane.b32.xlu0 %v6316, 64
        %v6431 = vpop.permute.xlu0 %6430
        %6432 = vrot.lane.b32.xlu0 %v6319, 64
        %v6433 = vpop.permute.xlu0 %6432
        %6434 = vrot.lane.b32.xlu0 %v6322, 64
        %v6435 = vpop.permute.xlu0 %6434
        %6436 = vrot.lane.b32.xlu0 %v6421, 64
        %v6437 = vpop.permute.xlu0 %6436
        %v6446 = vrot.slane %v6278, 2
        %v6447 = vrot.slane %v6286, 2
        %v6448 = vsel %vm1118, %v6446, %v6447
        %6449 = vrot.lane.b32.xlu0 %v6350, 80
        %v6450 = vpop.permute.xlu0 %6449
        %6451 = vrot.lane.b32.xlu0 %v6353, 80
        %v6452 = vpop.permute.xlu0 %6451
        %6453 = vrot.lane.b32.xlu0 %v6356, 80
        %v6454 = vpop.permute.xlu0 %6453
        %6455 = vrot.lane.b32.xlu0 %v6359, 80
        %v6456 = vpop.permute.xlu0 %6455
        %6457 = vrot.lane.b32.xlu0 %v6362, 80
        %v6458 = vpop.permute.xlu0 %6457
        %6459 = vrot.lane.b32.xlu0 %v6365, 80
        %v6460 = vpop.permute.xlu0 %6459
        %6461 = vrot.lane.b32.xlu0 %v6368, 80
        %v6462 = vpop.permute.xlu0 %6461
        %6463 = vrot.lane.b32.xlu0 %v6448, 80
        %v6464 = vpop.permute.xlu0 %6463
        %6473 = vrot.lane.b32.xlu0 %v6272, 96
        %v6474 = vpop.permute.xlu0 %6473
        %6475 = vrot.lane.b32.xlu0 %v6273, 96
        %v6476 = vpop.permute.xlu0 %6475
        %6477 = vrot.lane.b32.xlu0 %v6274, 96
        %v6478 = vpop.permute.xlu0 %6477
        %6479 = vrot.lane.b32.xlu0 %v6275, 96
        %v6480 = vpop.permute.xlu0 %6479
        %6481 = vrot.lane.b32.xlu0 %v6276, 96
        %v6482 = vpop.permute.xlu0 %6481
        %6483 = vrot.lane.b32.xlu0 %v6277, 96
        %v6484 = vpop.permute.xlu0 %6483
        %6485 = vrot.lane.b32.xlu0 %v6278, 96
        %v6486 = vpop.permute.xlu0 %6485
        %6494 = vrot.lane.b32.xlu0 %v6307, 112
        %v6495 = vpop.permute.xlu0 %6494
        %6496 = vrot.lane.b32.xlu0 %v6310, 112
        %v6497 = vpop.permute.xlu0 %6496
        %6498 = vrot.lane.b32.xlu0 %v6313, 112
        %v6499 = vpop.permute.xlu0 %6498
        %6500 = vrot.lane.b32.xlu0 %v6316, 112
        %v6501 = vpop.permute.xlu0 %6500
        %6502 = vrot.lane.b32.xlu0 %v6319, 112
        %v6503 = vpop.permute.xlu0 %6502
        %6504 = vrot.lane.b32.xlu0 %v6322, 112
        %v6505 = vpop.permute.xlu0 %6504
        %6506 = vrot.lane.b32.xlu0 %v6421, 112
        %v6507 = vpop.permute.xlu0 %6506
        %6508 = vrot.lane.b32.xlu0 %v6301, 112
        %v6509 = vpop.permute.xlu0 %6508
        %v6526 = vsel %vm1982, %v875, %v6324
        %v6527 = vsel %vm1982, %v6271, %v6326
        %v6528 = vsel %vm1982, %v6272, %v6328
        %v6529 = vsel %vm1982, %v6273, %v6330
        %v6530 = vsel %vm1982, %v6274, %v6332
        %v6531 = vsel %vm1982, %v6275, %v6334
        %v6532 = vsel %vm1982, %v6276, %v6336
        %v6533 = vsel %vm1982, %v6277, %v6338
        %v6534 = vsel %vm2114, %v6526, %v6370
        %v6535 = vsel %vm2114, %v6527, %v6372
        %v6536 = vsel %vm2114, %v6528, %v6374
        %v6537 = vsel %vm2114, %v6529, %v6376
        %v6538 = vsel %vm2114, %v6530, %v6378
        %v6539 = vsel %vm2114, %v6531, %v6380
        %v6540 = vsel %vm2114, %v6532, %v6382
        %v6541 = vsel %vm2114, %v6533, %v6384
        %v6542 = vsel %vm4526, %v6534, %v6395
        %v6543 = vsel %vm4526, %v6535, %v6397
        %v6544 = vsel %vm4526, %v6536, %v6399
        %v6545 = vsel %vm4526, %v6537, %v6401
        %v6546 = vsel %vm4526, %v6538, %v6403
        %v6547 = vsel %vm4526, %v6539, %v6405
        %v6548 = vsel %vm4526, %v6540, %v6407
        %v6549 = vsel %vm4526, %v6541, %v6409
        %v6550 = vsel %vm4559, %v6542, %v6423
        %v6551 = vsel %vm4559, %v6543, %v6425
        %v6552 = vsel %vm4559, %v6544, %v6427
        %v6553 = vsel %vm4559, %v6545, %v6429
        %v6554 = vsel %vm4559, %v6546, %v6431
        %v6555 = vsel %vm4559, %v6547, %v6433
        %v6556 = vsel %vm4559, %v6548, %v6435
        %v6557 = vsel %vm4559, %v6549, %v6437
        %v6558 = vsel %vm4592, %v6550, %v6450
        %v6559 = vsel %vm4592, %v6551, %v6452
        %v6560 = vsel %vm4592, %v6552, %v6454
        %v6561 = vsel %vm4592, %v6553, %v6456
        %v6562 = vsel %vm4592, %v6554, %v6458
        %v6563 = vsel %vm4592, %v6555, %v6460
        %v6564 = vsel %vm4592, %v6556, %v6462
        %v6565 = vsel %vm4592, %v6557, %v6464
        %v6566 = vsel %vm4625, %v6558, %v6474
        %v6567 = vsel %vm4625, %v6559, %v6476
        %v6568 = vsel %vm4625, %v6560, %v6478
        %v6569 = vsel %vm4625, %v6561, %v6480
        %v6570 = vsel %vm4625, %v6562, %v6482
        %v6571 = vsel %vm4625, %v6563, %v6484
        %v6572 = vsel %vm4625, %v6564, %v6486
        %v6573 = vsel %vm4625, %v6565, %v4299
        %v6574 = vsel %vm4658, %v6566, %v6495
        %v6575 = vsel %vm4658, %v6567, %v6497
        %v6576 = vsel %vm4658, %v6568, %v6499
        %v6577 = vsel %vm4658, %v6569, %v6501
        %v6578 = vsel %vm4658, %v6570, %v6503
        %v6579 = vsel %vm4658, %v6571, %v6505
        %v6580 = vsel %vm4658, %v6572, %v6507
        %v6581 = vsel %vm4658, %v6573, %v6509
        %v6582 = vpack.c.bf16 %v6575, %v6574
        %v6583 = vpack.c.bf16 %v6356, %v6353
        %v6584 = vpack.c.bf16 %v6577, %v6576
        %v6585 = vpack.c.bf16 %v6362, %v6359
        %v6586 = vpack.c.bf16 %v6579, %v6578
        %v6587 = vpack.c.bf16 %v6368, %v6365
        %v6588 = vpack.c.bf16 %v6581, %v6580
        %v6589 = vpack.c.bf16 %v6347, %v6448
        %v6591 = vlaneseq
        %v6592 = vshrl.u32 %v6591, 7
        %v6593 = vsub.s32 0, %v6592
        %v6594 = vrot.slane %v563, %v6593
        %v6614 = vunpack.c.l.b16 %v545
        %v6615 = vunpack.c.l.b16 %v546
        %v6616 = vunpack.c.l.b16 %v547
        %v6617 = vunpack.c.l.b16 %v548
        %v6618 = vunpack.c.l.b16 %v549
        %v6619 = vunpack.c.l.b16 %v550
        %v6620 = vunpack.c.l.b16 %v551
        %v6621 = vunpack.c.l.b16 %v552
        %v6622 = vunpack.c.l.b16 %v553
        %v6623 = vunpack.c.l.b16 %v554
        %v6624 = vunpack.c.l.b16 %v555
        %v6625 = vunpack.c.l.b16 %v556
        %v6626 = vunpack.c.l.b16 %v557
        %v6627 = vunpack.c.l.b16 %v558
        %v6628 = vunpack.c.l.b16 %v559
        %v6629 = vunpack.c.l.b16 %v560
        %v6630 = vunpack.c.l.b16 %v561
        %v6631 = vunpack.c.l.b16 %v562
        %v6632 = vpack.c.b16 %v6615, %v6614
        %v6633 = vpack.c.b16 %v6617, %v6616
        %v6634 = vpack.c.b16 %v6619, %v6618
        %v6635 = vpack.c.b16 %v6621, %v6620
        %v6636 = vpack.c.b16 %v6623, %v6622
        %v6637 = vpack.c.b16 %v6625, %v6624
        %v6638 = vpack.c.b16 %v6627, %v6626
        %v6639 = vpack.c.b16 %v6629, %v6628
        %v6640 = vpack.c.b16 %v6631, %v6630
        %v6651 = vsel %vm1982, %v6583, 0
        %v6654 = vsel %vm1982, %v6585, 0
        %v6657 = vsel %vm1982, %v6587, 0
        %v6660 = vsel %vm1982, %v6589, 0
        %6662 = vmatprep.subr.bf16.mxu0 0
        %6663 = vmatpush1.bf16.msra.mxu0 %v6639
        %6664 = vmatprep.subr.bf16.mxu0 0
        %6665 = vmatpush1.bf16.msra.mxu0 %v6638
        %6666 = vmatprep.subr.bf16.mxu0 0
        %6667 = vmatpush1.bf16.msra.mxu0 %v6637
        %6668 = vmatprep.subr.bf16.mxu0 0
        %6669 = vmatpush1.bf16.msra.mxu0 %v6636
        %6670 = vmatprep.subr.bf16.mxu0 0
        %6671 = vmatpush1.bf16.msra.mxu0 %v6635
        %6672 = vmatprep.subr.bf16.mxu0 0
        %6673 = vmatpush1.bf16.msra.mxu0 %v6634
        %6674 = vmatprep.subr.bf16.mxu0 0
        %6675 = vmatpush1.bf16.msra.mxu0 %v6633
        %6676 = vmatprep.subr.bf16.mxu0 0
        %6677 = vmatpush1.bf16.msra.mxu0 %v6632
        %6678 = vmatprep.subr.bf16.mxu0 0
        %6679 = vmatpush2.bf16.msra.mxu0 0
        %6680 = vmatprep.subr.bf16.mxu0 0
        %6681 = vmatpush2.bf16.msra.mxu0 0
        %6682 = vmatprep.subr.bf16.mxu0 0
        %6683 = vmatpush2.bf16.msra.mxu0 0
        %6684 = vmatprep.subr.bf16.mxu0 0
        %6685 = vmatpush2.bf16.msra.mxu0 0
        %6686 = vmatprep.subr.bf16.mxu0 0
        %6687 = vmatpush2.bf16.msra.mxu0 0
        %6688 = vmatprep.subr.bf16.mxu0 0
        %6689 = vmatpush2.bf16.msra.mxu0 0
        %6690 = vmatprep.subr.bf16.mxu0 0
        %6691 = vmatpush2.bf16.msra.mxu0 0
        %6692 = vmatprep.subr.bf16.mxu0 0
        %6693 = vmatpush2.bf16.msra.mxu0 %v6640
        %6694 = vmatprep.mubr.bf16.mxu0 %v6651
        %6695 = vmatmul.mubr.bf16.gmra.mxu0 %v6582
        %v6696 = vpop.f32.mrf.mxu0
        %v6697 = vadd.f32 %v6594, %v6696
        %v6698 = vpop.f32.mrf.mxu0
        %v6699 = vpop.f32.mrf.mxu0
        %v6700 = vadd.f32 %v6594, %v6699
        %v6701 = vpop.f32.mrf.mxu0
        %6702 = vmatprep.mubr.bf16.mxu0 %v6654
        %6703 = vmatmul.mubr.bf16.gmra.mxu0 %v6584
        %v6704 = vpop.f32.mrf.mxu0
        %v6705 = vadd.f32 %v6594, %v6704
        %v6706 = vpop.f32.mrf.mxu0
        %v6707 = vpop.f32.mrf.mxu0
        %v6708 = vadd.f32 %v6594, %v6707
        %v6709 = vpop.f32.mrf.mxu0
        %6710 = vmatprep.mubr.bf16.mxu0 %v6657
        %6711 = vmatmul.mubr.bf16.gmra.mxu0 %v6586
        %v6712 = vpop.f32.mrf.mxu0
        %v6713 = vadd.f32 %v6594, %v6712
        %v6714 = vpop.f32.mrf.mxu0
        %v6715 = vpop.f32.mrf.mxu0
        %v6716 = vadd.f32 %v6594, %v6715
        %v6717 = vpop.f32.mrf.mxu0
        %6718 = vmatprep.mubr.bf16.mxu0 %v6660
        %6719 = vmatmul.mubr.bf16.gmra.mxu0 %v6588
        %v6720 = vpop.f32.mrf.mxu0
        %v6721 = vadd.f32 %v6594, %v6720
        %v6722 = vpop.f32.mrf.mxu0
        %v6723 = vpop.f32.mrf.mxu0
        %v6724 = vadd.f32 %v6594, %v6723
        %v6725 = vpop.f32.mrf.mxu0
        %6726 = vdwg.mxu0
        %v6791 = vlaneseq
        %v6792 = vshrl.u32 %v6791, 7
        %v6793 = vsub.s32 0, %v6792
        %v6794 = vrot.slane %v3253, %v6793
        %v6795 = vlaneseq
        %v6796 = vshrl.u32 %v6795, 7
        %v6797 = vsub.s32 0, %v6796
        %v6798 = vrot.slane %v3254, %v6797
        %v6799 = vlaneseq
        %v6800 = vshrl.u32 %v6799, 7
        %v6801 = vsub.s32 0, %v6800
        %v6802 = vrot.slane %v3255, %v6801
        %v6803 = vlaneseq
        %v6804 = vshrl.u32 %v6803, 7
        %v6805 = vsub.s32 0, %v6804
        %v6806 = vrot.slane %v3256, %v6805
        %v6807 = vlaneseq
        %v6808 = vshrl.u32 %v6807, 7
        %v6809 = vsub.s32 0, %v6808
        %v6810 = vrot.slane %v3257, %v6809
        %v6811 = vlaneseq
        %v6812 = vshrl.u32 %v6811, 7
        %v6813 = vsub.s32 0, %v6812
        %v6814 = vrot.slane %v3258, %v6813
        %v6815 = vlaneseq
        %v6816 = vshrl.u32 %v6815, 7
        %v6817 = vsub.s32 0, %v6816
        %v6818 = vrot.slane %v3259, %v6817
        %v6819 = vlaneseq
        %v6820 = vshrl.u32 %v6819, 7
        %v6821 = vsub.s32 0, %v6820
        %v6822 = vrot.slane %v3260, %v6821
        %v6823 = vlaneseq
        %v6824 = vshrl.u32 %v6823, 7
        %v6825 = vsub.s32 0, %v6824
        %v6826 = vrot.slane %v3261, %v6825
        %v6827 = vlaneseq
        %v6828 = vshrl.u32 %v6827, 7
        %v6829 = vsub.s32 0, %v6828
        %v6830 = vrot.slane %v3262, %v6829
        %v6831 = vlaneseq
        %v6832 = vshrl.u32 %v6831, 7
        %v6833 = vsub.s32 0, %v6832
        %v6834 = vrot.slane %v3263, %v6833
        %v6835 = vlaneseq
        %v6836 = vshrl.u32 %v6835, 7
        %v6837 = vsub.s32 0, %v6836
        %v6838 = vrot.slane %v3264, %v6837
        %v6839 = vlaneseq
        %v6840 = vshrl.u32 %v6839, 7
        %v6841 = vsub.s32 0, %v6840
        %v6842 = vrot.slane %v3265, %v6841
        %v6843 = vlaneseq
        %v6844 = vshrl.u32 %v6843, 7
        %v6845 = vsub.s32 0, %v6844
        %v6846 = vrot.slane %v3266, %v6845
        %v6847 = vlaneseq
        %v6848 = vshrl.u32 %v6847, 7
        %v6849 = vsub.s32 0, %v6848
        %v6850 = vrot.slane %v3267, %v6849
        %v6851 = vlaneseq
        %v6852 = vshrl.u32 %v6851, 7
        %v6853 = vsub.s32 0, %v6852
        %v6854 = vrot.slane %v3268, %v6853
        %v6855 = vlaneseq
        %v6856 = vshrl.u32 %v6855, 7
        %v6857 = vsub.s32 0, %v6856
        %v6858 = vrot.slane %v3269, %v6857
        %v6859 = vlaneseq
        %v6860 = vshrl.u32 %v6859, 7
        %v6861 = vsub.s32 0, %v6860
        %v6862 = vrot.slane %v3270, %v6861
        %v6863 = vlaneseq
        %v6864 = vshrl.u32 %v6863, 7
        %v6865 = vsub.s32 0, %v6864
        %v6866 = vrot.slane %v3271, %v6865
        %v6867 = vlaneseq
        %v6868 = vshrl.u32 %v6867, 7
        %v6869 = vsub.s32 0, %v6868
        %v6870 = vrot.slane %v3272, %v6869
        %v6871 = vlaneseq
        %v6872 = vshrl.u32 %v6871, 7
        %v6873 = vsub.s32 0, %v6872
        %v6874 = vrot.slane %v3273, %v6873
        %v6875 = vlaneseq
        %v6876 = vshrl.u32 %v6875, 7
        %v6877 = vsub.s32 0, %v6876
        %v6878 = vrot.slane %v3274, %v6877
        %v6879 = vlaneseq
        %v6880 = vshrl.u32 %v6879, 7
        %v6881 = vsub.s32 0, %v6880
        %v6882 = vrot.slane %v3275, %v6881
        %v6883 = vlaneseq
        %v6884 = vshrl.u32 %v6883, 7
        %v6885 = vsub.s32 0, %v6884
        %v6886 = vrot.slane %v3276, %v6885
        %v6887 = vlaneseq
        %v6888 = vshrl.u32 %v6887, 7
        %v6889 = vsub.s32 0, %v6888
        %v6890 = vrot.slane %v3277, %v6889
        %v6891 = vlaneseq
        %v6892 = vshrl.u32 %v6891, 7
        %v6893 = vsub.s32 0, %v6892
        %v6894 = vrot.slane %v3278, %v6893
        %v6895 = vlaneseq
        %v6896 = vshrl.u32 %v6895, 7
        %v6897 = vsub.s32 0, %v6896
        %v6898 = vrot.slane %v3279, %v6897
        %v6899 = vlaneseq
        %v6900 = vshrl.u32 %v6899, 7
        %v6901 = vsub.s32 0, %v6900
        %v6902 = vrot.slane %v3280, %v6901
        %v6903 = vlaneseq
        %v6904 = vshrl.u32 %v6903, 7
        %v6905 = vsub.s32 0, %v6904
        %v6906 = vrot.slane %v3281, %v6905
        %v6907 = vlaneseq
        %v6908 = vshrl.u32 %v6907, 7
        %v6909 = vsub.s32 0, %v6908
        %v6910 = vrot.slane %v3282, %v6909
        %v6911 = vlaneseq
        %v6912 = vshrl.u32 %v6911, 7
        %v6913 = vsub.s32 0, %v6912
        %v6914 = vrot.slane %v3283, %v6913
        %v6915 = vlaneseq
        %v6916 = vshrl.u32 %v6915, 7
        %v6917 = vsub.s32 0, %v6916
        %v6918 = vrot.slane %v3284, %v6917
        %v6919 = vlaneseq
        %v6920 = vshrl.u32 %v6919, 7
        %v6921 = vsub.s32 0, %v6920
        %v6922 = vrot.slane %v3285, %v6921
        %v6923 = vlaneseq
        %v6924 = vshrl.u32 %v6923, 7
        %v6925 = vsub.s32 0, %v6924
        %v6926 = vrot.slane %v3286, %v6925
        %v6927 = vlaneseq
        %v6928 = vshrl.u32 %v6927, 7
        %v6929 = vsub.s32 0, %v6928
        %v6930 = vrot.slane %v3287, %v6929
        %v6931 = vlaneseq
        %v6932 = vshrl.u32 %v6931, 7
        %v6933 = vsub.s32 0, %v6932
        %v6934 = vrot.slane %v3288, %v6933
        %v6935 = vlaneseq
        %v6936 = vshrl.u32 %v6935, 7
        %v6937 = vsub.s32 0, %v6936
        %v6938 = vrot.slane %v3289, %v6937
        %v6939 = vlaneseq
        %v6940 = vshrl.u32 %v6939, 7
        %v6941 = vsub.s32 0, %v6940
        %v6942 = vrot.slane %v3290, %v6941
        %v6943 = vlaneseq
        %v6944 = vshrl.u32 %v6943, 7
        %v6945 = vsub.s32 0, %v6944
        %v6946 = vrot.slane %v3291, %v6945
        %v6947 = vlaneseq
        %v6948 = vshrl.u32 %v6947, 7
        %v6949 = vsub.s32 0, %v6948
        %v6950 = vrot.slane %v3292, %v6949
        %v6951 = vlaneseq
        %v6952 = vshrl.u32 %v6951, 7
        %v6953 = vsub.s32 0, %v6952
        %v6954 = vrot.slane %v3293, %v6953
        %v6955 = vlaneseq
        %v6956 = vshrl.u32 %v6955, 7
        %v6957 = vsub.s32 0, %v6956
        %v6958 = vrot.slane %v3294, %v6957
        %v6959 = vlaneseq
        %v6960 = vshrl.u32 %v6959, 7
        %v6961 = vsub.s32 0, %v6960
        %v6962 = vrot.slane %v3295, %v6961
        %v6963 = vlaneseq
        %v6964 = vshrl.u32 %v6963, 7
        %v6965 = vsub.s32 0, %v6964
        %v6966 = vrot.slane %v3296, %v6965
        %v6967 = vlaneseq
        %v6968 = vshrl.u32 %v6967, 7
        %v6969 = vsub.s32 0, %v6968
        %v6970 = vrot.slane %v3297, %v6969
        %v6971 = vlaneseq
        %v6972 = vshrl.u32 %v6971, 7
        %v6973 = vsub.s32 0, %v6972
        %v6974 = vrot.slane %v3298, %v6973
        %v6975 = vlaneseq
        %v6976 = vshrl.u32 %v6975, 7
        %v6977 = vsub.s32 0, %v6976
        %v6978 = vrot.slane %v3299, %v6977
        %v6979 = vlaneseq
        %v6980 = vshrl.u32 %v6979, 7
        %v6981 = vsub.s32 0, %v6980
        %v6982 = vrot.slane %v3300, %v6981
        %v6983 = vlaneseq
        %v6984 = vshrl.u32 %v6983, 7
        %v6985 = vsub.s32 0, %v6984
        %v6986 = vrot.slane %v3301, %v6985
        %v6987 = vlaneseq
        %v6988 = vshrl.u32 %v6987, 7
        %v6989 = vsub.s32 0, %v6988
        %v6990 = vrot.slane %v3302, %v6989
        %v6991 = vlaneseq
        %v6992 = vshrl.u32 %v6991, 7
        %v6993 = vsub.s32 0, %v6992
        %v6994 = vrot.slane %v3303, %v6993
        %v6995 = vlaneseq
        %v6996 = vshrl.u32 %v6995, 7
        %v6997 = vsub.s32 0, %v6996
        %v6998 = vrot.slane %v3304, %v6997
        %v6999 = vlaneseq
        %v7000 = vshrl.u32 %v6999, 7
        %v7001 = vsub.s32 0, %v7000
        %v7002 = vrot.slane %v3305, %v7001
        %v7003 = vlaneseq
        %v7004 = vshrl.u32 %v7003, 7
        %v7005 = vsub.s32 0, %v7004
        %v7006 = vrot.slane %v3306, %v7005
        %v7007 = vlaneseq
        %v7008 = vshrl.u32 %v7007, 7
        %v7009 = vsub.s32 0, %v7008
        %v7010 = vrot.slane %v3307, %v7009
        %v7011 = vlaneseq
        %v7012 = vshrl.u32 %v7011, 7
        %v7013 = vsub.s32 0, %v7012
        %v7014 = vrot.slane %v3308, %v7013
        %v7015 = vlaneseq
        %v7016 = vshrl.u32 %v7015, 7
        %v7017 = vsub.s32 0, %v7016
        %v7018 = vrot.slane %v3309, %v7017
        %v7019 = vlaneseq
        %v7020 = vshrl.u32 %v7019, 7
        %v7021 = vsub.s32 0, %v7020
        %v7022 = vrot.slane %v3310, %v7021
        %v7023 = vlaneseq
        %v7024 = vshrl.u32 %v7023, 7
        %v7025 = vsub.s32 0, %v7024
        %v7026 = vrot.slane %v3311, %v7025
        %v7027 = vlaneseq
        %v7028 = vshrl.u32 %v7027, 7
        %v7029 = vsub.s32 0, %v7028
        %v7030 = vrot.slane %v3312, %v7029
        %v7031 = vlaneseq
        %v7032 = vshrl.u32 %v7031, 7
        %v7033 = vsub.s32 0, %v7032
        %v7034 = vrot.slane %v3313, %v7033
        %v7035 = vlaneseq
        %v7036 = vshrl.u32 %v7035, 7
        %v7037 = vsub.s32 0, %v7036
        %v7038 = vrot.slane %v3314, %v7037
        %v7039 = vlaneseq
        %v7040 = vshrl.u32 %v7039, 7
        %v7041 = vsub.s32 0, %v7040
        %v7042 = vrot.slane %v3315, %v7041
        %v7043 = vlaneseq
        %v7044 = vshrl.u32 %v7043, 7
        %v7045 = vsub.s32 0, %v7044
        %v7046 = vrot.slane %v3316, %v7045
        %v7047 = vsel %vm6192, %v6798, %v6794
        %v7048 = vsel %vm6194, %v6802, %v7047
        %v7049 = vsel %vm6196, %v6806, %v7048
        %v7050 = vsel %vm6198, %v6810, %v7049
        %v7051 = vsel %vm6200, %v6814, %v7050
        %v7052 = vsel %vm6202, %v6818, %v7051
        %v7053 = vsel %vm6204, %v6822, %v7052
        %v7054 = vsel %vm6192, %v6830, %v6826
        %v7055 = vsel %vm6194, %v6834, %v7054
        %v7056 = vsel %vm6196, %v6838, %v7055
        %v7057 = vsel %vm6198, %v6842, %v7056
        %v7058 = vsel %vm6200, %v6846, %v7057
        %v7059 = vsel %vm6202, %v6850, %v7058
        %v7060 = vsel %vm6204, %v6854, %v7059
        %v7061 = vsel %vm6192, %v6862, %v6858
        %v7062 = vsel %vm6194, %v6866, %v7061
        %v7063 = vsel %vm6196, %v6870, %v7062
        %v7064 = vsel %vm6198, %v6874, %v7063
        %v7065 = vsel %vm6200, %v6878, %v7064
        %v7066 = vsel %vm6202, %v6882, %v7065
        %v7067 = vsel %vm6204, %v6886, %v7066
        %v7068 = vsel %vm6192, %v6894, %v6890
        %v7069 = vsel %vm6194, %v6898, %v7068
        %v7070 = vsel %vm6196, %v6902, %v7069
        %v7071 = vsel %vm6198, %v6906, %v7070
        %v7072 = vsel %vm6200, %v6910, %v7071
        %v7073 = vsel %vm6202, %v6914, %v7072
        %v7074 = vsel %vm6204, %v6918, %v7073
        %v7075 = vsel %vm6192, %v6926, %v6922
        %v7076 = vsel %vm6194, %v6930, %v7075
        %v7077 = vsel %vm6196, %v6934, %v7076
        %v7078 = vsel %vm6198, %v6938, %v7077
        %v7079 = vsel %vm6200, %v6942, %v7078
        %v7080 = vsel %vm6202, %v6946, %v7079
        %v7081 = vsel %vm6204, %v6950, %v7080
        %v7082 = vsel %vm6192, %v6958, %v6954
        %v7083 = vsel %vm6194, %v6962, %v7082
        %v7084 = vsel %vm6196, %v6966, %v7083
        %v7085 = vsel %vm6198, %v6970, %v7084
        %v7086 = vsel %vm6200, %v6974, %v7085
        %v7087 = vsel %vm6202, %v6978, %v7086
        %v7088 = vsel %vm6204, %v6982, %v7087
        %v7089 = vsel %vm6192, %v6990, %v6986
        %v7090 = vsel %vm6194, %v6994, %v7089
        %v7091 = vsel %vm6196, %v6998, %v7090
        %v7092 = vsel %vm6198, %v7002, %v7091
        %v7093 = vsel %vm6200, %v7006, %v7092
        %v7094 = vsel %vm6202, %v7010, %v7093
        %v7095 = vsel %vm6204, %v7014, %v7094
        %v7096 = vsel %vm6192, %v7022, %v7018
        %v7097 = vsel %vm6194, %v7026, %v7096
        %v7098 = vsel %vm6196, %v7030, %v7097
        %v7099 = vsel %vm6198, %v7034, %v7098
        %v7100 = vsel %vm6200, %v7038, %v7099
        %v7101 = vsel %vm6202, %v7042, %v7100
        %v7102 = vsel %vm6204, %v7046, %v7101
        %v7111 = vadd.f32 %v6697, %v7053
        %v7112 = vadd.f32 %v6700, %v7060
        %v7113 = vadd.f32 %v6705, %v7067
        %v7114 = vadd.f32 %v6708, %v7074
        %v7115 = vadd.f32 %v6713, %v7081
        %v7116 = vadd.f32 %v6716, %v7088
        %v7117 = vadd.f32 %v6721, %v7095
        %v7118 = vadd.f32 %v6724, %v7102
        %v7119 = vmul.f32 %v7111, 0.70710677
        %v7120 = vmul.f32 %v7112, 0.70710677
        %v7121 = vmul.f32 %v7113, 0.70710677
        %v7122 = vmul.f32 %v7114, 0.70710677
        %v7123 = vmul.f32 %v7115, 0.70710677
        %v7124 = vmul.f32 %v7116, 0.70710677
        %v7125 = vmul.f32 %v7117, 0.70710677
        %v7126 = vmul.f32 %v7118, 0.70710677
        %v7127 = vadd.f32 %v7119, %v7120
        %v7128 = vadd.f32 %v7121, %v7122
        %v7129 = vadd.f32 %v7123, %v7124
        %v7130 = vadd.f32 %v7125, %v7126
        %v7135 = vcombine.high %v7127, %v7127
        %v7137 = vunpack.c.l.s4 1983009808
        %v7138 = vunpack.c.0.s8 %v7137
        %v7139 = vlaneseq
        %v7140 = vshrl.u32 %v7139, 7
        %v7141 = vsub.s32 %v7138, %v7140
        %v7142 = vrot.slane %v7127, %v7141
        %v7144 = vunpack.c.l.s4 1983009808
        %v7145 = vunpack.c.0.s8 %v7144
        %v7146 = vlaneseq
        %v7147 = vshrl.u32 %v7146, 7
        %v7148 = vsub.s32 %v7145, %v7147
        %v7149 = vrot.slane %v7135, %v7148
        %v7150 = vcombine.high %v7142, %v7142
        %v7151 = vcombine.high %v7149, %v7149
        %v7152 = vcombine.high %v7128, %v7128
        %v7154 = vunpack.c.l.s4 1983009808
        %v7155 = vunpack.c.0.s8 %v7154
        %v7156 = vlaneseq
        %v7157 = vshrl.u32 %v7156, 7
        %v7158 = vsub.s32 %v7155, %v7157
        %v7159 = vrot.slane %v7128, %v7158
        %v7161 = vunpack.c.l.s4 1983009808
        %v7162 = vunpack.c.0.s8 %v7161
        %v7163 = vlaneseq
        %v7164 = vshrl.u32 %v7163, 7
        %v7165 = vsub.s32 %v7162, %v7164
        %v7166 = vrot.slane %v7152, %v7165
        %v7167 = vcombine.high %v7159, %v7159
        %v7168 = vcombine.high %v7166, %v7166
        %v7169 = vcombine.high %v7129, %v7129
        %v7171 = vunpack.c.l.s4 1983009808
        %v7172 = vunpack.c.0.s8 %v7171
        %v7173 = vlaneseq
        %v7174 = vshrl.u32 %v7173, 7
        %v7175 = vsub.s32 %v7172, %v7174
        %v7176 = vrot.slane %v7129, %v7175
        %v7178 = vunpack.c.l.s4 1983009808
        %v7179 = vunpack.c.0.s8 %v7178
        %v7180 = vlaneseq
        %v7181 = vshrl.u32 %v7180, 7
        %v7182 = vsub.s32 %v7179, %v7181
        %v7183 = vrot.slane %v7169, %v7182
        %v7184 = vcombine.high %v7176, %v7176
        %v7185 = vcombine.high %v7183, %v7183
        %v7186 = vcombine.high %v7130, %v7130
        %v7188 = vunpack.c.l.s4 1983009808
        %v7189 = vunpack.c.0.s8 %v7188
        %v7190 = vlaneseq
        %v7191 = vshrl.u32 %v7190, 7
        %v7192 = vsub.s32 %v7189, %v7191
        %v7193 = vrot.slane %v7130, %v7192
        %v7195 = vunpack.c.l.s4 1983009808
        %v7196 = vunpack.c.0.s8 %v7195
        %v7197 = vlaneseq
        %v7198 = vshrl.u32 %v7197, 7
        %v7199 = vsub.s32 %v7196, %v7198
        %v7200 = vrot.slane %v7186, %v7199
        %v7201 = vcombine.high %v7193, %v7193
        %v7202 = vcombine.high %v7200, %v7200
        %v7219 = vrot.slane %v7142, 7
        %v7220 = vrot.slane %v7219, 2
        %v7221 = vrot.slane %v7150, 7
        %v7222 = vrot.slane %v7221, 2
        %v7223 = vrot.slane %v7149, 7
        %v7224 = vrot.slane %v7223, 2
        %v7225 = vrot.slane %v7151, 7
        %v7226 = vrot.slane %v7225, 2
        %v7227 = vrot.slane %v7159, 7
        %v7228 = vrot.slane %v7227, 2
        %v7229 = vrot.slane %v7167, 7
        %v7230 = vrot.slane %v7229, 2
        %v7231 = vrot.slane %v7166, 7
        %v7232 = vrot.slane %v7231, 2
        %v7233 = vrot.slane %v7168, 7
        %v7234 = vrot.slane %v7233, 2
        %v7235 = vrot.slane %v7176, 7
        %v7236 = vrot.slane %v7235, 2
        %v7237 = vrot.slane %v7184, 7
        %v7238 = vrot.slane %v7237, 2
        %v7239 = vrot.slane %v7183, 7
        %v7240 = vrot.slane %v7239, 2
        %v7241 = vrot.slane %v7185, 7
        %v7242 = vrot.slane %v7241, 2
        %v7243 = vrot.slane %v7193, 7
        %v7244 = vrot.slane %v7243, 2
        %v7245 = vrot.slane %v7201, 7
        %v7246 = vrot.slane %v7245, 2
        %v7247 = vrot.slane %v7200, 7
        %v7248 = vrot.slane %v7247, 2
        %v7249 = vrot.slane %v7202, 7
        %v7250 = vrot.slane %v7249, 2
        %v7267 = vadd.f32 %v7142, %v7220
        %v7268 = vadd.f32 %v7150, %v7222
        %v7269 = vadd.f32 %v7149, %v7224
        %v7270 = vadd.f32 %v7151, %v7226
        %v7271 = vadd.f32 %v7159, %v7228
        %v7272 = vadd.f32 %v7167, %v7230
        %v7273 = vadd.f32 %v7166, %v7232
        %v7274 = vadd.f32 %v7168, %v7234
        %v7275 = vadd.f32 %v7176, %v7236
        %v7276 = vadd.f32 %v7184, %v7238
        %v7277 = vadd.f32 %v7183, %v7240
        %v7278 = vadd.f32 %v7185, %v7242
        %v7279 = vadd.f32 %v7193, %v7244
        %v7280 = vadd.f32 %v7201, %v7246
        %v7281 = vadd.f32 %v7200, %v7248
        %v7282 = vadd.f32 %v7202, %v7250
        %v7283 = vmul.f32 %v7267, 0.25
        %v7284 = vmul.f32 %v7268, 0.25
        %v7285 = vmul.f32 %v7269, 0.25
        %v7286 = vmul.f32 %v7270, 0.25
        %v7287 = vmul.f32 %v7271, 0.25
        %v7288 = vmul.f32 %v7272, 0.25
        %v7289 = vmul.f32 %v7273, 0.25
        %v7290 = vmul.f32 %v7274, 0.25
        %v7291 = vmul.f32 %v7275, 0.25
        %v7292 = vmul.f32 %v7276, 0.25
        %v7293 = vmul.f32 %v7277, 0.25
        %v7294 = vmul.f32 %v7278, 0.25
        %v7295 = vmul.f32 %v7279, 0.25
        %v7296 = vmul.f32 %v7280, 0.25
        %v7297 = vmul.f32 %v7281, 0.25
        %v7298 = vmul.f32 %v7282, 0.25
        %vm7299 = vcmp.ge.f32.partialorder %v7119, 0.0
        %vm7300 = vcmp.ge.f32.partialorder %v7120, 0.0
        %vm7301 = vcmp.ge.f32.partialorder %v7121, 0.0
        %vm7302 = vcmp.ge.f32.partialorder %v7122, 0.0
        %vm7303 = vcmp.ge.f32.partialorder %v7123, 0.0
        %vm7304 = vcmp.ge.f32.partialorder %v7124, 0.0
        %vm7305 = vcmp.ge.f32.partialorder %v7125, 0.0
        %vm7306 = vcmp.ge.f32.partialorder %v7126, 0.0
        %v7307 = vmul.f32 %v7119, 0.2
        %v7308 = vmul.f32 %v7120, 0.2
        %v7309 = vmul.f32 %v7121, 0.2
        %v7310 = vmul.f32 %v7122, 0.2
        %v7311 = vmul.f32 %v7123, 0.2
        %v7312 = vmul.f32 %v7124, 0.2
        %v7313 = vmul.f32 %v7125, 0.2
        %v7314 = vmul.f32 %v7126, 0.2
        %v7315 = vsel %vm7299, %v7119, %v7307
        %v7316 = vsel %vm7300, %v7120, %v7308
        %v7317 = vsel %vm7301, %v7121, %v7309
        %v7318 = vsel %vm7302, %v7122, %v7310
        %v7319 = vsel %vm7303, %v7123, %v7311
        %v7320 = vsel %vm7304, %v7124, %v7312
        %v7321 = vsel %vm7305, %v7125, %v7313
        %v7322 = vsel %vm7306, %v7126, %v7314
        %v7331 = vrot.slane %v7315, 7
        %v7332 = vrot.slane %v7316, 7
        %v7333 = vrot.slane %v7317, 7
        %v7334 = vrot.slane %v7318, 7
        %v7335 = vrot.slane %v7319, 7
        %v7336 = vrot.slane %v7320, 7
        %v7337 = vrot.slane %v7321, 7
        %v7338 = vrot.slane %v7322, 7
        %v7347 = vsel %vm775, 0.0, %v7331
        %v7348 = vsel %vm775, 0.0, %v7332
        %v7349 = vsel %vm775, 0.0, %v7333
        %v7350 = vsel %vm775, 0.0, %v7334
        %v7351 = vsel %vm775, 0.0, %v7335
        %v7352 = vsel %vm775, 0.0, %v7336
        %v7353 = vsel %vm775, 0.0, %v7337
        %v7354 = vsel %vm775, 0.0, %v7338
        %v7355 = vsel %vm775, %v7331, 0.0
        %v7356 = vsel %vm775, %v7332, 0.0
        %v7357 = vsel %vm775, %v7333, 0.0
        %v7358 = vsel %vm775, %v7334, 0.0
        %v7359 = vsel %vm775, %v7335, 0.0
        %v7360 = vsel %vm775, %v7336, 0.0
        %v7361 = vsel %vm775, %v7337, 0.0
        %v7362 = vsel %vm775, %v7338, 0.0
        %v7377 = vrot.slane %v7347, 1
        %v7378 = vrot.slane %v7355, 1
        %v7379 = vsel %vm941, %v7377, %v7378
        %v7380 = vrot.slane %v7348, 1
        %v7381 = vrot.slane %v7356, 1
        %v7382 = vsel %vm941, %v7380, %v7381
        %v7383 = vrot.slane %v7349, 1
        %v7384 = vrot.slane %v7357, 1
        %v7385 = vsel %vm941, %v7383, %v7384
        %v7386 = vrot.slane %v7350, 1
        %v7387 = vrot.slane %v7358, 1
        %v7388 = vsel %vm941, %v7386, %v7387
        %v7389 = vrot.slane %v7351, 1
        %v7390 = vrot.slane %v7359, 1
        %v7391 = vsel %vm941, %v7389, %v7390
        %v7392 = vrot.slane %v7352, 1
        %v7393 = vrot.slane %v7360, 1
        %v7394 = vsel %vm941, %v7392, %v7393
        %v7395 = vrot.slane %v7353, 1
        %v7396 = vrot.slane %v7361, 1
        %v7397 = vsel %vm941, %v7395, %v7396
        %7398 = vrot.lane.b32.xlu0 %v6301, 32
        %v7399 = vpop.permute.xlu0 %7398
        %7400 = vrot.lane.b32.xlu0 %v7379, 32
        %v7401 = vpop.permute.xlu0 %7400
        %7402 = vrot.lane.b32.xlu0 %v7382, 32
        %v7403 = vpop.permute.xlu0 %7402
        %7404 = vrot.lane.b32.xlu0 %v7385, 32
        %v7405 = vpop.permute.xlu0 %7404
        %7406 = vrot.lane.b32.xlu0 %v7388, 32
        %v7407 = vpop.permute.xlu0 %7406
        %7408 = vrot.lane.b32.xlu0 %v7391, 32
        %v7409 = vpop.permute.xlu0 %7408
        %7410 = vrot.lane.b32.xlu0 %v7394, 32
        %v7411 = vpop.permute.xlu0 %7410
        %7412 = vrot.lane.b32.xlu0 %v7397, 32
        %v7413 = vpop.permute.xlu0 %7412
        %v7422 = vrot.slane %v7347, 2
        %v7423 = vrot.slane %v7355, 2
        %v7424 = vsel %vm1118, %v7422, %v7423
        %v7425 = vrot.slane %v7348, 2
        %v7426 = vrot.slane %v7356, 2
        %v7427 = vsel %vm1118, %v7425, %v7426
        %v7428 = vrot.slane %v7349, 2
        %v7429 = vrot.slane %v7357, 2
        %v7430 = vsel %vm1118, %v7428, %v7429
        %v7431 = vrot.slane %v7350, 2
        %v7432 = vrot.slane %v7358, 2
        %v7433 = vsel %vm1118, %v7431, %v7432
        %v7434 = vrot.slane %v7351, 2
        %v7435 = vrot.slane %v7359, 2
        %v7436 = vsel %vm1118, %v7434, %v7435
        %v7437 = vrot.slane %v7352, 2
        %v7438 = vrot.slane %v7360, 2
        %v7439 = vsel %vm1118, %v7437, %v7438
        %v7440 = vrot.slane %v7353, 2
        %v7441 = vrot.slane %v7361, 2
        %v7442 = vsel %vm1118, %v7440, %v7441
        %7443 = vrot.lane.b32.xlu0 %v6347, 64
        %v7444 = vpop.permute.xlu0 %7443
        %7445 = vrot.lane.b32.xlu0 %v7424, 64
        %v7446 = vpop.permute.xlu0 %7445
        %7447 = vrot.lane.b32.xlu0 %v7427, 64
        %v7448 = vpop.permute.xlu0 %7447
        %7449 = vrot.lane.b32.xlu0 %v7430, 64
        %v7450 = vpop.permute.xlu0 %7449
        %7451 = vrot.lane.b32.xlu0 %v7433, 64
        %v7452 = vpop.permute.xlu0 %7451
        %7453 = vrot.lane.b32.xlu0 %v7436, 64
        %v7454 = vpop.permute.xlu0 %7453
        %7455 = vrot.lane.b32.xlu0 %v7439, 64
        %v7456 = vpop.permute.xlu0 %7455
        %7457 = vrot.lane.b32.xlu0 %v7442, 64
        %v7458 = vpop.permute.xlu0 %7457
        %7468 = vrot.lane.b32.xlu0 %v7347, 96
        %v7469 = vpop.permute.xlu0 %7468
        %7470 = vrot.lane.b32.xlu0 %v7348, 96
        %v7471 = vpop.permute.xlu0 %7470
        %7472 = vrot.lane.b32.xlu0 %v7349, 96
        %v7473 = vpop.permute.xlu0 %7472
        %7474 = vrot.lane.b32.xlu0 %v7350, 96
        %v7475 = vpop.permute.xlu0 %7474
        %7476 = vrot.lane.b32.xlu0 %v7351, 96
        %v7477 = vpop.permute.xlu0 %7476
        %7478 = vrot.lane.b32.xlu0 %v7352, 96
        %v7479 = vpop.permute.xlu0 %7478
        %7480 = vrot.lane.b32.xlu0 %v7353, 96
        %v7481 = vpop.permute.xlu0 %7480
        %7482 = vrot.lane.b32.xlu0 %v7354, 96
        %v7483 = vpop.permute.xlu0 %7482
        %v7493 = vrot.slane %v7354, 1
        %v7494 = vrot.slane %v7362, 1
        %v7495 = vsel %vm941, %v7493, %v7494
        %v7504 = vrot.slane %v7354, 2
        %v7505 = vrot.slane %v7362, 2
        %v7506 = vsel %vm1118, %v7504, %v7505
        %7507 = vrot.lane.b32.xlu0 %v7424, 32
        %v7508 = vpop.permute.xlu0 %7507
        %7509 = vrot.lane.b32.xlu0 %v7427, 32
        %v7510 = vpop.permute.xlu0 %7509
        %7511 = vrot.lane.b32.xlu0 %v7430, 32
        %v7512 = vpop.permute.xlu0 %7511
        %7513 = vrot.lane.b32.xlu0 %v7433, 32
        %v7514 = vpop.permute.xlu0 %7513
        %7515 = vrot.lane.b32.xlu0 %v7436, 32
        %v7516 = vpop.permute.xlu0 %7515
        %7517 = vrot.lane.b32.xlu0 %v7439, 32
        %v7518 = vpop.permute.xlu0 %7517
        %7519 = vrot.lane.b32.xlu0 %v7442, 32
        %v7520 = vpop.permute.xlu0 %7519
        %7521 = vrot.lane.b32.xlu0 %v7506, 32
        %v7522 = vpop.permute.xlu0 %7521
        %7531 = vrot.lane.b32.xlu0 %v7348, 64
        %v7532 = vpop.permute.xlu0 %7531
        %7533 = vrot.lane.b32.xlu0 %v7349, 64
        %v7534 = vpop.permute.xlu0 %7533
        %7535 = vrot.lane.b32.xlu0 %v7350, 64
        %v7536 = vpop.permute.xlu0 %7535
        %7537 = vrot.lane.b32.xlu0 %v7351, 64
        %v7538 = vpop.permute.xlu0 %7537
        %7539 = vrot.lane.b32.xlu0 %v7352, 64
        %v7540 = vpop.permute.xlu0 %7539
        %7541 = vrot.lane.b32.xlu0 %v7353, 64
        %v7542 = vpop.permute.xlu0 %7541
        %7543 = vrot.lane.b32.xlu0 %v7354, 64
        %v7544 = vpop.permute.xlu0 %7543
        %7545 = vrot.lane.b32.xlu0 %v875, 64
        %v7546 = vpop.permute.xlu0 %7545
        %7555 = vrot.lane.b32.xlu0 %v7382, 96
        %v7556 = vpop.permute.xlu0 %7555
        %7557 = vrot.lane.b32.xlu0 %v7385, 96
        %v7558 = vpop.permute.xlu0 %7557
        %7559 = vrot.lane.b32.xlu0 %v7388, 96
        %v7560 = vpop.permute.xlu0 %7559
        %7561 = vrot.lane.b32.xlu0 %v7391, 96
        %v7562 = vpop.permute.xlu0 %7561
        %7563 = vrot.lane.b32.xlu0 %v7394, 96
        %v7564 = vpop.permute.xlu0 %7563
        %7565 = vrot.lane.b32.xlu0 %v7397, 96
        %v7566 = vpop.permute.xlu0 %7565
        %7567 = vrot.lane.b32.xlu0 %v7495, 96
        %v7568 = vpop.permute.xlu0 %7567
        %7569 = vrot.lane.b32.xlu0 %v6301, 96
        %v7570 = vpop.permute.xlu0 %7569
        %v7586 = vsel %vm2114, %v875, %v7399
        %v7587 = vsel %vm2114, %v7347, %v7401
        %v7588 = vsel %vm2114, %v7348, %v7403
        %v7589 = vsel %vm2114, %v7349, %v7405
        %v7590 = vsel %vm2114, %v7350, %v7407
        %v7591 = vsel %vm2114, %v7351, %v7409
        %v7592 = vsel %vm2114, %v7352, %v7411
        %v7593 = vsel %vm2114, %v7353, %v7413
        %v7594 = vsel %vm4559, %v7586, %v7444
        %v7595 = vsel %vm4559, %v7587, %v7446
        %v7596 = vsel %vm4559, %v7588, %v7448
        %v7597 = vsel %vm4559, %v7589, %v7450
        %v7598 = vsel %vm4559, %v7590, %v7452
        %v7599 = vsel %vm4559, %v7591, %v7454
        %v7600 = vsel %vm4559, %v7592, %v7456
        %v7601 = vsel %vm4559, %v7593, %v7458
        %v7602 = vsel %vm4625, %v7594, %v7469
        %v7603 = vsel %vm4625, %v7595, %v7471
        %v7604 = vsel %vm4625, %v7596, %v7473
        %v7605 = vsel %vm4625, %v7597, %v7475
        %v7606 = vsel %vm4625, %v7598, %v7477
        %v7607 = vsel %vm4625, %v7599, %v7479
        %v7608 = vsel %vm4625, %v7600, %v7481
        %v7609 = vsel %vm4625, %v7601, %v7483
        %v7610 = vsel %vm2114, %v7379, %v7508
        %v7611 = vsel %vm2114, %v7382, %v7510
        %v7612 = vsel %vm2114, %v7385, %v7512
        %v7613 = vsel %vm2114, %v7388, %v7514
        %v7614 = vsel %vm2114, %v7391, %v7516
        %v7615 = vsel %vm2114, %v7394, %v7518
        %v7616 = vsel %vm2114, %v7397, %v7520
        %v7617 = vsel %vm2114, %v7495, %v7522
        %v7618 = vsel %vm4559, %v7610, %v7532
        %v7619 = vsel %vm4559, %v7611, %v7534
        %v7620 = vsel %vm4559, %v7612, %v7536
        %v7621 = vsel %vm4559, %v7613, %v7538
        %v7622 = vsel %vm4559, %v7614, %v7540
        %v7623 = vsel %vm4559, %v7615, %v7542
        %v7624 = vsel %vm4559, %v7616, %v7544
        %v7625 = vsel %vm4559, %v7617, %v7546
        %v7626 = vsel %vm4625, %v7618, %v7556
        %v7627 = vsel %vm4625, %v7619, %v7558
        %v7628 = vsel %vm4625, %v7620, %v7560
        %v7629 = vsel %vm4625, %v7621, %v7562
        %v7630 = vsel %vm4625, %v7622, %v7564
        %v7631 = vsel %vm4625, %v7623, %v7566
        %v7632 = vsel %vm4625, %v7624, %v7568
        %v7633 = vsel %vm4625, %v7625, %v7570
        %v7634 = vpack.c.bf16 %v7603, %v7602
        %v7635 = vpack.c.bf16 %v7627, %v7626
        %v7636 = vpack.c.bf16 %v7430, %v7427
        %v7637 = vpack.c.bf16 %v7605, %v7604
        %v7638 = vpack.c.bf16 %v7629, %v7628
        %v7639 = vpack.c.bf16 %v7436, %v7433
        %v7640 = vpack.c.bf16 %v7607, %v7606
        %v7641 = vpack.c.bf16 %v7631, %v7630
        %v7642 = vpack.c.bf16 %v7442, %v7439
        %v7643 = vpack.c.bf16 %v7609, %v7608
        %v7644 = vpack.c.bf16 %v7633, %v7632
        %v7645 = vpack.c.bf16 %v6347, %v7506
        %v7647 = vlaneseq
        %v7648 = vshrl.u32 %v7647, 7
        %v7649 = vsub.s32 0, %v7648
        %v7650 = vrot.slane %v602, %v7649
        %v7688 = vunpack.c.l.b16 %v566
        %v7689 = vunpack.c.l.b16 %v567
        %v7690 = vunpack.c.l.b16 %v568
        %v7691 = vunpack.c.l.b16 %v569
        %v7692 = vunpack.c.l.b16 %v570
        %v7693 = vunpack.c.l.b16 %v571
        %v7694 = vunpack.c.l.b16 %v572
        %v7695 = vunpack.c.l.b16 %v573
        %v7696 = vunpack.c.l.b16 %v574
        %v7697 = vunpack.c.l.b16 %v575
        %v7698 = vunpack.c.l.b16 %v576
        %v7699 = vunpack.c.l.b16 %v577
        %v7700 = vunpack.c.l.b16 %v578
        %v7701 = vunpack.c.l.b16 %v579
        %v7702 = vunpack.c.l.b16 %v580
        %v7703 = vunpack.c.l.b16 %v581
        %v7704 = vunpack.c.l.b16 %v582
        %v7705 = vunpack.c.l.b16 %v583
        %v7706 = vunpack.c.l.b16 %v584
        %v7707 = vunpack.c.l.b16 %v585
        %v7708 = vunpack.c.l.b16 %v586
        %v7709 = vunpack.c.l.b16 %v587
        %v7710 = vunpack.c.l.b16 %v588
        %v7711 = vunpack.c.l.b16 %v589
        %v7712 = vunpack.c.l.b16 %v590
        %v7713 = vunpack.c.l.b16 %v591
        %v7714 = vunpack.c.l.b16 %v592
        %v7715 = vunpack.c.l.b16 %v593
        %v7716 = vunpack.c.l.b16 %v594
        %v7717 = vunpack.c.l.b16 %v595
        %v7718 = vunpack.c.l.b16 %v596
        %v7719 = vunpack.c.l.b16 %v597
        %v7720 = vunpack.c.l.b16 %v598
        %v7721 = vunpack.c.l.b16 %v599
        %v7722 = vunpack.c.l.b16 %v600
        %v7723 = vunpack.c.l.b16 %v601
        %v7724 = vpack.c.b16 %v7689, %v7688
        %v7725 = vpack.c.b16 %v7691, %v7690
        %v7726 = vpack.c.b16 %v7693, %v7692
        %v7727 = vpack.c.b16 %v7695, %v7694
        %v7728 = vpack.c.b16 %v7697, %v7696
        %v7729 = vpack.c.b16 %v7699, %v7698
        %v7730 = vpack.c.b16 %v7701, %v7700
        %v7731 = vpack.c.b16 %v7703, %v7702
        %v7732 = vpack.c.b16 %v7705, %v7704
        %v7733 = vpack.c.b16 %v7707, %v7706
        %v7734 = vpack.c.b16 %v7709, %v7708
        %v7735 = vpack.c.b16 %v7711, %v7710
        %v7736 = vpack.c.b16 %v7713, %v7712
        %v7737 = vpack.c.b16 %v7715, %v7714
        %v7738 = vpack.c.b16 %v7717, %v7716
        %v7739 = vpack.c.b16 %v7719, %v7718
        %v7740 = vpack.c.b16 %v7721, %v7720
        %v7741 = vpack.c.b16 %v7723, %v7722
        %v7761 = vsel %vm2114, %v7636, 0
        %v7764 = vsel %vm2114, %v7639, 0
        %v7767 = vsel %vm2114, %v7642, 0
        %v7770 = vsel %vm2114, %v7645, 0
        %7772 = vmatprep.subr.bf16.mxu0 0
        %7773 = vmatpush1.bf16.msra.mxu0 %v7731
        %7774 = vmatprep.subr.bf16.mxu0 0
        %7775 = vmatpush1.bf16.msra.mxu0 %v7730
        %7776 = vmatprep.subr.bf16.mxu0 0
        %7777 = vmatpush1.bf16.msra.mxu0 %v7729
        %7778 = vmatprep.subr.bf16.mxu0 0
        %7779 = vmatpush1.bf16.msra.mxu0 %v7728
        %7780 = vmatprep.subr.bf16.mxu0 0
        %7781 = vmatpush1.bf16.msra.mxu0 %v7727
        %7782 = vmatprep.subr.bf16.mxu0 0
        %7783 = vmatpush1.bf16.msra.mxu0 %v7726
        %7784 = vmatprep.subr.bf16.mxu0 0
        %7785 = vmatpush1.bf16.msra.mxu0 %v7725
        %7786 = vmatprep.subr.bf16.mxu0 0
        %7787 = vmatpush1.bf16.msra.mxu0 %v7724
        %7788 = vmatprep.subr.bf16.mxu0 0
        %7789 = vmatpush2.bf16.msra.mxu0 %v7739
        %7790 = vmatprep.subr.bf16.mxu0 0
        %7791 = vmatpush2.bf16.msra.mxu0 %v7738
        %7792 = vmatprep.subr.bf16.mxu0 0
        %7793 = vmatpush2.bf16.msra.mxu0 %v7737
        %7794 = vmatprep.subr.bf16.mxu0 0
        %7795 = vmatpush2.bf16.msra.mxu0 %v7736
        %7796 = vmatprep.subr.bf16.mxu0 0
        %7797 = vmatpush2.bf16.msra.mxu0 %v7735
        %7798 = vmatprep.subr.bf16.mxu0 0
        %7799 = vmatpush2.bf16.msra.mxu0 %v7734
        %7800 = vmatprep.subr.bf16.mxu0 0
        %7801 = vmatpush2.bf16.msra.mxu0 %v7733
        %7802 = vmatprep.subr.bf16.mxu0 0
        %7803 = vmatpush2.bf16.msra.mxu0 %v7732
        %7804 = vmatprep.mubr.bf16.mxu0 %v7635
        %7805 = vmatmul.mubr.bf16.gmra.mxu0 %v7634
        %v7806 = vpop.f32.mrf.mxu0
        %v7807 = vadd.f32 %v7650, %v7806
        %v7808 = vpop.f32.mrf.mxu0
        %v7809 = vpop.f32.mrf.mxu0
        %v7810 = vadd.f32 %v7650, %v7809
        %v7811 = vpop.f32.mrf.mxu0
        %7812 = vmatprep.mubr.bf16.mxu0 %v7638
        %7813 = vmatmul.mubr.bf16.gmra.mxu0 %v7637
        %v7814 = vpop.f32.mrf.mxu0
        %v7815 = vadd.f32 %v7650, %v7814
        %v7816 = vpop.f32.mrf.mxu0
        %v7817 = vpop.f32.mrf.mxu0
        %v7818 = vadd.f32 %v7650, %v7817
        %v7819 = vpop.f32.mrf.mxu0
        %7820 = vmatprep.mubr.bf16.mxu0 %v7641
        %7821 = vmatmul.mubr.bf16.gmra.mxu0 %v7640
        %v7822 = vpop.f32.mrf.mxu0
        %v7823 = vadd.f32 %v7650, %v7822
        %v7824 = vpop.f32.mrf.mxu0
        %v7825 = vpop.f32.mrf.mxu0
        %v7826 = vadd.f32 %v7650, %v7825
        %v7827 = vpop.f32.mrf.mxu0
        %7828 = vmatprep.mubr.bf16.mxu0 %v7644
        %7829 = vmatmul.mubr.bf16.gmra.mxu0 %v7643
        %v7830 = vpop.f32.mrf.mxu0
        %v7831 = vadd.f32 %v7650, %v7830
        %v7832 = vpop.f32.mrf.mxu0
        %v7833 = vpop.f32.mrf.mxu0
        %v7834 = vadd.f32 %v7650, %v7833
        %v7835 = vpop.f32.mrf.mxu0
        %7836 = vdwg.mxu0
        %7837 = vmatprep.subr.bf16.mxu0 0
        %7838 = vmatpush1.bf16.msra.mxu0 0
        %7839 = vmatprep.subr.bf16.mxu0 0
        %7840 = vmatpush1.bf16.msra.mxu0 0
        %7841 = vmatprep.subr.bf16.mxu0 0
        %7842 = vmatpush1.bf16.msra.mxu0 0
        %7843 = vmatprep.subr.bf16.mxu0 0
        %7844 = vmatpush1.bf16.msra.mxu0 0
        %7845 = vmatprep.subr.bf16.mxu0 0
        %7846 = vmatpush1.bf16.msra.mxu0 0
        %7847 = vmatprep.subr.bf16.mxu0 0
        %7848 = vmatpush1.bf16.msra.mxu0 0
        %7849 = vmatprep.subr.bf16.mxu0 0
        %7850 = vmatpush1.bf16.msra.mxu0 %v7741
        %7851 = vmatprep.subr.bf16.mxu0 0
        %7852 = vmatpush1.bf16.msra.mxu0 %v7740
        %7853 = vmatprep.subr.bf16.mxu0 0
        %7854 = vmatpush2.bf16.msra.mxu0 0
        %7855 = vmatprep.subr.bf16.mxu0 0
        %7856 = vmatpush2.bf16.msra.mxu0 0
        %7857 = vmatprep.subr.bf16.mxu0 0
        %7858 = vmatpush2.bf16.msra.mxu0 0
        %7859 = vmatprep.subr.bf16.mxu0 0
        %7860 = vmatpush2.bf16.msra.mxu0 0
        %7861 = vmatprep.subr.bf16.mxu0 0
        %7862 = vmatpush2.bf16.msra.mxu0 0
        %7863 = vmatprep.subr.bf16.mxu0 0
        %7864 = vmatpush2.bf16.msra.mxu0 0
        %7865 = vmatprep.subr.bf16.mxu0 0
        %7866 = vmatpush2.bf16.msra.mxu0 0
        %7867 = vmatprep.subr.bf16.mxu0 0
        %7868 = vmatpush2.bf16.msra.mxu0 0
        %7869 = vmatprep.mubr.bf16.mxu0 0
        %7870 = vmatmul.mubr.bf16.gmra.mxu0 %v7761
        %v7871 = vpop.f32.mrf.mxu0
        %v7872 = vadd.f32 %v7807, %v7871
        %v7873 = vpop.f32.mrf.mxu0
        %v7874 = vpop.f32.mrf.mxu0
        %v7875 = vadd.f32 %v7810, %v7874
        %v7876 = vpop.f32.mrf.mxu0
        %7877 = vmatprep.mubr.bf16.mxu0 0
        %7878 = vmatmul.mubr.bf16.gmra.mxu0 %v7764
        %v7879 = vpop.f32.mrf.mxu0
        %v7880 = vadd.f32 %v7815, %v7879
        %v7881 = vpop.f32.mrf.mxu0
        %v7882 = vpop.f32.mrf.mxu0
        %v7883 = vadd.f32 %v7818, %v7882
        %v7884 = vpop.f32.mrf.mxu0
        %7885 = vmatprep.mubr.bf16.mxu0 0
        %7886 = vmatmul.mubr.bf16.gmra.mxu0 %v7767
        %v7887 = vpop.f32.mrf.mxu0
        %v7888 = vadd.f32 %v7823, %v7887
        %v7889 = vpop.f32.mrf.mxu0
        %v7890 = vpop.f32.mrf.mxu0
        %v7891 = vadd.f32 %v7826, %v7890
        %v7892 = vpop.f32.mrf.mxu0
        %7893 = vmatprep.mubr.bf16.mxu0 0
        %7894 = vmatmul.mubr.bf16.gmra.mxu0 %v7770
        %v7895 = vpop.f32.mrf.mxu0
        %v7896 = vadd.f32 %v7831, %v7895
        %v7897 = vpop.f32.mrf.mxu0
        %v7898 = vpop.f32.mrf.mxu0
        %v7899 = vadd.f32 %v7834, %v7898
        %v7900 = vpop.f32.mrf.mxu0
        %7901 = vdwg.mxu0
        %v7902 = vadd.f32 %v7872, %v7875
        %v7903 = vadd.f32 %v7880, %v7883
        %v7904 = vadd.f32 %v7888, %v7891
        %v7905 = vadd.f32 %v7896, %v7899
        %v7910 = vcombine.high %v7902, %v7902
        %v7912 = vunpack.c.l.s4 1983009808
        %v7913 = vunpack.c.0.s8 %v7912
        %v7914 = vlaneseq
        %v7915 = vshrl.u32 %v7914, 7
        %v7916 = vsub.s32 %v7913, %v7915
        %v7917 = vrot.slane %v7902, %v7916
        %v7919 = vunpack.c.l.s4 1983009808
        %v7920 = vunpack.c.0.s8 %v7919
        %v7921 = vlaneseq
        %v7922 = vshrl.u32 %v7921, 7
        %v7923 = vsub.s32 %v7920, %v7922
        %v7924 = vrot.slane %v7910, %v7923
        %v7925 = vcombine.high %v7917, %v7917
        %v7926 = vcombine.high %v7924, %v7924
        %v7927 = vcombine.high %v7903, %v7903
        %v7929 = vunpack.c.l.s4 1983009808
        %v7930 = vunpack.c.0.s8 %v7929
        %v7931 = vlaneseq
        %v7932 = vshrl.u32 %v7931, 7
        %v7933 = vsub.s32 %v7930, %v7932
        %v7934 = vrot.slane %v7903, %v7933
        %v7936 = vunpack.c.l.s4 1983009808
        %v7937 = vunpack.c.0.s8 %v7936
        %v7938 = vlaneseq
        %v7939 = vshrl.u32 %v7938, 7
        %v7940 = vsub.s32 %v7937, %v7939
        %v7941 = vrot.slane %v7927, %v7940
        %v7942 = vcombine.high %v7934, %v7934
        %v7943 = vcombine.high %v7941, %v7941
        %v7944 = vcombine.high %v7904, %v7904
        %v7946 = vunpack.c.l.s4 1983009808
        %v7947 = vunpack.c.0.s8 %v7946
        %v7948 = vlaneseq
        %v7949 = vshrl.u32 %v7948, 7
        %v7950 = vsub.s32 %v7947, %v7949
        %v7951 = vrot.slane %v7904, %v7950
        %v7953 = vunpack.c.l.s4 1983009808
        %v7954 = vunpack.c.0.s8 %v7953
        %v7955 = vlaneseq
        %v7956 = vshrl.u32 %v7955, 7
        %v7957 = vsub.s32 %v7954, %v7956
        %v7958 = vrot.slane %v7944, %v7957
        %v7959 = vcombine.high %v7951, %v7951
        %v7960 = vcombine.high %v7958, %v7958
        %v7961 = vcombine.high %v7905, %v7905
        %v7963 = vunpack.c.l.s4 1983009808
        %v7964 = vunpack.c.0.s8 %v7963
        %v7965 = vlaneseq
        %v7966 = vshrl.u32 %v7965, 7
        %v7967 = vsub.s32 %v7964, %v7966
        %v7968 = vrot.slane %v7905, %v7967
        %v7970 = vunpack.c.l.s4 1983009808
        %v7971 = vunpack.c.0.s8 %v7970
        %v7972 = vlaneseq
        %v7973 = vshrl.u32 %v7972, 7
        %v7974 = vsub.s32 %v7971, %v7973
        %v7975 = vrot.slane %v7961, %v7974
        %v7976 = vcombine.high %v7968, %v7968
        %v7977 = vcombine.high %v7975, %v7975
        %v7994 = vrot.slane %v7917, 7
        %v7995 = vrot.slane %v7994, 2
        %v7996 = vrot.slane %v7925, 7
        %v7997 = vrot.slane %v7996, 2
        %v7998 = vrot.slane %v7924, 7
        %v7999 = vrot.slane %v7998, 2
        %v8000 = vrot.slane %v7926, 7
        %v8001 = vrot.slane %v8000, 2
        %v8002 = vrot.slane %v7934, 7
        %v8003 = vrot.slane %v8002, 2
        %v8004 = vrot.slane %v7942, 7
        %v8005 = vrot.slane %v8004, 2
        %v8006 = vrot.slane %v7941, 7
        %v8007 = vrot.slane %v8006, 2
        %v8008 = vrot.slane %v7943, 7
        %v8009 = vrot.slane %v8008, 2
        %v8010 = vrot.slane %v7951, 7
        %v8011 = vrot.slane %v8010, 2
        %v8012 = vrot.slane %v7959, 7
        %v8013 = vrot.slane %v8012, 2
        %v8014 = vrot.slane %v7958, 7
        %v8015 = vrot.slane %v8014, 2
        %v8016 = vrot.slane %v7960, 7
        %v8017 = vrot.slane %v8016, 2
        %v8018 = vrot.slane %v7968, 7
        %v8019 = vrot.slane %v8018, 2
        %v8020 = vrot.slane %v7976, 7
        %v8021 = vrot.slane %v8020, 2
        %v8022 = vrot.slane %v7975, 7
        %v8023 = vrot.slane %v8022, 2
        %v8024 = vrot.slane %v7977, 7
        %v8025 = vrot.slane %v8024, 2
        %v8042 = vadd.f32 %v7917, %v7995
        %v8043 = vadd.f32 %v7925, %v7997
        %v8044 = vadd.f32 %v7924, %v7999
        %v8045 = vadd.f32 %v7926, %v8001
        %v8046 = vadd.f32 %v7934, %v8003
        %v8047 = vadd.f32 %v7942, %v8005
        %v8048 = vadd.f32 %v7941, %v8007
        %v8049 = vadd.f32 %v7943, %v8009
        %v8050 = vadd.f32 %v7951, %v8011
        %v8051 = vadd.f32 %v7959, %v8013
        %v8052 = vadd.f32 %v7958, %v8015
        %v8053 = vadd.f32 %v7960, %v8017
        %v8054 = vadd.f32 %v7968, %v8019
        %v8055 = vadd.f32 %v7976, %v8021
        %v8056 = vadd.f32 %v7975, %v8023
        %v8057 = vadd.f32 %v7977, %v8025
        %v8058 = vmul.f32 %v8042, 0.25
        %v8059 = vmul.f32 %v8043, 0.25
        %v8060 = vmul.f32 %v8044, 0.25
        %v8061 = vmul.f32 %v8045, 0.25
        %v8062 = vmul.f32 %v8046, 0.25
        %v8063 = vmul.f32 %v8047, 0.25
        %v8064 = vmul.f32 %v8048, 0.25
        %v8065 = vmul.f32 %v8049, 0.25
        %v8066 = vmul.f32 %v8050, 0.25
        %v8067 = vmul.f32 %v8051, 0.25
        %v8068 = vmul.f32 %v8052, 0.25
        %v8069 = vmul.f32 %v8053, 0.25
        %v8070 = vmul.f32 %v8054, 0.25
        %v8071 = vmul.f32 %v8055, 0.25
        %v8072 = vmul.f32 %v8056, 0.25
        %v8073 = vmul.f32 %v8057, 0.25
        %vm8074 = vcmp.ge.f32.partialorder %v8058, 0.0
        %vm8075 = vcmp.ge.f32.partialorder %v8059, 0.0
        %vm8076 = vcmp.ge.f32.partialorder %v8060, 0.0
        %vm8077 = vcmp.ge.f32.partialorder %v8061, 0.0
        %vm8078 = vcmp.ge.f32.partialorder %v8062, 0.0
        %vm8079 = vcmp.ge.f32.partialorder %v8063, 0.0
        %vm8080 = vcmp.ge.f32.partialorder %v8064, 0.0
        %vm8081 = vcmp.ge.f32.partialorder %v8065, 0.0
        %vm8082 = vcmp.ge.f32.partialorder %v8066, 0.0
        %vm8083 = vcmp.ge.f32.partialorder %v8067, 0.0
        %vm8084 = vcmp.ge.f32.partialorder %v8068, 0.0
        %vm8085 = vcmp.ge.f32.partialorder %v8069, 0.0
        %vm8086 = vcmp.ge.f32.partialorder %v8070, 0.0
        %vm8087 = vcmp.ge.f32.partialorder %v8071, 0.0
        %vm8088 = vcmp.ge.f32.partialorder %v8072, 0.0
        %vm8089 = vcmp.ge.f32.partialorder %v8073, 0.0
        %v8090 = vmul.f32 %v8058, 0.2
        %v8091 = vmul.f32 %v8059, 0.2
        %v8092 = vmul.f32 %v8060, 0.2
        %v8093 = vmul.f32 %v8061, 0.2
        %v8094 = vmul.f32 %v8062, 0.2
        %v8095 = vmul.f32 %v8063, 0.2
        %v8096 = vmul.f32 %v8064, 0.2
        %v8097 = vmul.f32 %v8065, 0.2
        %v8098 = vmul.f32 %v8066, 0.2
        %v8099 = vmul.f32 %v8067, 0.2
        %v8100 = vmul.f32 %v8068, 0.2
        %v8101 = vmul.f32 %v8069, 0.2
        %v8102 = vmul.f32 %v8070, 0.2
        %v8103 = vmul.f32 %v8071, 0.2
        %v8104 = vmul.f32 %v8072, 0.2
        %v8105 = vmul.f32 %v8073, 0.2
        %v8106 = vsel %vm8074, %v8058, %v8090
        %v8107 = vsel %vm8075, %v8059, %v8091
        %v8108 = vsel %vm8076, %v8060, %v8092
        %v8109 = vsel %vm8077, %v8061, %v8093
        %v8110 = vsel %vm8078, %v8062, %v8094
        %v8111 = vsel %vm8079, %v8063, %v8095
        %v8112 = vsel %vm8080, %v8064, %v8096
        %v8113 = vsel %vm8081, %v8065, %v8097
        %v8114 = vsel %vm8082, %v8066, %v8098
        %v8115 = vsel %vm8083, %v8067, %v8099
        %v8116 = vsel %vm8084, %v8068, %v8100
        %v8117 = vsel %vm8085, %v8069, %v8101
        %v8118 = vsel %vm8086, %v8070, %v8102
        %v8119 = vsel %vm8087, %v8071, %v8103
        %v8120 = vsel %vm8088, %v8072, %v8104
        %v8121 = vsel %vm8089, %v8073, %v8105
        %v8138 = vlaneseq
        %v8139 = vshrl.u32 %v8138, 7
        %v8140 = vsub.s32 0, %v8139
        %v8141 = vrot.slane %v8106, %v8140
        %v8142 = vlaneseq
        %v8143 = vshrl.u32 %v8142, 7
        %v8144 = vsub.s32 0, %v8143
        %v8145 = vrot.slane %v8107, %v8144
        %v8146 = vlaneseq
        %v8147 = vshrl.u32 %v8146, 7
        %v8148 = vsub.s32 0, %v8147
        %v8149 = vrot.slane %v8108, %v8148
        %v8150 = vlaneseq
        %v8151 = vshrl.u32 %v8150, 7
        %v8152 = vsub.s32 0, %v8151
        %v8153 = vrot.slane %v8109, %v8152
        %v8154 = vlaneseq
        %v8155 = vshrl.u32 %v8154, 7
        %v8156 = vsub.s32 0, %v8155
        %v8157 = vrot.slane %v8110, %v8156
        %v8158 = vlaneseq
        %v8159 = vshrl.u32 %v8158, 7
        %v8160 = vsub.s32 0, %v8159
        %v8161 = vrot.slane %v8111, %v8160
        %v8162 = vlaneseq
        %v8163 = vshrl.u32 %v8162, 7
        %v8164 = vsub.s32 0, %v8163
        %v8165 = vrot.slane %v8112, %v8164
        %v8166 = vlaneseq
        %v8167 = vshrl.u32 %v8166, 7
        %v8168 = vsub.s32 0, %v8167
        %v8169 = vrot.slane %v8113, %v8168
        %v8170 = vlaneseq
        %v8171 = vshrl.u32 %v8170, 7
        %v8172 = vsub.s32 0, %v8171
        %v8173 = vrot.slane %v8114, %v8172
        %v8174 = vlaneseq
        %v8175 = vshrl.u32 %v8174, 7
        %v8176 = vsub.s32 0, %v8175
        %v8177 = vrot.slane %v8115, %v8176
        %v8178 = vlaneseq
        %v8179 = vshrl.u32 %v8178, 7
        %v8180 = vsub.s32 0, %v8179
        %v8181 = vrot.slane %v8116, %v8180
        %v8182 = vlaneseq
        %v8183 = vshrl.u32 %v8182, 7
        %v8184 = vsub.s32 0, %v8183
        %v8185 = vrot.slane %v8117, %v8184
        %v8186 = vlaneseq
        %v8187 = vshrl.u32 %v8186, 7
        %v8188 = vsub.s32 0, %v8187
        %v8189 = vrot.slane %v8118, %v8188
        %v8190 = vlaneseq
        %v8191 = vshrl.u32 %v8190, 7
        %v8192 = vsub.s32 0, %v8191
        %v8193 = vrot.slane %v8119, %v8192
        %v8194 = vlaneseq
        %v8195 = vshrl.u32 %v8194, 7
        %v8196 = vsub.s32 0, %v8195
        %v8197 = vrot.slane %v8120, %v8196
        %v8198 = vlaneseq
        %v8199 = vshrl.u32 %v8198, 7
        %v8200 = vsub.s32 0, %v8199
        %v8201 = vrot.slane %v8121, %v8200
        %v8202 = vsel %vm6192, %v8145, %v8141
        %v8203 = vsel %vm6194, %v8149, %v8202
        %v8204 = vsel %vm6196, %v8153, %v8203
        %v8205 = vsel %vm6192, %v8161, %v8157
        %v8206 = vsel %vm6194, %v8165, %v8205
        %v8207 = vsel %vm6196, %v8169, %v8206
        %v8208 = vsel %vm6192, %v8177, %v8173
        %v8209 = vsel %vm6194, %v8181, %v8208
        %v8210 = vsel %vm6196, %v8185, %v8209
        %v8211 = vsel %vm6192, %v8193, %v8189
        %v8212 = vsel %vm6194, %v8197, %v8211
        %v8213 = vsel %vm6196, %v8201, %v8212
        %v8214 = vrot.slane %v8204, 7
        %v8215 = vrot.slane %v8207, 7
        %v8216 = vrot.slane %v8210, 7
        %v8217 = vrot.slane %v8213, 7
        %v8222 = vsel %vm775, 0.0, %v8214
        %v8223 = vsel %vm775, 0.0, %v8215
        %v8224 = vsel %vm775, 0.0, %v8216
        %v8225 = vsel %vm775, 0.0, %v8217
        %vm8226 = vcmask 1044480
        %v8227 = vsel %vm8226, %v875, 0.0
        %v8228 = vsel %vm8226, %v8222, 0.0
        %v8229 = vsel %vm8226, %v8223, 0.0
        %v8230 = vsel %vm8226, %v8224, 0.0
        %v8231 = vsel %vm8226, %v8225, 0.0
        %v8236 = vrot.slane %v8227, 1
        %v8237 = vrot.slane %v8228, 1
        %v8238 = vrot.slane %v8229, 1
        %v8239 = vrot.slane %v8230, 1
        %8240 = vrot.lane.b32.xlu0 %v8236, 32
        %v8241 = vpop.permute.xlu0 %8240
        %8242 = vrot.lane.b32.xlu0 %v8237, 32
        %v8243 = vpop.permute.xlu0 %8242
        %8244 = vrot.lane.b32.xlu0 %v8238, 32
        %v8245 = vpop.permute.xlu0 %8244
        %8246 = vrot.lane.b32.xlu0 %v8239, 32
        %v8247 = vpop.permute.xlu0 %8246
        %v8252 = vrot.slane %v8227, 2
        %v8253 = vrot.slane %v8228, 2
        %v8254 = vrot.slane %v8229, 2
        %v8255 = vrot.slane %v8230, 2
        %8256 = vrot.lane.b32.xlu0 %v8252, 64
        %v8257 = vpop.permute.xlu0 %8256
        %8258 = vrot.lane.b32.xlu0 %v8253, 64
        %v8259 = vpop.permute.xlu0 %8258
        %8260 = vrot.lane.b32.xlu0 %v8254, 64
        %v8261 = vpop.permute.xlu0 %8260
        %8262 = vrot.lane.b32.xlu0 %v8255, 64
        %v8263 = vpop.permute.xlu0 %8262
        %8269 = vrot.lane.b32.xlu0 %v8228, 96
        %v8270 = vpop.permute.xlu0 %8269
        %8271 = vrot.lane.b32.xlu0 %v8229, 96
        %v8272 = vpop.permute.xlu0 %8271
        %8273 = vrot.lane.b32.xlu0 %v8230, 96
        %v8274 = vpop.permute.xlu0 %8273
        %8275 = vrot.lane.b32.xlu0 %v8231, 96
        %v8276 = vpop.permute.xlu0 %8275
        %v8281 = vrot.slane %v8231, 1
        %v8286 = vrot.slane %v8231, 2
        %8287 = vrot.lane.b32.xlu0 %v8253, 32
        %v8288 = vpop.permute.xlu0 %8287
        %8289 = vrot.lane.b32.xlu0 %v8254, 32
        %v8290 = vpop.permute.xlu0 %8289
        %8291 = vrot.lane.b32.xlu0 %v8255, 32
        %v8292 = vpop.permute.xlu0 %8291
        %8293 = vrot.lane.b32.xlu0 %v8286, 32
        %v8294 = vpop.permute.xlu0 %8293
        %8299 = vrot.lane.b32.xlu0 %v8229, 64
        %v8300 = vpop.permute.xlu0 %8299
        %8301 = vrot.lane.b32.xlu0 %v8230, 64
        %v8302 = vpop.permute.xlu0 %8301
        %8303 = vrot.lane.b32.xlu0 %v8231, 64
        %v8304 = vpop.permute.xlu0 %8303
        %8305 = vrot.lane.b32.xlu0 %v8227, 64
        %v8306 = vpop.permute.xlu0 %8305
        %8311 = vrot.lane.b32.xlu0 %v8238, 96
        %v8312 = vpop.permute.xlu0 %8311
        %8313 = vrot.lane.b32.xlu0 %v8239, 96
        %v8314 = vpop.permute.xlu0 %8313
        %8315 = vrot.lane.b32.xlu0 %v8281, 96
        %v8316 = vpop.permute.xlu0 %8315
        %8317 = vrot.lane.b32.xlu0 %v8236, 96
        %v8318 = vpop.permute.xlu0 %8317
        %v8323 = vsel %vm2114, %v8227, %v8241
        %v8324 = vsel %vm2114, %v8228, %v8243
        %v8325 = vsel %vm2114, %v8229, %v8245
        %v8326 = vsel %vm2114, %v8230, %v8247
        %v8327 = vsel %vm4559, %v8323, %v8257
        %v8328 = vsel %vm4559, %v8324, %v8259
        %v8329 = vsel %vm4559, %v8325, %v8261
        %v8330 = vsel %vm4559, %v8326, %v8263
        %v8331 = vsel %vm4625, %v8327, %v8270
        %v8332 = vsel %vm4625, %v8328, %v8272
        %v8333 = vsel %vm4625, %v8329, %v8274
        %v8334 = vsel %vm4625, %v8330, %v8276
        %v8335 = vsel %vm2114, %v8237, %v8288
        %v8336 = vsel %vm2114, %v8238, %v8290
        %v8337 = vsel %vm2114, %v8239, %v8292
        %v8338 = vsel %vm2114, %v8281, %v8294
        %v8339 = vsel %vm4559, %v8335, %v8300
        %v8340 = vsel %vm4559, %v8336, %v8302
        %v8341 = vsel %vm4559, %v8337, %v8304
        %v8342 = vsel %vm4559, %v8338, %v8306
        %v8343 = vsel %vm4625, %v8339, %v8312
        %v8344 = vsel %vm4625, %v8340, %v8314
        %v8345 = vsel %vm4625, %v8341, %v8316
        %v8346 = vsel %vm4625, %v8342, %v8318
        %v8355 = vcombine.low %v8331, %v8343
        %v8356 = vcombine.low %v8332, %v8344
        %v8357 = vcombine.low %v8333, %v8345
        %v8358 = vcombine.low %v8334, %v8346
        %v8359 = vcombine.low %v8355, %v8356
        %v8360 = vcombine.high %v8355, %v8356
        %v8361 = vcombine.low %v8254, %v8255
        %v8362 = vcombine.low %v8357, %v8358
        %v8363 = vcombine.high %v8357, %v8358
        %v8364 = vcombine.low %v8286, %v8252
        %v8371 = vpack.c.bf16 %v8362, %v8359
        %v8372 = vpack.c.bf16 %v8363, %v8360
        %v8373 = vpack.c.bf16 %v8364, %v8361
        %v8375 = vlaneseq
        %v8376 = vshrl.u32 %v8375, 7
        %v8377 = vsub.s32 0, %v8376
        %v8378 = vrot.slane %v639, %v8377
        %v8416 = vunpack.c.l.b16 %v603
        %v8417 = vunpack.c.l.b16 %v604
        %v8418 = vunpack.c.l.b16 %v605
        %v8419 = vunpack.c.l.b16 %v606
        %v8420 = vunpack.c.l.b16 %v607
        %v8421 = vunpack.c.l.b16 %v608
        %v8422 = vunpack.c.l.b16 %v609
        %v8423 = vunpack.c.l.b16 %v610
        %v8424 = vunpack.c.l.b16 %v611
        %v8425 = vunpack.c.l.b16 %v612
        %v8426 = vunpack.c.l.b16 %v613
        %v8427 = vunpack.c.l.b16 %v614
        %v8428 = vunpack.c.l.b16 %v615
        %v8429 = vunpack.c.l.b16 %v616
        %v8430 = vunpack.c.l.b16 %v617
        %v8431 = vunpack.c.l.b16 %v618
        %v8432 = vunpack.c.l.b16 %v619
        %v8433 = vunpack.c.l.b16 %v620
        %v8434 = vunpack.c.l.b16 %v621
        %v8435 = vunpack.c.l.b16 %v622
        %v8436 = vunpack.c.l.b16 %v623
        %v8437 = vunpack.c.l.b16 %v624
        %v8438 = vunpack.c.l.b16 %v625
        %v8439 = vunpack.c.l.b16 %v626
        %v8440 = vunpack.c.l.b16 %v627
        %v8441 = vunpack.c.l.b16 %v628
        %v8442 = vunpack.c.l.b16 %v629
        %v8443 = vunpack.c.l.b16 %v630
        %v8444 = vunpack.c.l.b16 %v631
        %v8445 = vunpack.c.l.b16 %v632
        %v8446 = vunpack.c.l.b16 %v633
        %v8447 = vunpack.c.l.b16 %v634
        %v8448 = vunpack.c.l.b16 %v635
        %v8449 = vunpack.c.l.b16 %v636
        %v8450 = vunpack.c.l.b16 %v637
        %v8451 = vunpack.c.l.b16 %v638
        %v8452 = vpack.c.b16 %v8417, %v8416
        %v8453 = vpack.c.b16 %v8419, %v8418
        %v8454 = vpack.c.b16 %v8421, %v8420
        %v8455 = vpack.c.b16 %v8423, %v8422
        %v8456 = vpack.c.b16 %v8425, %v8424
        %v8457 = vpack.c.b16 %v8427, %v8426
        %v8458 = vpack.c.b16 %v8429, %v8428
        %v8459 = vpack.c.b16 %v8431, %v8430
        %v8460 = vpack.c.b16 %v8433, %v8432
        %v8461 = vpack.c.b16 %v8435, %v8434
        %v8462 = vpack.c.b16 %v8437, %v8436
        %v8463 = vpack.c.b16 %v8439, %v8438
        %v8464 = vpack.c.b16 %v8441, %v8440
        %v8465 = vpack.c.b16 %v8443, %v8442
        %v8466 = vpack.c.b16 %v8445, %v8444
        %v8467 = vpack.c.b16 %v8447, %v8446
        %v8468 = vpack.c.b16 %v8449, %v8448
        %v8469 = vpack.c.b16 %v8451, %v8450
        %v8489 = vsel %vm2114, %v8373, 0
        %8491 = vmatprep.subr.bf16.mxu0 0
        %8492 = vmatpush1.bf16.msra.mxu0 %v8459
        %8493 = vmatprep.subr.bf16.mxu0 0
        %8494 = vmatpush1.bf16.msra.mxu0 %v8458
        %8495 = vmatprep.subr.bf16.mxu0 0
        %8496 = vmatpush1.bf16.msra.mxu0 %v8457
        %8497 = vmatprep.subr.bf16.mxu0 0
        %8498 = vmatpush1.bf16.msra.mxu0 %v8456
        %8499 = vmatprep.subr.bf16.mxu0 0
        %8500 = vmatpush1.bf16.msra.mxu0 %v8455
        %8501 = vmatprep.subr.bf16.mxu0 0
        %8502 = vmatpush1.bf16.msra.mxu0 %v8454
        %8503 = vmatprep.subr.bf16.mxu0 0
        %8504 = vmatpush1.bf16.msra.mxu0 %v8453
        %8505 = vmatprep.subr.bf16.mxu0 0
        %8506 = vmatpush1.bf16.msra.mxu0 %v8452
        %8507 = vmatprep.subr.bf16.mxu0 0
        %8508 = vmatpush2.bf16.msra.mxu0 %v8467
        %8509 = vmatprep.subr.bf16.mxu0 0
        %8510 = vmatpush2.bf16.msra.mxu0 %v8466
        %8511 = vmatprep.subr.bf16.mxu0 0
        %8512 = vmatpush2.bf16.msra.mxu0 %v8465
        %8513 = vmatprep.subr.bf16.mxu0 0
        %8514 = vmatpush2.bf16.msra.mxu0 %v8464
        %8515 = vmatprep.subr.bf16.mxu0 0
        %8516 = vmatpush2.bf16.msra.mxu0 %v8463
        %8517 = vmatprep.subr.bf16.mxu0 0
        %8518 = vmatpush2.bf16.msra.mxu0 %v8462
        %8519 = vmatprep.subr.bf16.mxu0 0
        %8520 = vmatpush2.bf16.msra.mxu0 %v8461
        %8521 = vmatprep.subr.bf16.mxu0 0
        %8522 = vmatpush2.bf16.msra.mxu0 %v8460
        %8523 = vmatprep.mubr.bf16.mxu0 %v8372
        %8524 = vmatmul.mubr.bf16.gmra.mxu0 %v8371
        %v8525 = vpop.f32.mrf.mxu0
        %v8526 = vadd.f32 %v8378, %v8525
        %v8527 = vpop.f32.mrf.mxu0
        %v8528 = vpop.f32.mrf.mxu0
        %v8529 = vadd.f32 %v8378, %v8528
        %v8530 = vpop.f32.mrf.mxu0
        %8531 = vdwg.mxu0
        %8532 = vmatprep.subr.bf16.mxu0 0
        %8533 = vmatpush1.bf16.msra.mxu0 0
        %8534 = vmatprep.subr.bf16.mxu0 0
        %8535 = vmatpush1.bf16.msra.mxu0 0
        %8536 = vmatprep.subr.bf16.mxu0 0
        %8537 = vmatpush1.bf16.msra.mxu0 0
        %8538 = vmatprep.subr.bf16.mxu0 0
        %8539 = vmatpush1.bf16.msra.mxu0 0
        %8540 = vmatprep.subr.bf16.mxu0 0
        %8541 = vmatpush1.bf16.msra.mxu0 0
        %8542 = vmatprep.subr.bf16.mxu0 0
        %8543 = vmatpush1.bf16.msra.mxu0 0
        %8544 = vmatprep.subr.bf16.mxu0 0
        %8545 = vmatpush1.bf16.msra.mxu0 %v8469
        %8546 = vmatprep.subr.bf16.mxu0 0
        %8547 = vmatpush1.bf16.msra.mxu0 %v8468
        %8548 = vmatprep.subr.bf16.mxu0 0
        %8549 = vmatpush2.bf16.msra.mxu0 0
        %8550 = vmatprep.subr.bf16.mxu0 0
        %8551 = vmatpush2.bf16.msra.mxu0 0
        %8552 = vmatprep.subr.bf16.mxu0 0
        %8553 = vmatpush2.bf16.msra.mxu0 0
        %8554 = vmatprep.subr.bf16.mxu0 0
        %8555 = vmatpush2.bf16.msra.mxu0 0
        %8556 = vmatprep.subr.bf16.mxu0 0
        %8557 = vmatpush2.bf16.msra.mxu0 0
        %8558 = vmatprep.subr.bf16.mxu0 0
        %8559 = vmatpush2.bf16.msra.mxu0 0
        %8560 = vmatprep.subr.bf16.mxu0 0
        %8561 = vmatpush2.bf16.msra.mxu0 0
        %8562 = vmatprep.subr.bf16.mxu0 0
        %8563 = vmatpush2.bf16.msra.mxu0 0
        %8564 = vmatprep.mubr.bf16.mxu0 0
        %8565 = vmatmul.mubr.bf16.gmra.mxu0 %v8489
        %v8566 = vpop.f32.mrf.mxu0
        %v8567 = vadd.f32 %v8526, %v8566
        %v8568 = vpop.f32.mrf.mxu0
        %v8569 = vpop.f32.mrf.mxu0
        %v8570 = vadd.f32 %v8529, %v8569
        %v8571 = vpop.f32.mrf.mxu0
        %8572 = vdwg.mxu0
        %v8589 = vlaneseq
        %v8590 = vshrl.u32 %v8589, 7
        %v8591 = vsub.s32 0, %v8590
        %v8592 = vrot.slane %v7283, %v8591
        %v8593 = vlaneseq
        %v8594 = vshrl.u32 %v8593, 7
        %v8595 = vsub.s32 0, %v8594
        %v8596 = vrot.slane %v7284, %v8595
        %v8597 = vlaneseq
        %v8598 = vshrl.u32 %v8597, 7
        %v8599 = vsub.s32 0, %v8598
        %v8600 = vrot.slane %v7285, %v8599
        %v8601 = vlaneseq
        %v8602 = vshrl.u32 %v8601, 7
        %v8603 = vsub.s32 0, %v8602
        %v8604 = vrot.slane %v7286, %v8603
        %v8605 = vlaneseq
        %v8606 = vshrl.u32 %v8605, 7
        %v8607 = vsub.s32 0, %v8606
        %v8608 = vrot.slane %v7287, %v8607
        %v8609 = vlaneseq
        %v8610 = vshrl.u32 %v8609, 7
        %v8611 = vsub.s32 0, %v8610
        %v8612 = vrot.slane %v7288, %v8611
        %v8613 = vlaneseq
        %v8614 = vshrl.u32 %v8613, 7
        %v8615 = vsub.s32 0, %v8614
        %v8616 = vrot.slane %v7289, %v8615
        %v8617 = vlaneseq
        %v8618 = vshrl.u32 %v8617, 7
        %v8619 = vsub.s32 0, %v8618
        %v8620 = vrot.slane %v7290, %v8619
        %v8621 = vlaneseq
        %v8622 = vshrl.u32 %v8621, 7
        %v8623 = vsub.s32 0, %v8622
        %v8624 = vrot.slane %v7291, %v8623
        %v8625 = vlaneseq
        %v8626 = vshrl.u32 %v8625, 7
        %v8627 = vsub.s32 0, %v8626
        %v8628 = vrot.slane %v7292, %v8627
        %v8629 = vlaneseq
        %v8630 = vshrl.u32 %v8629, 7
        %v8631 = vsub.s32 0, %v8630
        %v8632 = vrot.slane %v7293, %v8631
        %v8633 = vlaneseq
        %v8634 = vshrl.u32 %v8633, 7
        %v8635 = vsub.s32 0, %v8634
        %v8636 = vrot.slane %v7294, %v8635
        %v8637 = vlaneseq
        %v8638 = vshrl.u32 %v8637, 7
        %v8639 = vsub.s32 0, %v8638
        %v8640 = vrot.slane %v7295, %v8639
        %v8641 = vlaneseq
        %v8642 = vshrl.u32 %v8641, 7
        %v8643 = vsub.s32 0, %v8642
        %v8644 = vrot.slane %v7296, %v8643
        %v8645 = vlaneseq
        %v8646 = vshrl.u32 %v8645, 7
        %v8647 = vsub.s32 0, %v8646
        %v8648 = vrot.slane %v7297, %v8647
        %v8649 = vlaneseq
        %v8650 = vshrl.u32 %v8649, 7
        %v8651 = vsub.s32 0, %v8650
        %v8652 = vrot.slane %v7298, %v8651
        %v8653 = vsel %vm6192, %v8596, %v8592
        %v8654 = vsel %vm6194, %v8600, %v8653
        %v8655 = vsel %vm6196, %v8604, %v8654
        %v8656 = vsel %vm6198, %v8608, %v8655
        %v8657 = vsel %vm6200, %v8612, %v8656
        %v8658 = vsel %vm6202, %v8616, %v8657
        %v8659 = vsel %vm6204, %v8620, %v8658
        %v8660 = vsel %vm6192, %v8628, %v8624
        %v8661 = vsel %vm6194, %v8632, %v8660
        %v8662 = vsel %vm6196, %v8636, %v8661
        %v8663 = vsel %vm6198, %v8640, %v8662
        %v8664 = vsel %vm6200, %v8644, %v8663
        %v8665 = vsel %vm6202, %v8648, %v8664
        %v8666 = vsel %vm6204, %v8652, %v8665
        %v8669 = vadd.f32 %v8567, %v8659
        %v8670 = vadd.f32 %v8570, %v8666
        %v8671 = vmul.f32 %v8669, 0.70710677
        %v8672 = vmul.f32 %v8670, 0.70710677
        %vm8673 = vcmp.ge.f32.partialorder %v8671, 0.0
        %vm8674 = vcmp.ge.f32.partialorder %v8672, 0.0
        %v8675 = vmul.f32 %v8671, 0.2
        %v8676 = vmul.f32 %v8672, 0.2
        %v8677 = vsel %vm8673, %v8671, %v8675
        %v8678 = vsel %vm8674, %v8672, %v8676
        %v8680 = vrot.slane %v8677, 1
        %8681 = vrot.lane.b32.xlu0 %v8680, 32
        %v8682 = vpop.permute.xlu0 %8681
        %v8684 = vrot.slane %v8677, 2
        %8685 = vrot.lane.b32.xlu0 %v8684, 64
        %v8686 = vpop.permute.xlu0 %8685
        %v8688 = vrot.slane %v8677, 3
        %8689 = vrot.lane.b32.xlu0 %v8688, 96
        %v8690 = vpop.permute.xlu0 %8689
        %v8692 = vrot.slane %v8677, 4
        %v8694 = vrot.slane %v8677, 5
        %8695 = vrot.lane.b32.xlu0 %v8694, 32
        %v8696 = vpop.permute.xlu0 %8695
        %v8698 = vrot.slane %v8677, 6
        %8699 = vrot.lane.b32.xlu0 %v8698, 64
        %v8700 = vpop.permute.xlu0 %8699
        %v8702 = vrot.slane %v8677, 7
        %8703 = vrot.lane.b32.xlu0 %v8702, 96
        %v8704 = vpop.permute.xlu0 %8703
        %v8707 = vrot.slane %v8678, 1
        %8708 = vrot.lane.b32.xlu0 %v8707, 32
        %v8709 = vpop.permute.xlu0 %8708
        %v8711 = vrot.slane %v8678, 2
        %8712 = vrot.lane.b32.xlu0 %v8711, 64
        %v8713 = vpop.permute.xlu0 %8712
        %v8715 = vrot.slane %v8678, 3
        %8716 = vrot.lane.b32.xlu0 %v8715, 96
        %v8717 = vpop.permute.xlu0 %8716
        %v8719 = vrot.slane %v8678, 4
        %v8721 = vrot.slane %v8678, 5
        %8722 = vrot.lane.b32.xlu0 %v8721, 32
        %v8723 = vpop.permute.xlu0 %8722
        %v8725 = vrot.slane %v8678, 6
        %8726 = vrot.lane.b32.xlu0 %v8725, 64
        %v8727 = vpop.permute.xlu0 %8726
        %v8729 = vrot.slane %v8678, 7
        %8730 = vrot.lane.b32.xlu0 %v8729, 96
        %v8731 = vpop.permute.xlu0 %8730
        %v8733 = vsel %vm2114, %v8677, %v8682
        %v8734 = vsel %vm4559, %v8733, %v8686
        %v8735 = vsel %vm4625, %v8734, %v8690
        %v8736 = vsel %vm2114, %v8692, %v8696
        %v8737 = vsel %vm4559, %v8736, %v8700
        %v8738 = vsel %vm4625, %v8737, %v8704
        %v8739 = vsel %vm2114, %v8678, %v8709
        %v8740 = vsel %vm4559, %v8739, %v8713
        %v8741 = vsel %vm4625, %v8740, %v8717
        %v8742 = vsel %vm2114, %v8719, %v8723
        %v8743 = vsel %vm4559, %v8742, %v8727
        %v8744 = vsel %vm4625, %v8743, %v8731
        %v8745 = vpack.c.bf16 %v8735, %v8735
        %v8746 = vpack.c.bf16 %v8738, %v8738
        %v8747 = vpack.c.bf16 %v8741, %v8741
        %v8748 = vpack.c.bf16 %v8744, %v8744
        %v8813 = vunpack.c.l.b16 %v640
        %v8814 = vunpack.c.l.b16 %v641
        %v8815 = vunpack.c.l.b16 %v642
        %v8816 = vunpack.c.l.b16 %v643
        %v8817 = vunpack.c.l.b16 %v644
        %v8818 = vunpack.c.l.b16 %v645
        %v8819 = vunpack.c.l.b16 %v646
        %v8820 = vunpack.c.l.b16 %v647
        %v8821 = vunpack.c.l.b16 %v648
        %v8822 = vunpack.c.l.b16 %v649
        %v8823 = vunpack.c.l.b16 %v650
        %v8824 = vunpack.c.l.b16 %v651
        %v8825 = vunpack.c.l.b16 %v652
        %v8826 = vunpack.c.l.b16 %v653
        %v8827 = vunpack.c.l.b16 %v654
        %v8828 = vunpack.c.l.b16 %v655
        %v8829 = vunpack.c.l.b16 %v656
        %v8830 = vunpack.c.l.b16 %v657
        %v8831 = vunpack.c.l.b16 %v658
        %v8832 = vunpack.c.l.b16 %v659
        %v8833 = vunpack.c.l.b16 %v660
        %v8834 = vunpack.c.l.b16 %v661
        %v8835 = vunpack.c.l.b16 %v662
        %v8836 = vunpack.c.l.b16 %v663
        %v8837 = vunpack.c.l.b16 %v664
        %v8838 = vunpack.c.l.b16 %v665
        %v8839 = vunpack.c.l.b16 %v666
        %v8840 = vunpack.c.l.b16 %v667
        %v8841 = vunpack.c.l.b16 %v668
        %v8842 = vunpack.c.l.b16 %v669
        %v8843 = vunpack.c.l.b16 %v670
        %v8844 = vunpack.c.l.b16 %v671
        %v8845 = vunpack.c.l.b16 %v672
        %v8846 = vunpack.c.l.b16 %v673
        %v8847 = vunpack.c.l.b16 %v674
        %v8848 = vunpack.c.l.b16 %v675
        %v8849 = vunpack.c.l.b16 %v676
        %v8850 = vunpack.c.l.b16 %v677
        %v8851 = vunpack.c.l.b16 %v678
        %v8852 = vunpack.c.l.b16 %v679
        %v8853 = vunpack.c.l.b16 %v680
        %v8854 = vunpack.c.l.b16 %v681
        %v8855 = vunpack.c.l.b16 %v682
        %v8856 = vunpack.c.l.b16 %v683
        %v8857 = vunpack.c.l.b16 %v684
        %v8858 = vunpack.c.l.b16 %v685
        %v8859 = vunpack.c.l.b16 %v686
        %v8860 = vunpack.c.l.b16 %v687
        %v8861 = vunpack.c.l.b16 %v688
        %v8862 = vunpack.c.l.b16 %v689
        %v8863 = vunpack.c.l.b16 %v690
        %v8864 = vunpack.c.l.b16 %v691
        %v8865 = vunpack.c.l.b16 %v692
        %v8866 = vunpack.c.l.b16 %v693
        %v8867 = vunpack.c.l.b16 %v694
        %v8868 = vunpack.c.l.b16 %v695
        %v8869 = vunpack.c.l.b16 %v696
        %v8870 = vunpack.c.l.b16 %v697
        %v8871 = vunpack.c.l.b16 %v698
        %v8872 = vunpack.c.l.b16 %v699
        %v8873 = vunpack.c.l.b16 %v700
        %v8874 = vunpack.c.l.b16 %v701
        %v8875 = vunpack.c.l.b16 %v702
        %v8876 = vunpack.c.l.b16 %v703
        %v8877 = vpack.c.b16 %v8814, %v8813
        %v8878 = vpack.c.b16 %v8816, %v8815
        %v8879 = vpack.c.b16 %v8818, %v8817
        %v8880 = vpack.c.b16 %v8820, %v8819
        %v8881 = vpack.c.b16 %v8822, %v8821
        %v8882 = vpack.c.b16 %v8824, %v8823
        %v8883 = vpack.c.b16 %v8826, %v8825
        %v8884 = vpack.c.b16 %v8828, %v8827
        %v8885 = vpack.c.b16 %v8830, %v8829
        %v8886 = vpack.c.b16 %v8832, %v8831
        %v8887 = vpack.c.b16 %v8834, %v8833
        %v8888 = vpack.c.b16 %v8836, %v8835
        %v8889 = vpack.c.b16 %v8838, %v8837
        %v8890 = vpack.c.b16 %v8840, %v8839
        %v8891 = vpack.c.b16 %v8842, %v8841
        %v8892 = vpack.c.b16 %v8844, %v8843
        %v8893 = vpack.c.b16 %v8846, %v8845
        %v8894 = vpack.c.b16 %v8848, %v8847
        %v8895 = vpack.c.b16 %v8850, %v8849
        %v8896 = vpack.c.b16 %v8852, %v8851
        %v8897 = vpack.c.b16 %v8854, %v8853
        %v8898 = vpack.c.b16 %v8856, %v8855
        %v8899 = vpack.c.b16 %v8858, %v8857
        %v8900 = vpack.c.b16 %v8860, %v8859
        %v8901 = vpack.c.b16 %v8862, %v8861
        %v8902 = vpack.c.b16 %v8864, %v8863
        %v8903 = vpack.c.b16 %v8866, %v8865
        %v8904 = vpack.c.b16 %v8868, %v8867
        %v8905 = vpack.c.b16 %v8870, %v8869
        %v8906 = vpack.c.b16 %v8872, %v8871
        %v8907 = vpack.c.b16 %v8874, %v8873
        %v8908 = vpack.c.b16 %v8876, %v8875
        %8941 = vmatprep.subr.bf16.mxu0 0
        %8942 = vmatpush1.bf16.msra.mxu0 %v8884
        %8943 = vmatprep.subr.bf16.mxu0 0
        %8944 = vmatpush1.bf16.msra.mxu0 %v8883
        %8945 = vmatprep.subr.bf16.mxu0 0
        %8946 = vmatpush1.bf16.msra.mxu0 %v8882
        %8947 = vmatprep.subr.bf16.mxu0 0
        %8948 = vmatpush1.bf16.msra.mxu0 %v8881
        %8949 = vmatprep.subr.bf16.mxu0 0
        %8950 = vmatpush1.bf16.msra.mxu0 %v8880
        %8951 = vmatprep.subr.bf16.mxu0 0
        %8952 = vmatpush1.bf16.msra.mxu0 %v8879
        %8953 = vmatprep.subr.bf16.mxu0 0
        %8954 = vmatpush1.bf16.msra.mxu0 %v8878
        %8955 = vmatprep.subr.bf16.mxu0 0
        %8956 = vmatpush1.bf16.msra.mxu0 %v8877
        %8957 = vmatprep.subr.bf16.mxu0 0
        %8958 = vmatpush2.bf16.msra.mxu0 %v8892
        %8959 = vmatprep.subr.bf16.mxu0 0
        %8960 = vmatpush2.bf16.msra.mxu0 %v8891
        %8961 = vmatprep.subr.bf16.mxu0 0
        %8962 = vmatpush2.bf16.msra.mxu0 %v8890
        %8963 = vmatprep.subr.bf16.mxu0 0
        %8964 = vmatpush2.bf16.msra.mxu0 %v8889
        %8965 = vmatprep.subr.bf16.mxu0 0
        %8966 = vmatpush2.bf16.msra.mxu0 %v8888
        %8967 = vmatprep.subr.bf16.mxu0 0
        %8968 = vmatpush2.bf16.msra.mxu0 %v8887
        %8969 = vmatprep.subr.bf16.mxu0 0
        %8970 = vmatpush2.bf16.msra.mxu0 %v8886
        %8971 = vmatprep.subr.bf16.mxu0 0
        %8972 = vmatpush2.bf16.msra.mxu0 %v8885
        %8973 = vmatprep.mubr.bf16.mxu0 %v8746
        %8974 = vmatmul.mubr.bf16.gmra.mxu0 %v8745
        %v8975 = vpop.f32.mrf.mxu0
        %v8976 = vadd.f32 %v704, %v8975
        %v8977 = vpop.f32.mrf.mxu0
        %v8978 = vpop.f32.mrf.mxu0
        %v8979 = vpop.f32.mrf.mxu0
        %8980 = vdwg.mxu0
        %8981 = vmatprep.subr.bf16.mxu0 0
        %8982 = vmatpush1.bf16.msra.mxu0 %v8900
        %8983 = vmatprep.subr.bf16.mxu0 0
        %8984 = vmatpush1.bf16.msra.mxu0 %v8899
        %8985 = vmatprep.subr.bf16.mxu0 0
        %8986 = vmatpush1.bf16.msra.mxu0 %v8898
        %8987 = vmatprep.subr.bf16.mxu0 0
        %8988 = vmatpush1.bf16.msra.mxu0 %v8897
        %8989 = vmatprep.subr.bf16.mxu0 0
        %8990 = vmatpush1.bf16.msra.mxu0 %v8896
        %8991 = vmatprep.subr.bf16.mxu0 0
        %8992 = vmatpush1.bf16.msra.mxu0 %v8895
        %8993 = vmatprep.subr.bf16.mxu0 0
        %8994 = vmatpush1.bf16.msra.mxu0 %v8894
        %8995 = vmatprep.subr.bf16.mxu0 0
        %8996 = vmatpush1.bf16.msra.mxu0 %v8893
        %8997 = vmatprep.subr.bf16.mxu0 0
        %8998 = vmatpush2.bf16.msra.mxu0 %v8908
        %8999 = vmatprep.subr.bf16.mxu0 0
        %9000 = vmatpush2.bf16.msra.mxu0 %v8907
        %9001 = vmatprep.subr.bf16.mxu0 0
        %9002 = vmatpush2.bf16.msra.mxu0 %v8906
        %9003 = vmatprep.subr.bf16.mxu0 0
        %9004 = vmatpush2.bf16.msra.mxu0 %v8905
        %9005 = vmatprep.subr.bf16.mxu0 0
        %9006 = vmatpush2.bf16.msra.mxu0 %v8904
        %9007 = vmatprep.subr.bf16.mxu0 0
        %9008 = vmatpush2.bf16.msra.mxu0 %v8903
        %9009 = vmatprep.subr.bf16.mxu0 0
        %9010 = vmatpush2.bf16.msra.mxu0 %v8902
        %9011 = vmatprep.subr.bf16.mxu0 0
        %9012 = vmatpush2.bf16.msra.mxu0 %v8901
        %9013 = vmatprep.mubr.bf16.mxu0 %v8748
        %9014 = vmatmul.mubr.bf16.gmra.mxu0 %v8747
        %v9015 = vpop.f32.mrf.mxu0
        %v9016 = vadd.f32 %v8976, %v9015
        %v9017 = vpop.f32.mrf.mxu0
        %v9018 = vpop.f32.mrf.mxu0
        %v9019 = vpop.f32.mrf.mxu0
        %9020 = vdwg.mxu0
        %vm9021 = vcmp.ge.f32.partialorder %v9016, 0.0
        %v9022 = vmul.f32 %v9016, 0.2
        %v9023 = vsel %vm9021, %v9016, %v9022
        %v9024 = vpack.c.bf16 %v9023, %v9023
        %v9029 = vunpack.c.l.b16 %v705
        %v9030 = vunpack.c.l.b16 %v706
        %v9031 = vunpack.c.l.b16 %v707
        %v9032 = vunpack.c.l.b16 %v708
        %v9033 = vpack.c.b16 %v9030, %v9029
        %v9034 = vpack.c.b16 %v9032, %v9031
        %v9038 = vsel %vm2114, %v9024, 0
        %9040 = vmatprep.subr.bf16.mxu0 0
        %9041 = vmatpush1.bf16.msra.mxu0 0
        %9042 = vmatprep.subr.bf16.mxu0 0
        %9043 = vmatpush1.bf16.msra.mxu0 0
        %9044 = vmatprep.subr.bf16.mxu0 0
        %9045 = vmatpush1.bf16.msra.mxu0 0
        %9046 = vmatprep.subr.bf16.mxu0 0
        %9047 = vmatpush1.bf16.msra.mxu0 0
        %9048 = vmatprep.subr.bf16.mxu0 0
        %9049 = vmatpush1.bf16.msra.mxu0 0
        %9050 = vmatprep.subr.bf16.mxu0 0
        %9051 = vmatpush1.bf16.msra.mxu0 0
        %9052 = vmatprep.subr.bf16.mxu0 0
        %9053 = vmatpush1.bf16.msra.mxu0 %v9034
        %9054 = vmatprep.subr.bf16.mxu0 0
        %9055 = vmatpush1.bf16.msra.mxu0 %v9033
        %9056 = vmatprep.subr.bf16.mxu0 0
        %9057 = vmatpush2.bf16.msra.mxu0 0
        %9058 = vmatprep.subr.bf16.mxu0 0
        %9059 = vmatpush2.bf16.msra.mxu0 0
        %9060 = vmatprep.subr.bf16.mxu0 0
        %9061 = vmatpush2.bf16.msra.mxu0 0
        %9062 = vmatprep.subr.bf16.mxu0 0
        %9063 = vmatpush2.bf16.msra.mxu0 0
        %9064 = vmatprep.subr.bf16.mxu0 0
        %9065 = vmatpush2.bf16.msra.mxu0 0
        %9066 = vmatprep.subr.bf16.mxu0 0
        %9067 = vmatpush2.bf16.msra.mxu0 0
        %9068 = vmatprep.subr.bf16.mxu0 0
        %9069 = vmatpush2.bf16.msra.mxu0 0
        %9070 = vmatprep.subr.bf16.mxu0 0
        %9071 = vmatpush2.bf16.msra.mxu0 0
        %9072 = vmatprep.mubr.bf16.mxu0 0
        %9073 = vmatmul.mubr.bf16.gmra.mxu0 %v9038
        %v9074 = vpop.f32.mrf.mxu0
        %v9075 = vadd.f32 %v709, %v9074
        %v9076 = vpop.f32.mrf.mxu0
        %v9077 = vpop.f32.mrf.mxu0
        %v9078 = vpop.f32.mrf.mxu0
        %9079 = vdwg.mxu0
        %vm9080 = vcmask 57344
        %9081 = vst.msk [vmem:[%s513] sm:$0x1] %vm9080, %v9075
        %s9082 = sand.u32 %s379, 1
        %s9083 = scalar_lea.sflag [#allocation3], %s9082
        %s9084 = sand.u32 %s379, 1
        %s9085 = scalar_lea.vmem [#allocation2], %s9084
        // Predicated region
        $region85: #{style_encoder_forward.1} parent=83 // pred_check
          %p9086 = pneg %p389
        $region86: #{style_encoder_forward.1} parent=83 // pred_check_branch
          %9088 = sbr.rel (%p9086) target = $region88
        $region87: #{style_encoder_forward.1} parent=83 // pred_region
          %s9090 = ssub.s32 16, 16
          %9091 = vsyncadd %s9083, %s9090
          %s9092 = smul.addr %s30, 16
          %s9093 = scalar_lea.hbm %s16, %s9092
          %s9095 = sshll.u32 %s9085, 4
          %s9096 = int_to_ptr.vmem [resolvable:$true] %s9095
          %9098 = dma.vmem_to_hbm [thread:$0]  %s9096, 16, %s9093, %s9083
        $region88: #{style_encoder_forward.1} parent=83 // pred_fallthru
          _
      $region84: #{style_encoder_forward.1} parent=5 // pred_fallthru
        _
      %p9099 = scmp.le.s32.totalorder 2, %s25
      // Predicated region
      $region89: #{style_encoder_forward.1} parent=5 // pred_check
        %p9100 = pneg %p9099
      $region90: #{style_encoder_forward.1} parent=5 // pred_check_branch
        %9102 = sbr.rel (%p9100) target = $region92
      $region91: #{style_encoder_forward.1} parent=5 // pred_region
        %s9103 = ssub.s32 %s25, 2
        // Predicated region
        $region93: #{style_encoder_forward.1} parent=91 // pred_check
          %p9104 = pneg %p395
        $region94: #{style_encoder_forward.1} parent=91 // pred_check_branch
          %9106 = sbr.rel (%p9104) target = $region96
        $region95: #{style_encoder_forward.1} parent=91 // pred_region
          %s9107 = sand.u32 %s380, 1
          %s9108 = scalar_lea.sflag [#allocation3], %s9107
          %s9109 = sand.u32 %s380, 1
          %s9110 = scalar_lea.vmem [#allocation2], %s9109
          %9111 = dma.done %s9108, 16
        $region96: #{style_encoder_forward.1} parent=91 // pred_fallthru
          _
      $region92: #{style_encoder_forward.1} parent=5 // pred_fallthru
        _
    $region6: #{style_encoder_forward.1} parent=1 // loop_footer
      %s29 = sadd.s32 1, %s25
    $region7: #{style_encoder_forward.1} parent=1 // loop_footer_branch
      %24 = sbr.rel target = $region3
    $region8: #{style_encoder_forward.1} parent=1 // loop_exit
      _
    %9112 = vsyncpa [#allocation3], 1
    %s9113 = scalar_lea.sflag [#allocation3], 1
    %9114 = vsyncpa %s9113, 1

</llo_original>
